<compile_context>
chip_gen: v7x
topology: tpu7x:2x2x1
jax: 0.10.0
libtpu: 0.0.40
codegen_flags: <defaults>
</compile_context>

<pallas_src>
import math

import jax
import jax.numpy as jnp
from jax.experimental import pallas as pl
from jax.experimental.pallas import tpu as pltpu


def _round_up(v, m):
    return (v + m - 1) // m * m


def make_lstm_kernel(num_layers, T, Hp, unroll):
    """Stacked LSTM over the full sequence + final FC on the last hidden state."""

    def sigmoid_t(x):
        # EUP-lean sigmoid: a single tanh instead of exp + reciprocal per gate.
        return 0.5 * jnp.tanh(0.5 * x) + 0.5

    def kernel(*refs):
        x_ref = refs[0]                                   # (T, BB, Din0)  f32
        layer_refs = refs[1:1 + 3 * num_layers]           # per layer: W_ih^T, W_hh^T, b
        wfc_ref = refs[1 + 3 * num_layers]                # (Hp, Op)  bf16
        bfc_ref = refs[2 + 3 * num_layers]                # (1, Op)   f32
        out_ref = refs[3 + 3 * num_layers]                # (BB, Op)  f32
        hbuf, gx_scr, h_scr, c_scr = refs[4 + 3 * num_layers:]

        BB = h_scr.shape[0]

        for layer in range(num_layers):
            wih_ref = layer_refs[3 * layer]               # (Din_l, 4Hp) bf16
            whh_ref = layer_refs[3 * layer + 1]           # (Hp, 4Hp)    bf16
            b_ref = layer_refs[3 * layer + 2]             # (1, 4Hp)     f32 (= b_ih+b_hh)

            # Layer input: original x for layer 0, previous layer's hidden sequence
            # after (fully materialized as a value before the time loop overwrites hbuf).
            inp = x_ref[...] if layer == 0 else hbuf[...]  # (T, BB, Din_l)
            Din = inp.shape[-1]

            # One big MXU matmul (M = T*BB) for every timestep's input projection.
            # Reshape in f32 (robust layout), cast the operand to bf16 for the MXU.
            inp2d = inp.reshape(T * BB, Din).astype(jnp.bfloat16)
            gx = jnp.dot(inp2d, wih_ref[...], preferred_element_type=jnp.float32)
            gx_scr[...] = (gx + b_ref[...]).reshape(T, BB, 4 * Hp)

            h_scr[...] = jnp.zeros_like(h_scr)
            c_scr[...] = jnp.zeros_like(c_scr)

            last_layer = layer == num_layers - 1

            def step(t, carry):
                # Re-read W_hh from VMEM each step so it is not live in vregs across
                # the whole (partially) unrolled body.
                gates = gx_scr[t] + jnp.dot(h_scr[...].astype(jnp.bfloat16),
                                            whh_ref[...],
                                            preferred_element_type=jnp.float32)
                i_g = sigmoid_t(gates[:, 0 * Hp:1 * Hp])
                f_g = sigmoid_t(gates[:, 1 * Hp:2 * Hp])
                g_g = jnp.tanh(gates[:, 2 * Hp:3 * Hp])
                o_g = sigmoid_t(gates[:, 3 * Hp:4 * Hp])
                c_new = f_g * c_scr[...] + i_g * g_g
                h_new = o_g * jnp.tanh(c_new)
                c_scr[...] = c_new
                h_scr[...] = h_new
                if not last_layer:        # last layer's hidden sequence is never read
                    hbuf[t] = h_new
                return carry

            jax.lax.fori_loop(0, T, step, 0, unroll=unroll)

        # Final FC fused on the last hidden state of the last layer.
        out_ref[...] = (jnp.dot(h_scr[...].astype(jnp.bfloat16), wfc_ref[...],
                                preferred_element_type=jnp.float32)
                        + bfc_ref[...]).astype(out_ref.dtype)

    return kernel


def lstm_forward(x, layer_params, wfc, bfc, *, max_batch_tile=256):
    """x: (B, T, input_size) batch-first, like the PyTorch module.
    layer_params: list of (w_ih, w_hh, b_ih, b_hh) in PyTorch layout
                  ((4H, Din_l), (4H, H), (4H,), (4H,)).
    wfc: (O, H), bfc: (O,). Returns (B, O) float32."""
    B, T, Din0 = x.shape
    num_layers = len(layer_params)
    H = layer_params[0][1].shape[1]
    O = wfc.shape[0]

    LANE = 128
    Hp = _round_up(H, LANE)          # lane-aligned hidden / gate width
    Op = _round_up(O, LANE)          # lane-dense output store

    # Batch: pad to a sublane multiple, then tile in big blocks (MXU M-dim).
    Bp = _round_up(B, 8)
    if Bp <= max_batch_tile:
        BB = Bp
    else:
        BB = 8
        for cand in range(_round_up(max_batch_tile, 8), 7, -8):
            if Bp % cand == 0:
                BB = cand
                break
    grid = (Bp // BB,)

    # Time-major so the recurrence only ever indexes the leading (slow) axis.
    # TODO(synk): DMA batch-major tiles and relayout once in VMEM to avoid this
    # whole-input XLA transpose when B*T*Din0 is large.
    x_tbd = jnp.transpose(x, (1, 0, 2)).astype(jnp.float32)        # (T, B, Din0)
    if Bp != B:
        x_tbd = jnp.pad(x_tbd, ((0, 0), (0, Bp - B), (0, 0)))

    def pad_gate_cols(w_t):
        # (K, 4H) with gate blocks [i|f|g|o] -> (K, 4*Hp), each gate zero-padded.
        K = w_t.shape[0]
        w4 = w_t.reshape(K, 4, H)
        w4 = jnp.pad(w4, ((0, 0), (0, 0), (0, Hp - H)))
        return w4.reshape(K, 4 * Hp)

    rep2 = lambda i: (0, 0)
    args = [x_tbd]
    in_specs = [pl.BlockSpec((T, BB, Din0), lambda i: (0, i, 0))]
    for layer, (w_ih, w_hh, b_ih, b_hh) in enumerate(layer_params):
        din = w_ih.shape[1]
        wih_t = pad_gate_cols(jnp.transpose(w_ih))                       # (din, 4Hp)
        if layer > 0:
            # Previous layer's hidden is Hp wide (zero padded); pad the K dim to match.
            wih_t = jnp.pad(wih_t, ((0, Hp - din), (0, 0)))
        wih_t = wih_t.astype(jnp.bfloat16)
        whh_t = pad_gate_cols(jnp.transpose(w_hh))                       # (H, 4Hp)
        whh_t = jnp.pad(whh_t, ((0, Hp - H), (0, 0))).astype(jnp.bfloat16)
        b = pad_gate_cols((b_ih + b_hh).reshape(1, 4 * H)).astype(jnp.float32)

        args += [wih_t, whh_t, b]
        # TODO(synk): pipeline_mode=pl.Buffered(1) on these constant-index weight specs
        # would halve their VMEM footprint for very large H (v7x headroom).
        in_specs += [pl.BlockSpec(wih_t.shape, rep2),
                     pl.BlockSpec(whh_t.shape, rep2),
                     pl.BlockSpec((1, 4 * Hp), rep2)]

    wfc_t = jnp.pad(jnp.transpose(wfc), ((0, Hp - H), (0, Op - O))).astype(jnp.bfloat16)
    bfc_p = jnp.pad(bfc, (0, Op - O)).reshape(1, Op).astype(jnp.float32)
    args += [wfc_t, bfc_p]
    in_specs += [pl.BlockSpec((Hp, Op), rep2), pl.BlockSpec((1, Op), rep2)]

    out = pl.pallas_call(
        make_lstm_kernel(num_layers, T, Hp, unroll=min(T, 8)),
        out_shape=jax.ShapeDtypeStruct((Bp, Op), jnp.float32),
        grid_spec=pltpu.PrefetchScalarGridSpec(
            num_scalar_prefetch=0,
            grid=grid,
            in_specs=in_specs,
            out_specs=pl.BlockSpec((BB, Op), lambda i: (i, 0)),
            scratch_shapes=[
                pltpu.VMEM((T, BB, Hp), jnp.float32),       # inter-layer hidden sequence
                pltpu.VMEM((T, BB, 4 * Hp), jnp.float32),   # precomputed input projections
                pltpu.VMEM((BB, Hp), jnp.float32),          # h_t
                pltpu.VMEM((BB, Hp), jnp.float32),          # c_t
            ]),
        compiler_params=pltpu.CompilerParams(
            dimension_semantics=("parallel",),
            vmem_limit_bytes=64 * 1024 * 1024),
    )(*args)
    return out[:B, :O]


def _reference_forward(x, layer_params, wfc, bfc):
    """Pure-JAX f32 reference mirroring torch.nn.LSTM (gate order i,f,g,o) + Linear."""
    B, T, _ = x.shape
    seq = x
    for (w_ih, w_hh, b_ih, b_hh) in layer_params:
        H = w_hh.shape[1]
        h = jnp.zeros((B, H), jnp.float32)
        c = jnp.zeros((B, H), jnp.float32)
        hs = []
        for t in range(T):
            gates = seq[:, t, :] @ w_ih.T + b_ih + h @ w_hh.T + b_hh
            i = jax.nn.sigmoid(gates[:, 0:H])
            f = jax.nn.sigmoid(gates[:, H:2 * H])
            g = jnp.tanh(gates[:, 2 * H:3 * H])
            o = jax.nn.sigmoid(gates[:, 3 * H:4 * H])
            c = f * c + i * g
            h = o * jnp.tanh(c)
            hs.append(h)
        seq = jnp.stack(hs, axis=1)
    return seq[:, -1, :] @ wfc.T + bfc


if __name__ == "__main__":
    B, T = 2, 8
    input_size, hidden_size, num_layers, output_size = 16, 32, 2, 4

    key = jax.random.PRNGKey(0)
    keys = jax.random.split(key, 1 + 4 * num_layers + 2)

    x = jax.random.normal(keys[0], (B, T, input_size), jnp.float32)

    # Deterministic uniform(-1/sqrt(H), 1/sqrt(H)) init, like nn.LSTM / nn.Linear defaults.
    bound = 1.0 / math.sqrt(hidden_size)
    layer_params = []
    ki = 1
    for layer in range(num_layers):
        din = input_size if layer == 0 else hidden_size
        w_ih = jax.random.uniform(keys[ki], (4 * hidden_size, din), jnp.float32, -bound, bound); ki += 1
        w_hh = jax.random.uniform(keys[ki], (4 * hidden_size, hidden_size), jnp.float32, -bound, bound); ki += 1
        b_ih = jax.random.uniform(keys[ki], (4 * hidden_size,), jnp.float32, -bound, bound); ki += 1
        b_hh = jax.random.uniform(keys[ki], (4 * hidden_size,), jnp.float32, -bound, bound); ki += 1
        layer_params.append((w_ih, w_hh, b_ih, b_hh))
    wfc = jax.random.uniform(keys[ki], (output_size, hidden_size), jnp.float32, -bound, bound); ki += 1
    bfc = jax.random.uniform(keys[ki], (output_size,), jnp.float32, -bound, bound)

    out = lstm_forward(x, layer_params, wfc, bfc)
    jax.block_until_ready(out)

    ref = _reference_forward(x, layer_params, wfc, bfc)
    assert out.shape == (B, output_size)
    max_err = float(jnp.max(jnp.abs(out - ref)))
    # bf16 MXU operands with f32 accumulation: compare against the f32 reference at a
    # tolerance appropriate for bf16 mantissa.
    assert jnp.allclose(out, ref, rtol=3e-2, atol=3e-2), f"max_err={max_err}"

    print("KERNEL_OK")
</pallas_src>

<mosaic_0001>
module attributes {stable_mosaic.version = 11 : i64} {
  func.func @kernel(%arg0: i32, %arg1: memref<8x8x16xf32, #tpu.memory_space<vmem>>, %arg2: memref<16x512xbf16, #tpu.memory_space<vmem>>, %arg3: memref<128x512xbf16, #tpu.memory_space<vmem>>, %arg4: memref<1x512xf32, #tpu.memory_space<vmem>>, %arg5: memref<128x512xbf16, #tpu.memory_space<vmem>>, %arg6: memref<128x512xbf16, #tpu.memory_space<vmem>>, %arg7: memref<1x512xf32, #tpu.memory_space<vmem>>, %arg8: memref<128x128xbf16, #tpu.memory_space<vmem>>, %arg9: memref<1x128xf32, #tpu.memory_space<vmem>>, %arg10: memref<8x128xf32, #tpu.memory_space<vmem>>, %arg11: memref<8x8x128xf32, #tpu.memory_space<vmem>>, %arg12: memref<8x8x512xf32, #tpu.memory_space<vmem>>, %arg13: memref<8x128xf32, #tpu.memory_space<vmem>>, %arg14: memref<8x128xf32, #tpu.memory_space<vmem>>) attributes {dimension_semantics = [#tpu.dimension_semantics<parallel>], iteration_bounds = array<i64: 1>, scalar_prefetch = 0 : i64, scratch_operands = 4 : i64, tpu.core_type = #tpu.core_type<tc>, window_params = [{transform_indices = @transform_0, window_bounds = array<i64: 8, 8, 16>}, {pipeline_mode = #tpu.pipeline_mode<synchronous>, transform_indices = @transform_1, window_bounds = array<i64: 16, 512>}, {pipeline_mode = #tpu.pipeline_mode<synchronous>, transform_indices = @transform_2, window_bounds = array<i64: 128, 512>}, {pipeline_mode = #tpu.pipeline_mode<synchronous>, transform_indices = @transform_3, window_bounds = array<i64: 1, 512>}, {pipeline_mode = #tpu.pipeline_mode<synchronous>, transform_indices = @transform_4, window_bounds = array<i64: 128, 512>}, {pipeline_mode = #tpu.pipeline_mode<synchronous>, transform_indices = @transform_5, window_bounds = array<i64: 128, 512>}, {pipeline_mode = #tpu.pipeline_mode<synchronous>, transform_indices = @transform_6, window_bounds = array<i64: 1, 512>}, {pipeline_mode = #tpu.pipeline_mode<synchronous>, transform_indices = @transform_7, window_bounds = array<i64: 128, 128>}, {pipeline_mode = #tpu.pipeline_mode<synchronous>, transform_indices = @transform_8, window_bounds = array<i64: 1, 128>}, {transform_indices = @transform_9, window_bounds = array<i64: 8, 128>}]} {
    %c0 = arith.constant 0 : index
    %c0_0 = arith.constant 0 : index
    %c0_1 = arith.constant 0 : index
    %0 = vector.load %arg1[%c0, %c0_0, %c0_1] : memref<8x8x16xf32, #tpu.memory_space<vmem>>, vector<8x8x16xf32>
    %1 = vector.shape_cast %0 : vector<8x8x16xf32> to vector<64x16xf32>
    %2 = arith.truncf %1 : vector<64x16xf32> to vector<64x16xbf16>
    %c0_2 = arith.constant 0 : index
    %c0_3 = arith.constant 0 : index
    %3 = vector.load %arg2[%c0_2, %c0_3] : memref<16x512xbf16, #tpu.memory_space<vmem>>, vector<16x512xbf16>
    %cst = arith.constant dense<0.000000e+00> : vector<64x512xf32>
    %4 = tpu.matmul %2, %3, %cst {dimension_numbers = #tpu.dot_dimension_numbers<[1], [0], [0], [1], [0, 0, 1, 1], [], []>} : vector<64x16xbf16>, vector<16x512xbf16>, vector<64x512xf32> -> vector<64x512xf32>
    %c0_4 = arith.constant 0 : index
    %c0_5 = arith.constant 0 : index
    %5 = vector.load %arg4[%c0_4, %c0_5] : memref<1x512xf32, #tpu.memory_space<vmem>>, vector<1x512xf32>
    %6 = vector.broadcast %5 : vector<1x512xf32> to vector<64x512xf32>
    %7 = arith.addf %4, %6 : vector<64x512xf32>
    %8 = vector.shape_cast %7 : vector<64x512xf32> to vector<8x8x512xf32>
    %c0_6 = arith.constant 0 : index
    %c0_7 = arith.constant 0 : index
    %c0_8 = arith.constant 0 : index
    %9 = vector.load %arg12[%c0_6, %c0_7, %c0_8] : memref<8x8x512xf32, #tpu.memory_space<vmem>>, vector<8x8x512xf32>
    tpu.vector_store %arg12[%c0_6, %c0_7, %c0_8], %8 {strides = array<i32>} : memref<8x8x512xf32, #tpu.memory_space<vmem>>, vector<8x8x512xf32>,
    %cst_9 = arith.constant 0.000000e+00 : f32
    %10 = vector.broadcast %cst_9 : f32 to vector<8x128xf32>
    %c0_10 = arith.constant 0 : index
    %c0_11 = arith.constant 0 : index
    %11 = vector.load %arg13[%c0_10, %c0_11] : memref<8x128xf32, #tpu.memory_space<vmem>>, vector<8x128xf32>
    tpu.vector_store %arg13[%c0_10, %c0_11], %10 {strides = array<i32>} : memref<8x128xf32, #tpu.memory_space<vmem>>, vector<8x128xf32>,
    %cst_12 = arith.constant 0.000000e+00 : f32
    %12 = vector.broadcast %cst_12 : f32 to vector<8x128xf32>
    %c0_13 = arith.constant 0 : index
    %c0_14 = arith.constant 0 : index
    %13 = vector.load %arg14[%c0_13, %c0_14] : memref<8x128xf32, #tpu.memory_space<vmem>>, vector<8x128xf32>
    tpu.vector_store %arg14[%c0_13, %c0_14], %12 {strides = array<i32>} : memref<8x128xf32, #tpu.memory_space<vmem>>, vector<8x128xf32>,
    %c0_i32 = arith.constant 0 : i32
    %14 = arith.index_cast %c0_i32 : i32 to index
    %c0_15 = arith.constant 0 : index
    %c0_16 = arith.constant 0 : index
    %15 = vector.load %arg12[%14, %c0_15, %c0_16] : memref<8x8x512xf32, #tpu.memory_space<vmem>>, vector<1x8x512xf32>
    %16 = vector.shape_cast %15 : vector<1x8x512xf32> to vector<8x512xf32>
    %c0_17 = arith.constant 0 : index
    %c0_18 = arith.constant 0 : index
    %17 = vector.load %arg13[%c0_17, %c0_18] : memref<8x128xf32, #tpu.memory_space<vmem>>, vector<8x128xf32>
    %18 = arith.truncf %17 : vector<8x128xf32> to vector<8x128xbf16>
    %c0_19 = arith.constant 0 : index
    %c0_20 = arith.constant 0 : index
    %19 = vector.load %arg3[%c0_19, %c0_20] : memref<128x512xbf16, #tpu.memory_space<vmem>>, vector<128x512xbf16>
    %cst_21 = arith.constant dense<0.000000e+00> : vector<8x512xf32>
    %20 = tpu.matmul %18, %19, %cst_21 {dimension_numbers = #tpu.dot_dimension_numbers<[1], [0], [0], [1], [0, 0, 1, 1], [], []>} : vector<8x128xbf16>, vector<128x512xbf16>, vector<8x512xf32> -> vector<8x512xf32>
    %21 = arith.addf %16, %20 : vector<8x512xf32>
    %22 = vector.extract_strided_slice %21 {offsets = [0, 0], sizes = [8, 128], strides = [1, 1]} : vector<8x512xf32> to vector<8x128xf32>
    %cst_22 = arith.constant 5.000000e-01 : f32
    %23 = vector.broadcast %cst_22 : f32 to vector<8x128xf32>
    %24 = arith.mulf %23, %22 : vector<8x128xf32>
    %25 = math.tanh %24 : vector<8x128xf32>
    %cst_23 = arith.constant 5.000000e-01 : f32
    %26 = vector.broadcast %cst_23 : f32 to vector<8x128xf32>
    %27 = arith.mulf %26, %25 : vector<8x128xf32>
    %cst_24 = arith.constant 5.000000e-01 : f32
    %28 = vector.broadcast %cst_24 : f32 to vector<8x128xf32>
    %29 = arith.addf %27, %28 : vector<8x128xf32>
    %30 = vector.extract_strided_slice %21 {offsets = [0, 128], sizes = [8, 128], strides = [1, 1]} : vector<8x512xf32> to vector<8x128xf32>
    %cst_25 = arith.constant 5.000000e-01 : f32
    %31 = vector.broadcast %cst_25 : f32 to vector<8x128xf32>
    %32 = arith.mulf %31, %30 : vector<8x128xf32>
    %33 = math.tanh %32 : vector<8x128xf32>
    %cst_26 = arith.constant 5.000000e-01 : f32
    %34 = vector.broadcast %cst_26 : f32 to vector<8x128xf32>
    %35 = arith.mulf %34, %33 : vector<8x128xf32>
    %cst_27 = arith.constant 5.000000e-01 : f32
    %36 = vector.broadcast %cst_27 : f32 to vector<8x128xf32>
    %37 = arith.addf %35, %36 : vector<8x128xf32>
    %38 = vector.extract_strided_slice %21 {offsets = [0, 256], sizes = [8, 128], strides = [1, 1]} : vector<8x512xf32> to vector<8x128xf32>
    %39 = math.tanh %38 : vector<8x128xf32>
    %40 = vector.extract_strided_slice %21 {offsets = [0, 384], sizes = [8, 128], strides = [1, 1]} : vector<8x512xf32> to vector<8x128xf32>
    %cst_28 = arith.constant 5.000000e-01 : f32
    %41 = vector.broadcast %cst_28 : f32 to vector<8x128xf32>
    %42 = arith.mulf %41, %40 : vector<8x128xf32>
    %43 = math.tanh %42 : vector<8x128xf32>
    %cst_29 = arith.constant 5.000000e-01 : f32
    %44 = vector.broadcast %cst_29 : f32 to vector<8x128xf32>
    %45 = arith.mulf %44, %43 : vector<8x128xf32>
    %cst_30 = arith.constant 5.000000e-01 : f32
    %46 = vector.broadcast %cst_30 : f32 to vector<8x128xf32>
    %47 = arith.addf %45, %46 : vector<8x128xf32>
    %c0_31 = arith.constant 0 : index
    %c0_32 = arith.constant 0 : index
    %48 = vector.load %arg14[%c0_31, %c0_32] : memref<8x128xf32, #tpu.memory_space<vmem>>, vector<8x128xf32>
    %49 = arith.mulf %37, %48 : vector<8x128xf32>
    %50 = arith.mulf %29, %39 : vector<8x128xf32>
    %51 = arith.addf %49, %50 : vector<8x128xf32>
    %52 = math.tanh %51 : vector<8x128xf32>
    %53 = arith.mulf %47, %52 : vector<8x128xf32>
    %c0_33 = arith.constant 0 : index
    %c0_34 = arith.constant 0 : index
    %54 = vector.load %arg14[%c0_33, %c0_34] : memref<8x128xf32, #tpu.memory_space<vmem>>, vector<8x128xf32>
    tpu.vector_store %arg14[%c0_33, %c0_34], %51 {strides = array<i32>} : memref<8x128xf32, #tpu.memory_space<vmem>>, vector<8x128xf32>,
    %c0_35 = arith.constant 0 : index
    %c0_36 = arith.constant 0 : index
    %55 = vector.load %arg13[%c0_35, %c0_36] : memref<8x128xf32, #tpu.memory_space<vmem>>, vector<8x128xf32>
    tpu.vector_store %arg13[%c0_35, %c0_36], %53 {strides = array<i32>} : memref<8x128xf32, #tpu.memory_space<vmem>>, vector<8x128xf32>,
    %56 = arith.index_cast %c0_i32 : i32 to index
    %c0_37 = arith.constant 0 : index
    %c0_38 = arith.constant 0 : index
    %57 = vector.load %arg11[%56, %c0_37, %c0_38] : memref<8x8x128xf32, #tpu.memory_space<vmem>>, vector<1x8x128xf32>
    %58 = vector.shape_cast %57 : vector<1x8x128xf32> to vector<8x128xf32>
    %59 = vector.shape_cast %53 : vector<8x128xf32> to vector<1x8x128xf32>
    tpu.vector_store %arg11[%56, %c0_37, %c0_38], %59 {strides = array<i32>} : memref<8x8x128xf32, #tpu.memory_space<vmem>>, vector<1x8x128xf32>,
    %c1_i32 = arith.constant 1 : i32
    %60 = arith.index_cast %c1_i32 : i32 to index
    %c0_39 = arith.constant 0 : index
    %c0_40 = arith.constant 0 : index
    %61 = vector.load %arg12[%60, %c0_39, %c0_40] : memref<8x8x512xf32, #tpu.memory_space<vmem>>, vector<1x8x512xf32>
    %62 = vector.shape_cast %61 : vector<1x8x512xf32> to vector<8x512xf32>
    %c0_41 = arith.constant 0 : index
    %c0_42 = arith.constant 0 : index
    %63 = vector.load %arg13[%c0_41, %c0_42] : memref<8x128xf32, #tpu.memory_space<vmem>>, vector<8x128xf32>
    %64 = arith.truncf %63 : vector<8x128xf32> to vector<8x128xbf16>
    %c0_43 = arith.constant 0 : index
    %c0_44 = arith.constant 0 : index
    %65 = vector.load %arg3[%c0_43, %c0_44] : memref<128x512xbf16, #tpu.memory_space<vmem>>, vector<128x512xbf16>
    %cst_45 = arith.constant dense<0.000000e+00> : vector<8x512xf32>
    %66 = tpu.matmul %64, %65, %cst_45 {dimension_numbers = #tpu.dot_dimension_numbers<[1], [0], [0], [1], [0, 0, 1, 1], [], []>} : vector<8x128xbf16>, vector<128x512xbf16>, vector<8x512xf32> -> vector<8x512xf32>
    %67 = arith.addf %62, %66 : vector<8x512xf32>
    %68 = vector.extract_strided_slice %67 {offsets = [0, 0], sizes = [8, 128], strides = [1, 1]} : vector<8x512xf32> to vector<8x128xf32>
    %cst_46 = arith.constant 5.000000e-01 : f32
    %69 = vector.broadcast %cst_46 : f32 to vector<8x128xf32>
    %70 = arith.mulf %69, %68 : vector<8x128xf32>
    %71 = math.tanh %70 : vector<8x128xf32>
    %cst_47 = arith.constant 5.000000e-01 : f32
    %72 = vector.broadcast %cst_47 : f32 to vector<8x128xf32>
    %73 = arith.mulf %72, %71 : vector<8x128xf32>
    %cst_48 = arith.constant 5.000000e-01 : f32
    %74 = vector.broadcast %cst_48 : f32 to vector<8x128xf32>
    %75 = arith.addf %73, %74 : vector<8x128xf32>
    %76 = vector.extract_strided_slice %67 {offsets = [0, 128], sizes = [8, 128], strides = [1, 1]} : vector<8x512xf32> to vector<8x128xf32>
    %cst_49 = arith.constant 5.000000e-01 : f32
    %77 = vector.broadcast %cst_49 : f32 to vector<8x128xf32>
    %78 = arith.mulf %77, %76 : vector<8x128xf32>
    %79 = math.tanh %78 : vector<8x128xf32>
    %cst_50 = arith.constant 5.000000e-01 : f32
    %80 = vector.broadcast %cst_50 : f32 to vector<8x128xf32>
    %81 = arith.mulf %80, %79 : vector<8x128xf32>
    %cst_51 = arith.constant 5.000000e-01 : f32
    %82 = vector.broadcast %cst_51 : f32 to vector<8x128xf32>
    %83 = arith.addf %81, %82 : vector<8x128xf32>
    %84 = vector.extract_strided_slice %67 {offsets = [0, 256], sizes = [8, 128], strides = [1, 1]} : vector<8x512xf32> to vector<8x128xf32>
    %85 = math.tanh %84 : vector<8x128xf32>
    %86 = vector.extract_strided_slice %67 {offsets = [0, 384], sizes = [8, 128], strides = [1, 1]} : vector<8x512xf32> to vector<8x128xf32>
    %cst_52 = arith.constant 5.000000e-01 : f32
    %87 = vector.broadcast %cst_52 : f32 to vector<8x128xf32>
    %88 = arith.mulf %87, %86 : vector<8x128xf32>
    %89 = math.tanh %88 : vector<8x128xf32>
    %cst_53 = arith.constant 5.000000e-01 : f32
    %90 = vector.broadcast %cst_53 : f32 to vector<8x128xf32>
    %91 = arith.mulf %90, %89 : vector<8x128xf32>
    %cst_54 = arith.constant 5.000000e-01 : f32
    %92 = vector.broadcast %cst_54 : f32 to vector<8x128xf32>
    %93 = arith.addf %91, %92 : vector<8x128xf32>
    %c0_55 = arith.constant 0 : index
    %c0_56 = arith.constant 0 : index
    %94 = vector.load %arg14[%c0_55, %c0_56] : memref<8x128xf32, #tpu.memory_space<vmem>>, vector<8x128xf32>
    %95 = arith.mulf %83, %94 : vector<8x128xf32>
    %96 = arith.mulf %75, %85 : vector<8x128xf32>
    %97 = arith.addf %95, %96 : vector<8x128xf32>
    %98 = math.tanh %97 : vector<8x128xf32>
    %99 = arith.mulf %93, %98 : vector<8x128xf32>
    %c0_57 = arith.constant 0 : index
    %c0_58 = arith.constant 0 : index
    %100 = vector.load %arg14[%c0_57, %c0_58] : memref<8x128xf32, #tpu.memory_space<vmem>>, vector<8x128xf32>
    tpu.vector_store %arg14[%c0_57, %c0_58], %97 {strides = array<i32>} : memref<8x128xf32, #tpu.memory_space<vmem>>, vector<8x128xf32>,
    %c0_59 = arith.constant 0 : index
    %c0_60 = arith.constant 0 : index
    %101 = vector.load %arg13[%c0_59, %c0_60] : memref<8x128xf32, #tpu.memory_space<vmem>>, vector<8x128xf32>
    tpu.vector_store %arg13[%c0_59, %c0_60], %99 {strides = array<i32>} : memref<8x128xf32, #tpu.memory_space<vmem>>, vector<8x128xf32>,
    %102 = arith.index_cast %c1_i32 : i32 to index
    %c0_61 = arith.constant 0 : index
    %c0_62 = arith.constant 0 : index
    %103 = vector.load %arg11[%102, %c0_61, %c0_62] : memref<8x8x128xf32, #tpu.memory_space<vmem>>, vector<1x8x128xf32>
    %104 = vector.shape_cast %103 : vector<1x8x128xf32> to vector<8x128xf32>
    %105 = vector.shape_cast %99 : vector<8x128xf32> to vector<1x8x128xf32>
    tpu.vector_store %arg11[%102, %c0_61, %c0_62], %105 {strides = array<i32>} : memref<8x8x128xf32, #tpu.memory_space<vmem>>, vector<1x8x128xf32>,
    %c2_i32 = arith.constant 2 : i32
    %106 = arith.index_cast %c2_i32 : i32 to index
    %c0_63 = arith.constant 0 : index
    %c0_64 = arith.constant 0 : index
    %107 = vector.load %arg12[%106, %c0_63, %c0_64] : memref<8x8x512xf32, #tpu.memory_space<vmem>>, vector<1x8x512xf32>
    %108 = vector.shape_cast %107 : vector<1x8x512xf32> to vector<8x512xf32>
    %c0_65 = arith.constant 0 : index
    %c0_66 = arith.constant 0 : index
    %109 = vector.load %arg13[%c0_65, %c0_66] : memref<8x128xf32, #tpu.memory_space<vmem>>, vector<8x128xf32>
    %110 = arith.truncf %109 : vector<8x128xf32> to vector<8x128xbf16>
    %c0_67 = arith.constant 0 : index
    %c0_68 = arith.constant 0 : index
    %111 = vector.load %arg3[%c0_67, %c0_68] : memref<128x512xbf16, #tpu.memory_space<vmem>>, vector<128x512xbf16>
    %cst_69 = arith.constant dense<0.000000e+00> : vector<8x512xf32>
    %112 = tpu.matmul %110, %111, %cst_69 {dimension_numbers = #tpu.dot_dimension_numbers<[1], [0], [0], [1], [0, 0, 1, 1], [], []>} : vector<8x128xbf16>, vector<128x512xbf16>, vector<8x512xf32> -> vector<8x512xf32>
    %113 = arith.addf %108, %112 : vector<8x512xf32>
    %114 = vector.extract_strided_slice %113 {offsets = [0, 0], sizes = [8, 128], strides = [1, 1]} : vector<8x512xf32> to vector<8x128xf32>
    %cst_70 = arith.constant 5.000000e-01 : f32
    %115 = vector.broadcast %cst_70 : f32 to vector<8x128xf32>
    %116 = arith.mulf %115, %114 : vector<8x128xf32>
    %117 = math.tanh %116 : vector<8x128xf32>
    %cst_71 = arith.constant 5.000000e-01 : f32
    %118 = vector.broadcast %cst_71 : f32 to vector<8x128xf32>
    %119 = arith.mulf %118, %117 : vector<8x128xf32>
    %cst_72 = arith.constant 5.000000e-01 : f32
    %120 = vector.broadcast %cst_72 : f32 to vector<8x128xf32>
    %121 = arith.addf %119, %120 : vector<8x128xf32>
    %122 = vector.extract_strided_slice %113 {offsets = [0, 128], sizes = [8, 128], strides = [1, 1]} : vector<8x512xf32> to vector<8x128xf32>
    %cst_73 = arith.constant 5.000000e-01 : f32
    %123 = vector.broadcast %cst_73 : f32 to vector<8x128xf32>
    %124 = arith.mulf %123, %122 : vector<8x128xf32>
    %125 = math.tanh %124 : vector<8x128xf32>
    %cst_74 = arith.constant 5.000000e-01 : f32
    %126 = vector.broadcast %cst_74 : f32 to vector<8x128xf32>
    %127 = arith.mulf %126, %125 : vector<8x128xf32>
    %cst_75 = arith.constant 5.000000e-01 : f32
    %128 = vector.broadcast %cst_75 : f32 to vector<8x128xf32>
    %129 = arith.addf %127, %128 : vector<8x128xf32>
    %130 = vector.extract_strided_slice %113 {offsets = [0, 256], sizes = [8, 128], strides = [1, 1]} : vector<8x512xf32> to vector<8x128xf32>
    %131 = math.tanh %130 : vector<8x128xf32>
    %132 = vector.extract_strided_slice %113 {offsets = [0, 384], sizes = [8, 128], strides = [1, 1]} : vector<8x512xf32> to vector<8x128xf32>
    %cst_76 = arith.constant 5.000000e-01 : f32
    %133 = vector.broadcast %cst_76 : f32 to vector<8x128xf32>
    %134 = arith.mulf %133, %132 : vector<8x128xf32>
    %135 = math.tanh %134 : vector<8x128xf32>
    %cst_77 = arith.constant 5.000000e-01 : f32
    %136 = vector.broadcast %cst_77 : f32 to vector<8x128xf32>
    %137 = arith.mulf %136, %135 : vector<8x128xf32>
    %cst_78 = arith.constant 5.000000e-01 : f32
    %138 = vector.broadcast %cst_78 : f32 to vector<8x128xf32>
    %139 = arith.addf %137, %138 : vector<8x128xf32>
    %c0_79 = arith.constant 0 : index
    %c0_80 = arith.constant 0 : index
    %140 = vector.load %arg14[%c0_79, %c0_80] : memref<8x128xf32, #tpu.memory_space<vmem>>, vector<8x128xf32>
    %141 = arith.mulf %129, %140 : vector<8x128xf32>
    %142 = arith.mulf %121, %131 : vector<8x128xf32>
    %143 = arith.addf %141, %142 : vector<8x128xf32>
    %144 = math.tanh %143 : vector<8x128xf32>
    %145 = arith.mulf %139, %144 : vector<8x128xf32>
    %c0_81 = arith.constant 0 : index
    %c0_82 = arith.constant 0 : index
    %146 = vector.load %arg14[%c0_81, %c0_82] : memref<8x128xf32, #tpu.memory_space<vmem>>, vector<8x128xf32>
    tpu.vector_store %arg14[%c0_81, %c0_82], %143 {strides = array<i32>} : memref<8x128xf32, #tpu.memory_space<vmem>>, vector<8x128xf32>,
    %c0_83 = arith.constant 0 : index
    %c0_84 = arith.constant 0 : index
    %147 = vector.load %arg13[%c0_83, %c0_84] : memref<8x128xf32, #tpu.memory_space<vmem>>, vector<8x128xf32>
    tpu.vector_store %arg13[%c0_83, %c0_84], %145 {strides = array<i32>} : memref<8x128xf32, #tpu.memory_space<vmem>>, vector<8x128xf32>,
    %148 = arith.index_cast %c2_i32 : i32 to index
    %c0_85 = arith.constant 0 : index
    %c0_86 = arith.constant 0 : index
    %149 = vector.load %arg11[%148, %c0_85, %c0_86] : memref<8x8x128xf32, #tpu.memory_space<vmem>>, vector<1x8x128xf32>
    %150 = vector.shape_cast %149 : vector<1x8x128xf32> to vector<8x128xf32>
    %151 = vector.shape_cast %145 : vector<8x128xf32> to vector<1x8x128xf32>
    tpu.vector_store %arg11[%148, %c0_85, %c0_86], %151 {strides = array<i32>} : memref<8x8x128xf32, #tpu.memory_space<vmem>>, vector<1x8x128xf32>,
    %c3_i32 = arith.constant 3 : i32
    %152 = arith.index_cast %c3_i32 : i32 to index
    %c0_87 = arith.constant 0 : index
    %c0_88 = arith.constant 0 : index
    %153 = vector.load %arg12[%152, %c0_87, %c0_88] : memref<8x8x512xf32, #tpu.memory_space<vmem>>, vector<1x8x512xf32>
    %154 = vector.shape_cast %153 : vector<1x8x512xf32> to vector<8x512xf32>
    %c0_89 = arith.constant 0 : index
    %c0_90 = arith.constant 0 : index
    %155 = vector.load %arg13[%c0_89, %c0_90] : memref<8x128xf32, #tpu.memory_space<vmem>>, vector<8x128xf32>
    %156 = arith.truncf %155 : vector<8x128xf32> to vector<8x128xbf16>
    %c0_91 = arith.constant 0 : index
    %c0_92 = arith.constant 0 : index
    %157 = vector.load %arg3[%c0_91, %c0_92] : memref<128x512xbf16, #tpu.memory_space<vmem>>, vector<128x512xbf16>
    %cst_93 = arith.constant dense<0.000000e+00> : vector<8x512xf32>
    %158 = tpu.matmul %156, %157, %cst_93 {dimension_numbers = #tpu.dot_dimension_numbers<[1], [0], [0], [1], [0, 0, 1, 1], [], []>} : vector<8x128xbf16>, vector<128x512xbf16>, vector<8x512xf32> -> vector<8x512xf32>
    %159 = arith.addf %154, %158 : vector<8x512xf32>
    %160 = vector.extract_strided_slice %159 {offsets = [0, 0], sizes = [8, 128], strides = [1, 1]} : vector<8x512xf32> to vector<8x128xf32>
    %cst_94 = arith.constant 5.000000e-01 : f32
    %161 = vector.broadcast %cst_94 : f32 to vector<8x128xf32>
    %162 = arith.mulf %161, %160 : vector<8x128xf32>
    %163 = math.tanh %162 : vector<8x128xf32>
    %cst_95 = arith.constant 5.000000e-01 : f32
    %164 = vector.broadcast %cst_95 : f32 to vector<8x128xf32>
    %165 = arith.mulf %164, %163 : vector<8x128xf32>
    %cst_96 = arith.constant 5.000000e-01 : f32
    %166 = vector.broadcast %cst_96 : f32 to vector<8x128xf32>
    %167 = arith.addf %165, %166 : vector<8x128xf32>
    %168 = vector.extract_strided_slice %159 {offsets = [0, 128], sizes = [8, 128], strides = [1, 1]} : vector<8x512xf32> to vector<8x128xf32>
    %cst_97 = arith.constant 5.000000e-01 : f32
    %169 = vector.broadcast %cst_97 : f32 to vector<8x128xf32>
    %170 = arith.mulf %169, %168 : vector<8x128xf32>
    %171 = math.tanh %170 : vector<8x128xf32>
    %cst_98 = arith.constant 5.000000e-01 : f32
    %172 = vector.broadcast %cst_98 : f32 to vector<8x128xf32>
    %173 = arith.mulf %172, %171 : vector<8x128xf32>
    %cst_99 = arith.constant 5.000000e-01 : f32
    %174 = vector.broadcast %cst_99 : f32 to vector<8x128xf32>
    %175 = arith.addf %173, %174 : vector<8x128xf32>
    %176 = vector.extract_strided_slice %159 {offsets = [0, 256], sizes = [8, 128], strides = [1, 1]} : vector<8x512xf32> to vector<8x128xf32>
    %177 = math.tanh %176 : vector<8x128xf32>
    %178 = vector.extract_strided_slice %159 {offsets = [0, 384], sizes = [8, 128], strides = [1, 1]} : vector<8x512xf32> to vector<8x128xf32>
    %cst_100 = arith.constant 5.000000e-01 : f32
    %179 = vector.broadcast %cst_100 : f32 to vector<8x128xf32>
    %180 = arith.mulf %179, %178 : vector<8x128xf32>
    %181 = math.tanh %180 : vector<8x128xf32>
    %cst_101 = arith.constant 5.000000e-01 : f32
    %182 = vector.broadcast %cst_101 : f32 to vector<8x128xf32>
    %183 = arith.mulf %182, %181 : vector<8x128xf32>
    %cst_102 = arith.constant 5.000000e-01 : f32
    %184 = vector.broadcast %cst_102 : f32 to vector<8x128xf32>
    %185 = arith.addf %183, %184 : vector<8x128xf32>
    %c0_103 = arith.constant 0 : index
    %c0_104 = arith.constant 0 : index
    %186 = vector.load %arg14[%c0_103, %c0_104] : memref<8x128xf32, #tpu.memory_space<vmem>>, vector<8x128xf32>
    %187 = arith.mulf %175, %186 : vector<8x128xf32>
    %188 = arith.mulf %167, %177 : vector<8x128xf32>
    %189 = arith.addf %187, %188 : vector<8x128xf32>
    %190 = math.tanh %189 : vector<8x128xf32>
    %191 = arith.mulf %185, %190 : vector<8x128xf32>
    %c0_105 = arith.constant 0 : index
    %c0_106 = arith.constant 0 : index
    %192 = vector.load %arg14[%c0_105, %c0_106] : memref<8x128xf32, #tpu.memory_space<vmem>>, vector<8x128xf32>
    tpu.vector_store %arg14[%c0_105, %c0_106], %189 {strides = array<i32>} : memref<8x128xf32, #tpu.memory_space<vmem>>, vector<8x128xf32>,
    %c0_107 = arith.constant 0 : index
    %c0_108 = arith.constant 0 : index
    %193 = vector.load %arg13[%c0_107, %c0_108] : memref<8x128xf32, #tpu.memory_space<vmem>>, vector<8x128xf32>
    tpu.vector_store %arg13[%c0_107, %c0_108], %191 {strides = array<i32>} : memref<8x128xf32, #tpu.memory_space<vmem>>, vector<8x128xf32>,
    %194 = arith.index_cast %c3_i32 : i32 to index
    %c0_109 = arith.constant 0 : index
    %c0_110 = arith.constant 0 : index
    %195 = vector.load %arg11[%194, %c0_109, %c0_110] : memref<8x8x128xf32, #tpu.memory_space<vmem>>, vector<1x8x128xf32>
    %196 = vector.shape_cast %195 : vector<1x8x128xf32> to vector<8x128xf32>
    %197 = vector.shape_cast %191 : vector<8x128xf32> to vector<1x8x128xf32>
    tpu.vector_store %arg11[%194, %c0_109, %c0_110], %197 {strides = array<i32>} : memref<8x8x128xf32, #tpu.memory_space<vmem>>, vector<1x8x128xf32>,
    %c4_i32 = arith.constant 4 : i32
    %198 = arith.index_cast %c4_i32 : i32 to index
    %c0_111 = arith.constant 0 : index
    %c0_112 = arith.constant 0 : index
    %199 = vector.load %arg12[%198, %c0_111, %c0_112] : memref<8x8x512xf32, #tpu.memory_space<vmem>>, vector<1x8x512xf32>
    %200 = vector.shape_cast %199 : vector<1x8x512xf32> to vector<8x512xf32>
    %c0_113 = arith.constant 0 : index
    %c0_114 = arith.constant 0 : index
    %201 = vector.load %arg13[%c0_113, %c0_114] : memref<8x128xf32, #tpu.memory_space<vmem>>, vector<8x128xf32>
    %202 = arith.truncf %201 : vector<8x128xf32> to vector<8x128xbf16>
    %c0_115 = arith.constant 0 : index
    %c0_116 = arith.constant 0 : index
    %203 = vector.load %arg3[%c0_115, %c0_116] : memref<128x512xbf16, #tpu.memory_space<vmem>>, vector<128x512xbf16>
    %cst_117 = arith.constant dense<0.000000e+00> : vector<8x512xf32>
    %204 = tpu.matmul %202, %203, %cst_117 {dimension_numbers = #tpu.dot_dimension_numbers<[1], [0], [0], [1], [0, 0, 1, 1], [], []>} : vector<8x128xbf16>, vector<128x512xbf16>, vector<8x512xf32> -> vector<8x512xf32>
    %205 = arith.addf %200, %204 : vector<8x512xf32>
    %206 = vector.extract_strided_slice %205 {offsets = [0, 0], sizes = [8, 128], strides = [1, 1]} : vector<8x512xf32> to vector<8x128xf32>
    %cst_118 = arith.constant 5.000000e-01 : f32
    %207 = vector.broadcast %cst_118 : f32 to vector<8x128xf32>
    %208 = arith.mulf %207, %206 : vector<8x128xf32>
    %209 = math.tanh %208 : vector<8x128xf32>
    %cst_119 = arith.constant 5.000000e-01 : f32
    %210 = vector.broadcast %cst_119 : f32 to vector<8x128xf32>
    %211 = arith.mulf %210, %209 : vector<8x128xf32>
    %cst_120 = arith.constant 5.000000e-01 : f32
    %212 = vector.broadcast %cst_120 : f32 to vector<8x128xf32>
    %213 = arith.addf %211, %212 : vector<8x128xf32>
    %214 = vector.extract_strided_slice %205 {offsets = [0, 128], sizes = [8, 128], strides = [1, 1]} : vector<8x512xf32> to vector<8x128xf32>
    %cst_121 = arith.constant 5.000000e-01 : f32
    %215 = vector.broadcast %cst_121 : f32 to vector<8x128xf32>
    %216 = arith.mulf %215, %214 : vector<8x128xf32>
    %217 = math.tanh %216 : vector<8x128xf32>
    %cst_122 = arith.constant 5.000000e-01 : f32
    %218 = vector.broadcast %cst_122 : f32 to vector<8x128xf32>
    %219 = arith.mulf %218, %217 : vector<8x128xf32>
    %cst_123 = arith.constant 5.000000e-01 : f32
    %220 = vector.broadcast %cst_123 : f32 to vector<8x128xf32>
    %221 = arith.addf %219, %220 : vector<8x128xf32>
    %222 = vector.extract_strided_slice %205 {offsets = [0, 256], sizes = [8, 128], strides = [1, 1]} : vector<8x512xf32> to vector<8x128xf32>
    %223 = math.tanh %222 : vector<8x128xf32>
    %224 = vector.extract_strided_slice %205 {offsets = [0, 384], sizes = [8, 128], strides = [1, 1]} : vector<8x512xf32> to vector<8x128xf32>
    %cst_124 = arith.constant 5.000000e-01 : f32
    %225 = vector.broadcast %cst_124 : f32 to vector<8x128xf32>
    %226 = arith.mulf %225, %224 : vector<8x128xf32>
    %227 = math.tanh %226 : vector<8x128xf32>
    %cst_125 = arith.constant 5.000000e-01 : f32
    %228 = vector.broadcast %cst_125 : f32 to vector<8x128xf32>
    %229 = arith.mulf %228, %227 : vector<8x128xf32>
    %cst_126 = arith.constant 5.000000e-01 : f32
    %230 = vector.broadcast %cst_126 : f32 to vector<8x128xf32>
    %231 = arith.addf %229, %230 : vector<8x128xf32>
    %c0_127 = arith.constant 0 : index
    %c0_128 = arith.constant 0 : index
    %232 = vector.load %arg14[%c0_127, %c0_128] : memref<8x128xf32, #tpu.memory_space<vmem>>, vector<8x128xf32>
    %233 = arith.mulf %221, %232 : vector<8x128xf32>
    %234 = arith.mulf %213, %223 : vector<8x128xf32>
    %235 = arith.addf %233, %234 : vector<8x128xf32>
    %236 = math.tanh %235 : vector<8x128xf32>
    %237 = arith.mulf %231, %236 : vector<8x128xf32>
    %c0_129 = arith.constant 0 : index
    %c0_130 = arith.constant 0 : index
    %238 = vector.load %arg14[%c0_129, %c0_130] : memref<8x128xf32, #tpu.memory_space<vmem>>, vector<8x128xf32>
    tpu.vector_store %arg14[%c0_129, %c0_130], %235 {strides = array<i32>} : memref<8x128xf32, #tpu.memory_space<vmem>>, vector<8x128xf32>,
    %c0_131 = arith.constant 0 : index
    %c0_132 = arith.constant 0 : index
    %239 = vector.load %arg13[%c0_131, %c0_132] : memref<8x128xf32, #tpu.memory_space<vmem>>, vector<8x128xf32>
    tpu.vector_store %arg13[%c0_131, %c0_132], %237 {strides = array<i32>} : memref<8x128xf32, #tpu.memory_space<vmem>>, vector<8x128xf32>,
    %240 = arith.index_cast %c4_i32 : i32 to index
    %c0_133 = arith.constant 0 : index
    %c0_134 = arith.constant 0 : index
    %241 = vector.load %arg11[%240, %c0_133, %c0_134] : memref<8x8x128xf32, #tpu.memory_space<vmem>>, vector<1x8x128xf32>
    %242 = vector.shape_cast %241 : vector<1x8x128xf32> to vector<8x128xf32>
    %243 = vector.shape_cast %237 : vector<8x128xf32> to vector<1x8x128xf32>
    tpu.vector_store %arg11[%240, %c0_133, %c0_134], %243 {strides = array<i32>} : memref<8x8x128xf32, #tpu.memory_space<vmem>>, vector<1x8x128xf32>,
    %c5_i32 = arith.constant 5 : i32
    %244 = arith.index_cast %c5_i32 : i32 to index
    %c0_135 = arith.constant 0 : index
    %c0_136 = arith.constant 0 : index
    %245 = vector.load %arg12[%244, %c0_135, %c0_136] : memref<8x8x512xf32, #tpu.memory_space<vmem>>, vector<1x8x512xf32>
    %246 = vector.shape_cast %245 : vector<1x8x512xf32> to vector<8x512xf32>
    %c0_137 = arith.constant 0 : index
    %c0_138 = arith.constant 0 : index
    %247 = vector.load %arg13[%c0_137, %c0_138] : memref<8x128xf32, #tpu.memory_space<vmem>>, vector<8x128xf32>
    %248 = arith.truncf %247 : vector<8x128xf32> to vector<8x128xbf16>
    %c0_139 = arith.constant 0 : index
    %c0_140 = arith.constant 0 : index
    %249 = vector.load %arg3[%c0_139, %c0_140] : memref<128x512xbf16, #tpu.memory_space<vmem>>, vector<128x512xbf16>
    %cst_141 = arith.constant dense<0.000000e+00> : vector<8x512xf32>
    %250 = tpu.matmul %248, %249, %cst_141 {dimension_numbers = #tpu.dot_dimension_numbers<[1], [0], [0], [1], [0, 0, 1, 1], [], []>} : vector<8x128xbf16>, vector<128x512xbf16>, vector<8x512xf32> -> vector<8x512xf32>
    %251 = arith.addf %246, %250 : vector<8x512xf32>
    %252 = vector.extract_strided_slice %251 {offsets = [0, 0], sizes = [8, 128], strides = [1, 1]} : vector<8x512xf32> to vector<8x128xf32>
    %cst_142 = arith.constant 5.000000e-01 : f32
    %253 = vector.broadcast %cst_142 : f32 to vector<8x128xf32>
    %254 = arith.mulf %253, %252 : vector<8x128xf32>
    %255 = math.tanh %254 : vector<8x128xf32>
    %cst_143 = arith.constant 5.000000e-01 : f32
    %256 = vector.broadcast %cst_143 : f32 to vector<8x128xf32>
    %257 = arith.mulf %256, %255 : vector<8x128xf32>
    %cst_144 = arith.constant 5.000000e-01 : f32
    %258 = vector.broadcast %cst_144 : f32 to vector<8x128xf32>
    %259 = arith.addf %257, %258 : vector<8x128xf32>
    %260 = vector.extract_strided_slice %251 {offsets = [0, 128], sizes = [8, 128], strides = [1, 1]} : vector<8x512xf32> to vector<8x128xf32>
    %cst_145 = arith.constant 5.000000e-01 : f32
    %261 = vector.broadcast %cst_145 : f32 to vector<8x128xf32>
    %262 = arith.mulf %261, %260 : vector<8x128xf32>
    %263 = math.tanh %262 : vector<8x128xf32>
    %cst_146 = arith.constant 5.000000e-01 : f32
    %264 = vector.broadcast %cst_146 : f32 to vector<8x128xf32>
    %265 = arith.mulf %264, %263 : vector<8x128xf32>
    %cst_147 = arith.constant 5.000000e-01 : f32
    %266 = vector.broadcast %cst_147 : f32 to vector<8x128xf32>
    %267 = arith.addf %265, %266 : vector<8x128xf32>
    %268 = vector.extract_strided_slice %251 {offsets = [0, 256], sizes = [8, 128], strides = [1, 1]} : vector<8x512xf32> to vector<8x128xf32>
    %269 = math.tanh %268 : vector<8x128xf32>
    %270 = vector.extract_strided_slice %251 {offsets = [0, 384], sizes = [8, 128], strides = [1, 1]} : vector<8x512xf32> to vector<8x128xf32>
    %cst_148 = arith.constant 5.000000e-01 : f32
    %271 = vector.broadcast %cst_148 : f32 to vector<8x128xf32>
    %272 = arith.mulf %271, %270 : vector<8x128xf32>
    %273 = math.tanh %272 : vector<8x128xf32>
    %cst_149 = arith.constant 5.000000e-01 : f32
    %274 = vector.broadcast %cst_149 : f32 to vector<8x128xf32>
    %275 = arith.mulf %274, %273 : vector<8x128xf32>
    %cst_150 = arith.constant 5.000000e-01 : f32
    %276 = vector.broadcast %cst_150 : f32 to vector<8x128xf32>
    %277 = arith.addf %275, %276 : vector<8x128xf32>
    %c0_151 = arith.constant 0 : index
    %c0_152 = arith.constant 0 : index
    %278 = vector.load %arg14[%c0_151, %c0_152] : memref<8x128xf32, #tpu.memory_space<vmem>>, vector<8x128xf32>
    %279 = arith.mulf %267, %278 : vector<8x128xf32>
    %280 = arith.mulf %259, %269 : vector<8x128xf32>
    %281 = arith.addf %279, %280 : vector<8x128xf32>
    %282 = math.tanh %281 : vector<8x128xf32>
    %283 = arith.mulf %277, %282 : vector<8x128xf32>
    %c0_153 = arith.constant 0 : index
    %c0_154 = arith.constant 0 : index
    %284 = vector.load %arg14[%c0_153, %c0_154] : memref<8x128xf32, #tpu.memory_space<vmem>>, vector<8x128xf32>
    tpu.vector_store %arg14[%c0_153, %c0_154], %281 {strides = array<i32>} : memref<8x128xf32, #tpu.memory_space<vmem>>, vector<8x128xf32>,
    %c0_155 = arith.constant 0 : index
    %c0_156 = arith.constant 0 : index
    %285 = vector.load %arg13[%c0_155, %c0_156] : memref<8x128xf32, #tpu.memory_space<vmem>>, vector<8x128xf32>
    tpu.vector_store %arg13[%c0_155, %c0_156], %283 {strides = array<i32>} : memref<8x128xf32, #tpu.memory_space<vmem>>, vector<8x128xf32>,
    %286 = arith.index_cast %c5_i32 : i32 to index
    %c0_157 = arith.constant 0 : index
    %c0_158 = arith.constant 0 : index
    %287 = vector.load %arg11[%286, %c0_157, %c0_158] : memref<8x8x128xf32, #tpu.memory_space<vmem>>, vector<1x8x128xf32>
    %288 = vector.shape_cast %287 : vector<1x8x128xf32> to vector<8x128xf32>
    %289 = vector.shape_cast %283 : vector<8x128xf32> to vector<1x8x128xf32>
    tpu.vector_store %arg11[%286, %c0_157, %c0_158], %289 {strides = array<i32>} : memref<8x8x128xf32, #tpu.memory_space<vmem>>, vector<1x8x128xf32>,
    %c6_i32 = arith.constant 6 : i32
    %290 = arith.index_cast %c6_i32 : i32 to index
    %c0_159 = arith.constant 0 : index
    %c0_160 = arith.constant 0 : index
    %291 = vector.load %arg12[%290, %c0_159, %c0_160] : memref<8x8x512xf32, #tpu.memory_space<vmem>>, vector<1x8x512xf32>
    %292 = vector.shape_cast %291 : vector<1x8x512xf32> to vector<8x512xf32>
    %c0_161 = arith.constant 0 : index
    %c0_162 = arith.constant 0 : index
    %293 = vector.load %arg13[%c0_161, %c0_162] : memref<8x128xf32, #tpu.memory_space<vmem>>, vector<8x128xf32>
    %294 = arith.truncf %293 : vector<8x128xf32> to vector<8x128xbf16>
    %c0_163 = arith.constant 0 : index
    %c0_164 = arith.constant 0 : index
    %295 = vector.load %arg3[%c0_163, %c0_164] : memref<128x512xbf16, #tpu.memory_space<vmem>>, vector<128x512xbf16>
    %cst_165 = arith.constant dense<0.000000e+00> : vector<8x512xf32>
    %296 = tpu.matmul %294, %295, %cst_165 {dimension_numbers = #tpu.dot_dimension_numbers<[1], [0], [0], [1], [0, 0, 1, 1], [], []>} : vector<8x128xbf16>, vector<128x512xbf16>, vector<8x512xf32> -> vector<8x512xf32>
    %297 = arith.addf %292, %296 : vector<8x512xf32>
    %298 = vector.extract_strided_slice %297 {offsets = [0, 0], sizes = [8, 128], strides = [1, 1]} : vector<8x512xf32> to vector<8x128xf32>
    %cst_166 = arith.constant 5.000000e-01 : f32
    %299 = vector.broadcast %cst_166 : f32 to vector<8x128xf32>
    %300 = arith.mulf %299, %298 : vector<8x128xf32>
    %301 = math.tanh %300 : vector<8x128xf32>
    %cst_167 = arith.constant 5.000000e-01 : f32
    %302 = vector.broadcast %cst_167 : f32 to vector<8x128xf32>
    %303 = arith.mulf %302, %301 : vector<8x128xf32>
    %cst_168 = arith.constant 5.000000e-01 : f32
    %304 = vector.broadcast %cst_168 : f32 to vector<8x128xf32>
    %305 = arith.addf %303, %304 : vector<8x128xf32>
    %306 = vector.extract_strided_slice %297 {offsets = [0, 128], sizes = [8, 128], strides = [1, 1]} : vector<8x512xf32> to vector<8x128xf32>
    %cst_169 = arith.constant 5.000000e-01 : f32
    %307 = vector.broadcast %cst_169 : f32 to vector<8x128xf32>
    %308 = arith.mulf %307, %306 : vector<8x128xf32>
    %309 = math.tanh %308 : vector<8x128xf32>
    %cst_170 = arith.constant 5.000000e-01 : f32
    %310 = vector.broadcast %cst_170 : f32 to vector<8x128xf32>
    %311 = arith.mulf %310, %309 : vector<8x128xf32>
    %cst_171 = arith.constant 5.000000e-01 : f32
    %312 = vector.broadcast %cst_171 : f32 to vector<8x128xf32>
    %313 = arith.addf %311, %312 : vector<8x128xf32>
    %314 = vector.extract_strided_slice %297 {offsets = [0, 256], sizes = [8, 128], strides = [1, 1]} : vector<8x512xf32> to vector<8x128xf32>
    %315 = math.tanh %314 : vector<8x128xf32>
    %316 = vector.extract_strided_slice %297 {offsets = [0, 384], sizes = [8, 128], strides = [1, 1]} : vector<8x512xf32> to vector<8x128xf32>
    %cst_172 = arith.constant 5.000000e-01 : f32
    %317 = vector.broadcast %cst_172 : f32 to vector<8x128xf32>
    %318 = arith.mulf %317, %316 : vector<8x128xf32>
    %319 = math.tanh %318 : vector<8x128xf32>
    %cst_173 = arith.constant 5.000000e-01 : f32
    %320 = vector.broadcast %cst_173 : f32 to vector<8x128xf32>
    %321 = arith.mulf %320, %319 : vector<8x128xf32>
    %cst_174 = arith.constant 5.000000e-01 : f32
    %322 = vector.broadcast %cst_174 : f32 to vector<8x128xf32>
    %323 = arith.addf %321, %322 : vector<8x128xf32>
    %c0_175 = arith.constant 0 : index
    %c0_176 = arith.constant 0 : index
    %324 = vector.load %arg14[%c0_175, %c0_176] : memref<8x128xf32, #tpu.memory_space<vmem>>, vector<8x128xf32>
    %325 = arith.mulf %313, %324 : vector<8x128xf32>
    %326 = arith.mulf %305, %315 : vector<8x128xf32>
    %327 = arith.addf %325, %326 : vector<8x128xf32>
    %328 = math.tanh %327 : vector<8x128xf32>
    %329 = arith.mulf %323, %328 : vector<8x128xf32>
    %c0_177 = arith.constant 0 : index
    %c0_178 = arith.constant 0 : index
    %330 = vector.load %arg14[%c0_177, %c0_178] : memref<8x128xf32, #tpu.memory_space<vmem>>, vector<8x128xf32>
    tpu.vector_store %arg14[%c0_177, %c0_178], %327 {strides = array<i32>} : memref<8x128xf32, #tpu.memory_space<vmem>>, vector<8x128xf32>,
    %c0_179 = arith.constant 0 : index
    %c0_180 = arith.constant 0 : index
    %331 = vector.load %arg13[%c0_179, %c0_180] : memref<8x128xf32, #tpu.memory_space<vmem>>, vector<8x128xf32>
    tpu.vector_store %arg13[%c0_179, %c0_180], %329 {strides = array<i32>} : memref<8x128xf32, #tpu.memory_space<vmem>>, vector<8x128xf32>,
    %332 = arith.index_cast %c6_i32 : i32 to index
    %c0_181 = arith.constant 0 : index
    %c0_182 = arith.constant 0 : index
    %333 = vector.load %arg11[%332, %c0_181, %c0_182] : memref<8x8x128xf32, #tpu.memory_space<vmem>>, vector<1x8x128xf32>
    %334 = vector.shape_cast %333 : vector<1x8x128xf32> to vector<8x128xf32>
    %335 = vector.shape_cast %329 : vector<8x128xf32> to vector<1x8x128xf32>
    tpu.vector_store %arg11[%332, %c0_181, %c0_182], %335 {strides = array<i32>} : memref<8x8x128xf32, #tpu.memory_space<vmem>>, vector<1x8x128xf32>,
    %c7_i32 = arith.constant 7 : i32
    %336 = arith.index_cast %c7_i32 : i32 to index
    %c0_183 = arith.constant 0 : index
    %c0_184 = arith.constant 0 : index
    %337 = vector.load %arg12[%336, %c0_183, %c0_184] : memref<8x8x512xf32, #tpu.memory_space<vmem>>, vector<1x8x512xf32>
    %338 = vector.shape_cast %337 : vector<1x8x512xf32> to vector<8x512xf32>
    %c0_185 = arith.constant 0 : index
    %c0_186 = arith.constant 0 : index
    %339 = vector.load %arg13[%c0_185, %c0_186] : memref<8x128xf32, #tpu.memory_space<vmem>>, vector<8x128xf32>
    %340 = arith.truncf %339 : vector<8x128xf32> to vector<8x128xbf16>
    %c0_187 = arith.constant 0 : index
    %c0_188 = arith.constant 0 : index
    %341 = vector.load %arg3[%c0_187, %c0_188] : memref<128x512xbf16, #tpu.memory_space<vmem>>, vector<128x512xbf16>
    %cst_189 = arith.constant dense<0.000000e+00> : vector<8x512xf32>
    %342 = tpu.matmul %340, %341, %cst_189 {dimension_numbers = #tpu.dot_dimension_numbers<[1], [0], [0], [1], [0, 0, 1, 1], [], []>} : vector<8x128xbf16>, vector<128x512xbf16>, vector<8x512xf32> -> vector<8x512xf32>
    %343 = arith.addf %338, %342 : vector<8x512xf32>
    %344 = vector.extract_strided_slice %343 {offsets = [0, 0], sizes = [8, 128], strides = [1, 1]} : vector<8x512xf32> to vector<8x128xf32>
    %cst_190 = arith.constant 5.000000e-01 : f32
    %345 = vector.broadcast %cst_190 : f32 to vector<8x128xf32>
    %346 = arith.mulf %345, %344 : vector<8x128xf32>
    %347 = math.tanh %346 : vector<8x128xf32>
    %cst_191 = arith.constant 5.000000e-01 : f32
    %348 = vector.broadcast %cst_191 : f32 to vector<8x128xf32>
    %349 = arith.mulf %348, %347 : vector<8x128xf32>
    %cst_192 = arith.constant 5.000000e-01 : f32
    %350 = vector.broadcast %cst_192 : f32 to vector<8x128xf32>
    %351 = arith.addf %349, %350 : vector<8x128xf32>
    %352 = vector.extract_strided_slice %343 {offsets = [0, 128], sizes = [8, 128], strides = [1, 1]} : vector<8x512xf32> to vector<8x128xf32>
    %cst_193 = arith.constant 5.000000e-01 : f32
    %353 = vector.broadcast %cst_193 : f32 to vector<8x128xf32>
    %354 = arith.mulf %353, %352 : vector<8x128xf32>
    %355 = math.tanh %354 : vector<8x128xf32>
    %cst_194 = arith.constant 5.000000e-01 : f32
    %356 = vector.broadcast %cst_194 : f32 to vector<8x128xf32>
    %357 = arith.mulf %356, %355 : vector<8x128xf32>
    %cst_195 = arith.constant 5.000000e-01 : f32
    %358 = vector.broadcast %cst_195 : f32 to vector<8x128xf32>
    %359 = arith.addf %357, %358 : vector<8x128xf32>
    %360 = vector.extract_strided_slice %343 {offsets = [0, 256], sizes = [8, 128], strides = [1, 1]} : vector<8x512xf32> to vector<8x128xf32>
    %361 = math.tanh %360 : vector<8x128xf32>
    %362 = vector.extract_strided_slice %343 {offsets = [0, 384], sizes = [8, 128], strides = [1, 1]} : vector<8x512xf32> to vector<8x128xf32>
    %cst_196 = arith.constant 5.000000e-01 : f32
    %363 = vector.broadcast %cst_196 : f32 to vector<8x128xf32>
    %364 = arith.mulf %363, %362 : vector<8x128xf32>
    %365 = math.tanh %364 : vector<8x128xf32>
    %cst_197 = arith.constant 5.000000e-01 : f32
    %366 = vector.broadcast %cst_197 : f32 to vector<8x128xf32>
    %367 = arith.mulf %366, %365 : vector<8x128xf32>
    %cst_198 = arith.constant 5.000000e-01 : f32
    %368 = vector.broadcast %cst_198 : f32 to vector<8x128xf32>
    %369 = arith.addf %367, %368 : vector<8x128xf32>
    %c0_199 = arith.constant 0 : index
    %c0_200 = arith.constant 0 : index
    %370 = vector.load %arg14[%c0_199, %c0_200] : memref<8x128xf32, #tpu.memory_space<vmem>>, vector<8x128xf32>
    %371 = arith.mulf %359, %370 : vector<8x128xf32>
    %372 = arith.mulf %351, %361 : vector<8x128xf32>
    %373 = arith.addf %371, %372 : vector<8x128xf32>
    %374 = math.tanh %373 : vector<8x128xf32>
    %375 = arith.mulf %369, %374 : vector<8x128xf32>
    %c0_201 = arith.constant 0 : index
    %c0_202 = arith.constant 0 : index
    %376 = vector.load %arg14[%c0_201, %c0_202] : memref<8x128xf32, #tpu.memory_space<vmem>>, vector<8x128xf32>
    tpu.vector_store %arg14[%c0_201, %c0_202], %373 {strides = array<i32>} : memref<8x128xf32, #tpu.memory_space<vmem>>, vector<8x128xf32>,
    %c0_203 = arith.constant 0 : index
    %c0_204 = arith.constant 0 : index
    %377 = vector.load %arg13[%c0_203, %c0_204] : memref<8x128xf32, #tpu.memory_space<vmem>>, vector<8x128xf32>
    tpu.vector_store %arg13[%c0_203, %c0_204], %375 {strides = array<i32>} : memref<8x128xf32, #tpu.memory_space<vmem>>, vector<8x128xf32>,
    %378 = arith.index_cast %c7_i32 : i32 to index
    %c0_205 = arith.constant 0 : index
    %c0_206 = arith.constant 0 : index
    %379 = vector.load %arg11[%378, %c0_205, %c0_206] : memref<8x8x128xf32, #tpu.memory_space<vmem>>, vector<1x8x128xf32>
    %380 = vector.shape_cast %379 : vector<1x8x128xf32> to vector<8x128xf32>
    %381 = vector.shape_cast %375 : vector<8x128xf32> to vector<1x8x128xf32>
    tpu.vector_store %arg11[%378, %c0_205, %c0_206], %381 {strides = array<i32>} : memref<8x8x128xf32, #tpu.memory_space<vmem>>, vector<1x8x128xf32>,
    %c8_i32 = arith.constant 8 : i32
    %c0_207 = arith.constant 0 : index
    %c0_208 = arith.constant 0 : index
    %c0_209 = arith.constant 0 : index
    %382 = vector.load %arg11[%c0_207, %c0_208, %c0_209] : memref<8x8x128xf32, #tpu.memory_space<vmem>>, vector<8x8x128xf32>
    %383 = vector.shape_cast %382 : vector<8x8x128xf32> to vector<64x128xf32>
    %384 = arith.truncf %383 : vector<64x128xf32> to vector<64x128xbf16>
    %c0_210 = arith.constant 0 : index
    %c0_211 = arith.constant 0 : index
    %385 = vector.load %arg5[%c0_210, %c0_211] : memref<128x512xbf16, #tpu.memory_space<vmem>>, vector<128x512xbf16>
    %cst_212 = arith.constant dense<0.000000e+00> : vector<64x512xf32>
    %386 = tpu.matmul %384, %385, %cst_212 {dimension_numbers = #tpu.dot_dimension_numbers<[1], [0], [0], [1], [0, 0, 1, 1], [], []>} : vector<64x128xbf16>, vector<128x512xbf16>, vector<64x512xf32> -> vector<64x512xf32>
    %c0_213 = arith.constant 0 : index
    %c0_214 = arith.constant 0 : index
    %387 = vector.load %arg7[%c0_213, %c0_214] : memref<1x512xf32, #tpu.memory_space<vmem>>, vector<1x512xf32>
    %388 = vector.broadcast %387 : vector<1x512xf32> to vector<64x512xf32>
    %389 = arith.addf %386, %388 : vector<64x512xf32>
    %390 = vector.shape_cast %389 : vector<64x512xf32> to vector<8x8x512xf32>
    %c0_215 = arith.constant 0 : index
    %c0_216 = arith.constant 0 : index
    %c0_217 = arith.constant 0 : index
    %391 = vector.load %arg12[%c0_215, %c0_216, %c0_217] : memref<8x8x512xf32, #tpu.memory_space<vmem>>, vector<8x8x512xf32>
    tpu.vector_store %arg12[%c0_215, %c0_216, %c0_217], %390 {strides = array<i32>} : memref<8x8x512xf32, #tpu.memory_space<vmem>>, vector<8x8x512xf32>,
    %cst_218 = arith.constant 0.000000e+00 : f32
    %392 = vector.broadcast %cst_218 : f32 to vector<8x128xf32>
    %c0_219 = arith.constant 0 : index
    %c0_220 = arith.constant 0 : index
    %393 = vector.load %arg13[%c0_219, %c0_220] : memref<8x128xf32, #tpu.memory_space<vmem>>, vector<8x128xf32>
    tpu.vector_store %arg13[%c0_219, %c0_220], %392 {strides = array<i32>} : memref<8x128xf32, #tpu.memory_space<vmem>>, vector<8x128xf32>,
    %cst_221 = arith.constant 0.000000e+00 : f32
    %394 = vector.broadcast %cst_221 : f32 to vector<8x128xf32>
    %c0_222 = arith.constant 0 : index
    %c0_223 = arith.constant 0 : index
    %395 = vector.load %arg14[%c0_222, %c0_223] : memref<8x128xf32, #tpu.memory_space<vmem>>, vector<8x128xf32>
    tpu.vector_store %arg14[%c0_222, %c0_223], %394 {strides = array<i32>} : memref<8x128xf32, #tpu.memory_space<vmem>>, vector<8x128xf32>,
    %c0_i32_224 = arith.constant 0 : i32
    %396 = arith.index_cast %c0_i32_224 : i32 to index
    %c0_225 = arith.constant 0 : index
    %c0_226 = arith.constant 0 : index
    %397 = vector.load %arg12[%396, %c0_225, %c0_226] : memref<8x8x512xf32, #tpu.memory_space<vmem>>, vector<1x8x512xf32>
    %398 = vector.shape_cast %397 : vector<1x8x512xf32> to vector<8x512xf32>
    %c0_227 = arith.constant 0 : index
    %c0_228 = arith.constant 0 : index
    %399 = vector.load %arg13[%c0_227, %c0_228] : memref<8x128xf32, #tpu.memory_space<vmem>>, vector<8x128xf32>
    %400 = arith.truncf %399 : vector<8x128xf32> to vector<8x128xbf16>
    %c0_229 = arith.constant 0 : index
    %c0_230 = arith.constant 0 : index
    %401 = vector.load %arg6[%c0_229, %c0_230] : memref<128x512xbf16, #tpu.memory_space<vmem>>, vector<128x512xbf16>
    %cst_231 = arith.constant dense<0.000000e+00> : vector<8x512xf32>
    %402 = tpu.matmul %400, %401, %cst_231 {dimension_numbers = #tpu.dot_dimension_numbers<[1], [0], [0], [1], [0, 0, 1, 1], [], []>} : vector<8x128xbf16>, vector<128x512xbf16>, vector<8x512xf32> -> vector<8x512xf32>
    %403 = arith.addf %398, %402 : vector<8x512xf32>
    %404 = vector.extract_strided_slice %403 {offsets = [0, 0], sizes = [8, 128], strides = [1, 1]} : vector<8x512xf32> to vector<8x128xf32>
    %cst_232 = arith.constant 5.000000e-01 : f32
    %405 = vector.broadcast %cst_232 : f32 to vector<8x128xf32>
    %406 = arith.mulf %405, %404 : vector<8x128xf32>
    %407 = math.tanh %406 : vector<8x128xf32>
    %cst_233 = arith.constant 5.000000e-01 : f32
    %408 = vector.broadcast %cst_233 : f32 to vector<8x128xf32>
    %409 = arith.mulf %408, %407 : vector<8x128xf32>
    %cst_234 = arith.constant 5.000000e-01 : f32
    %410 = vector.broadcast %cst_234 : f32 to vector<8x128xf32>
    %411 = arith.addf %409, %410 : vector<8x128xf32>
    %412 = vector.extract_strided_slice %403 {offsets = [0, 128], sizes = [8, 128], strides = [1, 1]} : vector<8x512xf32> to vector<8x128xf32>
    %cst_235 = arith.constant 5.000000e-01 : f32
    %413 = vector.broadcast %cst_235 : f32 to vector<8x128xf32>
    %414 = arith.mulf %413, %412 : vector<8x128xf32>
    %415 = math.tanh %414 : vector<8x128xf32>
    %cst_236 = arith.constant 5.000000e-01 : f32
    %416 = vector.broadcast %cst_236 : f32 to vector<8x128xf32>
    %417 = arith.mulf %416, %415 : vector<8x128xf32>
    %cst_237 = arith.constant 5.000000e-01 : f32
    %418 = vector.broadcast %cst_237 : f32 to vector<8x128xf32>
    %419 = arith.addf %417, %418 : vector<8x128xf32>
    %420 = vector.extract_strided_slice %403 {offsets = [0, 256], sizes = [8, 128], strides = [1, 1]} : vector<8x512xf32> to vector<8x128xf32>
    %421 = math.tanh %420 : vector<8x128xf32>
    %422 = vector.extract_strided_slice %403 {offsets = [0, 384], sizes = [8, 128], strides = [1, 1]} : vector<8x512xf32> to vector<8x128xf32>
    %cst_238 = arith.constant 5.000000e-01 : f32
    %423 = vector.broadcast %cst_238 : f32 to vector<8x128xf32>
    %424 = arith.mulf %423, %422 : vector<8x128xf32>
    %425 = math.tanh %424 : vector<8x128xf32>
    %cst_239 = arith.constant 5.000000e-01 : f32
    %426 = vector.broadcast %cst_239 : f32 to vector<8x128xf32>
    %427 = arith.mulf %426, %425 : vector<8x128xf32>
    %cst_240 = arith.constant 5.000000e-01 : f32
    %428 = vector.broadcast %cst_240 : f32 to vector<8x128xf32>
    %429 = arith.addf %427, %428 : vector<8x128xf32>
    %c0_241 = arith.constant 0 : index
    %c0_242 = arith.constant 0 : index
    %430 = vector.load %arg14[%c0_241, %c0_242] : memref<8x128xf32, #tpu.memory_space<vmem>>, vector<8x128xf32>
    %431 = arith.mulf %419, %430 : vector<8x128xf32>
    %432 = arith.mulf %411, %421 : vector<8x128xf32>
    %433 = arith.addf %431, %432 : vector<8x128xf32>
    %434 = math.tanh %433 : vector<8x128xf32>
    %435 = arith.mulf %429, %434 : vector<8x128xf32>
    %c0_243 = arith.constant 0 : index
    %c0_244 = arith.constant 0 : index
    %436 = vector.load %arg14[%c0_243, %c0_244] : memref<8x128xf32, #tpu.memory_space<vmem>>, vector<8x128xf32>
    tpu.vector_store %arg14[%c0_243, %c0_244], %433 {strides = array<i32>} : memref<8x128xf32, #tpu.memory_space<vmem>>, vector<8x128xf32>,
    %c0_245 = arith.constant 0 : index
    %c0_246 = arith.constant 0 : index
    %437 = vector.load %arg13[%c0_245, %c0_246] : memref<8x128xf32, #tpu.memory_space<vmem>>, vector<8x128xf32>
    tpu.vector_store %arg13[%c0_245, %c0_246], %435 {strides = array<i32>} : memref<8x128xf32, #tpu.memory_space<vmem>>, vector<8x128xf32>,
    %c1_i32_247 = arith.constant 1 : i32
    %438 = arith.index_cast %c1_i32_247 : i32 to index
    %c0_248 = arith.constant 0 : index
    %c0_249 = arith.constant 0 : index
    %439 = vector.load %arg12[%438, %c0_248, %c0_249] : memref<8x8x512xf32, #tpu.memory_space<vmem>>, vector<1x8x512xf32>
    %440 = vector.shape_cast %439 : vector<1x8x512xf32> to vector<8x512xf32>
    %c0_250 = arith.constant 0 : index
    %c0_251 = arith.constant 0 : index
    %441 = vector.load %arg13[%c0_250, %c0_251] : memref<8x128xf32, #tpu.memory_space<vmem>>, vector<8x128xf32>
    %442 = arith.truncf %441 : vector<8x128xf32> to vector<8x128xbf16>
    %c0_252 = arith.constant 0 : index
    %c0_253 = arith.constant 0 : index
    %443 = vector.load %arg6[%c0_252, %c0_253] : memref<128x512xbf16, #tpu.memory_space<vmem>>, vector<128x512xbf16>
    %cst_254 = arith.constant dense<0.000000e+00> : vector<8x512xf32>
    %444 = tpu.matmul %442, %443, %cst_254 {dimension_numbers = #tpu.dot_dimension_numbers<[1], [0], [0], [1], [0, 0, 1, 1], [], []>} : vector<8x128xbf16>, vector<128x512xbf16>, vector<8x512xf32> -> vector<8x512xf32>
    %445 = arith.addf %440, %444 : vector<8x512xf32>
    %446 = vector.extract_strided_slice %445 {offsets = [0, 0], sizes = [8, 128], strides = [1, 1]} : vector<8x512xf32> to vector<8x128xf32>
    %cst_255 = arith.constant 5.000000e-01 : f32
    %447 = vector.broadcast %cst_255 : f32 to vector<8x128xf32>
    %448 = arith.mulf %447, %446 : vector<8x128xf32>
    %449 = math.tanh %448 : vector<8x128xf32>
    %cst_256 = arith.constant 5.000000e-01 : f32
    %450 = vector.broadcast %cst_256 : f32 to vector<8x128xf32>
    %451 = arith.mulf %450, %449 : vector<8x128xf32>
    %cst_257 = arith.constant 5.000000e-01 : f32
    %452 = vector.broadcast %cst_257 : f32 to vector<8x128xf32>
    %453 = arith.addf %451, %452 : vector<8x128xf32>
    %454 = vector.extract_strided_slice %445 {offsets = [0, 128], sizes = [8, 128], strides = [1, 1]} : vector<8x512xf32> to vector<8x128xf32>
    %cst_258 = arith.constant 5.000000e-01 : f32
    %455 = vector.broadcast %cst_258 : f32 to vector<8x128xf32>
    %456 = arith.mulf %455, %454 : vector<8x128xf32>
    %457 = math.tanh %456 : vector<8x128xf32>
    %cst_259 = arith.constant 5.000000e-01 : f32
    %458 = vector.broadcast %cst_259 : f32 to vector<8x128xf32>
    %459 = arith.mulf %458, %457 : vector<8x128xf32>
    %cst_260 = arith.constant 5.000000e-01 : f32
    %460 = vector.broadcast %cst_260 : f32 to vector<8x128xf32>
    %461 = arith.addf %459, %460 : vector<8x128xf32>
    %462 = vector.extract_strided_slice %445 {offsets = [0, 256], sizes = [8, 128], strides = [1, 1]} : vector<8x512xf32> to vector<8x128xf32>
    %463 = math.tanh %462 : vector<8x128xf32>
    %464 = vector.extract_strided_slice %445 {offsets = [0, 384], sizes = [8, 128], strides = [1, 1]} : vector<8x512xf32> to vector<8x128xf32>
    %cst_261 = arith.constant 5.000000e-01 : f32
    %465 = vector.broadcast %cst_261 : f32 to vector<8x128xf32>
    %466 = arith.mulf %465, %464 : vector<8x128xf32>
    %467 = math.tanh %466 : vector<8x128xf32>
    %cst_262 = arith.constant 5.000000e-01 : f32
    %468 = vector.broadcast %cst_262 : f32 to vector<8x128xf32>
    %469 = arith.mulf %468, %467 : vector<8x128xf32>
    %cst_263 = arith.constant 5.000000e-01 : f32
    %470 = vector.broadcast %cst_263 : f32 to vector<8x128xf32>
    %471 = arith.addf %469, %470 : vector<8x128xf32>
    %c0_264 = arith.constant 0 : index
    %c0_265 = arith.constant 0 : index
    %472 = vector.load %arg14[%c0_264, %c0_265] : memref<8x128xf32, #tpu.memory_space<vmem>>, vector<8x128xf32>
    %473 = arith.mulf %461, %472 : vector<8x128xf32>
    %474 = arith.mulf %453, %463 : vector<8x128xf32>
    %475 = arith.addf %473, %474 : vector<8x128xf32>
    %476 = math.tanh %475 : vector<8x128xf32>
    %477 = arith.mulf %471, %476 : vector<8x128xf32>
    %c0_266 = arith.constant 0 : index
    %c0_267 = arith.constant 0 : index
    %478 = vector.load %arg14[%c0_266, %c0_267] : memref<8x128xf32, #tpu.memory_space<vmem>>, vector<8x128xf32>
    tpu.vector_store %arg14[%c0_266, %c0_267], %475 {strides = array<i32>} : memref<8x128xf32, #tpu.memory_space<vmem>>, vector<8x128xf32>,
    %c0_268 = arith.constant 0 : index
    %c0_269 = arith.constant 0 : index
    %479 = vector.load %arg13[%c0_268, %c0_269] : memref<8x128xf32, #tpu.memory_space<vmem>>, vector<8x128xf32>
    tpu.vector_store %arg13[%c0_268, %c0_269], %477 {strides = array<i32>} : memref<8x128xf32, #tpu.memory_space<vmem>>, vector<8x128xf32>,
    %c2_i32_270 = arith.constant 2 : i32
    %480 = arith.index_cast %c2_i32_270 : i32 to index
    %c0_271 = arith.constant 0 : index
    %c0_272 = arith.constant 0 : index
    %481 = vector.load %arg12[%480, %c0_271, %c0_272] : memref<8x8x512xf32, #tpu.memory_space<vmem>>, vector<1x8x512xf32>
    %482 = vector.shape_cast %481 : vector<1x8x512xf32> to vector<8x512xf32>
    %c0_273 = arith.constant 0 : index
    %c0_274 = arith.constant 0 : index
    %483 = vector.load %arg13[%c0_273, %c0_274] : memref<8x128xf32, #tpu.memory_space<vmem>>, vector<8x128xf32>
    %484 = arith.truncf %483 : vector<8x128xf32> to vector<8x128xbf16>
    %c0_275 = arith.constant 0 : index
    %c0_276 = arith.constant 0 : index
    %485 = vector.load %arg6[%c0_275, %c0_276] : memref<128x512xbf16, #tpu.memory_space<vmem>>, vector<128x512xbf16>
    %cst_277 = arith.constant dense<0.000000e+00> : vector<8x512xf32>
    %486 = tpu.matmul %484, %485, %cst_277 {dimension_numbers = #tpu.dot_dimension_numbers<[1], [0], [0], [1], [0, 0, 1, 1], [], []>} : vector<8x128xbf16>, vector<128x512xbf16>, vector<8x512xf32> -> vector<8x512xf32>
    %487 = arith.addf %482, %486 : vector<8x512xf32>
    %488 = vector.extract_strided_slice %487 {offsets = [0, 0], sizes = [8, 128], strides = [1, 1]} : vector<8x512xf32> to vector<8x128xf32>
    %cst_278 = arith.constant 5.000000e-01 : f32
    %489 = vector.broadcast %cst_278 : f32 to vector<8x128xf32>
    %490 = arith.mulf %489, %488 : vector<8x128xf32>
    %491 = math.tanh %490 : vector<8x128xf32>
    %cst_279 = arith.constant 5.000000e-01 : f32
    %492 = vector.broadcast %cst_279 : f32 to vector<8x128xf32>
    %493 = arith.mulf %492, %491 : vector<8x128xf32>
    %cst_280 = arith.constant 5.000000e-01 : f32
    %494 = vector.broadcast %cst_280 : f32 to vector<8x128xf32>
    %495 = arith.addf %493, %494 : vector<8x128xf32>
    %496 = vector.extract_strided_slice %487 {offsets = [0, 128], sizes = [8, 128], strides = [1, 1]} : vector<8x512xf32> to vector<8x128xf32>
    %cst_281 = arith.constant 5.000000e-01 : f32
    %497 = vector.broadcast %cst_281 : f32 to vector<8x128xf32>
    %498 = arith.mulf %497, %496 : vector<8x128xf32>
    %499 = math.tanh %498 : vector<8x128xf32>
    %cst_282 = arith.constant 5.000000e-01 : f32
    %500 = vector.broadcast %cst_282 : f32 to vector<8x128xf32>
    %501 = arith.mulf %500, %499 : vector<8x128xf32>
    %cst_283 = arith.constant 5.000000e-01 : f32
    %502 = vector.broadcast %cst_283 : f32 to vector<8x128xf32>
    %503 = arith.addf %501, %502 : vector<8x128xf32>
    %504 = vector.extract_strided_slice %487 {offsets = [0, 256], sizes = [8, 128], strides = [1, 1]} : vector<8x512xf32> to vector<8x128xf32>
    %505 = math.tanh %504 : vector<8x128xf32>
    %506 = vector.extract_strided_slice %487 {offsets = [0, 384], sizes = [8, 128], strides = [1, 1]} : vector<8x512xf32> to vector<8x128xf32>
    %cst_284 = arith.constant 5.000000e-01 : f32
    %507 = vector.broadcast %cst_284 : f32 to vector<8x128xf32>
    %508 = arith.mulf %507, %506 : vector<8x128xf32>
    %509 = math.tanh %508 : vector<8x128xf32>
    %cst_285 = arith.constant 5.000000e-01 : f32
    %510 = vector.broadcast %cst_285 : f32 to vector<8x128xf32>
    %511 = arith.mulf %510, %509 : vector<8x128xf32>
    %cst_286 = arith.constant 5.000000e-01 : f32
    %512 = vector.broadcast %cst_286 : f32 to vector<8x128xf32>
    %513 = arith.addf %511, %512 : vector<8x128xf32>
    %c0_287 = arith.constant 0 : index
    %c0_288 = arith.constant 0 : index
    %514 = vector.load %arg14[%c0_287, %c0_288] : memref<8x128xf32, #tpu.memory_space<vmem>>, vector<8x128xf32>
    %515 = arith.mulf %503, %514 : vector<8x128xf32>
    %516 = arith.mulf %495, %505 : vector<8x128xf32>
    %517 = arith.addf %515, %516 : vector<8x128xf32>
    %518 = math.tanh %517 : vector<8x128xf32>
    %519 = arith.mulf %513, %518 : vector<8x128xf32>
    %c0_289 = arith.constant 0 : index
    %c0_290 = arith.constant 0 : index
    %520 = vector.load %arg14[%c0_289, %c0_290] : memref<8x128xf32, #tpu.memory_space<vmem>>, vector<8x128xf32>
    tpu.vector_store %arg14[%c0_289, %c0_290], %517 {strides = array<i32>} : memref<8x128xf32, #tpu.memory_space<vmem>>, vector<8x128xf32>,
    %c0_291 = arith.constant 0 : index
    %c0_292 = arith.constant 0 : index
    %521 = vector.load %arg13[%c0_291, %c0_292] : memref<8x128xf32, #tpu.memory_space<vmem>>, vector<8x128xf32>
    tpu.vector_store %arg13[%c0_291, %c0_292], %519 {strides = array<i32>} : memref<8x128xf32, #tpu.memory_space<vmem>>, vector<8x128xf32>,
    %c3_i32_293 = arith.constant 3 : i32
    %522 = arith.index_cast %c3_i32_293 : i32 to index
    %c0_294 = arith.constant 0 : index
    %c0_295 = arith.constant 0 : index
    %523 = vector.load %arg12[%522, %c0_294, %c0_295] : memref<8x8x512xf32, #tpu.memory_space<vmem>>, vector<1x8x512xf32>
    %524 = vector.shape_cast %523 : vector<1x8x512xf32> to vector<8x512xf32>
    %c0_296 = arith.constant 0 : index
    %c0_297 = arith.constant 0 : index
    %525 = vector.load %arg13[%c0_296, %c0_297] : memref<8x128xf32, #tpu.memory_space<vmem>>, vector<8x128xf32>
    %526 = arith.truncf %525 : vector<8x128xf32> to vector<8x128xbf16>
    %c0_298 = arith.constant 0 : index
    %c0_299 = arith.constant 0 : index
    %527 = vector.load %arg6[%c0_298, %c0_299] : memref<128x512xbf16, #tpu.memory_space<vmem>>, vector<128x512xbf16>
    %cst_300 = arith.constant dense<0.000000e+00> : vector<8x512xf32>
    %528 = tpu.matmul %526, %527, %cst_300 {dimension_numbers = #tpu.dot_dimension_numbers<[1], [0], [0], [1], [0, 0, 1, 1], [], []>} : vector<8x128xbf16>, vector<128x512xbf16>, vector<8x512xf32> -> vector<8x512xf32>
    %529 = arith.addf %524, %528 : vector<8x512xf32>
    %530 = vector.extract_strided_slice %529 {offsets = [0, 0], sizes = [8, 128], strides = [1, 1]} : vector<8x512xf32> to vector<8x128xf32>
    %cst_301 = arith.constant 5.000000e-01 : f32
    %531 = vector.broadcast %cst_301 : f32 to vector<8x128xf32>
    %532 = arith.mulf %531, %530 : vector<8x128xf32>
    %533 = math.tanh %532 : vector<8x128xf32>
    %cst_302 = arith.constant 5.000000e-01 : f32
    %534 = vector.broadcast %cst_302 : f32 to vector<8x128xf32>
    %535 = arith.mulf %534, %533 : vector<8x128xf32>
    %cst_303 = arith.constant 5.000000e-01 : f32
    %536 = vector.broadcast %cst_303 : f32 to vector<8x128xf32>
    %537 = arith.addf %535, %536 : vector<8x128xf32>
    %538 = vector.extract_strided_slice %529 {offsets = [0, 128], sizes = [8, 128], strides = [1, 1]} : vector<8x512xf32> to vector<8x128xf32>
    %cst_304 = arith.constant 5.000000e-01 : f32
    %539 = vector.broadcast %cst_304 : f32 to vector<8x128xf32>
    %540 = arith.mulf %539, %538 : vector<8x128xf32>
    %541 = math.tanh %540 : vector<8x128xf32>
    %cst_305 = arith.constant 5.000000e-01 : f32
    %542 = vector.broadcast %cst_305 : f32 to vector<8x128xf32>
    %543 = arith.mulf %542, %541 : vector<8x128xf32>
    %cst_306 = arith.constant 5.000000e-01 : f32
    %544 = vector.broadcast %cst_306 : f32 to vector<8x128xf32>
    %545 = arith.addf %543, %544 : vector<8x128xf32>
    %546 = vector.extract_strided_slice %529 {offsets = [0, 256], sizes = [8, 128], strides = [1, 1]} : vector<8x512xf32> to vector<8x128xf32>
    %547 = math.tanh %546 : vector<8x128xf32>
    %548 = vector.extract_strided_slice %529 {offsets = [0, 384], sizes = [8, 128], strides = [1, 1]} : vector<8x512xf32> to vector<8x128xf32>
    %cst_307 = arith.constant 5.000000e-01 : f32
    %549 = vector.broadcast %cst_307 : f32 to vector<8x128xf32>
    %550 = arith.mulf %549, %548 : vector<8x128xf32>
    %551 = math.tanh %550 : vector<8x128xf32>
    %cst_308 = arith.constant 5.000000e-01 : f32
    %552 = vector.broadcast %cst_308 : f32 to vector<8x128xf32>
    %553 = arith.mulf %552, %551 : vector<8x128xf32>
    %cst_309 = arith.constant 5.000000e-01 : f32
    %554 = vector.broadcast %cst_309 : f32 to vector<8x128xf32>
    %555 = arith.addf %553, %554 : vector<8x128xf32>
    %c0_310 = arith.constant 0 : index
    %c0_311 = arith.constant 0 : index
    %556 = vector.load %arg14[%c0_310, %c0_311] : memref<8x128xf32, #tpu.memory_space<vmem>>, vector<8x128xf32>
    %557 = arith.mulf %545, %556 : vector<8x128xf32>
    %558 = arith.mulf %537, %547 : vector<8x128xf32>
    %559 = arith.addf %557, %558 : vector<8x128xf32>
    %560 = math.tanh %559 : vector<8x128xf32>
    %561 = arith.mulf %555, %560 : vector<8x128xf32>
    %c0_312 = arith.constant 0 : index
    %c0_313 = arith.constant 0 : index
    %562 = vector.load %arg14[%c0_312, %c0_313] : memref<8x128xf32, #tpu.memory_space<vmem>>, vector<8x128xf32>
    tpu.vector_store %arg14[%c0_312, %c0_313], %559 {strides = array<i32>} : memref<8x128xf32, #tpu.memory_space<vmem>>, vector<8x128xf32>,
    %c0_314 = arith.constant 0 : index
    %c0_315 = arith.constant 0 : index
    %563 = vector.load %arg13[%c0_314, %c0_315] : memref<8x128xf32, #tpu.memory_space<vmem>>, vector<8x128xf32>
    tpu.vector_store %arg13[%c0_314, %c0_315], %561 {strides = array<i32>} : memref<8x128xf32, #tpu.memory_space<vmem>>, vector<8x128xf32>,
    %c4_i32_316 = arith.constant 4 : i32
    %564 = arith.index_cast %c4_i32_316 : i32 to index
    %c0_317 = arith.constant 0 : index
    %c0_318 = arith.constant 0 : index
    %565 = vector.load %arg12[%564, %c0_317, %c0_318] : memref<8x8x512xf32, #tpu.memory_space<vmem>>, vector<1x8x512xf32>
    %566 = vector.shape_cast %565 : vector<1x8x512xf32> to vector<8x512xf32>
    %c0_319 = arith.constant 0 : index
    %c0_320 = arith.constant 0 : index
    %567 = vector.load %arg13[%c0_319, %c0_320] : memref<8x128xf32, #tpu.memory_space<vmem>>, vector<8x128xf32>
    %568 = arith.truncf %567 : vector<8x128xf32> to vector<8x128xbf16>
    %c0_321 = arith.constant 0 : index
    %c0_322 = arith.constant 0 : index
    %569 = vector.load %arg6[%c0_321, %c0_322] : memref<128x512xbf16, #tpu.memory_space<vmem>>, vector<128x512xbf16>
    %cst_323 = arith.constant dense<0.000000e+00> : vector<8x512xf32>
    %570 = tpu.matmul %568, %569, %cst_323 {dimension_numbers = #tpu.dot_dimension_numbers<[1], [0], [0], [1], [0, 0, 1, 1], [], []>} : vector<8x128xbf16>, vector<128x512xbf16>, vector<8x512xf32> -> vector<8x512xf32>
    %571 = arith.addf %566, %570 : vector<8x512xf32>
    %572 = vector.extract_strided_slice %571 {offsets = [0, 0], sizes = [8, 128], strides = [1, 1]} : vector<8x512xf32> to vector<8x128xf32>
    %cst_324 = arith.constant 5.000000e-01 : f32
    %573 = vector.broadcast %cst_324 : f32 to vector<8x128xf32>
    %574 = arith.mulf %573, %572 : vector<8x128xf32>
    %575 = math.tanh %574 : vector<8x128xf32>
    %cst_325 = arith.constant 5.000000e-01 : f32
    %576 = vector.broadcast %cst_325 : f32 to vector<8x128xf32>
    %577 = arith.mulf %576, %575 : vector<8x128xf32>
    %cst_326 = arith.constant 5.000000e-01 : f32
    %578 = vector.broadcast %cst_326 : f32 to vector<8x128xf32>
    %579 = arith.addf %577, %578 : vector<8x128xf32>
    %580 = vector.extract_strided_slice %571 {offsets = [0, 128], sizes = [8, 128], strides = [1, 1]} : vector<8x512xf32> to vector<8x128xf32>
    %cst_327 = arith.constant 5.000000e-01 : f32
    %581 = vector.broadcast %cst_327 : f32 to vector<8x128xf32>
    %582 = arith.mulf %581, %580 : vector<8x128xf32>
    %583 = math.tanh %582 : vector<8x128xf32>
    %cst_328 = arith.constant 5.000000e-01 : f32
    %584 = vector.broadcast %cst_328 : f32 to vector<8x128xf32>
    %585 = arith.mulf %584, %583 : vector<8x128xf32>
    %cst_329 = arith.constant 5.000000e-01 : f32
    %586 = vector.broadcast %cst_329 : f32 to vector<8x128xf32>
    %587 = arith.addf %585, %586 : vector<8x128xf32>
    %588 = vector.extract_strided_slice %571 {offsets = [0, 256], sizes = [8, 128], strides = [1, 1]} : vector<8x512xf32> to vector<8x128xf32>
    %589 = math.tanh %588 : vector<8x128xf32>
    %590 = vector.extract_strided_slice %571 {offsets = [0, 384], sizes = [8, 128], strides = [1, 1]} : vector<8x512xf32> to vector<8x128xf32>
    %cst_330 = arith.constant 5.000000e-01 : f32
    %591 = vector.broadcast %cst_330 : f32 to vector<8x128xf32>
    %592 = arith.mulf %591, %590 : vector<8x128xf32>
    %593 = math.tanh %592 : vector<8x128xf32>
    %cst_331 = arith.constant 5.000000e-01 : f32
    %594 = vector.broadcast %cst_331 : f32 to vector<8x128xf32>
    %595 = arith.mulf %594, %593 : vector<8x128xf32>
    %cst_332 = arith.constant 5.000000e-01 : f32
    %596 = vector.broadcast %cst_332 : f32 to vector<8x128xf32>
    %597 = arith.addf %595, %596 : vector<8x128xf32>
    %c0_333 = arith.constant 0 : index
    %c0_334 = arith.constant 0 : index
    %598 = vector.load %arg14[%c0_333, %c0_334] : memref<8x128xf32, #tpu.memory_space<vmem>>, vector<8x128xf32>
    %599 = arith.mulf %587, %598 : vector<8x128xf32>
    %600 = arith.mulf %579, %589 : vector<8x128xf32>
    %601 = arith.addf %599, %600 : vector<8x128xf32>
    %602 = math.tanh %601 : vector<8x128xf32>
    %603 = arith.mulf %597, %602 : vector<8x128xf32>
    %c0_335 = arith.constant 0 : index
    %c0_336 = arith.constant 0 : index
    %604 = vector.load %arg14[%c0_335, %c0_336] : memref<8x128xf32, #tpu.memory_space<vmem>>, vector<8x128xf32>
    tpu.vector_store %arg14[%c0_335, %c0_336], %601 {strides = array<i32>} : memref<8x128xf32, #tpu.memory_space<vmem>>, vector<8x128xf32>,
    %c0_337 = arith.constant 0 : index
    %c0_338 = arith.constant 0 : index
    %605 = vector.load %arg13[%c0_337, %c0_338] : memref<8x128xf32, #tpu.memory_space<vmem>>, vector<8x128xf32>
    tpu.vector_store %arg13[%c0_337, %c0_338], %603 {strides = array<i32>} : memref<8x128xf32, #tpu.memory_space<vmem>>, vector<8x128xf32>,
    %c5_i32_339 = arith.constant 5 : i32
    %606 = arith.index_cast %c5_i32_339 : i32 to index
    %c0_340 = arith.constant 0 : index
    %c0_341 = arith.constant 0 : index
    %607 = vector.load %arg12[%606, %c0_340, %c0_341] : memref<8x8x512xf32, #tpu.memory_space<vmem>>, vector<1x8x512xf32>
    %608 = vector.shape_cast %607 : vector<1x8x512xf32> to vector<8x512xf32>
    %c0_342 = arith.constant 0 : index
    %c0_343 = arith.constant 0 : index
    %609 = vector.load %arg13[%c0_342, %c0_343] : memref<8x128xf32, #tpu.memory_space<vmem>>, vector<8x128xf32>
    %610 = arith.truncf %609 : vector<8x128xf32> to vector<8x128xbf16>
    %c0_344 = arith.constant 0 : index
    %c0_345 = arith.constant 0 : index
    %611 = vector.load %arg6[%c0_344, %c0_345] : memref<128x512xbf16, #tpu.memory_space<vmem>>, vector<128x512xbf16>
    %cst_346 = arith.constant dense<0.000000e+00> : vector<8x512xf32>
    %612 = tpu.matmul %610, %611, %cst_346 {dimension_numbers = #tpu.dot_dimension_numbers<[1], [0], [0], [1], [0, 0, 1, 1], [], []>} : vector<8x128xbf16>, vector<128x512xbf16>, vector<8x512xf32> -> vector<8x512xf32>
    %613 = arith.addf %608, %612 : vector<8x512xf32>
    %614 = vector.extract_strided_slice %613 {offsets = [0, 0], sizes = [8, 128], strides = [1, 1]} : vector<8x512xf32> to vector<8x128xf32>
    %cst_347 = arith.constant 5.000000e-01 : f32
    %615 = vector.broadcast %cst_347 : f32 to vector<8x128xf32>
    %616 = arith.mulf %615, %614 : vector<8x128xf32>
    %617 = math.tanh %616 : vector<8x128xf32>
    %cst_348 = arith.constant 5.000000e-01 : f32
    %618 = vector.broadcast %cst_348 : f32 to vector<8x128xf32>
    %619 = arith.mulf %618, %617 : vector<8x128xf32>
    %cst_349 = arith.constant 5.000000e-01 : f32
    %620 = vector.broadcast %cst_349 : f32 to vector<8x128xf32>
    %621 = arith.addf %619, %620 : vector<8x128xf32>
    %622 = vector.extract_strided_slice %613 {offsets = [0, 128], sizes = [8, 128], strides = [1, 1]} : vector<8x512xf32> to vector<8x128xf32>
    %cst_350 = arith.constant 5.000000e-01 : f32
    %623 = vector.broadcast %cst_350 : f32 to vector<8x128xf32>
    %624 = arith.mulf %623, %622 : vector<8x128xf32>
    %625 = math.tanh %624 : vector<8x128xf32>
    %cst_351 = arith.constant 5.000000e-01 : f32
    %626 = vector.broadcast %cst_351 : f32 to vector<8x128xf32>
    %627 = arith.mulf %626, %625 : vector<8x128xf32>
    %cst_352 = arith.constant 5.000000e-01 : f32
    %628 = vector.broadcast %cst_352 : f32 to vector<8x128xf32>
    %629 = arith.addf %627, %628 : vector<8x128xf32>
    %630 = vector.extract_strided_slice %613 {offsets = [0, 256], sizes = [8, 128], strides = [1, 1]} : vector<8x512xf32> to vector<8x128xf32>
    %631 = math.tanh %630 : vector<8x128xf32>
    %632 = vector.extract_strided_slice %613 {offsets = [0, 384], sizes = [8, 128], strides = [1, 1]} : vector<8x512xf32> to vector<8x128xf32>
    %cst_353 = arith.constant 5.000000e-01 : f32
    %633 = vector.broadcast %cst_353 : f32 to vector<8x128xf32>
    %634 = arith.mulf %633, %632 : vector<8x128xf32>
    %635 = math.tanh %634 : vector<8x128xf32>
    %cst_354 = arith.constant 5.000000e-01 : f32
    %636 = vector.broadcast %cst_354 : f32 to vector<8x128xf32>
    %637 = arith.mulf %636, %635 : vector<8x128xf32>
    %cst_355 = arith.constant 5.000000e-01 : f32
    %638 = vector.broadcast %cst_355 : f32 to vector<8x128xf32>
    %639 = arith.addf %637, %638 : vector<8x128xf32>
    %c0_356 = arith.constant 0 : index
    %c0_357 = arith.constant 0 : index
    %640 = vector.load %arg14[%c0_356, %c0_357] : memref<8x128xf32, #tpu.memory_space<vmem>>, vector<8x128xf32>
    %641 = arith.mulf %629, %640 : vector<8x128xf32>
    %642 = arith.mulf %621, %631 : vector<8x128xf32>
    %643 = arith.addf %641, %642 : vector<8x128xf32>
    %644 = math.tanh %643 : vector<8x128xf32>
    %645 = arith.mulf %639, %644 : vector<8x128xf32>
    %c0_358 = arith.constant 0 : index
    %c0_359 = arith.constant 0 : index
    %646 = vector.load %arg14[%c0_358, %c0_359] : memref<8x128xf32, #tpu.memory_space<vmem>>, vector<8x128xf32>
    tpu.vector_store %arg14[%c0_358, %c0_359], %643 {strides = array<i32>} : memref<8x128xf32, #tpu.memory_space<vmem>>, vector<8x128xf32>,
    %c0_360 = arith.constant 0 : index
    %c0_361 = arith.constant 0 : index
    %647 = vector.load %arg13[%c0_360, %c0_361] : memref<8x128xf32, #tpu.memory_space<vmem>>, vector<8x128xf32>
    tpu.vector_store %arg13[%c0_360, %c0_361], %645 {strides = array<i32>} : memref<8x128xf32, #tpu.memory_space<vmem>>, vector<8x128xf32>,
    %c6_i32_362 = arith.constant 6 : i32
    %648 = arith.index_cast %c6_i32_362 : i32 to index
    %c0_363 = arith.constant 0 : index
    %c0_364 = arith.constant 0 : index
    %649 = vector.load %arg12[%648, %c0_363, %c0_364] : memref<8x8x512xf32, #tpu.memory_space<vmem>>, vector<1x8x512xf32>
    %650 = vector.shape_cast %649 : vector<1x8x512xf32> to vector<8x512xf32>
    %c0_365 = arith.constant 0 : index
    %c0_366 = arith.constant 0 : index
    %651 = vector.load %arg13[%c0_365, %c0_366] : memref<8x128xf32, #tpu.memory_space<vmem>>, vector<8x128xf32>
    %652 = arith.truncf %651 : vector<8x128xf32> to vector<8x128xbf16>
    %c0_367 = arith.constant 0 : index
    %c0_368 = arith.constant 0 : index
    %653 = vector.load %arg6[%c0_367, %c0_368] : memref<128x512xbf16, #tpu.memory_space<vmem>>, vector<128x512xbf16>
    %cst_369 = arith.constant dense<0.000000e+00> : vector<8x512xf32>
    %654 = tpu.matmul %652, %653, %cst_369 {dimension_numbers = #tpu.dot_dimension_numbers<[1], [0], [0], [1], [0, 0, 1, 1], [], []>} : vector<8x128xbf16>, vector<128x512xbf16>, vector<8x512xf32> -> vector<8x512xf32>
    %655 = arith.addf %650, %654 : vector<8x512xf32>
    %656 = vector.extract_strided_slice %655 {offsets = [0, 0], sizes = [8, 128], strides = [1, 1]} : vector<8x512xf32> to vector<8x128xf32>
    %cst_370 = arith.constant 5.000000e-01 : f32
    %657 = vector.broadcast %cst_370 : f32 to vector<8x128xf32>
    %658 = arith.mulf %657, %656 : vector<8x128xf32>
    %659 = math.tanh %658 : vector<8x128xf32>
    %cst_371 = arith.constant 5.000000e-01 : f32
    %660 = vector.broadcast %cst_371 : f32 to vector<8x128xf32>
    %661 = arith.mulf %660, %659 : vector<8x128xf32>
    %cst_372 = arith.constant 5.000000e-01 : f32
    %662 = vector.broadcast %cst_372 : f32 to vector<8x128xf32>
    %663 = arith.addf %661, %662 : vector<8x128xf32>
    %664 = vector.extract_strided_slice %655 {offsets = [0, 128], sizes = [8, 128], strides = [1, 1]} : vector<8x512xf32> to vector<8x128xf32>
    %cst_373 = arith.constant 5.000000e-01 : f32
    %665 = vector.broadcast %cst_373 : f32 to vector<8x128xf32>
    %666 = arith.mulf %665, %664 : vector<8x128xf32>
    %667 = math.tanh %666 : vector<8x128xf32>
    %cst_374 = arith.constant 5.000000e-01 : f32
    %668 = vector.broadcast %cst_374 : f32 to vector<8x128xf32>
    %669 = arith.mulf %668, %667 : vector<8x128xf32>
    %cst_375 = arith.constant 5.000000e-01 : f32
    %670 = vector.broadcast %cst_375 : f32 to vector<8x128xf32>
    %671 = arith.addf %669, %670 : vector<8x128xf32>
    %672 = vector.extract_strided_slice %655 {offsets = [0, 256], sizes = [8, 128], strides = [1, 1]} : vector<8x512xf32> to vector<8x128xf32>
    %673 = math.tanh %672 : vector<8x128xf32>
    %674 = vector.extract_strided_slice %655 {offsets = [0, 384], sizes = [8, 128], strides = [1, 1]} : vector<8x512xf32> to vector<8x128xf32>
    %cst_376 = arith.constant 5.000000e-01 : f32
    %675 = vector.broadcast %cst_376 : f32 to vector<8x128xf32>
    %676 = arith.mulf %675, %674 : vector<8x128xf32>
    %677 = math.tanh %676 : vector<8x128xf32>
    %cst_377 = arith.constant 5.000000e-01 : f32
    %678 = vector.broadcast %cst_377 : f32 to vector<8x128xf32>
    %679 = arith.mulf %678, %677 : vector<8x128xf32>
    %cst_378 = arith.constant 5.000000e-01 : f32
    %680 = vector.broadcast %cst_378 : f32 to vector<8x128xf32>
    %681 = arith.addf %679, %680 : vector<8x128xf32>
    %c0_379 = arith.constant 0 : index
    %c0_380 = arith.constant 0 : index
    %682 = vector.load %arg14[%c0_379, %c0_380] : memref<8x128xf32, #tpu.memory_space<vmem>>, vector<8x128xf32>
    %683 = arith.mulf %671, %682 : vector<8x128xf32>
    %684 = arith.mulf %663, %673 : vector<8x128xf32>
    %685 = arith.addf %683, %684 : vector<8x128xf32>
    %686 = math.tanh %685 : vector<8x128xf32>
    %687 = arith.mulf %681, %686 : vector<8x128xf32>
    %c0_381 = arith.constant 0 : index
    %c0_382 = arith.constant 0 : index
    %688 = vector.load %arg14[%c0_381, %c0_382] : memref<8x128xf32, #tpu.memory_space<vmem>>, vector<8x128xf32>
    tpu.vector_store %arg14[%c0_381, %c0_382], %685 {strides = array<i32>} : memref<8x128xf32, #tpu.memory_space<vmem>>, vector<8x128xf32>,
    %c0_383 = arith.constant 0 : index
    %c0_384 = arith.constant 0 : index
    %689 = vector.load %arg13[%c0_383, %c0_384] : memref<8x128xf32, #tpu.memory_space<vmem>>, vector<8x128xf32>
    tpu.vector_store %arg13[%c0_383, %c0_384], %687 {strides = array<i32>} : memref<8x128xf32, #tpu.memory_space<vmem>>, vector<8x128xf32>,
    %c7_i32_385 = arith.constant 7 : i32
    %690 = arith.index_cast %c7_i32_385 : i32 to index
    %c0_386 = arith.constant 0 : index
    %c0_387 = arith.constant 0 : index
    %691 = vector.load %arg12[%690, %c0_386, %c0_387] : memref<8x8x512xf32, #tpu.memory_space<vmem>>, vector<1x8x512xf32>
    %692 = vector.shape_cast %691 : vector<1x8x512xf32> to vector<8x512xf32>
    %c0_388 = arith.constant 0 : index
    %c0_389 = arith.constant 0 : index
    %693 = vector.load %arg13[%c0_388, %c0_389] : memref<8x128xf32, #tpu.memory_space<vmem>>, vector<8x128xf32>
    %694 = arith.truncf %693 : vector<8x128xf32> to vector<8x128xbf16>
    %c0_390 = arith.constant 0 : index
    %c0_391 = arith.constant 0 : index
    %695 = vector.load %arg6[%c0_390, %c0_391] : memref<128x512xbf16, #tpu.memory_space<vmem>>, vector<128x512xbf16>
    %cst_392 = arith.constant dense<0.000000e+00> : vector<8x512xf32>
    %696 = tpu.matmul %694, %695, %cst_392 {dimension_numbers = #tpu.dot_dimension_numbers<[1], [0], [0], [1], [0, 0, 1, 1], [], []>} : vector<8x128xbf16>, vector<128x512xbf16>, vector<8x512xf32> -> vector<8x512xf32>
    %697 = arith.addf %692, %696 : vector<8x512xf32>
    %698 = vector.extract_strided_slice %697 {offsets = [0, 0], sizes = [8, 128], strides = [1, 1]} : vector<8x512xf32> to vector<8x128xf32>
    %cst_393 = arith.constant 5.000000e-01 : f32
    %699 = vector.broadcast %cst_393 : f32 to vector<8x128xf32>
    %700 = arith.mulf %699, %698 : vector<8x128xf32>
    %701 = math.tanh %700 : vector<8x128xf32>
    %cst_394 = arith.constant 5.000000e-01 : f32
    %702 = vector.broadcast %cst_394 : f32 to vector<8x128xf32>
    %703 = arith.mulf %702, %701 : vector<8x128xf32>
    %cst_395 = arith.constant 5.000000e-01 : f32
    %704 = vector.broadcast %cst_395 : f32 to vector<8x128xf32>
    %705 = arith.addf %703, %704 : vector<8x128xf32>
    %706 = vector.extract_strided_slice %697 {offsets = [0, 128], sizes = [8, 128], strides = [1, 1]} : vector<8x512xf32> to vector<8x128xf32>
    %cst_396 = arith.constant 5.000000e-01 : f32
    %707 = vector.broadcast %cst_396 : f32 to vector<8x128xf32>
    %708 = arith.mulf %707, %706 : vector<8x128xf32>
    %709 = math.tanh %708 : vector<8x128xf32>
    %cst_397 = arith.constant 5.000000e-01 : f32
    %710 = vector.broadcast %cst_397 : f32 to vector<8x128xf32>
    %711 = arith.mulf %710, %709 : vector<8x128xf32>
    %cst_398 = arith.constant 5.000000e-01 : f32
    %712 = vector.broadcast %cst_398 : f32 to vector<8x128xf32>
    %713 = arith.addf %711, %712 : vector<8x128xf32>
    %714 = vector.extract_strided_slice %697 {offsets = [0, 256], sizes = [8, 128], strides = [1, 1]} : vector<8x512xf32> to vector<8x128xf32>
    %715 = math.tanh %714 : vector<8x128xf32>
    %716 = vector.extract_strided_slice %697 {offsets = [0, 384], sizes = [8, 128], strides = [1, 1]} : vector<8x512xf32> to vector<8x128xf32>
    %cst_399 = arith.constant 5.000000e-01 : f32
    %717 = vector.broadcast %cst_399 : f32 to vector<8x128xf32>
    %718 = arith.mulf %717, %716 : vector<8x128xf32>
    %719 = math.tanh %718 : vector<8x128xf32>
    %cst_400 = arith.constant 5.000000e-01 : f32
    %720 = vector.broadcast %cst_400 : f32 to vector<8x128xf32>
    %721 = arith.mulf %720, %719 : vector<8x128xf32>
    %cst_401 = arith.constant 5.000000e-01 : f32
    %722 = vector.broadcast %cst_401 : f32 to vector<8x128xf32>
    %723 = arith.addf %721, %722 : vector<8x128xf32>
    %c0_402 = arith.constant 0 : index
    %c0_403 = arith.constant 0 : index
    %724 = vector.load %arg14[%c0_402, %c0_403] : memref<8x128xf32, #tpu.memory_space<vmem>>, vector<8x128xf32>
    %725 = arith.mulf %713, %724 : vector<8x128xf32>
    %726 = arith.mulf %705, %715 : vector<8x128xf32>
    %727 = arith.addf %725, %726 : vector<8x128xf32>
    %728 = math.tanh %727 : vector<8x128xf32>
    %729 = arith.mulf %723, %728 : vector<8x128xf32>
    %c0_404 = arith.constant 0 : index
    %c0_405 = arith.constant 0 : index
    %730 = vector.load %arg14[%c0_404, %c0_405] : memref<8x128xf32, #tpu.memory_space<vmem>>, vector<8x128xf32>
    tpu.vector_store %arg14[%c0_404, %c0_405], %727 {strides = array<i32>} : memref<8x128xf32, #tpu.memory_space<vmem>>, vector<8x128xf32>,
    %c0_406 = arith.constant 0 : index
    %c0_407 = arith.constant 0 : index
    %731 = vector.load %arg13[%c0_406, %c0_407] : memref<8x128xf32, #tpu.memory_space<vmem>>, vector<8x128xf32>
    tpu.vector_store %arg13[%c0_406, %c0_407], %729 {strides = array<i32>} : memref<8x128xf32, #tpu.memory_space<vmem>>, vector<8x128xf32>,
    %c8_i32_408 = arith.constant 8 : i32
    %c0_409 = arith.constant 0 : index
    %c0_410 = arith.constant 0 : index
    %732 = vector.load %arg13[%c0_409, %c0_410] : memref<8x128xf32, #tpu.memory_space<vmem>>, vector<8x128xf32>
    %733 = arith.truncf %732 : vector<8x128xf32> to vector<8x128xbf16>
    %c0_411 = arith.constant 0 : index
    %c0_412 = arith.constant 0 : index
    %734 = vector.load %arg8[%c0_411, %c0_412] : memref<128x128xbf16, #tpu.memory_space<vmem>>, vector<128x128xbf16>
    %cst_413 = arith.constant dense<0.000000e+00> : vector<8x128xf32>
    %735 = tpu.matmul %733, %734, %cst_413 {dimension_numbers = #tpu.dot_dimension_numbers<[1], [0], [0], [1], [0, 0, 1, 1], [], []>} : vector<8x128xbf16>, vector<128x128xbf16>, vector<8x128xf32> -> vector<8x128xf32>
    %c0_414 = arith.constant 0 : index
    %c0_415 = arith.constant 0 : index
    %736 = vector.load %arg9[%c0_414, %c0_415] : memref<1x128xf32, #tpu.memory_space<vmem>>, vector<1x128xf32>
    %737 = vector.broadcast %736 : vector<1x128xf32> to vector<8x128xf32>
    %738 = arith.addf %735, %737 : vector<8x128xf32>
    %c0_416 = arith.constant 0 : index
    %c0_417 = arith.constant 0 : index
    %739 = vector.load %arg10[%c0_416, %c0_417] : memref<8x128xf32, #tpu.memory_space<vmem>>, vector<8x128xf32>
    tpu.vector_store %arg10[%c0_416, %c0_417], %738 {strides = array<i32>} : memref<8x128xf32, #tpu.memory_space<vmem>>, vector<8x128xf32>,
    return
  }
  func.func @transform_0(%arg0: i32) -> (i32, i32, i32) {
    %c0_i32 = arith.constant 0 : i32
    %c0_i32_0 = arith.constant 0 : i32
    %c0_i32_1 = arith.constant 0 : i32
    return %c0_i32, %arg0, %c0_i32_0 : i32, i32, i32
  }
  func.func @transform_1(%arg0: i32) -> (i32, i32) {
    %c0_i32 = arith.constant 0 : i32
    %c0_i32_0 = arith.constant 0 : i32
    %c0_i32_1 = arith.constant 0 : i32
    return %c0_i32, %c0_i32_0 : i32, i32
  }
  func.func @transform_2(%arg0: i32) -> (i32, i32) {
    %c0_i32 = arith.constant 0 : i32
    %c0_i32_0 = arith.constant 0 : i32
    %c0_i32_1 = arith.constant 0 : i32
    return %c0_i32, %c0_i32_0 : i32, i32
  }
  func.func @transform_3(%arg0: i32) -> (i32, i32) {
    %c0_i32 = arith.constant 0 : i32
    %c0_i32_0 = arith.constant 0 : i32
    %c0_i32_1 = arith.constant 0 : i32
    return %c0_i32, %c0_i32_0 : i32, i32
  }
  func.func @transform_4(%arg0: i32) -> (i32, i32) {
    %c0_i32 = arith.constant 0 : i32
    %c0_i32_0 = arith.constant 0 : i32
    %c0_i32_1 = arith.constant 0 : i32
    return %c0_i32, %c0_i32_0 : i32, i32
  }
  func.func @transform_5(%arg0: i32) -> (i32, i32) {
    %c0_i32 = arith.constant 0 : i32
    %c0_i32_0 = arith.constant 0 : i32
    %c0_i32_1 = arith.constant 0 : i32
    return %c0_i32, %c0_i32_0 : i32, i32
  }
  func.func @transform_6(%arg0: i32) -> (i32, i32) {
    %c0_i32 = arith.constant 0 : i32
    %c0_i32_0 = arith.constant 0 : i32
    %c0_i32_1 = arith.constant 0 : i32
    return %c0_i32, %c0_i32_0 : i32, i32
  }
  func.func @transform_7(%arg0: i32) -> (i32, i32) {
    %c0_i32 = arith.constant 0 : i32
    %c0_i32_0 = arith.constant 0 : i32
    %c0_i32_1 = arith.constant 0 : i32
    return %c0_i32, %c0_i32_0 : i32, i32
  }
  func.func @transform_8(%arg0: i32) -> (i32, i32) {
    %c0_i32 = arith.constant 0 : i32
    %c0_i32_0 = arith.constant 0 : i32
    %c0_i32_1 = arith.constant 0 : i32
    return %c0_i32, %c0_i32_0 : i32, i32
  }
  func.func @transform_9(%arg0: i32) -> (i32, i32) {
    %c0_i32 = arith.constant 0 : i32
    %c0_i32_0 = arith.constant 0 : i32
    return %arg0, %c0_i32 : i32, i32
  }
}

</mosaic_0001>

<llo_original>
// kernel: tpu_custom_call.1
$region0: #{tpu_custom_call.1}
  #allocation0 [shape = 'u32[]', space=smem, size = 0x4, offset = 0x4, fixed_abs, tag = 'smem constant byte address 0x4 - core index']
  #allocation1 [shape = 'u32[144,128]{1,0:T(1,128)}', space=vmem, size = 0x12000, scoped, tag = 'internal scratch']
  #allocation2 [shape = 'f32[8,8,128]{2,1,0:T(8,128)}', space=vmem, size = 0x8000, scoped, tag = 'scratch operand']
  #allocation3 [shape = 'f32[8,8,512]{2,1,0:T(8,128)}', space=vmem, size = 0x20000, scoped, tag = 'scratch operand']
  #allocation4 [shape = 'f32[8,128]{1,0:T(8,128)}', space=vmem, size = 0x1000, scoped, tag = 'scratch operand']
  #allocation5 [shape = 'f32[8,128]{1,0:T(8,128)}', space=vmem, size = 0x1000, scoped, tag = 'scratch operand']
  %s0 = inlined_call_operand.hbm [shape: f32[8,8,16], index: 0, kind: input, shape index: {}]
  %s1 = inlined_call_operand.hbm [shape: bf16[16,512], index: 1, kind: input, shape index: {}]
  %s2 = inlined_call_operand.hbm [shape: bf16[128,512], index: 2, kind: input, shape index: {}]
  %s3 = inlined_call_operand.hbm [shape: f32[1,512], index: 3, kind: input, shape index: {}]
  %s4 = inlined_call_operand.hbm [shape: bf16[128,512], index: 4, kind: input, shape index: {}]
  %s5 = inlined_call_operand.hbm [shape: bf16[128,512], index: 5, kind: input, shape index: {}]
  %s6 = inlined_call_operand.hbm [shape: f32[1,512], index: 6, kind: input, shape index: {}]
  %s7 = inlined_call_operand.hbm [shape: bf16[128,128], index: 7, kind: input, shape index: {}]
  %s8 = inlined_call_operand.hbm [shape: f32[1,128], index: 8, kind: input, shape index: {}]
  %s9 = inlined_call_operand.hbm [shape: f32[8,128], index: 9, kind: output, shape index: {}]
  %s10 = sld [smem:[#allocation0]]
  $region82: #{tpu_custom_call.1} parent=0
    _
  %s12 = ssub.s32 1, %s10
  %s13 = scalar_select 0, %s12, %s10
  $region1: #{tpu_custom_call.1} parent=0
    #allocation6 [shape = 'u8[32768]{0}', space=vmem, size = 0x8000, scoped, tag = 'input window, operand 0, single buffered']
    #allocation7 [shape = 's32[1]{0}', space=sflag, size = 0x4, scoped, tag = 'scoped memory for tpu_custom_call.1']
    #allocation8 [shape = 's32[1]{0}', space=sflag, size = 0x4, scoped, tag = 'scoped memory for tpu_custom_call.1']
    #allocation9 [shape = 'u8[16384]{0}', space=vmem, size = 0x4000, scoped, tag = 'input window, operand 1, single buffered']
    #allocation10 [shape = 's32[1]{0}', space=sflag, size = 0x4, scoped, tag = 'scoped memory for tpu_custom_call.1']
    #allocation11 [shape = 'u8[131072]{0}', space=vmem, size = 0x20000, scoped, tag = 'input window, operand 2, single buffered']
    #allocation12 [shape = 'u8[2048]{0}', space=vmem, size = 0x800, scoped, tag = 'input window, operand 3, single buffered']
    #allocation13 [shape = 's32[1]{0}', space=sflag, size = 0x4, scoped, tag = 'scoped memory for tpu_custom_call.1']
    #allocation14 [shape = 'u8[131072]{0}', space=vmem, size = 0x20000, scoped, tag = 'input window, operand 4, single buffered']
    #allocation15 [shape = 'u8[131072]{0}', space=vmem, size = 0x20000, scoped, tag = 'input window, operand 5, single buffered']
    #allocation16 [shape = 's32[1]{0}', space=sflag, size = 0x4, scoped, tag = 'scoped memory for tpu_custom_call.1']
    #allocation17 [shape = 'u8[2048]{0}', space=vmem, size = 0x800, scoped, tag = 'input window, operand 6, single buffered']
    #allocation18 [shape = 'u8[32768]{0}', space=vmem, size = 0x8000, scoped, tag = 'input window, operand 7, single buffered']
    #allocation19 [shape = 's32[1]{0}', space=sflag, size = 0x4, scoped, tag = 'scoped memory for tpu_custom_call.1']
    #allocation20 [shape = 'u8[512]{0}', space=vmem, size = 0x400, scoped, tag = 'input window, operand 8, single buffered']
    #allocation21 [shape = 'u8[4096]{0}', space=vmem, size = 0x1000, scoped, tag = 'output window, operand 0, single buffered']
    %14 = vsyncpa [#allocation7], 0
    %15 = vsyncpa [#allocation10], 0
    %16 = vsyncpa [#allocation13], 0
    %17 = vsyncpa [#allocation16], 0
    %18 = vsyncpa [#allocation19], 0
    %19 = vsyncpa [#allocation8], 0
    // Predicated region
    $region2: #{tpu_custom_call.1} parent=1 // pred_check
      _
    $region3: #{tpu_custom_call.1} parent=1 // pred_check_branch
      %21 = sbr.rel (0) target = $region5
    $region4: #{tpu_custom_call.1} parent=1 // pred_region
      %s23 = ssub.s32 1024, 1024
      %24 = vsyncadd [#allocation7], %s23
      %s25 = sshll.u32 [#allocation6], 4
      %s26 = int_to_ptr.vmem [resolvable:$true] %s25
      %31 = dma.hbm_to_vmem [thread:$0]  %s0, 1024, %s26, [#allocation7], 128, 128, 8
    $region5: #{tpu_custom_call.1} parent=1 // pred_fallthru
      _
    // Predicated region
    $region6: #{tpu_custom_call.1} parent=1 // pred_check
      _
    $region7: #{tpu_custom_call.1} parent=1 // pred_check_branch
      %33 = sbr.rel (0) target = $region9
    $region8: #{tpu_custom_call.1} parent=1 // pred_region
      %s35 = ssub.s32 512, 512
      %36 = vsyncadd [#allocation10], %s35
      %s37 = sshll.u32 [#allocation9], 4
      %s38 = int_to_ptr.vmem [resolvable:$true] %s37
      %43 = dma.hbm_to_vmem [thread:$0]  %s1, 512, %s38, [#allocation10], 256, 256, 16
    $region9: #{tpu_custom_call.1} parent=1 // pred_fallthru
      _
    // Predicated region
    $region10: #{tpu_custom_call.1} parent=1 // pred_check
      _
    $region11: #{tpu_custom_call.1} parent=1 // pred_check_branch
      %45 = sbr.rel (0) target = $region13
    $region12: #{tpu_custom_call.1} parent=1 // pred_region
      %s47 = ssub.s32 4096, 4096
      %48 = vsyncadd [#allocation10], %s47
      %s49 = sshll.u32 [#allocation11], 4
      %s50 = int_to_ptr.vmem [resolvable:$true] %s49
      %55 = dma.hbm_to_vmem [thread:$0]  %s2, 4096, %s50, [#allocation10], 256, 256, 16
    $region13: #{tpu_custom_call.1} parent=1 // pred_fallthru
      _
    // Predicated region
    $region14: #{tpu_custom_call.1} parent=1 // pred_check
      _
    $region15: #{tpu_custom_call.1} parent=1 // pred_check_branch
      %57 = sbr.rel (0) target = $region17
    $region16: #{tpu_custom_call.1} parent=1 // pred_region
      %s59 = ssub.s32 64, 64
      %60 = vsyncadd [#allocation13], %s59
      %s62 = sshll.u32 [#allocation12], 4
      %s63 = int_to_ptr.vmem [resolvable:$true] %s62
      %65 = dma.hbm_to_vmem [thread:$0]  %s3, 64, %s63, [#allocation13]
    $region17: #{tpu_custom_call.1} parent=1 // pred_fallthru
      _
    // Predicated region
    $region18: #{tpu_custom_call.1} parent=1 // pred_check
      _
    $region19: #{tpu_custom_call.1} parent=1 // pred_check_branch
      %67 = sbr.rel (0) target = $region21
    $region20: #{tpu_custom_call.1} parent=1 // pred_region
      %s69 = ssub.s32 4096, 4096
      %70 = vsyncadd [#allocation13], %s69
      %s71 = sshll.u32 [#allocation14], 4
      %s72 = int_to_ptr.vmem [resolvable:$true] %s71
      %77 = dma.hbm_to_vmem [thread:$0]  %s4, 4096, %s72, [#allocation13], 256, 256, 16
    $region21: #{tpu_custom_call.1} parent=1 // pred_fallthru
      _
    // Predicated region
    $region22: #{tpu_custom_call.1} parent=1 // pred_check
      _
    $region23: #{tpu_custom_call.1} parent=1 // pred_check_branch
      %79 = sbr.rel (0) target = $region25
    $region24: #{tpu_custom_call.1} parent=1 // pred_region
      %s81 = ssub.s32 4096, 4096
      %82 = vsyncadd [#allocation16], %s81
      %s83 = sshll.u32 [#allocation15], 4
      %s84 = int_to_ptr.vmem [resolvable:$true] %s83
      %89 = dma.hbm_to_vmem [thread:$0]  %s5, 4096, %s84, [#allocation16], 256, 256, 16
    $region25: #{tpu_custom_call.1} parent=1 // pred_fallthru
      _
    // Predicated region
    $region26: #{tpu_custom_call.1} parent=1 // pred_check
      _
    $region27: #{tpu_custom_call.1} parent=1 // pred_check_branch
      %91 = sbr.rel (0) target = $region29
    $region28: #{tpu_custom_call.1} parent=1 // pred_region
      %s93 = ssub.s32 64, 64
      %94 = vsyncadd [#allocation16], %s93
      %s96 = sshll.u32 [#allocation17], 4
      %s97 = int_to_ptr.vmem [resolvable:$true] %s96
      %99 = dma.hbm_to_vmem [thread:$0]  %s6, 64, %s97, [#allocation16]
    $region29: #{tpu_custom_call.1} parent=1 // pred_fallthru
      _
    // Predicated region
    $region30: #{tpu_custom_call.1} parent=1 // pred_check
      _
    $region31: #{tpu_custom_call.1} parent=1 // pred_check_branch
      %101 = sbr.rel (0) target = $region33
    $region32: #{tpu_custom_call.1} parent=1 // pred_region
      %s103 = ssub.s32 1024, 1024
      %104 = vsyncadd [#allocation19], %s103
      %s105 = sshll.u32 [#allocation18], 4
      %s106 = int_to_ptr.vmem [resolvable:$true] %s105
      %111 = dma.hbm_to_vmem [thread:$0]  %s7, 1024, %s106, [#allocation19], 64, 64, 4
    $region33: #{tpu_custom_call.1} parent=1 // pred_fallthru
      _
    // Predicated region
    $region34: #{tpu_custom_call.1} parent=1 // pred_check
      _
    $region35: #{tpu_custom_call.1} parent=1 // pred_check_branch
      %113 = sbr.rel (0) target = $region37
    $region36: #{tpu_custom_call.1} parent=1 // pred_region
      %s115 = ssub.s32 16, 16
      %116 = vsyncadd [#allocation19], %s115
      %s118 = sshll.u32 [#allocation20], 4
      %s119 = int_to_ptr.vmem [resolvable:$true] %s118
      %121 = dma.hbm_to_vmem [thread:$0]  %s8, 16, %s119, [#allocation19]
    $region37: #{tpu_custom_call.1} parent=1 // pred_fallthru
      _
    // Predicated region
    $region38: #{tpu_custom_call.1} parent=1 // pred_check
      _
    $region39: #{tpu_custom_call.1} parent=1 // pred_check_branch
      %123 = sbr.rel (0) target = $region41
    $region40: #{tpu_custom_call.1} parent=1 // pred_region
      %124 = dma.done [#allocation7], 1024
    $region41: #{tpu_custom_call.1} parent=1 // pred_fallthru
      _
    // Predicated region
    $region42: #{tpu_custom_call.1} parent=1 // pred_check
      _
    $region43: #{tpu_custom_call.1} parent=1 // pred_check_branch
      %126 = sbr.rel (0) target = $region45
    $region44: #{tpu_custom_call.1} parent=1 // pred_region
      %127 = dma.done [#allocation10], 512
    $region45: #{tpu_custom_call.1} parent=1 // pred_fallthru
      _
    // Predicated region
    $region46: #{tpu_custom_call.1} parent=1 // pred_check
      _
    $region47: #{tpu_custom_call.1} parent=1 // pred_check_branch
      %129 = sbr.rel (0) target = $region49
    $region48: #{tpu_custom_call.1} parent=1 // pred_region
      %130 = dma.done [#allocation10], 4096
    $region49: #{tpu_custom_call.1} parent=1 // pred_fallthru
      _
    // Predicated region
    $region50: #{tpu_custom_call.1} parent=1 // pred_check
      _
    $region51: #{tpu_custom_call.1} parent=1 // pred_check_branch
      %132 = sbr.rel (0) target = $region53
    $region52: #{tpu_custom_call.1} parent=1 // pred_region
      %133 = dma.done [#allocation13], 64
    $region53: #{tpu_custom_call.1} parent=1 // pred_fallthru
      _
    // Predicated region
    $region54: #{tpu_custom_call.1} parent=1 // pred_check
      _
    $region55: #{tpu_custom_call.1} parent=1 // pred_check_branch
      %135 = sbr.rel (0) target = $region57
    $region56: #{tpu_custom_call.1} parent=1 // pred_region
      %136 = dma.done [#allocation13], 4096
    $region57: #{tpu_custom_call.1} parent=1 // pred_fallthru
      _
    // Predicated region
    $region58: #{tpu_custom_call.1} parent=1 // pred_check
      _
    $region59: #{tpu_custom_call.1} parent=1 // pred_check_branch
      %138 = sbr.rel (0) target = $region61
    $region60: #{tpu_custom_call.1} parent=1 // pred_region
      %139 = dma.done [#allocation16], 4096
    $region61: #{tpu_custom_call.1} parent=1 // pred_fallthru
      _
    // Predicated region
    $region62: #{tpu_custom_call.1} parent=1 // pred_check
      _
    $region63: #{tpu_custom_call.1} parent=1 // pred_check_branch
      %141 = sbr.rel (0) target = $region65
    $region64: #{tpu_custom_call.1} parent=1 // pred_region
      %142 = dma.done [#allocation16], 64
    $region65: #{tpu_custom_call.1} parent=1 // pred_fallthru
      _
    // Predicated region
    $region66: #{tpu_custom_call.1} parent=1 // pred_check
      _
    $region67: #{tpu_custom_call.1} parent=1 // pred_check_branch
      %144 = sbr.rel (0) target = $region69
    $region68: #{tpu_custom_call.1} parent=1 // pred_region
      %145 = dma.done [#allocation19], 1024
    $region69: #{tpu_custom_call.1} parent=1 // pred_fallthru
      _
    // Predicated region
    $region70: #{tpu_custom_call.1} parent=1 // pred_check
      _
    $region71: #{tpu_custom_call.1} parent=1 // pred_check_branch
      %147 = sbr.rel (0) target = $region73
    $region72: #{tpu_custom_call.1} parent=1 // pred_region
      %148 = dma.done [#allocation19], 16
    $region73: #{tpu_custom_call.1} parent=1 // pred_fallthru
      _
    %v150 = vld [vmem:[#allocation6] sm:$0xff]
    %v151 = vld [vmem:[#allocation6 + $0x8] sm:$0xff]
    %v152 = vld [vmem:[#allocation6 + $0x10] sm:$0xff]
    %v153 = vld [vmem:[#allocation6 + $0x18] sm:$0xff]
    %v154 = vld [vmem:[#allocation6 + $0x20] sm:$0xff]
    %v155 = vld [vmem:[#allocation6 + $0x28] sm:$0xff]
    %v156 = vld [vmem:[#allocation6 + $0x30] sm:$0xff]
    %v157 = vld [vmem:[#allocation6 + $0x38] sm:$0xff]
    %v158 = vpack.c.bf16 %v151, %v150
    %v159 = vpack.c.bf16 %v153, %v152
    %v160 = vpack.c.bf16 %v155, %v154
    %v161 = vpack.c.bf16 %v157, %v156
    %v162 = vld [vmem:[#allocation9] sm:$0xff]
    %v163 = vld [vmem:[#allocation9 + $0x8] sm:$0xff]
    %v164 = vld [vmem:[#allocation9 + $0x10] sm:$0xff]
    %v165 = vld [vmem:[#allocation9 + $0x18] sm:$0xff]
    %v166 = vld [vmem:[#allocation12] sm:$0xf]
    %v168 = vlaneseq
    %v169 = vshrl.u32 %v168, 7
    %v170 = vsub.s32 0, %v169
    %v171 = vrot.slane %v166, %v170
    %v172 = vlaneseq
    %v173 = vshrl.u32 %v172, 7
    %v174 = vsub.s32 1, %v173
    %v175 = vrot.slane %v166, %v174
    %v176 = vlaneseq
    %v177 = vshrl.u32 %v176, 7
    %v178 = vsub.s32 2, %v177
    %v179 = vrot.slane %v166, %v178
    %v180 = vlaneseq
    %v181 = vshrl.u32 %v180, 7
    %v182 = vsub.s32 3, %v181
    %v183 = vrot.slane %v166, %v182
    %v192 = vunpack.c.l.b16 %v162
    %v193 = vunpack.c.h.b16 %v162
    %v194 = vunpack.c.l.b16 %v163
    %v195 = vunpack.c.h.b16 %v163
    %v196 = vunpack.c.l.b16 %v164
    %v197 = vunpack.c.h.b16 %v164
    %v198 = vunpack.c.l.b16 %v165
    %v199 = vunpack.c.h.b16 %v165
    %v200 = vpack.c.b16 %v196, %v192
    %v201 = vpack.c.b16 %v197, %v193
    %v202 = vpack.c.b16 %v198, %v194
    %v203 = vpack.c.b16 %v199, %v195
    %vm208 = vcmask 130048
    %v210 = vsel %vm208, %v158, 0
    %v213 = vsel %vm208, %v159, 0
    %v216 = vsel %vm208, %v160, 0
    %v219 = vsel %vm208, %v161, 0
    %221 = vmatprep.subr.bf16.mxu0 %v201
    %222 = vmatpush1.bf16.msra.mxu0 %v200
    %223 = vmatprep.subr.bf16.mxu0 0
    %224 = vmatpush1.bf16.msra.mxu0 0
    %225 = vmatprep.subr.bf16.mxu0 0
    %226 = vmatpush1.bf16.msra.mxu0 0
    %227 = vmatprep.subr.bf16.mxu0 0
    %228 = vmatpush1.bf16.msra.mxu0 0
    %229 = vmatprep.subr.bf16.mxu0 0
    %230 = vmatpush1.bf16.msra.mxu0 0
    %231 = vmatprep.subr.bf16.mxu0 0
    %232 = vmatpush1.bf16.msra.mxu0 0
    %233 = vmatprep.subr.bf16.mxu0 0
    %234 = vmatpush1.bf16.msra.mxu0 0
    %235 = vmatprep.subr.bf16.mxu0 0
    %236 = vmatpush1.bf16.msra.mxu0 0
    %237 = vmatprep.subr.bf16.mxu0 0
    %238 = vmatpush1.bf16.msra.mxu0 0
    %239 = vmatprep.subr.bf16.mxu0 0
    %240 = vmatpush1.bf16.msra.mxu0 0
    %241 = vmatprep.subr.bf16.mxu0 0
    %242 = vmatpush1.bf16.msra.mxu0 0
    %243 = vmatprep.subr.bf16.mxu0 0
    %244 = vmatpush1.bf16.msra.mxu0 0
    %245 = vmatprep.subr.bf16.mxu0 0
    %246 = vmatpush1.bf16.msra.mxu0 0
    %247 = vmatprep.subr.bf16.mxu0 0
    %248 = vmatpush1.bf16.msra.mxu0 0
    %249 = vmatprep.subr.bf16.mxu0 0
    %250 = vmatpush1.bf16.msra.mxu0 0
    %251 = vmatprep.subr.bf16.mxu0 0
    %252 = vmatpush1.bf16.msra.mxu0 0
    %253 = vmatprep.mubr.bf16.mxu0 0
    %254 = vmatmul.mubr.bf16.gmra.mrb[0].mxu0 %v210
    %v255 = vpop.f32.mrb[0].mxu0
    %v256 = vadd.f32 %v171, %v255
    %v257 = vpop.f32.mrb[0].mxu0
    %v258 = vadd.f32 %v175, %v257
    %v259 = vpop.f32.mrb[0].mxu0
    %v260 = vadd.f32 %v171, %v259
    %v261 = vpop.f32.mrb[0].mxu0
    %v262 = vadd.f32 %v175, %v261
    %263 = vmatprep.mubr.bf16.mxu0 0
    %264 = vmatmul.mubr.bf16.gmra.mrb[0].mxu0 %v213
    %v265 = vpop.f32.mrb[0].mxu0
    %v266 = vadd.f32 %v171, %v265
    %v267 = vpop.f32.mrb[0].mxu0
    %v268 = vadd.f32 %v175, %v267
    %v269 = vpop.f32.mrb[0].mxu0
    %v270 = vadd.f32 %v171, %v269
    %v271 = vpop.f32.mrb[0].mxu0
    %v272 = vadd.f32 %v175, %v271
    %273 = vmatprep.mubr.bf16.mxu0 0
    %274 = vmatmul.mubr.bf16.gmra.mrb[0].mxu0 %v216
    %v275 = vpop.f32.mrb[0].mxu0
    %v276 = vadd.f32 %v171, %v275
    %v277 = vpop.f32.mrb[0].mxu0
    %v278 = vadd.f32 %v175, %v277
    %v279 = vpop.f32.mrb[0].mxu0
    %v280 = vadd.f32 %v171, %v279
    %v281 = vpop.f32.mrb[0].mxu0
    %v282 = vadd.f32 %v175, %v281
    %283 = vmatprep.mubr.bf16.mxu0 0
    %284 = vmatmul.mubr.bf16.gmra.mrb[0].mxu0 %v219
    %v285 = vpop.f32.mrb[0].mxu0
    %v286 = vadd.f32 %v171, %v285
    %v287 = vpop.f32.mrb[0].mxu0
    %v288 = vadd.f32 %v175, %v287
    %v289 = vpop.f32.mrb[0].mxu0
    %v290 = vadd.f32 %v171, %v289
    %v291 = vpop.f32.mrb[0].mxu0
    %v292 = vadd.f32 %v175, %v291
    %293 = vdwg.mxu0
    %294 = vmatprep.subr.bf16.mxu0 %v203
    %295 = vmatpush1.bf16.msra.mxu0 %v202
    %296 = vmatprep.subr.bf16.mxu0 0
    %297 = vmatpush1.bf16.msra.mxu0 0
    %298 = vmatprep.subr.bf16.mxu0 0
    %299 = vmatpush1.bf16.msra.mxu0 0
    %300 = vmatprep.subr.bf16.mxu0 0
    %301 = vmatpush1.bf16.msra.mxu0 0
    %302 = vmatprep.subr.bf16.mxu0 0
    %303 = vmatpush1.bf16.msra.mxu0 0
    %304 = vmatprep.subr.bf16.mxu0 0
    %305 = vmatpush1.bf16.msra.mxu0 0
    %306 = vmatprep.subr.bf16.mxu0 0
    %307 = vmatpush1.bf16.msra.mxu0 0
    %308 = vmatprep.subr.bf16.mxu0 0
    %309 = vmatpush1.bf16.msra.mxu0 0
    %310 = vmatprep.subr.bf16.mxu0 0
    %311 = vmatpush1.bf16.msra.mxu0 0
    %312 = vmatprep.subr.bf16.mxu0 0
    %313 = vmatpush1.bf16.msra.mxu0 0
    %314 = vmatprep.subr.bf16.mxu0 0
    %315 = vmatpush1.bf16.msra.mxu0 0
    %316 = vmatprep.subr.bf16.mxu0 0
    %317 = vmatpush1.bf16.msra.mxu0 0
    %318 = vmatprep.subr.bf16.mxu0 0
    %319 = vmatpush1.bf16.msra.mxu0 0
    %320 = vmatprep.subr.bf16.mxu0 0
    %321 = vmatpush1.bf16.msra.mxu0 0
    %322 = vmatprep.subr.bf16.mxu0 0
    %323 = vmatpush1.bf16.msra.mxu0 0
    %324 = vmatprep.subr.bf16.mxu0 0
    %325 = vmatpush1.bf16.msra.mxu0 0
    %326 = vmatprep.mubr.bf16.mxu0 0
    %327 = vmatmul.mubr.bf16.gmra.mrb[0].mxu0 %v210
    %v328 = vpop.f32.mrb[0].mxu0
    %v329 = vadd.f32 %v179, %v328
    %v330 = vpop.f32.mrb[0].mxu0
    %v331 = vadd.f32 %v183, %v330
    %v332 = vpop.f32.mrb[0].mxu0
    %v333 = vadd.f32 %v179, %v332
    %v334 = vpop.f32.mrb[0].mxu0
    %v335 = vadd.f32 %v183, %v334
    %336 = vmatprep.mubr.bf16.mxu0 0
    %337 = vmatmul.mubr.bf16.gmra.mrb[0].mxu0 %v213
    %v338 = vpop.f32.mrb[0].mxu0
    %v339 = vadd.f32 %v179, %v338
    %v340 = vpop.f32.mrb[0].mxu0
    %v341 = vadd.f32 %v183, %v340
    %v342 = vpop.f32.mrb[0].mxu0
    %v343 = vadd.f32 %v179, %v342
    %v344 = vpop.f32.mrb[0].mxu0
    %v345 = vadd.f32 %v183, %v344
    %346 = vmatprep.mubr.bf16.mxu0 0
    %347 = vmatmul.mubr.bf16.gmra.mrb[0].mxu0 %v216
    %v348 = vpop.f32.mrb[0].mxu0
    %v349 = vadd.f32 %v179, %v348
    %v350 = vpop.f32.mrb[0].mxu0
    %v351 = vadd.f32 %v183, %v350
    %v352 = vpop.f32.mrb[0].mxu0
    %v353 = vadd.f32 %v179, %v352
    %v354 = vpop.f32.mrb[0].mxu0
    %v355 = vadd.f32 %v183, %v354
    %356 = vmatprep.mubr.bf16.mxu0 0
    %357 = vmatmul.mubr.bf16.gmra.mrb[0].mxu0 %v219
    %v358 = vpop.f32.mrb[0].mxu0
    %v359 = vadd.f32 %v179, %v358
    %v360 = vpop.f32.mrb[0].mxu0
    %v361 = vadd.f32 %v183, %v360
    %v362 = vpop.f32.mrb[0].mxu0
    %v363 = vadd.f32 %v179, %v362
    %v364 = vpop.f32.mrb[0].mxu0
    %v365 = vadd.f32 %v183, %v364
    %366 = vdwg.mxu0
    %367 = vst [vmem:[#allocation3] sm:$0xff] %v256
    %368 = vst [vmem:[#allocation3 + $0x8] sm:$0xff] %v258
    %369 = vst [vmem:[#allocation3 + $0x10] sm:$0xff] %v329
    %370 = vst [vmem:[#allocation3 + $0x18] sm:$0xff] %v331
    %371 = vst [vmem:[#allocation3 + $0x20] sm:$0xff] %v260
    %372 = vst [vmem:[#allocation3 + $0x28] sm:$0xff] %v262
    %373 = vst [vmem:[#allocation3 + $0x30] sm:$0xff] %v333
    %374 = vst [vmem:[#allocation3 + $0x38] sm:$0xff] %v335
    %375 = vst [vmem:[#allocation3 + $0x40] sm:$0xff] %v266
    %376 = vst [vmem:[#allocation3 + $0x48] sm:$0xff] %v268
    %377 = vst [vmem:[#allocation3 + $0x50] sm:$0xff] %v339
    %378 = vst [vmem:[#allocation3 + $0x58] sm:$0xff] %v341
    %379 = vst [vmem:[#allocation3 + $0x60] sm:$0xff] %v270
    %380 = vst [vmem:[#allocation3 + $0x68] sm:$0xff] %v272
    %381 = vst [vmem:[#allocation3 + $0x70] sm:$0xff] %v343
    %382 = vst [vmem:[#allocation3 + $0x78] sm:$0xff] %v345
    %383 = vst [vmem:[#allocation3 + $0x80] sm:$0xff] %v276
    %384 = vst [vmem:[#allocation3 + $0x88] sm:$0xff] %v278
    %385 = vst [vmem:[#allocation3 + $0x90] sm:$0xff] %v349
    %386 = vst [vmem:[#allocation3 + $0x98] sm:$0xff] %v351
    %387 = vst [vmem:[#allocation3 + $0xa0] sm:$0xff] %v280
    %388 = vst [vmem:[#allocation3 + $0xa8] sm:$0xff] %v282
    %389 = vst [vmem:[#allocation3 + $0xb0] sm:$0xff] %v353
    %390 = vst [vmem:[#allocation3 + $0xb8] sm:$0xff] %v355
    %391 = vst [vmem:[#allocation3 + $0xc0] sm:$0xff] %v286
    %392 = vst [vmem:[#allocation3 + $0xc8] sm:$0xff] %v288
    %393 = vst [vmem:[#allocation3 + $0xd0] sm:$0xff] %v359
    %394 = vst [vmem:[#allocation3 + $0xd8] sm:$0xff] %v361
    %395 = vst [vmem:[#allocation3 + $0xe0] sm:$0xff] %v290
    %396 = vst [vmem:[#allocation3 + $0xe8] sm:$0xff] %v292
    %397 = vst [vmem:[#allocation3 + $0xf0] sm:$0xff] %v363
    %398 = vst [vmem:[#allocation3 + $0xf8] sm:$0xff] %v365
    %399 = vst [vmem:[#allocation4] sm:$0xff] 0.0
    %400 = vst [vmem:[#allocation5] sm:$0xff] 0.0
    %v401 = vld [vmem:[#allocation3] sm:$0xff]
    %v402 = vld [vmem:[#allocation3 + $0x8] sm:$0xff]
    %v403 = vld [vmem:[#allocation3 + $0x10] sm:$0xff]
    %v404 = vld [vmem:[#allocation3 + $0x18] sm:$0xff]
    %v405 = vld [vmem:[#allocation4] sm:$0xff]
    %v406 = vpack.c.bf16 %v405, %v405
    %v407 = vld [vmem:[#allocation11] sm:$0xff]
    %v408 = vld [vmem:[#allocation11 + $0x8] sm:$0xff]
    %v409 = vld [vmem:[#allocation11 + $0x10] sm:$0xff]
    %v410 = vld [vmem:[#allocation11 + $0x18] sm:$0xff]
    %v411 = vld [vmem:[#allocation11 + $0x20] sm:$0xff]
    %v412 = vld [vmem:[#allocation11 + $0x28] sm:$0xff]
    %v413 = vld [vmem:[#allocation11 + $0x30] sm:$0xff]
    %v414 = vld [vmem:[#allocation11 + $0x38] sm:$0xff]
    %v415 = vld [vmem:[#allocation11 + $0x40] sm:$0xff]
    %v416 = vld [vmem:[#allocation11 + $0x48] sm:$0xff]
    %v417 = vld [vmem:[#allocation11 + $0x50] sm:$0xff]
    %v418 = vld [vmem:[#allocation11 + $0x58] sm:$0xff]
    %v419 = vld [vmem:[#allocation11 + $0x60] sm:$0xff]
    %v420 = vld [vmem:[#allocation11 + $0x68] sm:$0xff]
    %v421 = vld [vmem:[#allocation11 + $0x70] sm:$0xff]
    %v422 = vld [vmem:[#allocation11 + $0x78] sm:$0xff]
    %v423 = vld [vmem:[#allocation11 + $0x80] sm:$0xff]
    %v424 = vld [vmem:[#allocation11 + $0x88] sm:$0xff]
    %v425 = vld [vmem:[#allocation11 + $0x90] sm:$0xff]
    %v426 = vld [vmem:[#allocation11 + $0x98] sm:$0xff]
    %v427 = vld [vmem:[#allocation11 + $0xa0] sm:$0xff]
    %v428 = vld [vmem:[#allocation11 + $0xa8] sm:$0xff]
    %v429 = vld [vmem:[#allocation11 + $0xb0] sm:$0xff]
    %v430 = vld [vmem:[#allocation11 + $0xb8] sm:$0xff]
    %v431 = vld [vmem:[#allocation11 + $0xc0] sm:$0xff]
    %v432 = vld [vmem:[#allocation11 + $0xc8] sm:$0xff]
    %v433 = vld [vmem:[#allocation11 + $0xd0] sm:$0xff]
    %v434 = vld [vmem:[#allocation11 + $0xd8] sm:$0xff]
    %v435 = vld [vmem:[#allocation11 + $0xe0] sm:$0xff]
    %v436 = vld [vmem:[#allocation11 + $0xe8] sm:$0xff]
    %v437 = vld [vmem:[#allocation11 + $0xf0] sm:$0xff]
    %v438 = vld [vmem:[#allocation11 + $0xf8] sm:$0xff]
    %v471 = vunpack.c.l.b16 %v407
    %v472 = vunpack.c.h.b16 %v407
    %v473 = vunpack.c.l.b16 %v408
    %v474 = vunpack.c.h.b16 %v408
    %v475 = vunpack.c.l.b16 %v409
    %v476 = vunpack.c.h.b16 %v409
    %v477 = vunpack.c.l.b16 %v410
    %v478 = vunpack.c.h.b16 %v410
    %v479 = vunpack.c.l.b16 %v411
    %v480 = vunpack.c.h.b16 %v411
    %v481 = vunpack.c.l.b16 %v412
    %v482 = vunpack.c.h.b16 %v412
    %v483 = vunpack.c.l.b16 %v413
    %v484 = vunpack.c.h.b16 %v413
    %v485 = vunpack.c.l.b16 %v414
    %v486 = vunpack.c.h.b16 %v414
    %v487 = vunpack.c.l.b16 %v415
    %v488 = vunpack.c.h.b16 %v415
    %v489 = vunpack.c.l.b16 %v416
    %v490 = vunpack.c.h.b16 %v416
    %v491 = vunpack.c.l.b16 %v417
    %v492 = vunpack.c.h.b16 %v417
    %v493 = vunpack.c.l.b16 %v418
    %v494 = vunpack.c.h.b16 %v418
    %v495 = vunpack.c.l.b16 %v419
    %v496 = vunpack.c.h.b16 %v419
    %v497 = vunpack.c.l.b16 %v420
    %v498 = vunpack.c.h.b16 %v420
    %v499 = vunpack.c.l.b16 %v421
    %v500 = vunpack.c.h.b16 %v421
    %v501 = vunpack.c.l.b16 %v422
    %v502 = vunpack.c.h.b16 %v422
    %v503 = vunpack.c.l.b16 %v423
    %v504 = vunpack.c.h.b16 %v423
    %v505 = vunpack.c.l.b16 %v424
    %v506 = vunpack.c.h.b16 %v424
    %v507 = vunpack.c.l.b16 %v425
    %v508 = vunpack.c.h.b16 %v425
    %v509 = vunpack.c.l.b16 %v426
    %v510 = vunpack.c.h.b16 %v426
    %v511 = vunpack.c.l.b16 %v427
    %v512 = vunpack.c.h.b16 %v427
    %v513 = vunpack.c.l.b16 %v428
    %v514 = vunpack.c.h.b16 %v428
    %v515 = vunpack.c.l.b16 %v429
    %v516 = vunpack.c.h.b16 %v429
    %v517 = vunpack.c.l.b16 %v430
    %v518 = vunpack.c.h.b16 %v430
    %v519 = vunpack.c.l.b16 %v431
    %v520 = vunpack.c.h.b16 %v431
    %v521 = vunpack.c.l.b16 %v432
    %v522 = vunpack.c.h.b16 %v432
    %v523 = vunpack.c.l.b16 %v433
    %v524 = vunpack.c.h.b16 %v433
    %v525 = vunpack.c.l.b16 %v434
    %v526 = vunpack.c.h.b16 %v434
    %v527 = vunpack.c.l.b16 %v435
    %v528 = vunpack.c.h.b16 %v435
    %v529 = vunpack.c.l.b16 %v436
    %v530 = vunpack.c.h.b16 %v436
    %v531 = vunpack.c.l.b16 %v437
    %v532 = vunpack.c.h.b16 %v437
    %v533 = vunpack.c.l.b16 %v438
    %v534 = vunpack.c.h.b16 %v438
    %v535 = vpack.c.b16 %v475, %v471
    %v536 = vpack.c.b16 %v476, %v472
    %v537 = vpack.c.b16 %v477, %v473
    %v538 = vpack.c.b16 %v478, %v474
    %v539 = vpack.c.b16 %v483, %v479
    %v540 = vpack.c.b16 %v484, %v480
    %v541 = vpack.c.b16 %v485, %v481
    %v542 = vpack.c.b16 %v486, %v482
    %v543 = vpack.c.b16 %v491, %v487
    %v544 = vpack.c.b16 %v492, %v488
    %v545 = vpack.c.b16 %v493, %v489
    %v546 = vpack.c.b16 %v494, %v490
    %v547 = vpack.c.b16 %v499, %v495
    %v548 = vpack.c.b16 %v500, %v496
    %v549 = vpack.c.b16 %v501, %v497
    %v550 = vpack.c.b16 %v502, %v498
    %v551 = vpack.c.b16 %v507, %v503
    %v552 = vpack.c.b16 %v508, %v504
    %v553 = vpack.c.b16 %v509, %v505
    %v554 = vpack.c.b16 %v510, %v506
    %v555 = vpack.c.b16 %v515, %v511
    %v556 = vpack.c.b16 %v516, %v512
    %v557 = vpack.c.b16 %v517, %v513
    %v558 = vpack.c.b16 %v518, %v514
    %v559 = vpack.c.b16 %v523, %v519
    %v560 = vpack.c.b16 %v524, %v520
    %v561 = vpack.c.b16 %v525, %v521
    %v562 = vpack.c.b16 %v526, %v522
    %v563 = vpack.c.b16 %v531, %v527
    %v564 = vpack.c.b16 %v532, %v528
    %v565 = vpack.c.b16 %v533, %v529
    %v566 = vpack.c.b16 %v534, %v530
    %599 = vmatprep.subr.bf16.mxu0 %v536
    %600 = vmatpush1.bf16.msra.mxu0 %v535
    %601 = vmatprep.subr.bf16.mxu0 %v540
    %602 = vmatpush1.bf16.msra.mxu0 %v539
    %603 = vmatprep.subr.bf16.mxu0 %v544
    %604 = vmatpush1.bf16.msra.mxu0 %v543
    %605 = vmatprep.subr.bf16.mxu0 %v548
    %606 = vmatpush1.bf16.msra.mxu0 %v547
    %607 = vmatprep.subr.bf16.mxu0 %v552
    %608 = vmatpush1.bf16.msra.mxu0 %v551
    %609 = vmatprep.subr.bf16.mxu0 %v556
    %610 = vmatpush1.bf16.msra.mxu0 %v555
    %611 = vmatprep.subr.bf16.mxu0 %v560
    %612 = vmatpush1.bf16.msra.mxu0 %v559
    %613 = vmatprep.subr.bf16.mxu0 %v564
    %614 = vmatpush1.bf16.msra.mxu0 %v563
    %615 = vmatprep.subr.bf16.mxu0 0
    %616 = vmatpush1.bf16.msra.mxu0 0
    %617 = vmatprep.subr.bf16.mxu0 0
    %618 = vmatpush1.bf16.msra.mxu0 0
    %619 = vmatprep.subr.bf16.mxu0 0
    %620 = vmatpush1.bf16.msra.mxu0 0
    %621 = vmatprep.subr.bf16.mxu0 0
    %622 = vmatpush1.bf16.msra.mxu0 0
    %623 = vmatprep.subr.bf16.mxu0 0
    %624 = vmatpush1.bf16.msra.mxu0 0
    %625 = vmatprep.subr.bf16.mxu0 0
    %626 = vmatpush1.bf16.msra.mxu0 0
    %627 = vmatprep.subr.bf16.mxu0 0
    %628 = vmatpush1.bf16.msra.mxu0 0
    %629 = vmatprep.subr.bf16.mxu0 0
    %630 = vmatpush1.bf16.msra.mxu0 0
    %631 = vmatprep.mubr.bf16.mxu0 0
    %632 = vmatmul.mubr.bf16.gmra.mrb[0].mxu0 %v406
    %v633 = vpop.f32.mrb[0].mxu0
    %v634 = vadd.f32 0.0, %v633
    %v635 = vpop.f32.mrb[0].mxu0
    %v636 = vadd.f32 0.0, %v635
    %v637 = vpop.f32.mrb[0].mxu0
    %v638 = vpop.f32.mrb[0].mxu0
    %639 = vdwg.mxu0
    %640 = vmatprep.subr.bf16.mxu0 %v538
    %641 = vmatpush1.bf16.msra.mxu0 %v537
    %642 = vmatprep.subr.bf16.mxu0 %v542
    %643 = vmatpush1.bf16.msra.mxu0 %v541
    %644 = vmatprep.subr.bf16.mxu0 %v546
    %645 = vmatpush1.bf16.msra.mxu0 %v545
    %646 = vmatprep.subr.bf16.mxu0 %v550
    %647 = vmatpush1.bf16.msra.mxu0 %v549
    %648 = vmatprep.subr.bf16.mxu0 %v554
    %649 = vmatpush1.bf16.msra.mxu0 %v553
    %650 = vmatprep.subr.bf16.mxu0 %v558
    %651 = vmatpush1.bf16.msra.mxu0 %v557
    %652 = vmatprep.subr.bf16.mxu0 %v562
    %653 = vmatpush1.bf16.msra.mxu0 %v561
    %654 = vmatprep.subr.bf16.mxu0 %v566
    %655 = vmatpush1.bf16.msra.mxu0 %v565
    %656 = vmatprep.subr.bf16.mxu0 0
    %657 = vmatpush1.bf16.msra.mxu0 0
    %658 = vmatprep.subr.bf16.mxu0 0
    %659 = vmatpush1.bf16.msra.mxu0 0
    %660 = vmatprep.subr.bf16.mxu0 0
    %661 = vmatpush1.bf16.msra.mxu0 0
    %662 = vmatprep.subr.bf16.mxu0 0
    %663 = vmatpush1.bf16.msra.mxu0 0
    %664 = vmatprep.subr.bf16.mxu0 0
    %665 = vmatpush1.bf16.msra.mxu0 0
    %666 = vmatprep.subr.bf16.mxu0 0
    %667 = vmatpush1.bf16.msra.mxu0 0
    %668 = vmatprep.subr.bf16.mxu0 0
    %669 = vmatpush1.bf16.msra.mxu0 0
    %670 = vmatprep.subr.bf16.mxu0 0
    %671 = vmatpush1.bf16.msra.mxu0 0
    %672 = vmatprep.mubr.bf16.mxu0 0
    %673 = vmatmul.mubr.bf16.gmra.mrb[0].mxu0 %v406
    %v674 = vpop.f32.mrb[0].mxu0
    %v675 = vadd.f32 0.0, %v674
    %v676 = vpop.f32.mrb[0].mxu0
    %v677 = vadd.f32 0.0, %v676
    %v678 = vpop.f32.mrb[0].mxu0
    %v679 = vpop.f32.mrb[0].mxu0
    %680 = vdwg.mxu0
    %v681 = vadd.f32 %v401, %v634
    %v682 = vadd.f32 %v402, %v636
    %v683 = vadd.f32 %v403, %v675
    %v684 = vadd.f32 %v404, %v677
    %v685 = vmul.f32 %v681, 0.5
    %v686 = vtanh.pop %v685
    %v687 = vmul.f32 %v686, 0.5
    %v688 = vadd.f32 %v687, 0.5
    %v689 = vmul.f32 %v682, 0.5
    %v690 = vtanh.pop %v689
    %v691 = vmul.f32 %v690, 0.5
    %v692 = vadd.f32 %v691, 0.5
    %v693 = vtanh.pop %v683
    %v694 = vmul.f32 %v684, 0.5
    %v695 = vtanh.pop %v694
    %v696 = vmul.f32 %v695, 0.5
    %v697 = vadd.f32 %v696, 0.5
    %v698 = vld [vmem:[#allocation5] sm:$0xff]
    %v699 = vmul.f32 %v692, %v698
    %v700 = vmul.f32 %v688, %v693
    %v701 = vadd.f32 %v699, %v700
    %v702 = vtanh.pop %v701
    %v703 = vmul.f32 %v697, %v702
    %704 = vst [vmem:[#allocation5] sm:$0xff] %v701
    %705 = vst [vmem:[#allocation4] sm:$0xff] %v703
    %706 = vst [vmem:[#allocation2] sm:$0xff] %v703
    %s707 = scalar_lea.vmem [#allocation3], 32
    %v708 = vld [vmem:[%s707] sm:$0xff]
    %v709 = vld [vmem:[%s707 + $0x8] sm:$0xff]
    %v710 = vld [vmem:[%s707 + $0x10] sm:$0xff]
    %v711 = vld [vmem:[%s707 + $0x18] sm:$0xff]
    %v712 = vld [vmem:[#allocation4] sm:$0xff]
    %v713 = vpack.c.bf16 %v712, %v712
    %v714 = vld [vmem:[#allocation11] sm:$0xff]
    %v715 = vld [vmem:[#allocation11 + $0x8] sm:$0xff]
    %v716 = vld [vmem:[#allocation11 + $0x10] sm:$0xff]
    %v717 = vld [vmem:[#allocation11 + $0x18] sm:$0xff]
    %v718 = vld [vmem:[#allocation11 + $0x20] sm:$0xff]
    %v719 = vld [vmem:[#allocation11 + $0x28] sm:$0xff]
    %v720 = vld [vmem:[#allocation11 + $0x30] sm:$0xff]
    %v721 = vld [vmem:[#allocation11 + $0x38] sm:$0xff]
    %v722 = vld [vmem:[#allocation11 + $0x40] sm:$0xff]
    %v723 = vld [vmem:[#allocation11 + $0x48] sm:$0xff]
    %v724 = vld [vmem:[#allocation11 + $0x50] sm:$0xff]
    %v725 = vld [vmem:[#allocation11 + $0x58] sm:$0xff]
    %v726 = vld [vmem:[#allocation11 + $0x60] sm:$0xff]
    %v727 = vld [vmem:[#allocation11 + $0x68] sm:$0xff]
    %v728 = vld [vmem:[#allocation11 + $0x70] sm:$0xff]
    %v729 = vld [vmem:[#allocation11 + $0x78] sm:$0xff]
    %v730 = vld [vmem:[#allocation11 + $0x80] sm:$0xff]
    %v731 = vld [vmem:[#allocation11 + $0x88] sm:$0xff]
    %v732 = vld [vmem:[#allocation11 + $0x90] sm:$0xff]
    %v733 = vld [vmem:[#allocation11 + $0x98] sm:$0xff]
    %v734 = vld [vmem:[#allocation11 + $0xa0] sm:$0xff]
    %v735 = vld [vmem:[#allocation11 + $0xa8] sm:$0xff]
    %v736 = vld [vmem:[#allocation11 + $0xb0] sm:$0xff]
    %v737 = vld [vmem:[#allocation11 + $0xb8] sm:$0xff]
    %v738 = vld [vmem:[#allocation11 + $0xc0] sm:$0xff]
    %v739 = vld [vmem:[#allocation11 + $0xc8] sm:$0xff]
    %v740 = vld [vmem:[#allocation11 + $0xd0] sm:$0xff]
    %v741 = vld [vmem:[#allocation11 + $0xd8] sm:$0xff]
    %v742 = vld [vmem:[#allocation11 + $0xe0] sm:$0xff]
    %v743 = vld [vmem:[#allocation11 + $0xe8] sm:$0xff]
    %v744 = vld [vmem:[#allocation11 + $0xf0] sm:$0xff]
    %v745 = vld [vmem:[#allocation11 + $0xf8] sm:$0xff]
    %v778 = vunpack.c.l.b16 %v714
    %v779 = vunpack.c.h.b16 %v714
    %v780 = vunpack.c.l.b16 %v715
    %v781 = vunpack.c.h.b16 %v715
    %v782 = vunpack.c.l.b16 %v716
    %v783 = vunpack.c.h.b16 %v716
    %v784 = vunpack.c.l.b16 %v717
    %v785 = vunpack.c.h.b16 %v717
    %v786 = vunpack.c.l.b16 %v718
    %v787 = vunpack.c.h.b16 %v718
    %v788 = vunpack.c.l.b16 %v719
    %v789 = vunpack.c.h.b16 %v719
    %v790 = vunpack.c.l.b16 %v720
    %v791 = vunpack.c.h.b16 %v720
    %v792 = vunpack.c.l.b16 %v721
    %v793 = vunpack.c.h.b16 %v721
    %v794 = vunpack.c.l.b16 %v722
    %v795 = vunpack.c.h.b16 %v722
    %v796 = vunpack.c.l.b16 %v723
    %v797 = vunpack.c.h.b16 %v723
    %v798 = vunpack.c.l.b16 %v724
    %v799 = vunpack.c.h.b16 %v724
    %v800 = vunpack.c.l.b16 %v725
    %v801 = vunpack.c.h.b16 %v725
    %v802 = vunpack.c.l.b16 %v726
    %v803 = vunpack.c.h.b16 %v726
    %v804 = vunpack.c.l.b16 %v727
    %v805 = vunpack.c.h.b16 %v727
    %v806 = vunpack.c.l.b16 %v728
    %v807 = vunpack.c.h.b16 %v728
    %v808 = vunpack.c.l.b16 %v729
    %v809 = vunpack.c.h.b16 %v729
    %v810 = vunpack.c.l.b16 %v730
    %v811 = vunpack.c.h.b16 %v730
    %v812 = vunpack.c.l.b16 %v731
    %v813 = vunpack.c.h.b16 %v731
    %v814 = vunpack.c.l.b16 %v732
    %v815 = vunpack.c.h.b16 %v732
    %v816 = vunpack.c.l.b16 %v733
    %v817 = vunpack.c.h.b16 %v733
    %v818 = vunpack.c.l.b16 %v734
    %v819 = vunpack.c.h.b16 %v734
    %v820 = vunpack.c.l.b16 %v735
    %v821 = vunpack.c.h.b16 %v735
    %v822 = vunpack.c.l.b16 %v736
    %v823 = vunpack.c.h.b16 %v736
    %v824 = vunpack.c.l.b16 %v737
    %v825 = vunpack.c.h.b16 %v737
    %v826 = vunpack.c.l.b16 %v738
    %v827 = vunpack.c.h.b16 %v738
    %v828 = vunpack.c.l.b16 %v739
    %v829 = vunpack.c.h.b16 %v739
    %v830 = vunpack.c.l.b16 %v740
    %v831 = vunpack.c.h.b16 %v740
    %v832 = vunpack.c.l.b16 %v741
    %v833 = vunpack.c.h.b16 %v741
    %v834 = vunpack.c.l.b16 %v742
    %v835 = vunpack.c.h.b16 %v742
    %v836 = vunpack.c.l.b16 %v743
    %v837 = vunpack.c.h.b16 %v743
    %v838 = vunpack.c.l.b16 %v744
    %v839 = vunpack.c.h.b16 %v744
    %v840 = vunpack.c.l.b16 %v745
    %v841 = vunpack.c.h.b16 %v745
    %v842 = vpack.c.b16 %v782, %v778
    %v843 = vpack.c.b16 %v783, %v779
    %v844 = vpack.c.b16 %v784, %v780
    %v845 = vpack.c.b16 %v785, %v781
    %v846 = vpack.c.b16 %v790, %v786
    %v847 = vpack.c.b16 %v791, %v787
    %v848 = vpack.c.b16 %v792, %v788
    %v849 = vpack.c.b16 %v793, %v789
    %v850 = vpack.c.b16 %v798, %v794
    %v851 = vpack.c.b16 %v799, %v795
    %v852 = vpack.c.b16 %v800, %v796
    %v853 = vpack.c.b16 %v801, %v797
    %v854 = vpack.c.b16 %v806, %v802
    %v855 = vpack.c.b16 %v807, %v803
    %v856 = vpack.c.b16 %v808, %v804
    %v857 = vpack.c.b16 %v809, %v805
    %v858 = vpack.c.b16 %v814, %v810
    %v859 = vpack.c.b16 %v815, %v811
    %v860 = vpack.c.b16 %v816, %v812
    %v861 = vpack.c.b16 %v817, %v813
    %v862 = vpack.c.b16 %v822, %v818
    %v863 = vpack.c.b16 %v823, %v819
    %v864 = vpack.c.b16 %v824, %v820
    %v865 = vpack.c.b16 %v825, %v821
    %v866 = vpack.c.b16 %v830, %v826
    %v867 = vpack.c.b16 %v831, %v827
    %v868 = vpack.c.b16 %v832, %v828
    %v869 = vpack.c.b16 %v833, %v829
    %v870 = vpack.c.b16 %v838, %v834
    %v871 = vpack.c.b16 %v839, %v835
    %v872 = vpack.c.b16 %v840, %v836
    %v873 = vpack.c.b16 %v841, %v837
    %906 = vmatprep.subr.bf16.mxu0 %v843
    %907 = vmatpush1.bf16.msra.mxu0 %v842
    %908 = vmatprep.subr.bf16.mxu0 %v847
    %909 = vmatpush1.bf16.msra.mxu0 %v846
    %910 = vmatprep.subr.bf16.mxu0 %v851
    %911 = vmatpush1.bf16.msra.mxu0 %v850
    %912 = vmatprep.subr.bf16.mxu0 %v855
    %913 = vmatpush1.bf16.msra.mxu0 %v854
    %914 = vmatprep.subr.bf16.mxu0 %v859
    %915 = vmatpush1.bf16.msra.mxu0 %v858
    %916 = vmatprep.subr.bf16.mxu0 %v863
    %917 = vmatpush1.bf16.msra.mxu0 %v862
    %918 = vmatprep.subr.bf16.mxu0 %v867
    %919 = vmatpush1.bf16.msra.mxu0 %v866
    %920 = vmatprep.subr.bf16.mxu0 %v871
    %921 = vmatpush1.bf16.msra.mxu0 %v870
    %922 = vmatprep.subr.bf16.mxu0 0
    %923 = vmatpush1.bf16.msra.mxu0 0
    %924 = vmatprep.subr.bf16.mxu0 0
    %925 = vmatpush1.bf16.msra.mxu0 0
    %926 = vmatprep.subr.bf16.mxu0 0
    %927 = vmatpush1.bf16.msra.mxu0 0
    %928 = vmatprep.subr.bf16.mxu0 0
    %929 = vmatpush1.bf16.msra.mxu0 0
    %930 = vmatprep.subr.bf16.mxu0 0
    %931 = vmatpush1.bf16.msra.mxu0 0
    %932 = vmatprep.subr.bf16.mxu0 0
    %933 = vmatpush1.bf16.msra.mxu0 0
    %934 = vmatprep.subr.bf16.mxu0 0
    %935 = vmatpush1.bf16.msra.mxu0 0
    %936 = vmatprep.subr.bf16.mxu0 0
    %937 = vmatpush1.bf16.msra.mxu0 0
    %938 = vmatprep.mubr.bf16.mxu0 0
    %939 = vmatmul.mubr.bf16.gmra.mrb[0].mxu0 %v713
    %v940 = vpop.f32.mrb[0].mxu0
    %v941 = vadd.f32 0.0, %v940
    %v942 = vpop.f32.mrb[0].mxu0
    %v943 = vadd.f32 0.0, %v942
    %v944 = vpop.f32.mrb[0].mxu0
    %v945 = vpop.f32.mrb[0].mxu0
    %946 = vdwg.mxu0
    %947 = vmatprep.subr.bf16.mxu0 %v845
    %948 = vmatpush1.bf16.msra.mxu0 %v844
    %949 = vmatprep.subr.bf16.mxu0 %v849
    %950 = vmatpush1.bf16.msra.mxu0 %v848
    %951 = vmatprep.subr.bf16.mxu0 %v853
    %952 = vmatpush1.bf16.msra.mxu0 %v852
    %953 = vmatprep.subr.bf16.mxu0 %v857
    %954 = vmatpush1.bf16.msra.mxu0 %v856
    %955 = vmatprep.subr.bf16.mxu0 %v861
    %956 = vmatpush1.bf16.msra.mxu0 %v860
    %957 = vmatprep.subr.bf16.mxu0 %v865
    %958 = vmatpush1.bf16.msra.mxu0 %v864
    %959 = vmatprep.subr.bf16.mxu0 %v869
    %960 = vmatpush1.bf16.msra.mxu0 %v868
    %961 = vmatprep.subr.bf16.mxu0 %v873
    %962 = vmatpush1.bf16.msra.mxu0 %v872
    %963 = vmatprep.subr.bf16.mxu0 0
    %964 = vmatpush1.bf16.msra.mxu0 0
    %965 = vmatprep.subr.bf16.mxu0 0
    %966 = vmatpush1.bf16.msra.mxu0 0
    %967 = vmatprep.subr.bf16.mxu0 0
    %968 = vmatpush1.bf16.msra.mxu0 0
    %969 = vmatprep.subr.bf16.mxu0 0
    %970 = vmatpush1.bf16.msra.mxu0 0
    %971 = vmatprep.subr.bf16.mxu0 0
    %972 = vmatpush1.bf16.msra.mxu0 0
    %973 = vmatprep.subr.bf16.mxu0 0
    %974 = vmatpush1.bf16.msra.mxu0 0
    %975 = vmatprep.subr.bf16.mxu0 0
    %976 = vmatpush1.bf16.msra.mxu0 0
    %977 = vmatprep.subr.bf16.mxu0 0
    %978 = vmatpush1.bf16.msra.mxu0 0
    %979 = vmatprep.mubr.bf16.mxu0 0
    %980 = vmatmul.mubr.bf16.gmra.mrb[0].mxu0 %v713
    %v981 = vpop.f32.mrb[0].mxu0
    %v982 = vadd.f32 0.0, %v981
    %v983 = vpop.f32.mrb[0].mxu0
    %v984 = vadd.f32 0.0, %v983
    %v985 = vpop.f32.mrb[0].mxu0
    %v986 = vpop.f32.mrb[0].mxu0
    %987 = vdwg.mxu0
    %v988 = vadd.f32 %v708, %v941
    %v989 = vadd.f32 %v709, %v943
    %v990 = vadd.f32 %v710, %v982
    %v991 = vadd.f32 %v711, %v984
    %v992 = vmul.f32 %v988, 0.5
    %v993 = vtanh.pop %v992
    %v994 = vmul.f32 %v993, 0.5
    %v995 = vadd.f32 %v994, 0.5
    %v996 = vmul.f32 %v989, 0.5
    %v997 = vtanh.pop %v996
    %v998 = vmul.f32 %v997, 0.5
    %v999 = vadd.f32 %v998, 0.5
    %v1000 = vtanh.pop %v990
    %v1001 = vmul.f32 %v991, 0.5
    %v1002 = vtanh.pop %v1001
    %v1003 = vmul.f32 %v1002, 0.5
    %v1004 = vadd.f32 %v1003, 0.5
    %v1005 = vld [vmem:[#allocation5] sm:$0xff]
    %v1006 = vmul.f32 %v999, %v1005
    %v1007 = vmul.f32 %v995, %v1000
    %v1008 = vadd.f32 %v1006, %v1007
    %v1009 = vtanh.pop %v1008
    %v1010 = vmul.f32 %v1004, %v1009
    %1011 = vst [vmem:[#allocation5] sm:$0xff] %v1008
    %1012 = vst [vmem:[#allocation4] sm:$0xff] %v1010
    %s1013 = scalar_lea.vmem [#allocation2], 8
    %1014 = vst [vmem:[%s1013] sm:$0xff] %v1010
    %s1015 = scalar_lea.vmem [#allocation3], 64
    %v1016 = vld [vmem:[%s1015] sm:$0xff]
    %v1017 = vld [vmem:[%s1015 + $0x8] sm:$0xff]
    %v1018 = vld [vmem:[%s1015 + $0x10] sm:$0xff]
    %v1019 = vld [vmem:[%s1015 + $0x18] sm:$0xff]
    %v1020 = vld [vmem:[#allocation4] sm:$0xff]
    %v1021 = vpack.c.bf16 %v1020, %v1020
    %v1022 = vld [vmem:[#allocation11] sm:$0xff]
    %v1023 = vld [vmem:[#allocation11 + $0x8] sm:$0xff]
    %v1024 = vld [vmem:[#allocation11 + $0x10] sm:$0xff]
    %v1025 = vld [vmem:[#allocation11 + $0x18] sm:$0xff]
    %v1026 = vld [vmem:[#allocation11 + $0x20] sm:$0xff]
    %v1027 = vld [vmem:[#allocation11 + $0x28] sm:$0xff]
    %v1028 = vld [vmem:[#allocation11 + $0x30] sm:$0xff]
    %v1029 = vld [vmem:[#allocation11 + $0x38] sm:$0xff]
    %v1030 = vld [vmem:[#allocation11 + $0x40] sm:$0xff]
    %v1031 = vld [vmem:[#allocation11 + $0x48] sm:$0xff]
    %v1032 = vld [vmem:[#allocation11 + $0x50] sm:$0xff]
    %v1033 = vld [vmem:[#allocation11 + $0x58] sm:$0xff]
    %v1034 = vld [vmem:[#allocation11 + $0x60] sm:$0xff]
    %v1035 = vld [vmem:[#allocation11 + $0x68] sm:$0xff]
    %v1036 = vld [vmem:[#allocation11 + $0x70] sm:$0xff]
    %v1037 = vld [vmem:[#allocation11 + $0x78] sm:$0xff]
    %v1038 = vld [vmem:[#allocation11 + $0x80] sm:$0xff]
    %v1039 = vld [vmem:[#allocation11 + $0x88] sm:$0xff]
    %v1040 = vld [vmem:[#allocation11 + $0x90] sm:$0xff]
    %v1041 = vld [vmem:[#allocation11 + $0x98] sm:$0xff]
    %v1042 = vld [vmem:[#allocation11 + $0xa0] sm:$0xff]
    %v1043 = vld [vmem:[#allocation11 + $0xa8] sm:$0xff]
    %v1044 = vld [vmem:[#allocation11 + $0xb0] sm:$0xff]
    %v1045 = vld [vmem:[#allocation11 + $0xb8] sm:$0xff]
    %v1046 = vld [vmem:[#allocation11 + $0xc0] sm:$0xff]
    %v1047 = vld [vmem:[#allocation11 + $0xc8] sm:$0xff]
    %v1048 = vld [vmem:[#allocation11 + $0xd0] sm:$0xff]
    %v1049 = vld [vmem:[#allocation11 + $0xd8] sm:$0xff]
    %v1050 = vld [vmem:[#allocation11 + $0xe0] sm:$0xff]
    %v1051 = vld [vmem:[#allocation11 + $0xe8] sm:$0xff]
    %v1052 = vld [vmem:[#allocation11 + $0xf0] sm:$0xff]
    %v1053 = vld [vmem:[#allocation11 + $0xf8] sm:$0xff]
    %v1086 = vunpack.c.l.b16 %v1022
    %v1087 = vunpack.c.h.b16 %v1022
    %v1088 = vunpack.c.l.b16 %v1023
    %v1089 = vunpack.c.h.b16 %v1023
    %v1090 = vunpack.c.l.b16 %v1024
    %v1091 = vunpack.c.h.b16 %v1024
    %v1092 = vunpack.c.l.b16 %v1025
    %v1093 = vunpack.c.h.b16 %v1025
    %v1094 = vunpack.c.l.b16 %v1026
    %v1095 = vunpack.c.h.b16 %v1026
    %v1096 = vunpack.c.l.b16 %v1027
    %v1097 = vunpack.c.h.b16 %v1027
    %v1098 = vunpack.c.l.b16 %v1028
    %v1099 = vunpack.c.h.b16 %v1028
    %v1100 = vunpack.c.l.b16 %v1029
    %v1101 = vunpack.c.h.b16 %v1029
    %v1102 = vunpack.c.l.b16 %v1030
    %v1103 = vunpack.c.h.b16 %v1030
    %v1104 = vunpack.c.l.b16 %v1031
    %v1105 = vunpack.c.h.b16 %v1031
    %v1106 = vunpack.c.l.b16 %v1032
    %v1107 = vunpack.c.h.b16 %v1032
    %v1108 = vunpack.c.l.b16 %v1033
    %v1109 = vunpack.c.h.b16 %v1033
    %v1110 = vunpack.c.l.b16 %v1034
    %v1111 = vunpack.c.h.b16 %v1034
    %v1112 = vunpack.c.l.b16 %v1035
    %v1113 = vunpack.c.h.b16 %v1035
    %v1114 = vunpack.c.l.b16 %v1036
    %v1115 = vunpack.c.h.b16 %v1036
    %v1116 = vunpack.c.l.b16 %v1037
    %v1117 = vunpack.c.h.b16 %v1037
    %v1118 = vunpack.c.l.b16 %v1038
    %v1119 = vunpack.c.h.b16 %v1038
    %v1120 = vunpack.c.l.b16 %v1039
    %v1121 = vunpack.c.h.b16 %v1039
    %v1122 = vunpack.c.l.b16 %v1040
    %v1123 = vunpack.c.h.b16 %v1040
    %v1124 = vunpack.c.l.b16 %v1041
    %v1125 = vunpack.c.h.b16 %v1041
    %v1126 = vunpack.c.l.b16 %v1042
    %v1127 = vunpack.c.h.b16 %v1042
    %v1128 = vunpack.c.l.b16 %v1043
    %v1129 = vunpack.c.h.b16 %v1043
    %v1130 = vunpack.c.l.b16 %v1044
    %v1131 = vunpack.c.h.b16 %v1044
    %v1132 = vunpack.c.l.b16 %v1045
    %v1133 = vunpack.c.h.b16 %v1045
    %v1134 = vunpack.c.l.b16 %v1046
    %v1135 = vunpack.c.h.b16 %v1046
    %v1136 = vunpack.c.l.b16 %v1047
    %v1137 = vunpack.c.h.b16 %v1047
    %v1138 = vunpack.c.l.b16 %v1048
    %v1139 = vunpack.c.h.b16 %v1048
    %v1140 = vunpack.c.l.b16 %v1049
    %v1141 = vunpack.c.h.b16 %v1049
    %v1142 = vunpack.c.l.b16 %v1050
    %v1143 = vunpack.c.h.b16 %v1050
    %v1144 = vunpack.c.l.b16 %v1051
    %v1145 = vunpack.c.h.b16 %v1051
    %v1146 = vunpack.c.l.b16 %v1052
    %v1147 = vunpack.c.h.b16 %v1052
    %v1148 = vunpack.c.l.b16 %v1053
    %v1149 = vunpack.c.h.b16 %v1053
    %v1150 = vpack.c.b16 %v1090, %v1086
    %v1151 = vpack.c.b16 %v1091, %v1087
    %v1152 = vpack.c.b16 %v1092, %v1088
    %v1153 = vpack.c.b16 %v1093, %v1089
    %v1154 = vpack.c.b16 %v1098, %v1094
    %v1155 = vpack.c.b16 %v1099, %v1095
    %v1156 = vpack.c.b16 %v1100, %v1096
    %v1157 = vpack.c.b16 %v1101, %v1097
    %v1158 = vpack.c.b16 %v1106, %v1102
    %v1159 = vpack.c.b16 %v1107, %v1103
    %v1160 = vpack.c.b16 %v1108, %v1104
    %v1161 = vpack.c.b16 %v1109, %v1105
    %v1162 = vpack.c.b16 %v1114, %v1110
    %v1163 = vpack.c.b16 %v1115, %v1111
    %v1164 = vpack.c.b16 %v1116, %v1112
    %v1165 = vpack.c.b16 %v1117, %v1113
    %v1166 = vpack.c.b16 %v1122, %v1118
    %v1167 = vpack.c.b16 %v1123, %v1119
    %v1168 = vpack.c.b16 %v1124, %v1120
    %v1169 = vpack.c.b16 %v1125, %v1121
    %v1170 = vpack.c.b16 %v1130, %v1126
    %v1171 = vpack.c.b16 %v1131, %v1127
    %v1172 = vpack.c.b16 %v1132, %v1128
    %v1173 = vpack.c.b16 %v1133, %v1129
    %v1174 = vpack.c.b16 %v1138, %v1134
    %v1175 = vpack.c.b16 %v1139, %v1135
    %v1176 = vpack.c.b16 %v1140, %v1136
    %v1177 = vpack.c.b16 %v1141, %v1137
    %v1178 = vpack.c.b16 %v1146, %v1142
    %v1179 = vpack.c.b16 %v1147, %v1143
    %v1180 = vpack.c.b16 %v1148, %v1144
    %v1181 = vpack.c.b16 %v1149, %v1145
    %1214 = vmatprep.subr.bf16.mxu0 %v1151
    %1215 = vmatpush1.bf16.msra.mxu0 %v1150
    %1216 = vmatprep.subr.bf16.mxu0 %v1155
    %1217 = vmatpush1.bf16.msra.mxu0 %v1154
    %1218 = vmatprep.subr.bf16.mxu0 %v1159
    %1219 = vmatpush1.bf16.msra.mxu0 %v1158
    %1220 = vmatprep.subr.bf16.mxu0 %v1163
    %1221 = vmatpush1.bf16.msra.mxu0 %v1162
    %1222 = vmatprep.subr.bf16.mxu0 %v1167
    %1223 = vmatpush1.bf16.msra.mxu0 %v1166
    %1224 = vmatprep.subr.bf16.mxu0 %v1171
    %1225 = vmatpush1.bf16.msra.mxu0 %v1170
    %1226 = vmatprep.subr.bf16.mxu0 %v1175
    %1227 = vmatpush1.bf16.msra.mxu0 %v1174
    %1228 = vmatprep.subr.bf16.mxu0 %v1179
    %1229 = vmatpush1.bf16.msra.mxu0 %v1178
    %1230 = vmatprep.subr.bf16.mxu0 0
    %1231 = vmatpush1.bf16.msra.mxu0 0
    %1232 = vmatprep.subr.bf16.mxu0 0
    %1233 = vmatpush1.bf16.msra.mxu0 0
    %1234 = vmatprep.subr.bf16.mxu0 0
    %1235 = vmatpush1.bf16.msra.mxu0 0
    %1236 = vmatprep.subr.bf16.mxu0 0
    %1237 = vmatpush1.bf16.msra.mxu0 0
    %1238 = vmatprep.subr.bf16.mxu0 0
    %1239 = vmatpush1.bf16.msra.mxu0 0
    %1240 = vmatprep.subr.bf16.mxu0 0
    %1241 = vmatpush1.bf16.msra.mxu0 0
    %1242 = vmatprep.subr.bf16.mxu0 0
    %1243 = vmatpush1.bf16.msra.mxu0 0
    %1244 = vmatprep.subr.bf16.mxu0 0
    %1245 = vmatpush1.bf16.msra.mxu0 0
    %1246 = vmatprep.mubr.bf16.mxu0 0
    %1247 = vmatmul.mubr.bf16.gmra.mrb[0].mxu0 %v1021
    %v1248 = vpop.f32.mrb[0].mxu0
    %v1249 = vadd.f32 0.0, %v1248
    %v1250 = vpop.f32.mrb[0].mxu0
    %v1251 = vadd.f32 0.0, %v1250
    %v1252 = vpop.f32.mrb[0].mxu0
    %v1253 = vpop.f32.mrb[0].mxu0
    %1254 = vdwg.mxu0
    %1255 = vmatprep.subr.bf16.mxu0 %v1153
    %1256 = vmatpush1.bf16.msra.mxu0 %v1152
    %1257 = vmatprep.subr.bf16.mxu0 %v1157
    %1258 = vmatpush1.bf16.msra.mxu0 %v1156
    %1259 = vmatprep.subr.bf16.mxu0 %v1161
    %1260 = vmatpush1.bf16.msra.mxu0 %v1160
    %1261 = vmatprep.subr.bf16.mxu0 %v1165
    %1262 = vmatpush1.bf16.msra.mxu0 %v1164
    %1263 = vmatprep.subr.bf16.mxu0 %v1169
    %1264 = vmatpush1.bf16.msra.mxu0 %v1168
    %1265 = vmatprep.subr.bf16.mxu0 %v1173
    %1266 = vmatpush1.bf16.msra.mxu0 %v1172
    %1267 = vmatprep.subr.bf16.mxu0 %v1177
    %1268 = vmatpush1.bf16.msra.mxu0 %v1176
    %1269 = vmatprep.subr.bf16.mxu0 %v1181
    %1270 = vmatpush1.bf16.msra.mxu0 %v1180
    %1271 = vmatprep.subr.bf16.mxu0 0
    %1272 = vmatpush1.bf16.msra.mxu0 0
    %1273 = vmatprep.subr.bf16.mxu0 0
    %1274 = vmatpush1.bf16.msra.mxu0 0
    %1275 = vmatprep.subr.bf16.mxu0 0
    %1276 = vmatpush1.bf16.msra.mxu0 0
    %1277 = vmatprep.subr.bf16.mxu0 0
    %1278 = vmatpush1.bf16.msra.mxu0 0
    %1279 = vmatprep.subr.bf16.mxu0 0
    %1280 = vmatpush1.bf16.msra.mxu0 0
    %1281 = vmatprep.subr.bf16.mxu0 0
    %1282 = vmatpush1.bf16.msra.mxu0 0
    %1283 = vmatprep.subr.bf16.mxu0 0
    %1284 = vmatpush1.bf16.msra.mxu0 0
    %1285 = vmatprep.subr.bf16.mxu0 0
    %1286 = vmatpush1.bf16.msra.mxu0 0
    %1287 = vmatprep.mubr.bf16.mxu0 0
    %1288 = vmatmul.mubr.bf16.gmra.mrb[0].mxu0 %v1021
    %v1289 = vpop.f32.mrb[0].mxu0
    %v1290 = vadd.f32 0.0, %v1289
    %v1291 = vpop.f32.mrb[0].mxu0
    %v1292 = vadd.f32 0.0, %v1291
    %v1293 = vpop.f32.mrb[0].mxu0
    %v1294 = vpop.f32.mrb[0].mxu0
    %1295 = vdwg.mxu0
    %v1296 = vadd.f32 %v1016, %v1249
    %v1297 = vadd.f32 %v1017, %v1251
    %v1298 = vadd.f32 %v1018, %v1290
    %v1299 = vadd.f32 %v1019, %v1292
    %v1300 = vmul.f32 %v1296, 0.5
    %v1301 = vtanh.pop %v1300
    %v1302 = vmul.f32 %v1301, 0.5
    %v1303 = vadd.f32 %v1302, 0.5
    %v1304 = vmul.f32 %v1297, 0.5
    %v1305 = vtanh.pop %v1304
    %v1306 = vmul.f32 %v1305, 0.5
    %v1307 = vadd.f32 %v1306, 0.5
    %v1308 = vtanh.pop %v1298
    %v1309 = vmul.f32 %v1299, 0.5
    %v1310 = vtanh.pop %v1309
    %v1311 = vmul.f32 %v1310, 0.5
    %v1312 = vadd.f32 %v1311, 0.5
    %v1313 = vld [vmem:[#allocation5] sm:$0xff]
    %v1314 = vmul.f32 %v1307, %v1313
    %v1315 = vmul.f32 %v1303, %v1308
    %v1316 = vadd.f32 %v1314, %v1315
    %v1317 = vtanh.pop %v1316
    %v1318 = vmul.f32 %v1312, %v1317
    %1319 = vst [vmem:[#allocation5] sm:$0xff] %v1316
    %1320 = vst [vmem:[#allocation4] sm:$0xff] %v1318
    %s1321 = scalar_lea.vmem [#allocation2], 16
    %1322 = vst [vmem:[%s1321] sm:$0xff] %v1318
    %s1323 = scalar_lea.vmem [#allocation3], 96
    %v1324 = vld [vmem:[%s1323] sm:$0xff]
    %v1325 = vld [vmem:[%s1323 + $0x8] sm:$0xff]
    %v1326 = vld [vmem:[%s1323 + $0x10] sm:$0xff]
    %v1327 = vld [vmem:[%s1323 + $0x18] sm:$0xff]
    %v1328 = vld [vmem:[#allocation4] sm:$0xff]
    %v1329 = vpack.c.bf16 %v1328, %v1328
    %v1330 = vld [vmem:[#allocation11] sm:$0xff]
    %v1331 = vld [vmem:[#allocation11 + $0x8] sm:$0xff]
    %v1332 = vld [vmem:[#allocation11 + $0x10] sm:$0xff]
    %v1333 = vld [vmem:[#allocation11 + $0x18] sm:$0xff]
    %v1334 = vld [vmem:[#allocation11 + $0x20] sm:$0xff]
    %v1335 = vld [vmem:[#allocation11 + $0x28] sm:$0xff]
    %v1336 = vld [vmem:[#allocation11 + $0x30] sm:$0xff]
    %v1337 = vld [vmem:[#allocation11 + $0x38] sm:$0xff]
    %v1338 = vld [vmem:[#allocation11 + $0x40] sm:$0xff]
    %v1339 = vld [vmem:[#allocation11 + $0x48] sm:$0xff]
    %v1340 = vld [vmem:[#allocation11 + $0x50] sm:$0xff]
    %v1341 = vld [vmem:[#allocation11 + $0x58] sm:$0xff]
    %v1342 = vld [vmem:[#allocation11 + $0x60] sm:$0xff]
    %v1343 = vld [vmem:[#allocation11 + $0x68] sm:$0xff]
    %v1344 = vld [vmem:[#allocation11 + $0x70] sm:$0xff]
    %v1345 = vld [vmem:[#allocation11 + $0x78] sm:$0xff]
    %v1346 = vld [vmem:[#allocation11 + $0x80] sm:$0xff]
    %v1347 = vld [vmem:[#allocation11 + $0x88] sm:$0xff]
    %v1348 = vld [vmem:[#allocation11 + $0x90] sm:$0xff]
    %v1349 = vld [vmem:[#allocation11 + $0x98] sm:$0xff]
    %v1350 = vld [vmem:[#allocation11 + $0xa0] sm:$0xff]
    %v1351 = vld [vmem:[#allocation11 + $0xa8] sm:$0xff]
    %v1352 = vld [vmem:[#allocation11 + $0xb0] sm:$0xff]
    %v1353 = vld [vmem:[#allocation11 + $0xb8] sm:$0xff]
    %v1354 = vld [vmem:[#allocation11 + $0xc0] sm:$0xff]
    %v1355 = vld [vmem:[#allocation11 + $0xc8] sm:$0xff]
    %v1356 = vld [vmem:[#allocation11 + $0xd0] sm:$0xff]
    %v1357 = vld [vmem:[#allocation11 + $0xd8] sm:$0xff]
    %v1358 = vld [vmem:[#allocation11 + $0xe0] sm:$0xff]
    %v1359 = vld [vmem:[#allocation11 + $0xe8] sm:$0xff]
    %v1360 = vld [vmem:[#allocation11 + $0xf0] sm:$0xff]
    %v1361 = vld [vmem:[#allocation11 + $0xf8] sm:$0xff]
    %v1394 = vunpack.c.l.b16 %v1330
    %v1395 = vunpack.c.h.b16 %v1330
    %v1396 = vunpack.c.l.b16 %v1331
    %v1397 = vunpack.c.h.b16 %v1331
    %v1398 = vunpack.c.l.b16 %v1332
    %v1399 = vunpack.c.h.b16 %v1332
    %v1400 = vunpack.c.l.b16 %v1333
    %v1401 = vunpack.c.h.b16 %v1333
    %v1402 = vunpack.c.l.b16 %v1334
    %v1403 = vunpack.c.h.b16 %v1334
    %v1404 = vunpack.c.l.b16 %v1335
    %v1405 = vunpack.c.h.b16 %v1335
    %v1406 = vunpack.c.l.b16 %v1336
    %v1407 = vunpack.c.h.b16 %v1336
    %v1408 = vunpack.c.l.b16 %v1337
    %v1409 = vunpack.c.h.b16 %v1337
    %v1410 = vunpack.c.l.b16 %v1338
    %v1411 = vunpack.c.h.b16 %v1338
    %v1412 = vunpack.c.l.b16 %v1339
    %v1413 = vunpack.c.h.b16 %v1339
    %v1414 = vunpack.c.l.b16 %v1340
    %v1415 = vunpack.c.h.b16 %v1340
    %v1416 = vunpack.c.l.b16 %v1341
    %v1417 = vunpack.c.h.b16 %v1341
    %v1418 = vunpack.c.l.b16 %v1342
    %v1419 = vunpack.c.h.b16 %v1342
    %v1420 = vunpack.c.l.b16 %v1343
    %v1421 = vunpack.c.h.b16 %v1343
    %v1422 = vunpack.c.l.b16 %v1344
    %v1423 = vunpack.c.h.b16 %v1344
    %v1424 = vunpack.c.l.b16 %v1345
    %v1425 = vunpack.c.h.b16 %v1345
    %v1426 = vunpack.c.l.b16 %v1346
    %v1427 = vunpack.c.h.b16 %v1346
    %v1428 = vunpack.c.l.b16 %v1347
    %v1429 = vunpack.c.h.b16 %v1347
    %v1430 = vunpack.c.l.b16 %v1348
    %v1431 = vunpack.c.h.b16 %v1348
    %v1432 = vunpack.c.l.b16 %v1349
    %v1433 = vunpack.c.h.b16 %v1349
    %v1434 = vunpack.c.l.b16 %v1350
    %v1435 = vunpack.c.h.b16 %v1350
    %v1436 = vunpack.c.l.b16 %v1351
    %v1437 = vunpack.c.h.b16 %v1351
    %v1438 = vunpack.c.l.b16 %v1352
    %v1439 = vunpack.c.h.b16 %v1352
    %v1440 = vunpack.c.l.b16 %v1353
    %v1441 = vunpack.c.h.b16 %v1353
    %v1442 = vunpack.c.l.b16 %v1354
    %v1443 = vunpack.c.h.b16 %v1354
    %v1444 = vunpack.c.l.b16 %v1355
    %v1445 = vunpack.c.h.b16 %v1355
    %v1446 = vunpack.c.l.b16 %v1356
    %v1447 = vunpack.c.h.b16 %v1356
    %v1448 = vunpack.c.l.b16 %v1357
    %v1449 = vunpack.c.h.b16 %v1357
    %v1450 = vunpack.c.l.b16 %v1358
    %v1451 = vunpack.c.h.b16 %v1358
    %v1452 = vunpack.c.l.b16 %v1359
    %v1453 = vunpack.c.h.b16 %v1359
    %v1454 = vunpack.c.l.b16 %v1360
    %v1455 = vunpack.c.h.b16 %v1360
    %v1456 = vunpack.c.l.b16 %v1361
    %v1457 = vunpack.c.h.b16 %v1361
    %v1458 = vpack.c.b16 %v1398, %v1394
    %v1459 = vpack.c.b16 %v1399, %v1395
    %v1460 = vpack.c.b16 %v1400, %v1396
    %v1461 = vpack.c.b16 %v1401, %v1397
    %v1462 = vpack.c.b16 %v1406, %v1402
    %v1463 = vpack.c.b16 %v1407, %v1403
    %v1464 = vpack.c.b16 %v1408, %v1404
    %v1465 = vpack.c.b16 %v1409, %v1405
    %v1466 = vpack.c.b16 %v1414, %v1410
    %v1467 = vpack.c.b16 %v1415, %v1411
    %v1468 = vpack.c.b16 %v1416, %v1412
    %v1469 = vpack.c.b16 %v1417, %v1413
    %v1470 = vpack.c.b16 %v1422, %v1418
    %v1471 = vpack.c.b16 %v1423, %v1419
    %v1472 = vpack.c.b16 %v1424, %v1420
    %v1473 = vpack.c.b16 %v1425, %v1421
    %v1474 = vpack.c.b16 %v1430, %v1426
    %v1475 = vpack.c.b16 %v1431, %v1427
    %v1476 = vpack.c.b16 %v1432, %v1428
    %v1477 = vpack.c.b16 %v1433, %v1429
    %v1478 = vpack.c.b16 %v1438, %v1434
    %v1479 = vpack.c.b16 %v1439, %v1435
    %v1480 = vpack.c.b16 %v1440, %v1436
    %v1481 = vpack.c.b16 %v1441, %v1437
    %v1482 = vpack.c.b16 %v1446, %v1442
    %v1483 = vpack.c.b16 %v1447, %v1443
    %v1484 = vpack.c.b16 %v1448, %v1444
    %v1485 = vpack.c.b16 %v1449, %v1445
    %v1486 = vpack.c.b16 %v1454, %v1450
    %v1487 = vpack.c.b16 %v1455, %v1451
    %v1488 = vpack.c.b16 %v1456, %v1452
    %v1489 = vpack.c.b16 %v1457, %v1453
    %1522 = vmatprep.subr.bf16.mxu0 %v1459
    %1523 = vmatpush1.bf16.msra.mxu0 %v1458
    %1524 = vmatprep.subr.bf16.mxu0 %v1463
    %1525 = vmatpush1.bf16.msra.mxu0 %v1462
    %1526 = vmatprep.subr.bf16.mxu0 %v1467
    %1527 = vmatpush1.bf16.msra.mxu0 %v1466
    %1528 = vmatprep.subr.bf16.mxu0 %v1471
    %1529 = vmatpush1.bf16.msra.mxu0 %v1470
    %1530 = vmatprep.subr.bf16.mxu0 %v1475
    %1531 = vmatpush1.bf16.msra.mxu0 %v1474
    %1532 = vmatprep.subr.bf16.mxu0 %v1479
    %1533 = vmatpush1.bf16.msra.mxu0 %v1478
    %1534 = vmatprep.subr.bf16.mxu0 %v1483
    %1535 = vmatpush1.bf16.msra.mxu0 %v1482
    %1536 = vmatprep.subr.bf16.mxu0 %v1487
    %1537 = vmatpush1.bf16.msra.mxu0 %v1486
    %1538 = vmatprep.subr.bf16.mxu0 0
    %1539 = vmatpush1.bf16.msra.mxu0 0
    %1540 = vmatprep.subr.bf16.mxu0 0
    %1541 = vmatpush1.bf16.msra.mxu0 0
    %1542 = vmatprep.subr.bf16.mxu0 0
    %1543 = vmatpush1.bf16.msra.mxu0 0
    %1544 = vmatprep.subr.bf16.mxu0 0
    %1545 = vmatpush1.bf16.msra.mxu0 0
    %1546 = vmatprep.subr.bf16.mxu0 0
    %1547 = vmatpush1.bf16.msra.mxu0 0
    %1548 = vmatprep.subr.bf16.mxu0 0
    %1549 = vmatpush1.bf16.msra.mxu0 0
    %1550 = vmatprep.subr.bf16.mxu0 0
    %1551 = vmatpush1.bf16.msra.mxu0 0
    %1552 = vmatprep.subr.bf16.mxu0 0
    %1553 = vmatpush1.bf16.msra.mxu0 0
    %1554 = vmatprep.mubr.bf16.mxu0 0
    %1555 = vmatmul.mubr.bf16.gmra.mrb[0].mxu0 %v1329
    %v1556 = vpop.f32.mrb[0].mxu0
    %v1557 = vadd.f32 0.0, %v1556
    %v1558 = vpop.f32.mrb[0].mxu0
    %v1559 = vadd.f32 0.0, %v1558
    %v1560 = vpop.f32.mrb[0].mxu0
    %v1561 = vpop.f32.mrb[0].mxu0
    %1562 = vdwg.mxu0
    %1563 = vmatprep.subr.bf16.mxu0 %v1461
    %1564 = vmatpush1.bf16.msra.mxu0 %v1460
    %1565 = vmatprep.subr.bf16.mxu0 %v1465
    %1566 = vmatpush1.bf16.msra.mxu0 %v1464
    %1567 = vmatprep.subr.bf16.mxu0 %v1469
    %1568 = vmatpush1.bf16.msra.mxu0 %v1468
    %1569 = vmatprep.subr.bf16.mxu0 %v1473
    %1570 = vmatpush1.bf16.msra.mxu0 %v1472
    %1571 = vmatprep.subr.bf16.mxu0 %v1477
    %1572 = vmatpush1.bf16.msra.mxu0 %v1476
    %1573 = vmatprep.subr.bf16.mxu0 %v1481
    %1574 = vmatpush1.bf16.msra.mxu0 %v1480
    %1575 = vmatprep.subr.bf16.mxu0 %v1485
    %1576 = vmatpush1.bf16.msra.mxu0 %v1484
    %1577 = vmatprep.subr.bf16.mxu0 %v1489
    %1578 = vmatpush1.bf16.msra.mxu0 %v1488
    %1579 = vmatprep.subr.bf16.mxu0 0
    %1580 = vmatpush1.bf16.msra.mxu0 0
    %1581 = vmatprep.subr.bf16.mxu0 0
    %1582 = vmatpush1.bf16.msra.mxu0 0
    %1583 = vmatprep.subr.bf16.mxu0 0
    %1584 = vmatpush1.bf16.msra.mxu0 0
    %1585 = vmatprep.subr.bf16.mxu0 0
    %1586 = vmatpush1.bf16.msra.mxu0 0
    %1587 = vmatprep.subr.bf16.mxu0 0
    %1588 = vmatpush1.bf16.msra.mxu0 0
    %1589 = vmatprep.subr.bf16.mxu0 0
    %1590 = vmatpush1.bf16.msra.mxu0 0
    %1591 = vmatprep.subr.bf16.mxu0 0
    %1592 = vmatpush1.bf16.msra.mxu0 0
    %1593 = vmatprep.subr.bf16.mxu0 0
    %1594 = vmatpush1.bf16.msra.mxu0 0
    %1595 = vmatprep.mubr.bf16.mxu0 0
    %1596 = vmatmul.mubr.bf16.gmra.mrb[0].mxu0 %v1329
    %v1597 = vpop.f32.mrb[0].mxu0
    %v1598 = vadd.f32 0.0, %v1597
    %v1599 = vpop.f32.mrb[0].mxu0
    %v1600 = vadd.f32 0.0, %v1599
    %v1601 = vpop.f32.mrb[0].mxu0
    %v1602 = vpop.f32.mrb[0].mxu0
    %1603 = vdwg.mxu0
    %v1604 = vadd.f32 %v1324, %v1557
    %v1605 = vadd.f32 %v1325, %v1559
    %v1606 = vadd.f32 %v1326, %v1598
    %v1607 = vadd.f32 %v1327, %v1600
    %v1608 = vmul.f32 %v1604, 0.5
    %v1609 = vtanh.pop %v1608
    %v1610 = vmul.f32 %v1609, 0.5
    %v1611 = vadd.f32 %v1610, 0.5
    %v1612 = vmul.f32 %v1605, 0.5
    %v1613 = vtanh.pop %v1612
    %v1614 = vmul.f32 %v1613, 0.5
    %v1615 = vadd.f32 %v1614, 0.5
    %v1616 = vtanh.pop %v1606
    %v1617 = vmul.f32 %v1607, 0.5
    %v1618 = vtanh.pop %v1617
    %v1619 = vmul.f32 %v1618, 0.5
    %v1620 = vadd.f32 %v1619, 0.5
    %v1621 = vld [vmem:[#allocation5] sm:$0xff]
    %v1622 = vmul.f32 %v1615, %v1621
    %v1623 = vmul.f32 %v1611, %v1616
    %v1624 = vadd.f32 %v1622, %v1623
    %v1625 = vtanh.pop %v1624
    %v1626 = vmul.f32 %v1620, %v1625
    %1627 = vst [vmem:[#allocation5] sm:$0xff] %v1624
    %1628 = vst [vmem:[#allocation4] sm:$0xff] %v1626
    %s1629 = scalar_lea.vmem [#allocation2], 24
    %1630 = vst [vmem:[%s1629] sm:$0xff] %v1626
    %s1631 = scalar_lea.vmem [#allocation3], 128
    %v1632 = vld [vmem:[%s1631] sm:$0xff]
    %v1633 = vld [vmem:[%s1631 + $0x8] sm:$0xff]
    %v1634 = vld [vmem:[%s1631 + $0x10] sm:$0xff]
    %v1635 = vld [vmem:[%s1631 + $0x18] sm:$0xff]
    %v1636 = vld [vmem:[#allocation4] sm:$0xff]
    %v1637 = vpack.c.bf16 %v1636, %v1636
    %v1638 = vld [vmem:[#allocation11] sm:$0xff]
    %v1639 = vld [vmem:[#allocation11 + $0x8] sm:$0xff]
    %v1640 = vld [vmem:[#allocation11 + $0x10] sm:$0xff]
    %v1641 = vld [vmem:[#allocation11 + $0x18] sm:$0xff]
    %v1642 = vld [vmem:[#allocation11 + $0x20] sm:$0xff]
    %v1643 = vld [vmem:[#allocation11 + $0x28] sm:$0xff]
    %v1644 = vld [vmem:[#allocation11 + $0x30] sm:$0xff]
    %v1645 = vld [vmem:[#allocation11 + $0x38] sm:$0xff]
    %v1646 = vld [vmem:[#allocation11 + $0x40] sm:$0xff]
    %v1647 = vld [vmem:[#allocation11 + $0x48] sm:$0xff]
    %v1648 = vld [vmem:[#allocation11 + $0x50] sm:$0xff]
    %v1649 = vld [vmem:[#allocation11 + $0x58] sm:$0xff]
    %v1650 = vld [vmem:[#allocation11 + $0x60] sm:$0xff]
    %v1651 = vld [vmem:[#allocation11 + $0x68] sm:$0xff]
    %v1652 = vld [vmem:[#allocation11 + $0x70] sm:$0xff]
    %v1653 = vld [vmem:[#allocation11 + $0x78] sm:$0xff]
    %v1654 = vld [vmem:[#allocation11 + $0x80] sm:$0xff]
    %v1655 = vld [vmem:[#allocation11 + $0x88] sm:$0xff]
    %v1656 = vld [vmem:[#allocation11 + $0x90] sm:$0xff]
    %v1657 = vld [vmem:[#allocation11 + $0x98] sm:$0xff]
    %v1658 = vld [vmem:[#allocation11 + $0xa0] sm:$0xff]
    %v1659 = vld [vmem:[#allocation11 + $0xa8] sm:$0xff]
    %v1660 = vld [vmem:[#allocation11 + $0xb0] sm:$0xff]
    %v1661 = vld [vmem:[#allocation11 + $0xb8] sm:$0xff]
    %v1662 = vld [vmem:[#allocation11 + $0xc0] sm:$0xff]
    %v1663 = vld [vmem:[#allocation11 + $0xc8] sm:$0xff]
    %v1664 = vld [vmem:[#allocation11 + $0xd0] sm:$0xff]
    %v1665 = vld [vmem:[#allocation11 + $0xd8] sm:$0xff]
    %v1666 = vld [vmem:[#allocation11 + $0xe0] sm:$0xff]
    %v1667 = vld [vmem:[#allocation11 + $0xe8] sm:$0xff]
    %v1668 = vld [vmem:[#allocation11 + $0xf0] sm:$0xff]
    %v1669 = vld [vmem:[#allocation11 + $0xf8] sm:$0xff]
    %v1702 = vunpack.c.l.b16 %v1638
    %v1703 = vunpack.c.h.b16 %v1638
    %v1704 = vunpack.c.l.b16 %v1639
    %v1705 = vunpack.c.h.b16 %v1639
    %v1706 = vunpack.c.l.b16 %v1640
    %v1707 = vunpack.c.h.b16 %v1640
    %v1708 = vunpack.c.l.b16 %v1641
    %v1709 = vunpack.c.h.b16 %v1641
    %v1710 = vunpack.c.l.b16 %v1642
    %v1711 = vunpack.c.h.b16 %v1642
    %v1712 = vunpack.c.l.b16 %v1643
    %v1713 = vunpack.c.h.b16 %v1643
    %v1714 = vunpack.c.l.b16 %v1644
    %v1715 = vunpack.c.h.b16 %v1644
    %v1716 = vunpack.c.l.b16 %v1645
    %v1717 = vunpack.c.h.b16 %v1645
    %v1718 = vunpack.c.l.b16 %v1646
    %v1719 = vunpack.c.h.b16 %v1646
    %v1720 = vunpack.c.l.b16 %v1647
    %v1721 = vunpack.c.h.b16 %v1647
    %v1722 = vunpack.c.l.b16 %v1648
    %v1723 = vunpack.c.h.b16 %v1648
    %v1724 = vunpack.c.l.b16 %v1649
    %v1725 = vunpack.c.h.b16 %v1649
    %v1726 = vunpack.c.l.b16 %v1650
    %v1727 = vunpack.c.h.b16 %v1650
    %v1728 = vunpack.c.l.b16 %v1651
    %v1729 = vunpack.c.h.b16 %v1651
    %v1730 = vunpack.c.l.b16 %v1652
    %v1731 = vunpack.c.h.b16 %v1652
    %v1732 = vunpack.c.l.b16 %v1653
    %v1733 = vunpack.c.h.b16 %v1653
    %v1734 = vunpack.c.l.b16 %v1654
    %v1735 = vunpack.c.h.b16 %v1654
    %v1736 = vunpack.c.l.b16 %v1655
    %v1737 = vunpack.c.h.b16 %v1655
    %v1738 = vunpack.c.l.b16 %v1656
    %v1739 = vunpack.c.h.b16 %v1656
    %v1740 = vunpack.c.l.b16 %v1657
    %v1741 = vunpack.c.h.b16 %v1657
    %v1742 = vunpack.c.l.b16 %v1658
    %v1743 = vunpack.c.h.b16 %v1658
    %v1744 = vunpack.c.l.b16 %v1659
    %v1745 = vunpack.c.h.b16 %v1659
    %v1746 = vunpack.c.l.b16 %v1660
    %v1747 = vunpack.c.h.b16 %v1660
    %v1748 = vunpack.c.l.b16 %v1661
    %v1749 = vunpack.c.h.b16 %v1661
    %v1750 = vunpack.c.l.b16 %v1662
    %v1751 = vunpack.c.h.b16 %v1662
    %v1752 = vunpack.c.l.b16 %v1663
    %v1753 = vunpack.c.h.b16 %v1663
    %v1754 = vunpack.c.l.b16 %v1664
    %v1755 = vunpack.c.h.b16 %v1664
    %v1756 = vunpack.c.l.b16 %v1665
    %v1757 = vunpack.c.h.b16 %v1665
    %v1758 = vunpack.c.l.b16 %v1666
    %v1759 = vunpack.c.h.b16 %v1666
    %v1760 = vunpack.c.l.b16 %v1667
    %v1761 = vunpack.c.h.b16 %v1667
    %v1762 = vunpack.c.l.b16 %v1668
    %v1763 = vunpack.c.h.b16 %v1668
    %v1764 = vunpack.c.l.b16 %v1669
    %v1765 = vunpack.c.h.b16 %v1669
    %v1766 = vpack.c.b16 %v1706, %v1702
    %v1767 = vpack.c.b16 %v1707, %v1703
    %v1768 = vpack.c.b16 %v1708, %v1704
    %v1769 = vpack.c.b16 %v1709, %v1705
    %v1770 = vpack.c.b16 %v1714, %v1710
    %v1771 = vpack.c.b16 %v1715, %v1711
    %v1772 = vpack.c.b16 %v1716, %v1712
    %v1773 = vpack.c.b16 %v1717, %v1713
    %v1774 = vpack.c.b16 %v1722, %v1718
    %v1775 = vpack.c.b16 %v1723, %v1719
    %v1776 = vpack.c.b16 %v1724, %v1720
    %v1777 = vpack.c.b16 %v1725, %v1721
    %v1778 = vpack.c.b16 %v1730, %v1726
    %v1779 = vpack.c.b16 %v1731, %v1727
    %v1780 = vpack.c.b16 %v1732, %v1728
    %v1781 = vpack.c.b16 %v1733, %v1729
    %v1782 = vpack.c.b16 %v1738, %v1734
    %v1783 = vpack.c.b16 %v1739, %v1735
    %v1784 = vpack.c.b16 %v1740, %v1736
    %v1785 = vpack.c.b16 %v1741, %v1737
    %v1786 = vpack.c.b16 %v1746, %v1742
    %v1787 = vpack.c.b16 %v1747, %v1743
    %v1788 = vpack.c.b16 %v1748, %v1744
    %v1789 = vpack.c.b16 %v1749, %v1745
    %v1790 = vpack.c.b16 %v1754, %v1750
    %v1791 = vpack.c.b16 %v1755, %v1751
    %v1792 = vpack.c.b16 %v1756, %v1752
    %v1793 = vpack.c.b16 %v1757, %v1753
    %v1794 = vpack.c.b16 %v1762, %v1758
    %v1795 = vpack.c.b16 %v1763, %v1759
    %v1796 = vpack.c.b16 %v1764, %v1760
    %v1797 = vpack.c.b16 %v1765, %v1761
    %1830 = vmatprep.subr.bf16.mxu0 %v1767
    %1831 = vmatpush1.bf16.msra.mxu0 %v1766
    %1832 = vmatprep.subr.bf16.mxu0 %v1771
    %1833 = vmatpush1.bf16.msra.mxu0 %v1770
    %1834 = vmatprep.subr.bf16.mxu0 %v1775
    %1835 = vmatpush1.bf16.msra.mxu0 %v1774
    %1836 = vmatprep.subr.bf16.mxu0 %v1779
    %1837 = vmatpush1.bf16.msra.mxu0 %v1778
    %1838 = vmatprep.subr.bf16.mxu0 %v1783
    %1839 = vmatpush1.bf16.msra.mxu0 %v1782
    %1840 = vmatprep.subr.bf16.mxu0 %v1787
    %1841 = vmatpush1.bf16.msra.mxu0 %v1786
    %1842 = vmatprep.subr.bf16.mxu0 %v1791
    %1843 = vmatpush1.bf16.msra.mxu0 %v1790
    %1844 = vmatprep.subr.bf16.mxu0 %v1795
    %1845 = vmatpush1.bf16.msra.mxu0 %v1794
    %1846 = vmatprep.subr.bf16.mxu0 0
    %1847 = vmatpush1.bf16.msra.mxu0 0
    %1848 = vmatprep.subr.bf16.mxu0 0
    %1849 = vmatpush1.bf16.msra.mxu0 0
    %1850 = vmatprep.subr.bf16.mxu0 0
    %1851 = vmatpush1.bf16.msra.mxu0 0
    %1852 = vmatprep.subr.bf16.mxu0 0
    %1853 = vmatpush1.bf16.msra.mxu0 0
    %1854 = vmatprep.subr.bf16.mxu0 0
    %1855 = vmatpush1.bf16.msra.mxu0 0
    %1856 = vmatprep.subr.bf16.mxu0 0
    %1857 = vmatpush1.bf16.msra.mxu0 0
    %1858 = vmatprep.subr.bf16.mxu0 0
    %1859 = vmatpush1.bf16.msra.mxu0 0
    %1860 = vmatprep.subr.bf16.mxu0 0
    %1861 = vmatpush1.bf16.msra.mxu0 0
    %1862 = vmatprep.mubr.bf16.mxu0 0
    %1863 = vmatmul.mubr.bf16.gmra.mrb[0].mxu0 %v1637
    %v1864 = vpop.f32.mrb[0].mxu0
    %v1865 = vadd.f32 0.0, %v1864
    %v1866 = vpop.f32.mrb[0].mxu0
    %v1867 = vadd.f32 0.0, %v1866
    %v1868 = vpop.f32.mrb[0].mxu0
    %v1869 = vpop.f32.mrb[0].mxu0
    %1870 = vdwg.mxu0
    %1871 = vmatprep.subr.bf16.mxu0 %v1769
    %1872 = vmatpush1.bf16.msra.mxu0 %v1768
    %1873 = vmatprep.subr.bf16.mxu0 %v1773
    %1874 = vmatpush1.bf16.msra.mxu0 %v1772
    %1875 = vmatprep.subr.bf16.mxu0 %v1777
    %1876 = vmatpush1.bf16.msra.mxu0 %v1776
    %1877 = vmatprep.subr.bf16.mxu0 %v1781
    %1878 = vmatpush1.bf16.msra.mxu0 %v1780
    %1879 = vmatprep.subr.bf16.mxu0 %v1785
    %1880 = vmatpush1.bf16.msra.mxu0 %v1784
    %1881 = vmatprep.subr.bf16.mxu0 %v1789
    %1882 = vmatpush1.bf16.msra.mxu0 %v1788
    %1883 = vmatprep.subr.bf16.mxu0 %v1793
    %1884 = vmatpush1.bf16.msra.mxu0 %v1792
    %1885 = vmatprep.subr.bf16.mxu0 %v1797
    %1886 = vmatpush1.bf16.msra.mxu0 %v1796
    %1887 = vmatprep.subr.bf16.mxu0 0
    %1888 = vmatpush1.bf16.msra.mxu0 0
    %1889 = vmatprep.subr.bf16.mxu0 0
    %1890 = vmatpush1.bf16.msra.mxu0 0
    %1891 = vmatprep.subr.bf16.mxu0 0
    %1892 = vmatpush1.bf16.msra.mxu0 0
    %1893 = vmatprep.subr.bf16.mxu0 0
    %1894 = vmatpush1.bf16.msra.mxu0 0
    %1895 = vmatprep.subr.bf16.mxu0 0
    %1896 = vmatpush1.bf16.msra.mxu0 0
    %1897 = vmatprep.subr.bf16.mxu0 0
    %1898 = vmatpush1.bf16.msra.mxu0 0
    %1899 = vmatprep.subr.bf16.mxu0 0
    %1900 = vmatpush1.bf16.msra.mxu0 0
    %1901 = vmatprep.subr.bf16.mxu0 0
    %1902 = vmatpush1.bf16.msra.mxu0 0
    %1903 = vmatprep.mubr.bf16.mxu0 0
    %1904 = vmatmul.mubr.bf16.gmra.mrb[0].mxu0 %v1637
    %v1905 = vpop.f32.mrb[0].mxu0
    %v1906 = vadd.f32 0.0, %v1905
    %v1907 = vpop.f32.mrb[0].mxu0
    %v1908 = vadd.f32 0.0, %v1907
    %v1909 = vpop.f32.mrb[0].mxu0
    %v1910 = vpop.f32.mrb[0].mxu0
    %1911 = vdwg.mxu0
    %v1912 = vadd.f32 %v1632, %v1865
    %v1913 = vadd.f32 %v1633, %v1867
    %v1914 = vadd.f32 %v1634, %v1906
    %v1915 = vadd.f32 %v1635, %v1908
    %v1916 = vmul.f32 %v1912, 0.5
    %v1917 = vtanh.pop %v1916
    %v1918 = vmul.f32 %v1917, 0.5
    %v1919 = vadd.f32 %v1918, 0.5
    %v1920 = vmul.f32 %v1913, 0.5
    %v1921 = vtanh.pop %v1920
    %v1922 = vmul.f32 %v1921, 0.5
    %v1923 = vadd.f32 %v1922, 0.5
    %v1924 = vtanh.pop %v1914
    %v1925 = vmul.f32 %v1915, 0.5
    %v1926 = vtanh.pop %v1925
    %v1927 = vmul.f32 %v1926, 0.5
    %v1928 = vadd.f32 %v1927, 0.5
    %v1929 = vld [vmem:[#allocation5] sm:$0xff]
    %v1930 = vmul.f32 %v1923, %v1929
    %v1931 = vmul.f32 %v1919, %v1924
    %v1932 = vadd.f32 %v1930, %v1931
    %v1933 = vtanh.pop %v1932
    %v1934 = vmul.f32 %v1928, %v1933
    %1935 = vst [vmem:[#allocation5] sm:$0xff] %v1932
    %1936 = vst [vmem:[#allocation4] sm:$0xff] %v1934
    %s1937 = scalar_lea.vmem [#allocation2], 32
    %1938 = vst [vmem:[%s1937] sm:$0xff] %v1934
    %s1939 = scalar_lea.vmem [#allocation3], 160
    %v1940 = vld [vmem:[%s1939] sm:$0xff]
    %v1941 = vld [vmem:[%s1939 + $0x8] sm:$0xff]
    %v1942 = vld [vmem:[%s1939 + $0x10] sm:$0xff]
    %v1943 = vld [vmem:[%s1939 + $0x18] sm:$0xff]
    %v1944 = vld [vmem:[#allocation4] sm:$0xff]
    %v1945 = vpack.c.bf16 %v1944, %v1944
    %v1946 = vld [vmem:[#allocation11] sm:$0xff]
    %v1947 = vld [vmem:[#allocation11 + $0x8] sm:$0xff]
    %v1948 = vld [vmem:[#allocation11 + $0x10] sm:$0xff]
    %v1949 = vld [vmem:[#allocation11 + $0x18] sm:$0xff]
    %v1950 = vld [vmem:[#allocation11 + $0x20] sm:$0xff]
    %v1951 = vld [vmem:[#allocation11 + $0x28] sm:$0xff]
    %v1952 = vld [vmem:[#allocation11 + $0x30] sm:$0xff]
    %v1953 = vld [vmem:[#allocation11 + $0x38] sm:$0xff]
    %v1954 = vld [vmem:[#allocation11 + $0x40] sm:$0xff]
    %v1955 = vld [vmem:[#allocation11 + $0x48] sm:$0xff]
    %v1956 = vld [vmem:[#allocation11 + $0x50] sm:$0xff]
    %v1957 = vld [vmem:[#allocation11 + $0x58] sm:$0xff]
    %v1958 = vld [vmem:[#allocation11 + $0x60] sm:$0xff]
    %v1959 = vld [vmem:[#allocation11 + $0x68] sm:$0xff]
    %v1960 = vld [vmem:[#allocation11 + $0x70] sm:$0xff]
    %v1961 = vld [vmem:[#allocation11 + $0x78] sm:$0xff]
    %v1962 = vld [vmem:[#allocation11 + $0x80] sm:$0xff]
    %v1963 = vld [vmem:[#allocation11 + $0x88] sm:$0xff]
    %v1964 = vld [vmem:[#allocation11 + $0x90] sm:$0xff]
    %v1965 = vld [vmem:[#allocation11 + $0x98] sm:$0xff]
    %v1966 = vld [vmem:[#allocation11 + $0xa0] sm:$0xff]
    %v1967 = vld [vmem:[#allocation11 + $0xa8] sm:$0xff]
    %v1968 = vld [vmem:[#allocation11 + $0xb0] sm:$0xff]
    %v1969 = vld [vmem:[#allocation11 + $0xb8] sm:$0xff]
    %v1970 = vld [vmem:[#allocation11 + $0xc0] sm:$0xff]
    %v1971 = vld [vmem:[#allocation11 + $0xc8] sm:$0xff]
    %v1972 = vld [vmem:[#allocation11 + $0xd0] sm:$0xff]
    %v1973 = vld [vmem:[#allocation11 + $0xd8] sm:$0xff]
    %v1974 = vld [vmem:[#allocation11 + $0xe0] sm:$0xff]
    %v1975 = vld [vmem:[#allocation11 + $0xe8] sm:$0xff]
    %v1976 = vld [vmem:[#allocation11 + $0xf0] sm:$0xff]
    %v1977 = vld [vmem:[#allocation11 + $0xf8] sm:$0xff]
    %v2010 = vunpack.c.l.b16 %v1946
    %v2011 = vunpack.c.h.b16 %v1946
    %v2012 = vunpack.c.l.b16 %v1947
    %v2013 = vunpack.c.h.b16 %v1947
    %v2014 = vunpack.c.l.b16 %v1948
    %v2015 = vunpack.c.h.b16 %v1948
    %v2016 = vunpack.c.l.b16 %v1949
    %v2017 = vunpack.c.h.b16 %v1949
    %v2018 = vunpack.c.l.b16 %v1950
    %v2019 = vunpack.c.h.b16 %v1950
    %v2020 = vunpack.c.l.b16 %v1951
    %v2021 = vunpack.c.h.b16 %v1951
    %v2022 = vunpack.c.l.b16 %v1952
    %v2023 = vunpack.c.h.b16 %v1952
    %v2024 = vunpack.c.l.b16 %v1953
    %v2025 = vunpack.c.h.b16 %v1953
    %v2026 = vunpack.c.l.b16 %v1954
    %v2027 = vunpack.c.h.b16 %v1954
    %v2028 = vunpack.c.l.b16 %v1955
    %v2029 = vunpack.c.h.b16 %v1955
    %v2030 = vunpack.c.l.b16 %v1956
    %v2031 = vunpack.c.h.b16 %v1956
    %v2032 = vunpack.c.l.b16 %v1957
    %v2033 = vunpack.c.h.b16 %v1957
    %v2034 = vunpack.c.l.b16 %v1958
    %v2035 = vunpack.c.h.b16 %v1958
    %v2036 = vunpack.c.l.b16 %v1959
    %v2037 = vunpack.c.h.b16 %v1959
    %v2038 = vunpack.c.l.b16 %v1960
    %v2039 = vunpack.c.h.b16 %v1960
    %v2040 = vunpack.c.l.b16 %v1961
    %v2041 = vunpack.c.h.b16 %v1961
    %v2042 = vunpack.c.l.b16 %v1962
    %v2043 = vunpack.c.h.b16 %v1962
    %v2044 = vunpack.c.l.b16 %v1963
    %v2045 = vunpack.c.h.b16 %v1963
    %v2046 = vunpack.c.l.b16 %v1964
    %v2047 = vunpack.c.h.b16 %v1964
    %v2048 = vunpack.c.l.b16 %v1965
    %v2049 = vunpack.c.h.b16 %v1965
    %v2050 = vunpack.c.l.b16 %v1966
    %v2051 = vunpack.c.h.b16 %v1966
    %v2052 = vunpack.c.l.b16 %v1967
    %v2053 = vunpack.c.h.b16 %v1967
    %v2054 = vunpack.c.l.b16 %v1968
    %v2055 = vunpack.c.h.b16 %v1968
    %v2056 = vunpack.c.l.b16 %v1969
    %v2057 = vunpack.c.h.b16 %v1969
    %v2058 = vunpack.c.l.b16 %v1970
    %v2059 = vunpack.c.h.b16 %v1970
    %v2060 = vunpack.c.l.b16 %v1971
    %v2061 = vunpack.c.h.b16 %v1971
    %v2062 = vunpack.c.l.b16 %v1972
    %v2063 = vunpack.c.h.b16 %v1972
    %v2064 = vunpack.c.l.b16 %v1973
    %v2065 = vunpack.c.h.b16 %v1973
    %v2066 = vunpack.c.l.b16 %v1974
    %v2067 = vunpack.c.h.b16 %v1974
    %v2068 = vunpack.c.l.b16 %v1975
    %v2069 = vunpack.c.h.b16 %v1975
    %v2070 = vunpack.c.l.b16 %v1976
    %v2071 = vunpack.c.h.b16 %v1976
    %v2072 = vunpack.c.l.b16 %v1977
    %v2073 = vunpack.c.h.b16 %v1977
    %v2074 = vpack.c.b16 %v2014, %v2010
    %v2075 = vpack.c.b16 %v2015, %v2011
    %v2076 = vpack.c.b16 %v2016, %v2012
    %v2077 = vpack.c.b16 %v2017, %v2013
    %v2078 = vpack.c.b16 %v2022, %v2018
    %v2079 = vpack.c.b16 %v2023, %v2019
    %v2080 = vpack.c.b16 %v2024, %v2020
    %v2081 = vpack.c.b16 %v2025, %v2021
    %v2082 = vpack.c.b16 %v2030, %v2026
    %v2083 = vpack.c.b16 %v2031, %v2027
    %v2084 = vpack.c.b16 %v2032, %v2028
    %v2085 = vpack.c.b16 %v2033, %v2029
    %v2086 = vpack.c.b16 %v2038, %v2034
    %v2087 = vpack.c.b16 %v2039, %v2035
    %v2088 = vpack.c.b16 %v2040, %v2036
    %v2089 = vpack.c.b16 %v2041, %v2037
    %v2090 = vpack.c.b16 %v2046, %v2042
    %v2091 = vpack.c.b16 %v2047, %v2043
    %v2092 = vpack.c.b16 %v2048, %v2044
    %v2093 = vpack.c.b16 %v2049, %v2045
    %v2094 = vpack.c.b16 %v2054, %v2050
    %v2095 = vpack.c.b16 %v2055, %v2051
    %v2096 = vpack.c.b16 %v2056, %v2052
    %v2097 = vpack.c.b16 %v2057, %v2053
    %v2098 = vpack.c.b16 %v2062, %v2058
    %v2099 = vpack.c.b16 %v2063, %v2059
    %v2100 = vpack.c.b16 %v2064, %v2060
    %v2101 = vpack.c.b16 %v2065, %v2061
    %v2102 = vpack.c.b16 %v2070, %v2066
    %v2103 = vpack.c.b16 %v2071, %v2067
    %v2104 = vpack.c.b16 %v2072, %v2068
    %v2105 = vpack.c.b16 %v2073, %v2069
    %2138 = vmatprep.subr.bf16.mxu0 %v2075
    %2139 = vmatpush1.bf16.msra.mxu0 %v2074
    %2140 = vmatprep.subr.bf16.mxu0 %v2079
    %2141 = vmatpush1.bf16.msra.mxu0 %v2078
    %2142 = vmatprep.subr.bf16.mxu0 %v2083
    %2143 = vmatpush1.bf16.msra.mxu0 %v2082
    %2144 = vmatprep.subr.bf16.mxu0 %v2087
    %2145 = vmatpush1.bf16.msra.mxu0 %v2086
    %2146 = vmatprep.subr.bf16.mxu0 %v2091
    %2147 = vmatpush1.bf16.msra.mxu0 %v2090
    %2148 = vmatprep.subr.bf16.mxu0 %v2095
    %2149 = vmatpush1.bf16.msra.mxu0 %v2094
    %2150 = vmatprep.subr.bf16.mxu0 %v2099
    %2151 = vmatpush1.bf16.msra.mxu0 %v2098
    %2152 = vmatprep.subr.bf16.mxu0 %v2103
    %2153 = vmatpush1.bf16.msra.mxu0 %v2102
    %2154 = vmatprep.subr.bf16.mxu0 0
    %2155 = vmatpush1.bf16.msra.mxu0 0
    %2156 = vmatprep.subr.bf16.mxu0 0
    %2157 = vmatpush1.bf16.msra.mxu0 0
    %2158 = vmatprep.subr.bf16.mxu0 0
    %2159 = vmatpush1.bf16.msra.mxu0 0
    %2160 = vmatprep.subr.bf16.mxu0 0
    %2161 = vmatpush1.bf16.msra.mxu0 0
    %2162 = vmatprep.subr.bf16.mxu0 0
    %2163 = vmatpush1.bf16.msra.mxu0 0
    %2164 = vmatprep.subr.bf16.mxu0 0
    %2165 = vmatpush1.bf16.msra.mxu0 0
    %2166 = vmatprep.subr.bf16.mxu0 0
    %2167 = vmatpush1.bf16.msra.mxu0 0
    %2168 = vmatprep.subr.bf16.mxu0 0
    %2169 = vmatpush1.bf16.msra.mxu0 0
    %2170 = vmatprep.mubr.bf16.mxu0 0
    %2171 = vmatmul.mubr.bf16.gmra.mrb[0].mxu0 %v1945
    %v2172 = vpop.f32.mrb[0].mxu0
    %v2173 = vadd.f32 0.0, %v2172
    %v2174 = vpop.f32.mrb[0].mxu0
    %v2175 = vadd.f32 0.0, %v2174
    %v2176 = vpop.f32.mrb[0].mxu0
    %v2177 = vpop.f32.mrb[0].mxu0
    %2178 = vdwg.mxu0
    %2179 = vmatprep.subr.bf16.mxu0 %v2077
    %2180 = vmatpush1.bf16.msra.mxu0 %v2076
    %2181 = vmatprep.subr.bf16.mxu0 %v2081
    %2182 = vmatpush1.bf16.msra.mxu0 %v2080
    %2183 = vmatprep.subr.bf16.mxu0 %v2085
    %2184 = vmatpush1.bf16.msra.mxu0 %v2084
    %2185 = vmatprep.subr.bf16.mxu0 %v2089
    %2186 = vmatpush1.bf16.msra.mxu0 %v2088
    %2187 = vmatprep.subr.bf16.mxu0 %v2093
    %2188 = vmatpush1.bf16.msra.mxu0 %v2092
    %2189 = vmatprep.subr.bf16.mxu0 %v2097
    %2190 = vmatpush1.bf16.msra.mxu0 %v2096
    %2191 = vmatprep.subr.bf16.mxu0 %v2101
    %2192 = vmatpush1.bf16.msra.mxu0 %v2100
    %2193 = vmatprep.subr.bf16.mxu0 %v2105
    %2194 = vmatpush1.bf16.msra.mxu0 %v2104
    %2195 = vmatprep.subr.bf16.mxu0 0
    %2196 = vmatpush1.bf16.msra.mxu0 0
    %2197 = vmatprep.subr.bf16.mxu0 0
    %2198 = vmatpush1.bf16.msra.mxu0 0
    %2199 = vmatprep.subr.bf16.mxu0 0
    %2200 = vmatpush1.bf16.msra.mxu0 0
    %2201 = vmatprep.subr.bf16.mxu0 0
    %2202 = vmatpush1.bf16.msra.mxu0 0
    %2203 = vmatprep.subr.bf16.mxu0 0
    %2204 = vmatpush1.bf16.msra.mxu0 0
    %2205 = vmatprep.subr.bf16.mxu0 0
    %2206 = vmatpush1.bf16.msra.mxu0 0
    %2207 = vmatprep.subr.bf16.mxu0 0
    %2208 = vmatpush1.bf16.msra.mxu0 0
    %2209 = vmatprep.subr.bf16.mxu0 0
    %2210 = vmatpush1.bf16.msra.mxu0 0
    %2211 = vmatprep.mubr.bf16.mxu0 0
    %2212 = vmatmul.mubr.bf16.gmra.mrb[0].mxu0 %v1945
    %v2213 = vpop.f32.mrb[0].mxu0
    %v2214 = vadd.f32 0.0, %v2213
    %v2215 = vpop.f32.mrb[0].mxu0
    %v2216 = vadd.f32 0.0, %v2215
    %v2217 = vpop.f32.mrb[0].mxu0
    %v2218 = vpop.f32.mrb[0].mxu0
    %2219 = vdwg.mxu0
    %v2220 = vadd.f32 %v1940, %v2173
    %v2221 = vadd.f32 %v1941, %v2175
    %v2222 = vadd.f32 %v1942, %v2214
    %v2223 = vadd.f32 %v1943, %v2216
    %v2224 = vmul.f32 %v2220, 0.5
    %v2225 = vtanh.pop %v2224
    %v2226 = vmul.f32 %v2225, 0.5
    %v2227 = vadd.f32 %v2226, 0.5
    %v2228 = vmul.f32 %v2221, 0.5
    %v2229 = vtanh.pop %v2228
    %v2230 = vmul.f32 %v2229, 0.5
    %v2231 = vadd.f32 %v2230, 0.5
    %v2232 = vtanh.pop %v2222
    %v2233 = vmul.f32 %v2223, 0.5
    %v2234 = vtanh.pop %v2233
    %v2235 = vmul.f32 %v2234, 0.5
    %v2236 = vadd.f32 %v2235, 0.5
    %v2237 = vld [vmem:[#allocation5] sm:$0xff]
    %v2238 = vmul.f32 %v2231, %v2237
    %v2239 = vmul.f32 %v2227, %v2232
    %v2240 = vadd.f32 %v2238, %v2239
    %v2241 = vtanh.pop %v2240
    %v2242 = vmul.f32 %v2236, %v2241
    %2243 = vst [vmem:[#allocation5] sm:$0xff] %v2240
    %2244 = vst [vmem:[#allocation4] sm:$0xff] %v2242
    %s2245 = scalar_lea.vmem [#allocation2], 40
    %2246 = vst [vmem:[%s2245] sm:$0xff] %v2242
    %s2247 = scalar_lea.vmem [#allocation3], 192
    %v2248 = vld [vmem:[%s2247] sm:$0xff]
    %v2249 = vld [vmem:[%s2247 + $0x8] sm:$0xff]
    %v2250 = vld [vmem:[%s2247 + $0x10] sm:$0xff]
    %v2251 = vld [vmem:[%s2247 + $0x18] sm:$0xff]
    %v2252 = vld [vmem:[#allocation4] sm:$0xff]
    %v2253 = vpack.c.bf16 %v2252, %v2252
    %v2254 = vld [vmem:[#allocation11] sm:$0xff]
    %v2255 = vld [vmem:[#allocation11 + $0x8] sm:$0xff]
    %v2256 = vld [vmem:[#allocation11 + $0x10] sm:$0xff]
    %v2257 = vld [vmem:[#allocation11 + $0x18] sm:$0xff]
    %v2258 = vld [vmem:[#allocation11 + $0x20] sm:$0xff]
    %v2259 = vld [vmem:[#allocation11 + $0x28] sm:$0xff]
    %v2260 = vld [vmem:[#allocation11 + $0x30] sm:$0xff]
    %v2261 = vld [vmem:[#allocation11 + $0x38] sm:$0xff]
    %v2262 = vld [vmem:[#allocation11 + $0x40] sm:$0xff]
    %v2263 = vld [vmem:[#allocation11 + $0x48] sm:$0xff]
    %v2264 = vld [vmem:[#allocation11 + $0x50] sm:$0xff]
    %v2265 = vld [vmem:[#allocation11 + $0x58] sm:$0xff]
    %v2266 = vld [vmem:[#allocation11 + $0x60] sm:$0xff]
    %v2267 = vld [vmem:[#allocation11 + $0x68] sm:$0xff]
    %v2268 = vld [vmem:[#allocation11 + $0x70] sm:$0xff]
    %v2269 = vld [vmem:[#allocation11 + $0x78] sm:$0xff]
    %v2270 = vld [vmem:[#allocation11 + $0x80] sm:$0xff]
    %v2271 = vld [vmem:[#allocation11 + $0x88] sm:$0xff]
    %v2272 = vld [vmem:[#allocation11 + $0x90] sm:$0xff]
    %v2273 = vld [vmem:[#allocation11 + $0x98] sm:$0xff]
    %v2274 = vld [vmem:[#allocation11 + $0xa0] sm:$0xff]
    %v2275 = vld [vmem:[#allocation11 + $0xa8] sm:$0xff]
    %v2276 = vld [vmem:[#allocation11 + $0xb0] sm:$0xff]
    %v2277 = vld [vmem:[#allocation11 + $0xb8] sm:$0xff]
    %v2278 = vld [vmem:[#allocation11 + $0xc0] sm:$0xff]
    %v2279 = vld [vmem:[#allocation11 + $0xc8] sm:$0xff]
    %v2280 = vld [vmem:[#allocation11 + $0xd0] sm:$0xff]
    %v2281 = vld [vmem:[#allocation11 + $0xd8] sm:$0xff]
    %v2282 = vld [vmem:[#allocation11 + $0xe0] sm:$0xff]
    %v2283 = vld [vmem:[#allocation11 + $0xe8] sm:$0xff]
    %v2284 = vld [vmem:[#allocation11 + $0xf0] sm:$0xff]
    %v2285 = vld [vmem:[#allocation11 + $0xf8] sm:$0xff]
    %v2318 = vunpack.c.l.b16 %v2254
    %v2319 = vunpack.c.h.b16 %v2254
    %v2320 = vunpack.c.l.b16 %v2255
    %v2321 = vunpack.c.h.b16 %v2255
    %v2322 = vunpack.c.l.b16 %v2256
    %v2323 = vunpack.c.h.b16 %v2256
    %v2324 = vunpack.c.l.b16 %v2257
    %v2325 = vunpack.c.h.b16 %v2257
    %v2326 = vunpack.c.l.b16 %v2258
    %v2327 = vunpack.c.h.b16 %v2258
    %v2328 = vunpack.c.l.b16 %v2259
    %v2329 = vunpack.c.h.b16 %v2259
    %v2330 = vunpack.c.l.b16 %v2260
    %v2331 = vunpack.c.h.b16 %v2260
    %v2332 = vunpack.c.l.b16 %v2261
    %v2333 = vunpack.c.h.b16 %v2261
    %v2334 = vunpack.c.l.b16 %v2262
    %v2335 = vunpack.c.h.b16 %v2262
    %v2336 = vunpack.c.l.b16 %v2263
    %v2337 = vunpack.c.h.b16 %v2263
    %v2338 = vunpack.c.l.b16 %v2264
    %v2339 = vunpack.c.h.b16 %v2264
    %v2340 = vunpack.c.l.b16 %v2265
    %v2341 = vunpack.c.h.b16 %v2265
    %v2342 = vunpack.c.l.b16 %v2266
    %v2343 = vunpack.c.h.b16 %v2266
    %v2344 = vunpack.c.l.b16 %v2267
    %v2345 = vunpack.c.h.b16 %v2267
    %v2346 = vunpack.c.l.b16 %v2268
    %v2347 = vunpack.c.h.b16 %v2268
    %v2348 = vunpack.c.l.b16 %v2269
    %v2349 = vunpack.c.h.b16 %v2269
    %v2350 = vunpack.c.l.b16 %v2270
    %v2351 = vunpack.c.h.b16 %v2270
    %v2352 = vunpack.c.l.b16 %v2271
    %v2353 = vunpack.c.h.b16 %v2271
    %v2354 = vunpack.c.l.b16 %v2272
    %v2355 = vunpack.c.h.b16 %v2272
    %v2356 = vunpack.c.l.b16 %v2273
    %v2357 = vunpack.c.h.b16 %v2273
    %v2358 = vunpack.c.l.b16 %v2274
    %v2359 = vunpack.c.h.b16 %v2274
    %v2360 = vunpack.c.l.b16 %v2275
    %v2361 = vunpack.c.h.b16 %v2275
    %v2362 = vunpack.c.l.b16 %v2276
    %v2363 = vunpack.c.h.b16 %v2276
    %v2364 = vunpack.c.l.b16 %v2277
    %v2365 = vunpack.c.h.b16 %v2277
    %v2366 = vunpack.c.l.b16 %v2278
    %v2367 = vunpack.c.h.b16 %v2278
    %v2368 = vunpack.c.l.b16 %v2279
    %v2369 = vunpack.c.h.b16 %v2279
    %v2370 = vunpack.c.l.b16 %v2280
    %v2371 = vunpack.c.h.b16 %v2280
    %v2372 = vunpack.c.l.b16 %v2281
    %v2373 = vunpack.c.h.b16 %v2281
    %v2374 = vunpack.c.l.b16 %v2282
    %v2375 = vunpack.c.h.b16 %v2282
    %v2376 = vunpack.c.l.b16 %v2283
    %v2377 = vunpack.c.h.b16 %v2283
    %v2378 = vunpack.c.l.b16 %v2284
    %v2379 = vunpack.c.h.b16 %v2284
    %v2380 = vunpack.c.l.b16 %v2285
    %v2381 = vunpack.c.h.b16 %v2285
    %v2382 = vpack.c.b16 %v2322, %v2318
    %v2383 = vpack.c.b16 %v2323, %v2319
    %v2384 = vpack.c.b16 %v2324, %v2320
    %v2385 = vpack.c.b16 %v2325, %v2321
    %v2386 = vpack.c.b16 %v2330, %v2326
    %v2387 = vpack.c.b16 %v2331, %v2327
    %v2388 = vpack.c.b16 %v2332, %v2328
    %v2389 = vpack.c.b16 %v2333, %v2329
    %v2390 = vpack.c.b16 %v2338, %v2334
    %v2391 = vpack.c.b16 %v2339, %v2335
    %v2392 = vpack.c.b16 %v2340, %v2336
    %v2393 = vpack.c.b16 %v2341, %v2337
    %v2394 = vpack.c.b16 %v2346, %v2342
    %v2395 = vpack.c.b16 %v2347, %v2343
    %v2396 = vpack.c.b16 %v2348, %v2344
    %v2397 = vpack.c.b16 %v2349, %v2345
    %v2398 = vpack.c.b16 %v2354, %v2350
    %v2399 = vpack.c.b16 %v2355, %v2351
    %v2400 = vpack.c.b16 %v2356, %v2352
    %v2401 = vpack.c.b16 %v2357, %v2353
    %v2402 = vpack.c.b16 %v2362, %v2358
    %v2403 = vpack.c.b16 %v2363, %v2359
    %v2404 = vpack.c.b16 %v2364, %v2360
    %v2405 = vpack.c.b16 %v2365, %v2361
    %v2406 = vpack.c.b16 %v2370, %v2366
    %v2407 = vpack.c.b16 %v2371, %v2367
    %v2408 = vpack.c.b16 %v2372, %v2368
    %v2409 = vpack.c.b16 %v2373, %v2369
    %v2410 = vpack.c.b16 %v2378, %v2374
    %v2411 = vpack.c.b16 %v2379, %v2375
    %v2412 = vpack.c.b16 %v2380, %v2376
    %v2413 = vpack.c.b16 %v2381, %v2377
    %2446 = vmatprep.subr.bf16.mxu0 %v2383
    %2447 = vmatpush1.bf16.msra.mxu0 %v2382
    %2448 = vmatprep.subr.bf16.mxu0 %v2387
    %2449 = vmatpush1.bf16.msra.mxu0 %v2386
    %2450 = vmatprep.subr.bf16.mxu0 %v2391
    %2451 = vmatpush1.bf16.msra.mxu0 %v2390
    %2452 = vmatprep.subr.bf16.mxu0 %v2395
    %2453 = vmatpush1.bf16.msra.mxu0 %v2394
    %2454 = vmatprep.subr.bf16.mxu0 %v2399
    %2455 = vmatpush1.bf16.msra.mxu0 %v2398
    %2456 = vmatprep.subr.bf16.mxu0 %v2403
    %2457 = vmatpush1.bf16.msra.mxu0 %v2402
    %2458 = vmatprep.subr.bf16.mxu0 %v2407
    %2459 = vmatpush1.bf16.msra.mxu0 %v2406
    %2460 = vmatprep.subr.bf16.mxu0 %v2411
    %2461 = vmatpush1.bf16.msra.mxu0 %v2410
    %2462 = vmatprep.subr.bf16.mxu0 0
    %2463 = vmatpush1.bf16.msra.mxu0 0
    %2464 = vmatprep.subr.bf16.mxu0 0
    %2465 = vmatpush1.bf16.msra.mxu0 0
    %2466 = vmatprep.subr.bf16.mxu0 0
    %2467 = vmatpush1.bf16.msra.mxu0 0
    %2468 = vmatprep.subr.bf16.mxu0 0
    %2469 = vmatpush1.bf16.msra.mxu0 0
    %2470 = vmatprep.subr.bf16.mxu0 0
    %2471 = vmatpush1.bf16.msra.mxu0 0
    %2472 = vmatprep.subr.bf16.mxu0 0
    %2473 = vmatpush1.bf16.msra.mxu0 0
    %2474 = vmatprep.subr.bf16.mxu0 0
    %2475 = vmatpush1.bf16.msra.mxu0 0
    %2476 = vmatprep.subr.bf16.mxu0 0
    %2477 = vmatpush1.bf16.msra.mxu0 0
    %2478 = vmatprep.mubr.bf16.mxu0 0
    %2479 = vmatmul.mubr.bf16.gmra.mrb[0].mxu0 %v2253
    %v2480 = vpop.f32.mrb[0].mxu0
    %v2481 = vadd.f32 0.0, %v2480
    %v2482 = vpop.f32.mrb[0].mxu0
    %v2483 = vadd.f32 0.0, %v2482
    %v2484 = vpop.f32.mrb[0].mxu0
    %v2485 = vpop.f32.mrb[0].mxu0
    %2486 = vdwg.mxu0
    %2487 = vmatprep.subr.bf16.mxu0 %v2385
    %2488 = vmatpush1.bf16.msra.mxu0 %v2384
    %2489 = vmatprep.subr.bf16.mxu0 %v2389
    %2490 = vmatpush1.bf16.msra.mxu0 %v2388
    %2491 = vmatprep.subr.bf16.mxu0 %v2393
    %2492 = vmatpush1.bf16.msra.mxu0 %v2392
    %2493 = vmatprep.subr.bf16.mxu0 %v2397
    %2494 = vmatpush1.bf16.msra.mxu0 %v2396
    %2495 = vmatprep.subr.bf16.mxu0 %v2401
    %2496 = vmatpush1.bf16.msra.mxu0 %v2400
    %2497 = vmatprep.subr.bf16.mxu0 %v2405
    %2498 = vmatpush1.bf16.msra.mxu0 %v2404
    %2499 = vmatprep.subr.bf16.mxu0 %v2409
    %2500 = vmatpush1.bf16.msra.mxu0 %v2408
    %2501 = vmatprep.subr.bf16.mxu0 %v2413
    %2502 = vmatpush1.bf16.msra.mxu0 %v2412
    %2503 = vmatprep.subr.bf16.mxu0 0
    %2504 = vmatpush1.bf16.msra.mxu0 0
    %2505 = vmatprep.subr.bf16.mxu0 0
    %2506 = vmatpush1.bf16.msra.mxu0 0
    %2507 = vmatprep.subr.bf16.mxu0 0
    %2508 = vmatpush1.bf16.msra.mxu0 0
    %2509 = vmatprep.subr.bf16.mxu0 0
    %2510 = vmatpush1.bf16.msra.mxu0 0
    %2511 = vmatprep.subr.bf16.mxu0 0
    %2512 = vmatpush1.bf16.msra.mxu0 0
    %2513 = vmatprep.subr.bf16.mxu0 0
    %2514 = vmatpush1.bf16.msra.mxu0 0
    %2515 = vmatprep.subr.bf16.mxu0 0
    %2516 = vmatpush1.bf16.msra.mxu0 0
    %2517 = vmatprep.subr.bf16.mxu0 0
    %2518 = vmatpush1.bf16.msra.mxu0 0
    %2519 = vmatprep.mubr.bf16.mxu0 0
    %2520 = vmatmul.mubr.bf16.gmra.mrb[0].mxu0 %v2253
    %v2521 = vpop.f32.mrb[0].mxu0
    %v2522 = vadd.f32 0.0, %v2521
    %v2523 = vpop.f32.mrb[0].mxu0
    %v2524 = vadd.f32 0.0, %v2523
    %v2525 = vpop.f32.mrb[0].mxu0
    %v2526 = vpop.f32.mrb[0].mxu0
    %2527 = vdwg.mxu0
    %v2528 = vadd.f32 %v2248, %v2481
    %v2529 = vadd.f32 %v2249, %v2483
    %v2530 = vadd.f32 %v2250, %v2522
    %v2531 = vadd.f32 %v2251, %v2524
    %v2532 = vmul.f32 %v2528, 0.5
    %v2533 = vtanh.pop %v2532
    %v2534 = vmul.f32 %v2533, 0.5
    %v2535 = vadd.f32 %v2534, 0.5
    %v2536 = vmul.f32 %v2529, 0.5
    %v2537 = vtanh.pop %v2536
    %v2538 = vmul.f32 %v2537, 0.5
    %v2539 = vadd.f32 %v2538, 0.5
    %v2540 = vtanh.pop %v2530
    %v2541 = vmul.f32 %v2531, 0.5
    %v2542 = vtanh.pop %v2541
    %v2543 = vmul.f32 %v2542, 0.5
    %v2544 = vadd.f32 %v2543, 0.5
    %v2545 = vld [vmem:[#allocation5] sm:$0xff]
    %v2546 = vmul.f32 %v2539, %v2545
    %v2547 = vmul.f32 %v2535, %v2540
    %v2548 = vadd.f32 %v2546, %v2547
    %v2549 = vtanh.pop %v2548
    %v2550 = vmul.f32 %v2544, %v2549
    %2551 = vst [vmem:[#allocation5] sm:$0xff] %v2548
    %2552 = vst [vmem:[#allocation4] sm:$0xff] %v2550
    %s2553 = scalar_lea.vmem [#allocation2], 48
    %2554 = vst [vmem:[%s2553] sm:$0xff] %v2550
    %s2555 = scalar_lea.vmem [#allocation3], 224
    %v2556 = vld [vmem:[%s2555] sm:$0xff]
    %v2557 = vld [vmem:[%s2555 + $0x8] sm:$0xff]
    %v2558 = vld [vmem:[%s2555 + $0x10] sm:$0xff]
    %v2559 = vld [vmem:[%s2555 + $0x18] sm:$0xff]
    %v2560 = vld [vmem:[#allocation4] sm:$0xff]
    %v2561 = vpack.c.bf16 %v2560, %v2560
    %v2562 = vld [vmem:[#allocation11] sm:$0xff]
    %v2563 = vld [vmem:[#allocation11 + $0x8] sm:$0xff]
    %v2564 = vld [vmem:[#allocation11 + $0x10] sm:$0xff]
    %v2565 = vld [vmem:[#allocation11 + $0x18] sm:$0xff]
    %v2566 = vld [vmem:[#allocation11 + $0x20] sm:$0xff]
    %v2567 = vld [vmem:[#allocation11 + $0x28] sm:$0xff]
    %v2568 = vld [vmem:[#allocation11 + $0x30] sm:$0xff]
    %v2569 = vld [vmem:[#allocation11 + $0x38] sm:$0xff]
    %v2570 = vld [vmem:[#allocation11 + $0x40] sm:$0xff]
    %v2571 = vld [vmem:[#allocation11 + $0x48] sm:$0xff]
    %v2572 = vld [vmem:[#allocation11 + $0x50] sm:$0xff]
    %v2573 = vld [vmem:[#allocation11 + $0x58] sm:$0xff]
    %v2574 = vld [vmem:[#allocation11 + $0x60] sm:$0xff]
    %v2575 = vld [vmem:[#allocation11 + $0x68] sm:$0xff]
    %v2576 = vld [vmem:[#allocation11 + $0x70] sm:$0xff]
    %v2577 = vld [vmem:[#allocation11 + $0x78] sm:$0xff]
    %v2578 = vld [vmem:[#allocation11 + $0x80] sm:$0xff]
    %v2579 = vld [vmem:[#allocation11 + $0x88] sm:$0xff]
    %v2580 = vld [vmem:[#allocation11 + $0x90] sm:$0xff]
    %v2581 = vld [vmem:[#allocation11 + $0x98] sm:$0xff]
    %v2582 = vld [vmem:[#allocation11 + $0xa0] sm:$0xff]
    %v2583 = vld [vmem:[#allocation11 + $0xa8] sm:$0xff]
    %v2584 = vld [vmem:[#allocation11 + $0xb0] sm:$0xff]
    %v2585 = vld [vmem:[#allocation11 + $0xb8] sm:$0xff]
    %v2586 = vld [vmem:[#allocation11 + $0xc0] sm:$0xff]
    %v2587 = vld [vmem:[#allocation11 + $0xc8] sm:$0xff]
    %v2588 = vld [vmem:[#allocation11 + $0xd0] sm:$0xff]
    %v2589 = vld [vmem:[#allocation11 + $0xd8] sm:$0xff]
    %v2590 = vld [vmem:[#allocation11 + $0xe0] sm:$0xff]
    %v2591 = vld [vmem:[#allocation11 + $0xe8] sm:$0xff]
    %v2592 = vld [vmem:[#allocation11 + $0xf0] sm:$0xff]
    %v2593 = vld [vmem:[#allocation11 + $0xf8] sm:$0xff]
    %v2626 = vunpack.c.l.b16 %v2562
    %v2627 = vunpack.c.h.b16 %v2562
    %v2628 = vunpack.c.l.b16 %v2563
    %v2629 = vunpack.c.h.b16 %v2563
    %v2630 = vunpack.c.l.b16 %v2564
    %v2631 = vunpack.c.h.b16 %v2564
    %v2632 = vunpack.c.l.b16 %v2565
    %v2633 = vunpack.c.h.b16 %v2565
    %v2634 = vunpack.c.l.b16 %v2566
    %v2635 = vunpack.c.h.b16 %v2566
    %v2636 = vunpack.c.l.b16 %v2567
    %v2637 = vunpack.c.h.b16 %v2567
    %v2638 = vunpack.c.l.b16 %v2568
    %v2639 = vunpack.c.h.b16 %v2568
    %v2640 = vunpack.c.l.b16 %v2569
    %v2641 = vunpack.c.h.b16 %v2569
    %v2642 = vunpack.c.l.b16 %v2570
    %v2643 = vunpack.c.h.b16 %v2570
    %v2644 = vunpack.c.l.b16 %v2571
    %v2645 = vunpack.c.h.b16 %v2571
    %v2646 = vunpack.c.l.b16 %v2572
    %v2647 = vunpack.c.h.b16 %v2572
    %v2648 = vunpack.c.l.b16 %v2573
    %v2649 = vunpack.c.h.b16 %v2573
    %v2650 = vunpack.c.l.b16 %v2574
    %v2651 = vunpack.c.h.b16 %v2574
    %v2652 = vunpack.c.l.b16 %v2575
    %v2653 = vunpack.c.h.b16 %v2575
    %v2654 = vunpack.c.l.b16 %v2576
    %v2655 = vunpack.c.h.b16 %v2576
    %v2656 = vunpack.c.l.b16 %v2577
    %v2657 = vunpack.c.h.b16 %v2577
    %v2658 = vunpack.c.l.b16 %v2578
    %v2659 = vunpack.c.h.b16 %v2578
    %v2660 = vunpack.c.l.b16 %v2579
    %v2661 = vunpack.c.h.b16 %v2579
    %v2662 = vunpack.c.l.b16 %v2580
    %v2663 = vunpack.c.h.b16 %v2580
    %v2664 = vunpack.c.l.b16 %v2581
    %v2665 = vunpack.c.h.b16 %v2581
    %v2666 = vunpack.c.l.b16 %v2582
    %v2667 = vunpack.c.h.b16 %v2582
    %v2668 = vunpack.c.l.b16 %v2583
    %v2669 = vunpack.c.h.b16 %v2583
    %v2670 = vunpack.c.l.b16 %v2584
    %v2671 = vunpack.c.h.b16 %v2584
    %v2672 = vunpack.c.l.b16 %v2585
    %v2673 = vunpack.c.h.b16 %v2585
    %v2674 = vunpack.c.l.b16 %v2586
    %v2675 = vunpack.c.h.b16 %v2586
    %v2676 = vunpack.c.l.b16 %v2587
    %v2677 = vunpack.c.h.b16 %v2587
    %v2678 = vunpack.c.l.b16 %v2588
    %v2679 = vunpack.c.h.b16 %v2588
    %v2680 = vunpack.c.l.b16 %v2589
    %v2681 = vunpack.c.h.b16 %v2589
    %v2682 = vunpack.c.l.b16 %v2590
    %v2683 = vunpack.c.h.b16 %v2590
    %v2684 = vunpack.c.l.b16 %v2591
    %v2685 = vunpack.c.h.b16 %v2591
    %v2686 = vunpack.c.l.b16 %v2592
    %v2687 = vunpack.c.h.b16 %v2592
    %v2688 = vunpack.c.l.b16 %v2593
    %v2689 = vunpack.c.h.b16 %v2593
    %v2690 = vpack.c.b16 %v2630, %v2626
    %v2691 = vpack.c.b16 %v2631, %v2627
    %v2692 = vpack.c.b16 %v2632, %v2628
    %v2693 = vpack.c.b16 %v2633, %v2629
    %v2694 = vpack.c.b16 %v2638, %v2634
    %v2695 = vpack.c.b16 %v2639, %v2635
    %v2696 = vpack.c.b16 %v2640, %v2636
    %v2697 = vpack.c.b16 %v2641, %v2637
    %v2698 = vpack.c.b16 %v2646, %v2642
    %v2699 = vpack.c.b16 %v2647, %v2643
    %v2700 = vpack.c.b16 %v2648, %v2644
    %v2701 = vpack.c.b16 %v2649, %v2645
    %v2702 = vpack.c.b16 %v2654, %v2650
    %v2703 = vpack.c.b16 %v2655, %v2651
    %v2704 = vpack.c.b16 %v2656, %v2652
    %v2705 = vpack.c.b16 %v2657, %v2653
    %v2706 = vpack.c.b16 %v2662, %v2658
    %v2707 = vpack.c.b16 %v2663, %v2659
    %v2708 = vpack.c.b16 %v2664, %v2660
    %v2709 = vpack.c.b16 %v2665, %v2661
    %v2710 = vpack.c.b16 %v2670, %v2666
    %v2711 = vpack.c.b16 %v2671, %v2667
    %v2712 = vpack.c.b16 %v2672, %v2668
    %v2713 = vpack.c.b16 %v2673, %v2669
    %v2714 = vpack.c.b16 %v2678, %v2674
    %v2715 = vpack.c.b16 %v2679, %v2675
    %v2716 = vpack.c.b16 %v2680, %v2676
    %v2717 = vpack.c.b16 %v2681, %v2677
    %v2718 = vpack.c.b16 %v2686, %v2682
    %v2719 = vpack.c.b16 %v2687, %v2683
    %v2720 = vpack.c.b16 %v2688, %v2684
    %v2721 = vpack.c.b16 %v2689, %v2685
    %2754 = vmatprep.subr.bf16.mxu0 %v2691
    %2755 = vmatpush1.bf16.msra.mxu0 %v2690
    %2756 = vmatprep.subr.bf16.mxu0 %v2695
    %2757 = vmatpush1.bf16.msra.mxu0 %v2694
    %2758 = vmatprep.subr.bf16.mxu0 %v2699
    %2759 = vmatpush1.bf16.msra.mxu0 %v2698
    %2760 = vmatprep.subr.bf16.mxu0 %v2703
    %2761 = vmatpush1.bf16.msra.mxu0 %v2702
    %2762 = vmatprep.subr.bf16.mxu0 %v2707
    %2763 = vmatpush1.bf16.msra.mxu0 %v2706
    %2764 = vmatprep.subr.bf16.mxu0 %v2711
    %2765 = vmatpush1.bf16.msra.mxu0 %v2710
    %2766 = vmatprep.subr.bf16.mxu0 %v2715
    %2767 = vmatpush1.bf16.msra.mxu0 %v2714
    %2768 = vmatprep.subr.bf16.mxu0 %v2719
    %2769 = vmatpush1.bf16.msra.mxu0 %v2718
    %2770 = vmatprep.subr.bf16.mxu0 0
    %2771 = vmatpush1.bf16.msra.mxu0 0
    %2772 = vmatprep.subr.bf16.mxu0 0
    %2773 = vmatpush1.bf16.msra.mxu0 0
    %2774 = vmatprep.subr.bf16.mxu0 0
    %2775 = vmatpush1.bf16.msra.mxu0 0
    %2776 = vmatprep.subr.bf16.mxu0 0
    %2777 = vmatpush1.bf16.msra.mxu0 0
    %2778 = vmatprep.subr.bf16.mxu0 0
    %2779 = vmatpush1.bf16.msra.mxu0 0
    %2780 = vmatprep.subr.bf16.mxu0 0
    %2781 = vmatpush1.bf16.msra.mxu0 0
    %2782 = vmatprep.subr.bf16.mxu0 0
    %2783 = vmatpush1.bf16.msra.mxu0 0
    %2784 = vmatprep.subr.bf16.mxu0 0
    %2785 = vmatpush1.bf16.msra.mxu0 0
    %2786 = vmatprep.mubr.bf16.mxu0 0
    %2787 = vmatmul.mubr.bf16.gmra.mrb[0].mxu0 %v2561
    %v2788 = vpop.f32.mrb[0].mxu0
    %v2789 = vadd.f32 0.0, %v2788
    %v2790 = vpop.f32.mrb[0].mxu0
    %v2791 = vadd.f32 0.0, %v2790
    %v2792 = vpop.f32.mrb[0].mxu0
    %v2793 = vpop.f32.mrb[0].mxu0
    %2794 = vdwg.mxu0
    %2795 = vmatprep.subr.bf16.mxu0 %v2693
    %2796 = vmatpush1.bf16.msra.mxu0 %v2692
    %2797 = vmatprep.subr.bf16.mxu0 %v2697
    %2798 = vmatpush1.bf16.msra.mxu0 %v2696
    %2799 = vmatprep.subr.bf16.mxu0 %v2701
    %2800 = vmatpush1.bf16.msra.mxu0 %v2700
    %2801 = vmatprep.subr.bf16.mxu0 %v2705
    %2802 = vmatpush1.bf16.msra.mxu0 %v2704
    %2803 = vmatprep.subr.bf16.mxu0 %v2709
    %2804 = vmatpush1.bf16.msra.mxu0 %v2708
    %2805 = vmatprep.subr.bf16.mxu0 %v2713
    %2806 = vmatpush1.bf16.msra.mxu0 %v2712
    %2807 = vmatprep.subr.bf16.mxu0 %v2717
    %2808 = vmatpush1.bf16.msra.mxu0 %v2716
    %2809 = vmatprep.subr.bf16.mxu0 %v2721
    %2810 = vmatpush1.bf16.msra.mxu0 %v2720
    %2811 = vmatprep.subr.bf16.mxu0 0
    %2812 = vmatpush1.bf16.msra.mxu0 0
    %2813 = vmatprep.subr.bf16.mxu0 0
    %2814 = vmatpush1.bf16.msra.mxu0 0
    %2815 = vmatprep.subr.bf16.mxu0 0
    %2816 = vmatpush1.bf16.msra.mxu0 0
    %2817 = vmatprep.subr.bf16.mxu0 0
    %2818 = vmatpush1.bf16.msra.mxu0 0
    %2819 = vmatprep.subr.bf16.mxu0 0
    %2820 = vmatpush1.bf16.msra.mxu0 0
    %2821 = vmatprep.subr.bf16.mxu0 0
    %2822 = vmatpush1.bf16.msra.mxu0 0
    %2823 = vmatprep.subr.bf16.mxu0 0
    %2824 = vmatpush1.bf16.msra.mxu0 0
    %2825 = vmatprep.subr.bf16.mxu0 0
    %2826 = vmatpush1.bf16.msra.mxu0 0
    %2827 = vmatprep.mubr.bf16.mxu0 0
    %2828 = vmatmul.mubr.bf16.gmra.mrb[0].mxu0 %v2561
    %v2829 = vpop.f32.mrb[0].mxu0
    %v2830 = vadd.f32 0.0, %v2829
    %v2831 = vpop.f32.mrb[0].mxu0
    %v2832 = vadd.f32 0.0, %v2831
    %v2833 = vpop.f32.mrb[0].mxu0
    %v2834 = vpop.f32.mrb[0].mxu0
    %2835 = vdwg.mxu0
    %v2836 = vadd.f32 %v2556, %v2789
    %v2837 = vadd.f32 %v2557, %v2791
    %v2838 = vadd.f32 %v2558, %v2830
    %v2839 = vadd.f32 %v2559, %v2832
    %v2840 = vmul.f32 %v2836, 0.5
    %v2841 = vtanh.pop %v2840
    %v2842 = vmul.f32 %v2841, 0.5
    %v2843 = vadd.f32 %v2842, 0.5
    %v2844 = vmul.f32 %v2837, 0.5
    %v2845 = vtanh.pop %v2844
    %v2846 = vmul.f32 %v2845, 0.5
    %v2847 = vadd.f32 %v2846, 0.5
    %v2848 = vtanh.pop %v2838
    %v2849 = vmul.f32 %v2839, 0.5
    %v2850 = vtanh.pop %v2849
    %v2851 = vmul.f32 %v2850, 0.5
    %v2852 = vadd.f32 %v2851, 0.5
    %v2853 = vld [vmem:[#allocation5] sm:$0xff]
    %v2854 = vmul.f32 %v2847, %v2853
    %v2855 = vmul.f32 %v2843, %v2848
    %v2856 = vadd.f32 %v2854, %v2855
    %v2857 = vtanh.pop %v2856
    %v2858 = vmul.f32 %v2852, %v2857
    %2859 = vst [vmem:[#allocation5] sm:$0xff] %v2856
    %2860 = vst [vmem:[#allocation4] sm:$0xff] %v2858
    %s2861 = scalar_lea.vmem [#allocation2], 56
    %2862 = vst [vmem:[%s2861] sm:$0xff] %v2858
    %v2863 = vld [vmem:[#allocation2] sm:$0xff]
    %v2864 = vld [vmem:[#allocation2 + $0x8] sm:$0xff]
    %v2865 = vld [vmem:[#allocation2 + $0x10] sm:$0xff]
    %v2866 = vld [vmem:[#allocation2 + $0x18] sm:$0xff]
    %v2867 = vld [vmem:[#allocation2 + $0x20] sm:$0xff]
    %v2868 = vld [vmem:[#allocation2 + $0x28] sm:$0xff]
    %v2869 = vld [vmem:[#allocation2 + $0x30] sm:$0xff]
    %v2870 = vld [vmem:[#allocation2 + $0x38] sm:$0xff]
    %v2871 = vpack.c.bf16 %v2864, %v2863
    %v2872 = vpack.c.bf16 %v2866, %v2865
    %v2873 = vpack.c.bf16 %v2868, %v2867
    %v2874 = vpack.c.bf16 %v2870, %v2869
    %v2875 = vld [vmem:[#allocation14] sm:$0xff]
    %v2876 = vld [vmem:[#allocation14 + $0x8] sm:$0xff]
    %v2877 = vld [vmem:[#allocation14 + $0x10] sm:$0xff]
    %v2878 = vld [vmem:[#allocation14 + $0x18] sm:$0xff]
    %v2879 = vld [vmem:[#allocation14 + $0x20] sm:$0xff]
    %v2880 = vld [vmem:[#allocation14 + $0x28] sm:$0xff]
    %v2881 = vld [vmem:[#allocation14 + $0x30] sm:$0xff]
    %v2882 = vld [vmem:[#allocation14 + $0x38] sm:$0xff]
    %v2883 = vld [vmem:[#allocation14 + $0x40] sm:$0xff]
    %v2884 = vld [vmem:[#allocation14 + $0x48] sm:$0xff]
    %v2885 = vld [vmem:[#allocation14 + $0x50] sm:$0xff]
    %v2886 = vld [vmem:[#allocation14 + $0x58] sm:$0xff]
    %v2887 = vld [vmem:[#allocation14 + $0x60] sm:$0xff]
    %v2888 = vld [vmem:[#allocation14 + $0x68] sm:$0xff]
    %v2889 = vld [vmem:[#allocation14 + $0x70] sm:$0xff]
    %v2890 = vld [vmem:[#allocation14 + $0x78] sm:$0xff]
    %v2891 = vld [vmem:[#allocation14 + $0x80] sm:$0xff]
    %v2892 = vld [vmem:[#allocation14 + $0x88] sm:$0xff]
    %v2893 = vld [vmem:[#allocation14 + $0x90] sm:$0xff]
    %v2894 = vld [vmem:[#allocation14 + $0x98] sm:$0xff]
    %v2895 = vld [vmem:[#allocation14 + $0xa0] sm:$0xff]
    %v2896 = vld [vmem:[#allocation14 + $0xa8] sm:$0xff]
    %v2897 = vld [vmem:[#allocation14 + $0xb0] sm:$0xff]
    %v2898 = vld [vmem:[#allocation14 + $0xb8] sm:$0xff]
    %v2899 = vld [vmem:[#allocation14 + $0xc0] sm:$0xff]
    %v2900 = vld [vmem:[#allocation14 + $0xc8] sm:$0xff]
    %v2901 = vld [vmem:[#allocation14 + $0xd0] sm:$0xff]
    %v2902 = vld [vmem:[#allocation14 + $0xd8] sm:$0xff]
    %v2903 = vld [vmem:[#allocation14 + $0xe0] sm:$0xff]
    %v2904 = vld [vmem:[#allocation14 + $0xe8] sm:$0xff]
    %v2905 = vld [vmem:[#allocation14 + $0xf0] sm:$0xff]
    %v2906 = vld [vmem:[#allocation14 + $0xf8] sm:$0xff]
    %v2907 = vld [vmem:[#allocation17] sm:$0xf]
    %v2909 = vlaneseq
    %v2910 = vshrl.u32 %v2909, 7
    %v2911 = vsub.s32 0, %v2910
    %v2912 = vrot.slane %v2907, %v2911
    %v2913 = vlaneseq
    %v2914 = vshrl.u32 %v2913, 7
    %v2915 = vsub.s32 1, %v2914
    %v2916 = vrot.slane %v2907, %v2915
    %v2917 = vlaneseq
    %v2918 = vshrl.u32 %v2917, 7
    %v2919 = vsub.s32 2, %v2918
    %v2920 = vrot.slane %v2907, %v2919
    %v2921 = vlaneseq
    %v2922 = vshrl.u32 %v2921, 7
    %v2923 = vsub.s32 3, %v2922
    %v2924 = vrot.slane %v2907, %v2923
    %v2961 = vunpack.c.l.b16 %v2875
    %v2962 = vunpack.c.h.b16 %v2875
    %v2963 = vunpack.c.l.b16 %v2876
    %v2964 = vunpack.c.h.b16 %v2876
    %v2965 = vunpack.c.l.b16 %v2877
    %v2966 = vunpack.c.h.b16 %v2877
    %v2967 = vunpack.c.l.b16 %v2878
    %v2968 = vunpack.c.h.b16 %v2878
    %v2969 = vunpack.c.l.b16 %v2879
    %v2970 = vunpack.c.h.b16 %v2879
    %v2971 = vunpack.c.l.b16 %v2880
    %v2972 = vunpack.c.h.b16 %v2880
    %v2973 = vunpack.c.l.b16 %v2881
    %v2974 = vunpack.c.h.b16 %v2881
    %v2975 = vunpack.c.l.b16 %v2882
    %v2976 = vunpack.c.h.b16 %v2882
    %v2977 = vunpack.c.l.b16 %v2883
    %v2978 = vunpack.c.h.b16 %v2883
    %v2979 = vunpack.c.l.b16 %v2884
    %v2980 = vunpack.c.h.b16 %v2884
    %v2981 = vunpack.c.l.b16 %v2885
    %v2982 = vunpack.c.h.b16 %v2885
    %v2983 = vunpack.c.l.b16 %v2886
    %v2984 = vunpack.c.h.b16 %v2886
    %v2985 = vunpack.c.l.b16 %v2887
    %v2986 = vunpack.c.h.b16 %v2887
    %v2987 = vunpack.c.l.b16 %v2888
    %v2988 = vunpack.c.h.b16 %v2888
    %v2989 = vunpack.c.l.b16 %v2889
    %v2990 = vunpack.c.h.b16 %v2889
    %v2991 = vunpack.c.l.b16 %v2890
    %v2992 = vunpack.c.h.b16 %v2890
    %v2993 = vunpack.c.l.b16 %v2891
    %v2994 = vunpack.c.h.b16 %v2891
    %v2995 = vunpack.c.l.b16 %v2892
    %v2996 = vunpack.c.h.b16 %v2892
    %v2997 = vunpack.c.l.b16 %v2893
    %v2998 = vunpack.c.h.b16 %v2893
    %v2999 = vunpack.c.l.b16 %v2894
    %v3000 = vunpack.c.h.b16 %v2894
    %v3001 = vunpack.c.l.b16 %v2895
    %v3002 = vunpack.c.h.b16 %v2895
    %v3003 = vunpack.c.l.b16 %v2896
    %v3004 = vunpack.c.h.b16 %v2896
    %v3005 = vunpack.c.l.b16 %v2897
    %v3006 = vunpack.c.h.b16 %v2897
    %v3007 = vunpack.c.l.b16 %v2898
    %v3008 = vunpack.c.h.b16 %v2898
    %v3009 = vunpack.c.l.b16 %v2899
    %v3010 = vunpack.c.h.b16 %v2899
    %v3011 = vunpack.c.l.b16 %v2900
    %v3012 = vunpack.c.h.b16 %v2900
    %v3013 = vunpack.c.l.b16 %v2901
    %v3014 = vunpack.c.h.b16 %v2901
    %v3015 = vunpack.c.l.b16 %v2902
    %v3016 = vunpack.c.h.b16 %v2902
    %v3017 = vunpack.c.l.b16 %v2903
    %v3018 = vunpack.c.h.b16 %v2903
    %v3019 = vunpack.c.l.b16 %v2904
    %v3020 = vunpack.c.h.b16 %v2904
    %v3021 = vunpack.c.l.b16 %v2905
    %v3022 = vunpack.c.h.b16 %v2905
    %v3023 = vunpack.c.l.b16 %v2906
    %v3024 = vunpack.c.h.b16 %v2906
    %v3025 = vpack.c.b16 %v2965, %v2961
    %v3026 = vpack.c.b16 %v2966, %v2962
    %v3027 = vpack.c.b16 %v2967, %v2963
    %v3028 = vpack.c.b16 %v2968, %v2964
    %v3029 = vpack.c.b16 %v2973, %v2969
    %v3030 = vpack.c.b16 %v2974, %v2970
    %v3031 = vpack.c.b16 %v2975, %v2971
    %v3032 = vpack.c.b16 %v2976, %v2972
    %v3033 = vpack.c.b16 %v2981, %v2977
    %v3034 = vpack.c.b16 %v2982, %v2978
    %v3035 = vpack.c.b16 %v2983, %v2979
    %v3036 = vpack.c.b16 %v2984, %v2980
    %v3037 = vpack.c.b16 %v2989, %v2985
    %v3038 = vpack.c.b16 %v2990, %v2986
    %v3039 = vpack.c.b16 %v2991, %v2987
    %v3040 = vpack.c.b16 %v2992, %v2988
    %v3041 = vpack.c.b16 %v2997, %v2993
    %v3042 = vpack.c.b16 %v2998, %v2994
    %v3043 = vpack.c.b16 %v2999, %v2995
    %v3044 = vpack.c.b16 %v3000, %v2996
    %v3045 = vpack.c.b16 %v3005, %v3001
    %v3046 = vpack.c.b16 %v3006, %v3002
    %v3047 = vpack.c.b16 %v3007, %v3003
    %v3048 = vpack.c.b16 %v3008, %v3004
    %v3049 = vpack.c.b16 %v3013, %v3009
    %v3050 = vpack.c.b16 %v3014, %v3010
    %v3051 = vpack.c.b16 %v3015, %v3011
    %v3052 = vpack.c.b16 %v3016, %v3012
    %v3053 = vpack.c.b16 %v3021, %v3017
    %v3054 = vpack.c.b16 %v3022, %v3018
    %v3055 = vpack.c.b16 %v3023, %v3019
    %v3056 = vpack.c.b16 %v3024, %v3020
    %3089 = vmatprep.subr.bf16.mxu0 %v3026
    %3090 = vmatpush1.bf16.msra.mxu0 %v3025
    %3091 = vmatprep.subr.bf16.mxu0 %v3030
    %3092 = vmatpush1.bf16.msra.mxu0 %v3029
    %3093 = vmatprep.subr.bf16.mxu0 %v3034
    %3094 = vmatpush1.bf16.msra.mxu0 %v3033
    %3095 = vmatprep.subr.bf16.mxu0 %v3038
    %3096 = vmatpush1.bf16.msra.mxu0 %v3037
    %3097 = vmatprep.subr.bf16.mxu0 %v3042
    %3098 = vmatpush1.bf16.msra.mxu0 %v3041
    %3099 = vmatprep.subr.bf16.mxu0 %v3046
    %3100 = vmatpush1.bf16.msra.mxu0 %v3045
    %3101 = vmatprep.subr.bf16.mxu0 %v3050
    %3102 = vmatpush1.bf16.msra.mxu0 %v3049
    %3103 = vmatprep.subr.bf16.mxu0 %v3054
    %3104 = vmatpush1.bf16.msra.mxu0 %v3053
    %3105 = vmatprep.subr.bf16.mxu0 0
    %3106 = vmatpush1.bf16.msra.mxu0 0
    %3107 = vmatprep.subr.bf16.mxu0 0
    %3108 = vmatpush1.bf16.msra.mxu0 0
    %3109 = vmatprep.subr.bf16.mxu0 0
    %3110 = vmatpush1.bf16.msra.mxu0 0
    %3111 = vmatprep.subr.bf16.mxu0 0
    %3112 = vmatpush1.bf16.msra.mxu0 0
    %3113 = vmatprep.subr.bf16.mxu0 0
    %3114 = vmatpush1.bf16.msra.mxu0 0
    %3115 = vmatprep.subr.bf16.mxu0 0
    %3116 = vmatpush1.bf16.msra.mxu0 0
    %3117 = vmatprep.subr.bf16.mxu0 0
    %3118 = vmatpush1.bf16.msra.mxu0 0
    %3119 = vmatprep.subr.bf16.mxu0 0
    %3120 = vmatpush1.bf16.msra.mxu0 0
    %3121 = vmatprep.mubr.bf16.mxu0 0
    %3122 = vmatmul.mubr.bf16.gmra.mrb[0].mxu0 %v2871
    %v3123 = vpop.f32.mrb[0].mxu0
    %v3124 = vadd.f32 %v2912, %v3123
    %v3125 = vpop.f32.mrb[0].mxu0
    %v3126 = vadd.f32 %v2916, %v3125
    %v3127 = vpop.f32.mrb[0].mxu0
    %v3128 = vadd.f32 %v2912, %v3127
    %v3129 = vpop.f32.mrb[0].mxu0
    %v3130 = vadd.f32 %v2916, %v3129
    %3131 = vmatprep.mubr.bf16.mxu0 0
    %3132 = vmatmul.mubr.bf16.gmra.mrb[0].mxu0 %v2872
    %v3133 = vpop.f32.mrb[0].mxu0
    %v3134 = vadd.f32 %v2912, %v3133
    %v3135 = vpop.f32.mrb[0].mxu0
    %v3136 = vadd.f32 %v2916, %v3135
    %v3137 = vpop.f32.mrb[0].mxu0
    %v3138 = vadd.f32 %v2912, %v3137
    %v3139 = vpop.f32.mrb[0].mxu0
    %v3140 = vadd.f32 %v2916, %v3139
    %3141 = vmatprep.mubr.bf16.mxu0 0
    %3142 = vmatmul.mubr.bf16.gmra.mrb[0].mxu0 %v2873
    %v3143 = vpop.f32.mrb[0].mxu0
    %v3144 = vadd.f32 %v2912, %v3143
    %v3145 = vpop.f32.mrb[0].mxu0
    %v3146 = vadd.f32 %v2916, %v3145
    %v3147 = vpop.f32.mrb[0].mxu0
    %v3148 = vadd.f32 %v2912, %v3147
    %v3149 = vpop.f32.mrb[0].mxu0
    %v3150 = vadd.f32 %v2916, %v3149
    %3151 = vmatprep.mubr.bf16.mxu0 0
    %3152 = vmatmul.mubr.bf16.gmra.mrb[0].mxu0 %v2874
    %v3153 = vpop.f32.mrb[0].mxu0
    %v3154 = vadd.f32 %v2912, %v3153
    %v3155 = vpop.f32.mrb[0].mxu0
    %v3156 = vadd.f32 %v2916, %v3155
    %v3157 = vpop.f32.mrb[0].mxu0
    %v3158 = vadd.f32 %v2912, %v3157
    %v3159 = vpop.f32.mrb[0].mxu0
    %v3160 = vadd.f32 %v2916, %v3159
    %3161 = vdwg.mxu0
    %3162 = vmatprep.subr.bf16.mxu0 %v3028
    %3163 = vmatpush1.bf16.msra.mxu0 %v3027
    %3164 = vmatprep.subr.bf16.mxu0 %v3032
    %3165 = vmatpush1.bf16.msra.mxu0 %v3031
    %3166 = vmatprep.subr.bf16.mxu0 %v3036
    %3167 = vmatpush1.bf16.msra.mxu0 %v3035
    %3168 = vmatprep.subr.bf16.mxu0 %v3040
    %3169 = vmatpush1.bf16.msra.mxu0 %v3039
    %3170 = vmatprep.subr.bf16.mxu0 %v3044
    %3171 = vmatpush1.bf16.msra.mxu0 %v3043
    %3172 = vmatprep.subr.bf16.mxu0 %v3048
    %3173 = vmatpush1.bf16.msra.mxu0 %v3047
    %3174 = vmatprep.subr.bf16.mxu0 %v3052
    %3175 = vmatpush1.bf16.msra.mxu0 %v3051
    %3176 = vmatprep.subr.bf16.mxu0 %v3056
    %3177 = vmatpush1.bf16.msra.mxu0 %v3055
    %3178 = vmatprep.subr.bf16.mxu0 0
    %3179 = vmatpush1.bf16.msra.mxu0 0
    %3180 = vmatprep.subr.bf16.mxu0 0
    %3181 = vmatpush1.bf16.msra.mxu0 0
    %3182 = vmatprep.subr.bf16.mxu0 0
    %3183 = vmatpush1.bf16.msra.mxu0 0
    %3184 = vmatprep.subr.bf16.mxu0 0
    %3185 = vmatpush1.bf16.msra.mxu0 0
    %3186 = vmatprep.subr.bf16.mxu0 0
    %3187 = vmatpush1.bf16.msra.mxu0 0
    %3188 = vmatprep.subr.bf16.mxu0 0
    %3189 = vmatpush1.bf16.msra.mxu0 0
    %3190 = vmatprep.subr.bf16.mxu0 0
    %3191 = vmatpush1.bf16.msra.mxu0 0
    %3192 = vmatprep.subr.bf16.mxu0 0
    %3193 = vmatpush1.bf16.msra.mxu0 0
    %3194 = vmatprep.mubr.bf16.mxu0 0
    %3195 = vmatmul.mubr.bf16.gmra.mrb[0].mxu0 %v2871
    %v3196 = vpop.f32.mrb[0].mxu0
    %v3197 = vadd.f32 %v2920, %v3196
    %v3198 = vpop.f32.mrb[0].mxu0
    %v3199 = vadd.f32 %v2924, %v3198
    %v3200 = vpop.f32.mrb[0].mxu0
    %v3201 = vadd.f32 %v2920, %v3200
    %v3202 = vpop.f32.mrb[0].mxu0
    %v3203 = vadd.f32 %v2924, %v3202
    %3204 = vmatprep.mubr.bf16.mxu0 0
    %3205 = vmatmul.mubr.bf16.gmra.mrb[0].mxu0 %v2872
    %v3206 = vpop.f32.mrb[0].mxu0
    %v3207 = vadd.f32 %v2920, %v3206
    %v3208 = vpop.f32.mrb[0].mxu0
    %v3209 = vadd.f32 %v2924, %v3208
    %v3210 = vpop.f32.mrb[0].mxu0
    %v3211 = vadd.f32 %v2920, %v3210
    %v3212 = vpop.f32.mrb[0].mxu0
    %v3213 = vadd.f32 %v2924, %v3212
    %3214 = vmatprep.mubr.bf16.mxu0 0
    %3215 = vmatmul.mubr.bf16.gmra.mrb[0].mxu0 %v2873
    %v3216 = vpop.f32.mrb[0].mxu0
    %v3217 = vadd.f32 %v2920, %v3216
    %v3218 = vpop.f32.mrb[0].mxu0
    %v3219 = vadd.f32 %v2924, %v3218
    %v3220 = vpop.f32.mrb[0].mxu0
    %v3221 = vadd.f32 %v2920, %v3220
    %v3222 = vpop.f32.mrb[0].mxu0
    %v3223 = vadd.f32 %v2924, %v3222
    %3224 = vmatprep.mubr.bf16.mxu0 0
    %3225 = vmatmul.mubr.bf16.gmra.mrb[0].mxu0 %v2874
    %v3226 = vpop.f32.mrb[0].mxu0
    %v3227 = vadd.f32 %v2920, %v3226
    %v3228 = vpop.f32.mrb[0].mxu0
    %v3229 = vadd.f32 %v2924, %v3228
    %v3230 = vpop.f32.mrb[0].mxu0
    %v3231 = vadd.f32 %v2920, %v3230
    %v3232 = vpop.f32.mrb[0].mxu0
    %v3233 = vadd.f32 %v2924, %v3232
    %3234 = vdwg.mxu0
    %3235 = vst [vmem:[#allocation3] sm:$0xff] %v3124
    %3236 = vst [vmem:[#allocation3 + $0x8] sm:$0xff] %v3126
    %3237 = vst [vmem:[#allocation3 + $0x10] sm:$0xff] %v3197
    %3238 = vst [vmem:[#allocation3 + $0x18] sm:$0xff] %v3199
    %3239 = vst [vmem:[#allocation3 + $0x20] sm:$0xff] %v3128
    %3240 = vst [vmem:[#allocation3 + $0x28] sm:$0xff] %v3130
    %3241 = vst [vmem:[#allocation3 + $0x30] sm:$0xff] %v3201
    %3242 = vst [vmem:[#allocation3 + $0x38] sm:$0xff] %v3203
    %3243 = vst [vmem:[#allocation3 + $0x40] sm:$0xff] %v3134
    %3244 = vst [vmem:[#allocation3 + $0x48] sm:$0xff] %v3136
    %3245 = vst [vmem:[#allocation3 + $0x50] sm:$0xff] %v3207
    %3246 = vst [vmem:[#allocation3 + $0x58] sm:$0xff] %v3209
    %3247 = vst [vmem:[#allocation3 + $0x60] sm:$0xff] %v3138
    %3248 = vst [vmem:[#allocation3 + $0x68] sm:$0xff] %v3140
    %3249 = vst [vmem:[#allocation3 + $0x70] sm:$0xff] %v3211
    %3250 = vst [vmem:[#allocation3 + $0x78] sm:$0xff] %v3213
    %3251 = vst [vmem:[#allocation3 + $0x80] sm:$0xff] %v3144
    %3252 = vst [vmem:[#allocation3 + $0x88] sm:$0xff] %v3146
    %3253 = vst [vmem:[#allocation3 + $0x90] sm:$0xff] %v3217
    %3254 = vst [vmem:[#allocation3 + $0x98] sm:$0xff] %v3219
    %3255 = vst [vmem:[#allocation3 + $0xa0] sm:$0xff] %v3148
    %3256 = vst [vmem:[#allocation3 + $0xa8] sm:$0xff] %v3150
    %3257 = vst [vmem:[#allocation3 + $0xb0] sm:$0xff] %v3221
    %3258 = vst [vmem:[#allocation3 + $0xb8] sm:$0xff] %v3223
    %3259 = vst [vmem:[#allocation3 + $0xc0] sm:$0xff] %v3154
    %3260 = vst [vmem:[#allocation3 + $0xc8] sm:$0xff] %v3156
    %3261 = vst [vmem:[#allocation3 + $0xd0] sm:$0xff] %v3227
    %3262 = vst [vmem:[#allocation3 + $0xd8] sm:$0xff] %v3229
    %3263 = vst [vmem:[#allocation3 + $0xe0] sm:$0xff] %v3158
    %3264 = vst [vmem:[#allocation3 + $0xe8] sm:$0xff] %v3160
    %3265 = vst [vmem:[#allocation3 + $0xf0] sm:$0xff] %v3231
    %3266 = vst [vmem:[#allocation3 + $0xf8] sm:$0xff] %v3233
    %3267 = vst [vmem:[#allocation4] sm:$0xff] 0.0
    %3268 = vst [vmem:[#allocation5] sm:$0xff] 0.0
    %v3269 = vld [vmem:[#allocation3] sm:$0xff]
    %v3270 = vld [vmem:[#allocation3 + $0x8] sm:$0xff]
    %v3271 = vld [vmem:[#allocation3 + $0x10] sm:$0xff]
    %v3272 = vld [vmem:[#allocation3 + $0x18] sm:$0xff]
    %v3273 = vld [vmem:[#allocation4] sm:$0xff]
    %v3274 = vpack.c.bf16 %v3273, %v3273
    %v3275 = vld [vmem:[#allocation15] sm:$0xff]
    %v3276 = vld [vmem:[#allocation15 + $0x8] sm:$0xff]
    %v3277 = vld [vmem:[#allocation15 + $0x10] sm:$0xff]
    %v3278 = vld [vmem:[#allocation15 + $0x18] sm:$0xff]
    %v3279 = vld [vmem:[#allocation15 + $0x20] sm:$0xff]
    %v3280 = vld [vmem:[#allocation15 + $0x28] sm:$0xff]
    %v3281 = vld [vmem:[#allocation15 + $0x30] sm:$0xff]
    %v3282 = vld [vmem:[#allocation15 + $0x38] sm:$0xff]
    %v3283 = vld [vmem:[#allocation15 + $0x40] sm:$0xff]
    %v3284 = vld [vmem:[#allocation15 + $0x48] sm:$0xff]
    %v3285 = vld [vmem:[#allocation15 + $0x50] sm:$0xff]
    %v3286 = vld [vmem:[#allocation15 + $0x58] sm:$0xff]
    %v3287 = vld [vmem:[#allocation15 + $0x60] sm:$0xff]
    %v3288 = vld [vmem:[#allocation15 + $0x68] sm:$0xff]
    %v3289 = vld [vmem:[#allocation15 + $0x70] sm:$0xff]
    %v3290 = vld [vmem:[#allocation15 + $0x78] sm:$0xff]
    %v3291 = vld [vmem:[#allocation15 + $0x80] sm:$0xff]
    %v3292 = vld [vmem:[#allocation15 + $0x88] sm:$0xff]
    %v3293 = vld [vmem:[#allocation15 + $0x90] sm:$0xff]
    %v3294 = vld [vmem:[#allocation15 + $0x98] sm:$0xff]
    %v3295 = vld [vmem:[#allocation15 + $0xa0] sm:$0xff]
    %v3296 = vld [vmem:[#allocation15 + $0xa8] sm:$0xff]
    %v3297 = vld [vmem:[#allocation15 + $0xb0] sm:$0xff]
    %v3298 = vld [vmem:[#allocation15 + $0xb8] sm:$0xff]
    %v3299 = vld [vmem:[#allocation15 + $0xc0] sm:$0xff]
    %v3300 = vld [vmem:[#allocation15 + $0xc8] sm:$0xff]
    %v3301 = vld [vmem:[#allocation15 + $0xd0] sm:$0xff]
    %v3302 = vld [vmem:[#allocation15 + $0xd8] sm:$0xff]
    %v3303 = vld [vmem:[#allocation15 + $0xe0] sm:$0xff]
    %v3304 = vld [vmem:[#allocation15 + $0xe8] sm:$0xff]
    %v3305 = vld [vmem:[#allocation15 + $0xf0] sm:$0xff]
    %v3306 = vld [vmem:[#allocation15 + $0xf8] sm:$0xff]
    %v3339 = vunpack.c.l.b16 %v3275
    %v3340 = vunpack.c.h.b16 %v3275
    %v3341 = vunpack.c.l.b16 %v3276
    %v3342 = vunpack.c.h.b16 %v3276
    %v3343 = vunpack.c.l.b16 %v3277
    %v3344 = vunpack.c.h.b16 %v3277
    %v3345 = vunpack.c.l.b16 %v3278
    %v3346 = vunpack.c.h.b16 %v3278
    %v3347 = vunpack.c.l.b16 %v3279
    %v3348 = vunpack.c.h.b16 %v3279
    %v3349 = vunpack.c.l.b16 %v3280
    %v3350 = vunpack.c.h.b16 %v3280
    %v3351 = vunpack.c.l.b16 %v3281
    %v3352 = vunpack.c.h.b16 %v3281
    %v3353 = vunpack.c.l.b16 %v3282
    %v3354 = vunpack.c.h.b16 %v3282
    %v3355 = vunpack.c.l.b16 %v3283
    %v3356 = vunpack.c.h.b16 %v3283
    %v3357 = vunpack.c.l.b16 %v3284
    %v3358 = vunpack.c.h.b16 %v3284
    %v3359 = vunpack.c.l.b16 %v3285
    %v3360 = vunpack.c.h.b16 %v3285
    %v3361 = vunpack.c.l.b16 %v3286
    %v3362 = vunpack.c.h.b16 %v3286
    %v3363 = vunpack.c.l.b16 %v3287
    %v3364 = vunpack.c.h.b16 %v3287
    %v3365 = vunpack.c.l.b16 %v3288
    %v3366 = vunpack.c.h.b16 %v3288
    %v3367 = vunpack.c.l.b16 %v3289
    %v3368 = vunpack.c.h.b16 %v3289
    %v3369 = vunpack.c.l.b16 %v3290
    %v3370 = vunpack.c.h.b16 %v3290
    %v3371 = vunpack.c.l.b16 %v3291
    %v3372 = vunpack.c.h.b16 %v3291
    %v3373 = vunpack.c.l.b16 %v3292
    %v3374 = vunpack.c.h.b16 %v3292
    %v3375 = vunpack.c.l.b16 %v3293
    %v3376 = vunpack.c.h.b16 %v3293
    %v3377 = vunpack.c.l.b16 %v3294
    %v3378 = vunpack.c.h.b16 %v3294
    %v3379 = vunpack.c.l.b16 %v3295
    %v3380 = vunpack.c.h.b16 %v3295
    %v3381 = vunpack.c.l.b16 %v3296
    %v3382 = vunpack.c.h.b16 %v3296
    %v3383 = vunpack.c.l.b16 %v3297
    %v3384 = vunpack.c.h.b16 %v3297
    %v3385 = vunpack.c.l.b16 %v3298
    %v3386 = vunpack.c.h.b16 %v3298
    %v3387 = vunpack.c.l.b16 %v3299
    %v3388 = vunpack.c.h.b16 %v3299
    %v3389 = vunpack.c.l.b16 %v3300
    %v3390 = vunpack.c.h.b16 %v3300
    %v3391 = vunpack.c.l.b16 %v3301
    %v3392 = vunpack.c.h.b16 %v3301
    %v3393 = vunpack.c.l.b16 %v3302
    %v3394 = vunpack.c.h.b16 %v3302
    %v3395 = vunpack.c.l.b16 %v3303
    %v3396 = vunpack.c.h.b16 %v3303
    %v3397 = vunpack.c.l.b16 %v3304
    %v3398 = vunpack.c.h.b16 %v3304
    %v3399 = vunpack.c.l.b16 %v3305
    %v3400 = vunpack.c.h.b16 %v3305
    %v3401 = vunpack.c.l.b16 %v3306
    %v3402 = vunpack.c.h.b16 %v3306
    %v3403 = vpack.c.b16 %v3343, %v3339
    %v3404 = vpack.c.b16 %v3344, %v3340
    %v3405 = vpack.c.b16 %v3345, %v3341
    %v3406 = vpack.c.b16 %v3346, %v3342
    %v3407 = vpack.c.b16 %v3351, %v3347
    %v3408 = vpack.c.b16 %v3352, %v3348
    %v3409 = vpack.c.b16 %v3353, %v3349
    %v3410 = vpack.c.b16 %v3354, %v3350
    %v3411 = vpack.c.b16 %v3359, %v3355
    %v3412 = vpack.c.b16 %v3360, %v3356
    %v3413 = vpack.c.b16 %v3361, %v3357
    %v3414 = vpack.c.b16 %v3362, %v3358
    %v3415 = vpack.c.b16 %v3367, %v3363
    %v3416 = vpack.c.b16 %v3368, %v3364
    %v3417 = vpack.c.b16 %v3369, %v3365
    %v3418 = vpack.c.b16 %v3370, %v3366
    %v3419 = vpack.c.b16 %v3375, %v3371
    %v3420 = vpack.c.b16 %v3376, %v3372
    %v3421 = vpack.c.b16 %v3377, %v3373
    %v3422 = vpack.c.b16 %v3378, %v3374
    %v3423 = vpack.c.b16 %v3383, %v3379
    %v3424 = vpack.c.b16 %v3384, %v3380
    %v3425 = vpack.c.b16 %v3385, %v3381
    %v3426 = vpack.c.b16 %v3386, %v3382
    %v3427 = vpack.c.b16 %v3391, %v3387
    %v3428 = vpack.c.b16 %v3392, %v3388
    %v3429 = vpack.c.b16 %v3393, %v3389
    %v3430 = vpack.c.b16 %v3394, %v3390
    %v3431 = vpack.c.b16 %v3399, %v3395
    %v3432 = vpack.c.b16 %v3400, %v3396
    %v3433 = vpack.c.b16 %v3401, %v3397
    %v3434 = vpack.c.b16 %v3402, %v3398
    %3467 = vmatprep.subr.bf16.mxu0 %v3404
    %3468 = vmatpush1.bf16.msra.mxu0 %v3403
    %3469 = vmatprep.subr.bf16.mxu0 %v3408
    %3470 = vmatpush1.bf16.msra.mxu0 %v3407
    %3471 = vmatprep.subr.bf16.mxu0 %v3412
    %3472 = vmatpush1.bf16.msra.mxu0 %v3411
    %3473 = vmatprep.subr.bf16.mxu0 %v3416
    %3474 = vmatpush1.bf16.msra.mxu0 %v3415
    %3475 = vmatprep.subr.bf16.mxu0 %v3420
    %3476 = vmatpush1.bf16.msra.mxu0 %v3419
    %3477 = vmatprep.subr.bf16.mxu0 %v3424
    %3478 = vmatpush1.bf16.msra.mxu0 %v3423
    %3479 = vmatprep.subr.bf16.mxu0 %v3428
    %3480 = vmatpush1.bf16.msra.mxu0 %v3427
    %3481 = vmatprep.subr.bf16.mxu0 %v3432
    %3482 = vmatpush1.bf16.msra.mxu0 %v3431
    %3483 = vmatprep.subr.bf16.mxu0 0
    %3484 = vmatpush1.bf16.msra.mxu0 0
    %3485 = vmatprep.subr.bf16.mxu0 0
    %3486 = vmatpush1.bf16.msra.mxu0 0
    %3487 = vmatprep.subr.bf16.mxu0 0
    %3488 = vmatpush1.bf16.msra.mxu0 0
    %3489 = vmatprep.subr.bf16.mxu0 0
    %3490 = vmatpush1.bf16.msra.mxu0 0
    %3491 = vmatprep.subr.bf16.mxu0 0
    %3492 = vmatpush1.bf16.msra.mxu0 0
    %3493 = vmatprep.subr.bf16.mxu0 0
    %3494 = vmatpush1.bf16.msra.mxu0 0
    %3495 = vmatprep.subr.bf16.mxu0 0
    %3496 = vmatpush1.bf16.msra.mxu0 0
    %3497 = vmatprep.subr.bf16.mxu0 0
    %3498 = vmatpush1.bf16.msra.mxu0 0
    %3499 = vmatprep.mubr.bf16.mxu0 0
    %3500 = vmatmul.mubr.bf16.gmra.mrb[0].mxu0 %v3274
    %v3501 = vpop.f32.mrb[0].mxu0
    %v3502 = vadd.f32 0.0, %v3501
    %v3503 = vpop.f32.mrb[0].mxu0
    %v3504 = vadd.f32 0.0, %v3503
    %v3505 = vpop.f32.mrb[0].mxu0
    %v3506 = vpop.f32.mrb[0].mxu0
    %3507 = vdwg.mxu0
    %3508 = vmatprep.subr.bf16.mxu0 %v3406
    %3509 = vmatpush1.bf16.msra.mxu0 %v3405
    %3510 = vmatprep.subr.bf16.mxu0 %v3410
    %3511 = vmatpush1.bf16.msra.mxu0 %v3409
    %3512 = vmatprep.subr.bf16.mxu0 %v3414
    %3513 = vmatpush1.bf16.msra.mxu0 %v3413
    %3514 = vmatprep.subr.bf16.mxu0 %v3418
    %3515 = vmatpush1.bf16.msra.mxu0 %v3417
    %3516 = vmatprep.subr.bf16.mxu0 %v3422
    %3517 = vmatpush1.bf16.msra.mxu0 %v3421
    %3518 = vmatprep.subr.bf16.mxu0 %v3426
    %3519 = vmatpush1.bf16.msra.mxu0 %v3425
    %3520 = vmatprep.subr.bf16.mxu0 %v3430
    %3521 = vmatpush1.bf16.msra.mxu0 %v3429
    %3522 = vmatprep.subr.bf16.mxu0 %v3434
    %3523 = vmatpush1.bf16.msra.mxu0 %v3433
    %3524 = vmatprep.subr.bf16.mxu0 0
    %3525 = vmatpush1.bf16.msra.mxu0 0
    %3526 = vmatprep.subr.bf16.mxu0 0
    %3527 = vmatpush1.bf16.msra.mxu0 0
    %3528 = vmatprep.subr.bf16.mxu0 0
    %3529 = vmatpush1.bf16.msra.mxu0 0
    %3530 = vmatprep.subr.bf16.mxu0 0
    %3531 = vmatpush1.bf16.msra.mxu0 0
    %3532 = vmatprep.subr.bf16.mxu0 0
    %3533 = vmatpush1.bf16.msra.mxu0 0
    %3534 = vmatprep.subr.bf16.mxu0 0
    %3535 = vmatpush1.bf16.msra.mxu0 0
    %3536 = vmatprep.subr.bf16.mxu0 0
    %3537 = vmatpush1.bf16.msra.mxu0 0
    %3538 = vmatprep.subr.bf16.mxu0 0
    %3539 = vmatpush1.bf16.msra.mxu0 0
    %3540 = vmatprep.mubr.bf16.mxu0 0
    %3541 = vmatmul.mubr.bf16.gmra.mrb[0].mxu0 %v3274
    %v3542 = vpop.f32.mrb[0].mxu0
    %v3543 = vadd.f32 0.0, %v3542
    %v3544 = vpop.f32.mrb[0].mxu0
    %v3545 = vadd.f32 0.0, %v3544
    %v3546 = vpop.f32.mrb[0].mxu0
    %v3547 = vpop.f32.mrb[0].mxu0
    %3548 = vdwg.mxu0
    %v3549 = vadd.f32 %v3269, %v3502
    %v3550 = vadd.f32 %v3270, %v3504
    %v3551 = vadd.f32 %v3271, %v3543
    %v3552 = vadd.f32 %v3272, %v3545
    %v3553 = vmul.f32 %v3549, 0.5
    %v3554 = vtanh.pop %v3553
    %v3555 = vmul.f32 %v3554, 0.5
    %v3556 = vadd.f32 %v3555, 0.5
    %v3557 = vmul.f32 %v3550, 0.5
    %v3558 = vtanh.pop %v3557
    %v3559 = vmul.f32 %v3558, 0.5
    %v3560 = vadd.f32 %v3559, 0.5
    %v3561 = vtanh.pop %v3551
    %v3562 = vmul.f32 %v3552, 0.5
    %v3563 = vtanh.pop %v3562
    %v3564 = vmul.f32 %v3563, 0.5
    %v3565 = vadd.f32 %v3564, 0.5
    %v3566 = vld [vmem:[#allocation5] sm:$0xff]
    %v3567 = vmul.f32 %v3560, %v3566
    %v3568 = vmul.f32 %v3556, %v3561
    %v3569 = vadd.f32 %v3567, %v3568
    %v3570 = vtanh.pop %v3569
    %v3571 = vmul.f32 %v3565, %v3570
    %3572 = vst [vmem:[#allocation5] sm:$0xff] %v3569
    %3573 = vst [vmem:[#allocation4] sm:$0xff] %v3571
    %v3574 = vld [vmem:[%s707] sm:$0xff]
    %v3575 = vld [vmem:[%s707 + $0x8] sm:$0xff]
    %v3576 = vld [vmem:[%s707 + $0x10] sm:$0xff]
    %v3577 = vld [vmem:[%s707 + $0x18] sm:$0xff]
    %v3578 = vld [vmem:[#allocation4] sm:$0xff]
    %v3579 = vpack.c.bf16 %v3578, %v3578
    %v3580 = vld [vmem:[#allocation15] sm:$0xff]
    %v3581 = vld [vmem:[#allocation15 + $0x8] sm:$0xff]
    %v3582 = vld [vmem:[#allocation15 + $0x10] sm:$0xff]
    %v3583 = vld [vmem:[#allocation15 + $0x18] sm:$0xff]
    %v3584 = vld [vmem:[#allocation15 + $0x20] sm:$0xff]
    %v3585 = vld [vmem:[#allocation15 + $0x28] sm:$0xff]
    %v3586 = vld [vmem:[#allocation15 + $0x30] sm:$0xff]
    %v3587 = vld [vmem:[#allocation15 + $0x38] sm:$0xff]
    %v3588 = vld [vmem:[#allocation15 + $0x40] sm:$0xff]
    %v3589 = vld [vmem:[#allocation15 + $0x48] sm:$0xff]
    %v3590 = vld [vmem:[#allocation15 + $0x50] sm:$0xff]
    %v3591 = vld [vmem:[#allocation15 + $0x58] sm:$0xff]
    %v3592 = vld [vmem:[#allocation15 + $0x60] sm:$0xff]
    %v3593 = vld [vmem:[#allocation15 + $0x68] sm:$0xff]
    %v3594 = vld [vmem:[#allocation15 + $0x70] sm:$0xff]
    %v3595 = vld [vmem:[#allocation15 + $0x78] sm:$0xff]
    %v3596 = vld [vmem:[#allocation15 + $0x80] sm:$0xff]
    %v3597 = vld [vmem:[#allocation15 + $0x88] sm:$0xff]
    %v3598 = vld [vmem:[#allocation15 + $0x90] sm:$0xff]
    %v3599 = vld [vmem:[#allocation15 + $0x98] sm:$0xff]
    %v3600 = vld [vmem:[#allocation15 + $0xa0] sm:$0xff]
    %v3601 = vld [vmem:[#allocation15 + $0xa8] sm:$0xff]
    %v3602 = vld [vmem:[#allocation15 + $0xb0] sm:$0xff]
    %v3603 = vld [vmem:[#allocation15 + $0xb8] sm:$0xff]
    %v3604 = vld [vmem:[#allocation15 + $0xc0] sm:$0xff]
    %v3605 = vld [vmem:[#allocation15 + $0xc8] sm:$0xff]
    %v3606 = vld [vmem:[#allocation15 + $0xd0] sm:$0xff]
    %v3607 = vld [vmem:[#allocation15 + $0xd8] sm:$0xff]
    %v3608 = vld [vmem:[#allocation15 + $0xe0] sm:$0xff]
    %v3609 = vld [vmem:[#allocation15 + $0xe8] sm:$0xff]
    %v3610 = vld [vmem:[#allocation15 + $0xf0] sm:$0xff]
    %v3611 = vld [vmem:[#allocation15 + $0xf8] sm:$0xff]
    %v3644 = vunpack.c.l.b16 %v3580
    %v3645 = vunpack.c.h.b16 %v3580
    %v3646 = vunpack.c.l.b16 %v3581
    %v3647 = vunpack.c.h.b16 %v3581
    %v3648 = vunpack.c.l.b16 %v3582
    %v3649 = vunpack.c.h.b16 %v3582
    %v3650 = vunpack.c.l.b16 %v3583
    %v3651 = vunpack.c.h.b16 %v3583
    %v3652 = vunpack.c.l.b16 %v3584
    %v3653 = vunpack.c.h.b16 %v3584
    %v3654 = vunpack.c.l.b16 %v3585
    %v3655 = vunpack.c.h.b16 %v3585
    %v3656 = vunpack.c.l.b16 %v3586
    %v3657 = vunpack.c.h.b16 %v3586
    %v3658 = vunpack.c.l.b16 %v3587
    %v3659 = vunpack.c.h.b16 %v3587
    %v3660 = vunpack.c.l.b16 %v3588
    %v3661 = vunpack.c.h.b16 %v3588
    %v3662 = vunpack.c.l.b16 %v3589
    %v3663 = vunpack.c.h.b16 %v3589
    %v3664 = vunpack.c.l.b16 %v3590
    %v3665 = vunpack.c.h.b16 %v3590
    %v3666 = vunpack.c.l.b16 %v3591
    %v3667 = vunpack.c.h.b16 %v3591
    %v3668 = vunpack.c.l.b16 %v3592
    %v3669 = vunpack.c.h.b16 %v3592
    %v3670 = vunpack.c.l.b16 %v3593
    %v3671 = vunpack.c.h.b16 %v3593
    %v3672 = vunpack.c.l.b16 %v3594
    %v3673 = vunpack.c.h.b16 %v3594
    %v3674 = vunpack.c.l.b16 %v3595
    %v3675 = vunpack.c.h.b16 %v3595
    %v3676 = vunpack.c.l.b16 %v3596
    %v3677 = vunpack.c.h.b16 %v3596
    %v3678 = vunpack.c.l.b16 %v3597
    %v3679 = vunpack.c.h.b16 %v3597
    %v3680 = vunpack.c.l.b16 %v3598
    %v3681 = vunpack.c.h.b16 %v3598
    %v3682 = vunpack.c.l.b16 %v3599
    %v3683 = vunpack.c.h.b16 %v3599
    %v3684 = vunpack.c.l.b16 %v3600
    %v3685 = vunpack.c.h.b16 %v3600
    %v3686 = vunpack.c.l.b16 %v3601
    %v3687 = vunpack.c.h.b16 %v3601
    %v3688 = vunpack.c.l.b16 %v3602
    %v3689 = vunpack.c.h.b16 %v3602
    %v3690 = vunpack.c.l.b16 %v3603
    %v3691 = vunpack.c.h.b16 %v3603
    %v3692 = vunpack.c.l.b16 %v3604
    %v3693 = vunpack.c.h.b16 %v3604
    %v3694 = vunpack.c.l.b16 %v3605
    %v3695 = vunpack.c.h.b16 %v3605
    %v3696 = vunpack.c.l.b16 %v3606
    %v3697 = vunpack.c.h.b16 %v3606
    %v3698 = vunpack.c.l.b16 %v3607
    %v3699 = vunpack.c.h.b16 %v3607
    %v3700 = vunpack.c.l.b16 %v3608
    %v3701 = vunpack.c.h.b16 %v3608
    %v3702 = vunpack.c.l.b16 %v3609
    %v3703 = vunpack.c.h.b16 %v3609
    %v3704 = vunpack.c.l.b16 %v3610
    %v3705 = vunpack.c.h.b16 %v3610
    %v3706 = vunpack.c.l.b16 %v3611
    %v3707 = vunpack.c.h.b16 %v3611
    %v3708 = vpack.c.b16 %v3648, %v3644
    %v3709 = vpack.c.b16 %v3649, %v3645
    %v3710 = vpack.c.b16 %v3650, %v3646
    %v3711 = vpack.c.b16 %v3651, %v3647
    %v3712 = vpack.c.b16 %v3656, %v3652
    %v3713 = vpack.c.b16 %v3657, %v3653
    %v3714 = vpack.c.b16 %v3658, %v3654
    %v3715 = vpack.c.b16 %v3659, %v3655
    %v3716 = vpack.c.b16 %v3664, %v3660
    %v3717 = vpack.c.b16 %v3665, %v3661
    %v3718 = vpack.c.b16 %v3666, %v3662
    %v3719 = vpack.c.b16 %v3667, %v3663
    %v3720 = vpack.c.b16 %v3672, %v3668
    %v3721 = vpack.c.b16 %v3673, %v3669
    %v3722 = vpack.c.b16 %v3674, %v3670
    %v3723 = vpack.c.b16 %v3675, %v3671
    %v3724 = vpack.c.b16 %v3680, %v3676
    %v3725 = vpack.c.b16 %v3681, %v3677
    %v3726 = vpack.c.b16 %v3682, %v3678
    %v3727 = vpack.c.b16 %v3683, %v3679
    %v3728 = vpack.c.b16 %v3688, %v3684
    %v3729 = vpack.c.b16 %v3689, %v3685
    %v3730 = vpack.c.b16 %v3690, %v3686
    %v3731 = vpack.c.b16 %v3691, %v3687
    %v3732 = vpack.c.b16 %v3696, %v3692
    %v3733 = vpack.c.b16 %v3697, %v3693
    %v3734 = vpack.c.b16 %v3698, %v3694
    %v3735 = vpack.c.b16 %v3699, %v3695
    %v3736 = vpack.c.b16 %v3704, %v3700
    %v3737 = vpack.c.b16 %v3705, %v3701
    %v3738 = vpack.c.b16 %v3706, %v3702
    %v3739 = vpack.c.b16 %v3707, %v3703
    %3772 = vmatprep.subr.bf16.mxu0 %v3709
    %3773 = vmatpush1.bf16.msra.mxu0 %v3708
    %3774 = vmatprep.subr.bf16.mxu0 %v3713
    %3775 = vmatpush1.bf16.msra.mxu0 %v3712
    %3776 = vmatprep.subr.bf16.mxu0 %v3717
    %3777 = vmatpush1.bf16.msra.mxu0 %v3716
    %3778 = vmatprep.subr.bf16.mxu0 %v3721
    %3779 = vmatpush1.bf16.msra.mxu0 %v3720
    %3780 = vmatprep.subr.bf16.mxu0 %v3725
    %3781 = vmatpush1.bf16.msra.mxu0 %v3724
    %3782 = vmatprep.subr.bf16.mxu0 %v3729
    %3783 = vmatpush1.bf16.msra.mxu0 %v3728
    %3784 = vmatprep.subr.bf16.mxu0 %v3733
    %3785 = vmatpush1.bf16.msra.mxu0 %v3732
    %3786 = vmatprep.subr.bf16.mxu0 %v3737
    %3787 = vmatpush1.bf16.msra.mxu0 %v3736
    %3788 = vmatprep.subr.bf16.mxu0 0
    %3789 = vmatpush1.bf16.msra.mxu0 0
    %3790 = vmatprep.subr.bf16.mxu0 0
    %3791 = vmatpush1.bf16.msra.mxu0 0
    %3792 = vmatprep.subr.bf16.mxu0 0
    %3793 = vmatpush1.bf16.msra.mxu0 0
    %3794 = vmatprep.subr.bf16.mxu0 0
    %3795 = vmatpush1.bf16.msra.mxu0 0
    %3796 = vmatprep.subr.bf16.mxu0 0
    %3797 = vmatpush1.bf16.msra.mxu0 0
    %3798 = vmatprep.subr.bf16.mxu0 0
    %3799 = vmatpush1.bf16.msra.mxu0 0
    %3800 = vmatprep.subr.bf16.mxu0 0
    %3801 = vmatpush1.bf16.msra.mxu0 0
    %3802 = vmatprep.subr.bf16.mxu0 0
    %3803 = vmatpush1.bf16.msra.mxu0 0
    %3804 = vmatprep.mubr.bf16.mxu0 0
    %3805 = vmatmul.mubr.bf16.gmra.mrb[0].mxu0 %v3579
    %v3806 = vpop.f32.mrb[0].mxu0
    %v3807 = vadd.f32 0.0, %v3806
    %v3808 = vpop.f32.mrb[0].mxu0
    %v3809 = vadd.f32 0.0, %v3808
    %v3810 = vpop.f32.mrb[0].mxu0
    %v3811 = vpop.f32.mrb[0].mxu0
    %3812 = vdwg.mxu0
    %3813 = vmatprep.subr.bf16.mxu0 %v3711
    %3814 = vmatpush1.bf16.msra.mxu0 %v3710
    %3815 = vmatprep.subr.bf16.mxu0 %v3715
    %3816 = vmatpush1.bf16.msra.mxu0 %v3714
    %3817 = vmatprep.subr.bf16.mxu0 %v3719
    %3818 = vmatpush1.bf16.msra.mxu0 %v3718
    %3819 = vmatprep.subr.bf16.mxu0 %v3723
    %3820 = vmatpush1.bf16.msra.mxu0 %v3722
    %3821 = vmatprep.subr.bf16.mxu0 %v3727
    %3822 = vmatpush1.bf16.msra.mxu0 %v3726
    %3823 = vmatprep.subr.bf16.mxu0 %v3731
    %3824 = vmatpush1.bf16.msra.mxu0 %v3730
    %3825 = vmatprep.subr.bf16.mxu0 %v3735
    %3826 = vmatpush1.bf16.msra.mxu0 %v3734
    %3827 = vmatprep.subr.bf16.mxu0 %v3739
    %3828 = vmatpush1.bf16.msra.mxu0 %v3738
    %3829 = vmatprep.subr.bf16.mxu0 0
    %3830 = vmatpush1.bf16.msra.mxu0 0
    %3831 = vmatprep.subr.bf16.mxu0 0
    %3832 = vmatpush1.bf16.msra.mxu0 0
    %3833 = vmatprep.subr.bf16.mxu0 0
    %3834 = vmatpush1.bf16.msra.mxu0 0
    %3835 = vmatprep.subr.bf16.mxu0 0
    %3836 = vmatpush1.bf16.msra.mxu0 0
    %3837 = vmatprep.subr.bf16.mxu0 0
    %3838 = vmatpush1.bf16.msra.mxu0 0
    %3839 = vmatprep.subr.bf16.mxu0 0
    %3840 = vmatpush1.bf16.msra.mxu0 0
    %3841 = vmatprep.subr.bf16.mxu0 0
    %3842 = vmatpush1.bf16.msra.mxu0 0
    %3843 = vmatprep.subr.bf16.mxu0 0
    %3844 = vmatpush1.bf16.msra.mxu0 0
    %3845 = vmatprep.mubr.bf16.mxu0 0
    %3846 = vmatmul.mubr.bf16.gmra.mrb[0].mxu0 %v3579
    %v3847 = vpop.f32.mrb[0].mxu0
    %v3848 = vadd.f32 0.0, %v3847
    %v3849 = vpop.f32.mrb[0].mxu0
    %v3850 = vadd.f32 0.0, %v3849
    %v3851 = vpop.f32.mrb[0].mxu0
    %v3852 = vpop.f32.mrb[0].mxu0
    %3853 = vdwg.mxu0
    %v3854 = vadd.f32 %v3574, %v3807
    %v3855 = vadd.f32 %v3575, %v3809
    %v3856 = vadd.f32 %v3576, %v3848
    %v3857 = vadd.f32 %v3577, %v3850
    %v3858 = vmul.f32 %v3854, 0.5
    %v3859 = vtanh.pop %v3858
    %v3860 = vmul.f32 %v3859, 0.5
    %v3861 = vadd.f32 %v3860, 0.5
    %v3862 = vmul.f32 %v3855, 0.5
    %v3863 = vtanh.pop %v3862
    %v3864 = vmul.f32 %v3863, 0.5
    %v3865 = vadd.f32 %v3864, 0.5
    %v3866 = vtanh.pop %v3856
    %v3867 = vmul.f32 %v3857, 0.5
    %v3868 = vtanh.pop %v3867
    %v3869 = vmul.f32 %v3868, 0.5
    %v3870 = vadd.f32 %v3869, 0.5
    %v3871 = vld [vmem:[#allocation5] sm:$0xff]
    %v3872 = vmul.f32 %v3865, %v3871
    %v3873 = vmul.f32 %v3861, %v3866
    %v3874 = vadd.f32 %v3872, %v3873
    %v3875 = vtanh.pop %v3874
    %v3876 = vmul.f32 %v3870, %v3875
    %3877 = vst [vmem:[#allocation5] sm:$0xff] %v3874
    %3878 = vst [vmem:[#allocation4] sm:$0xff] %v3876
    %v3879 = vld [vmem:[%s1015] sm:$0xff]
    %v3880 = vld [vmem:[%s1015 + $0x8] sm:$0xff]
    %v3881 = vld [vmem:[%s1015 + $0x10] sm:$0xff]
    %v3882 = vld [vmem:[%s1015 + $0x18] sm:$0xff]
    %v3883 = vld [vmem:[#allocation4] sm:$0xff]
    %v3884 = vpack.c.bf16 %v3883, %v3883
    %v3885 = vld [vmem:[#allocation15] sm:$0xff]
    %v3886 = vld [vmem:[#allocation15 + $0x8] sm:$0xff]
    %v3887 = vld [vmem:[#allocation15 + $0x10] sm:$0xff]
    %v3888 = vld [vmem:[#allocation15 + $0x18] sm:$0xff]
    %v3889 = vld [vmem:[#allocation15 + $0x20] sm:$0xff]
    %v3890 = vld [vmem:[#allocation15 + $0x28] sm:$0xff]
    %v3891 = vld [vmem:[#allocation15 + $0x30] sm:$0xff]
    %v3892 = vld [vmem:[#allocation15 + $0x38] sm:$0xff]
    %v3893 = vld [vmem:[#allocation15 + $0x40] sm:$0xff]
    %v3894 = vld [vmem:[#allocation15 + $0x48] sm:$0xff]
    %v3895 = vld [vmem:[#allocation15 + $0x50] sm:$0xff]
    %v3896 = vld [vmem:[#allocation15 + $0x58] sm:$0xff]
    %v3897 = vld [vmem:[#allocation15 + $0x60] sm:$0xff]
    %v3898 = vld [vmem:[#allocation15 + $0x68] sm:$0xff]
    %v3899 = vld [vmem:[#allocation15 + $0x70] sm:$0xff]
    %v3900 = vld [vmem:[#allocation15 + $0x78] sm:$0xff]
    %v3901 = vld [vmem:[#allocation15 + $0x80] sm:$0xff]
    %v3902 = vld [vmem:[#allocation15 + $0x88] sm:$0xff]
    %v3903 = vld [vmem:[#allocation15 + $0x90] sm:$0xff]
    %v3904 = vld [vmem:[#allocation15 + $0x98] sm:$0xff]
    %v3905 = vld [vmem:[#allocation15 + $0xa0] sm:$0xff]
    %v3906 = vld [vmem:[#allocation15 + $0xa8] sm:$0xff]
    %v3907 = vld [vmem:[#allocation15 + $0xb0] sm:$0xff]
    %v3908 = vld [vmem:[#allocation15 + $0xb8] sm:$0xff]
    %v3909 = vld [vmem:[#allocation15 + $0xc0] sm:$0xff]
    %v3910 = vld [vmem:[#allocation15 + $0xc8] sm:$0xff]
    %v3911 = vld [vmem:[#allocation15 + $0xd0] sm:$0xff]
    %v3912 = vld [vmem:[#allocation15 + $0xd8] sm:$0xff]
    %v3913 = vld [vmem:[#allocation15 + $0xe0] sm:$0xff]
    %v3914 = vld [vmem:[#allocation15 + $0xe8] sm:$0xff]
    %v3915 = vld [vmem:[#allocation15 + $0xf0] sm:$0xff]
    %v3916 = vld [vmem:[#allocation15 + $0xf8] sm:$0xff]
    %v3949 = vunpack.c.l.b16 %v3885
    %v3950 = vunpack.c.h.b16 %v3885
    %v3951 = vunpack.c.l.b16 %v3886
    %v3952 = vunpack.c.h.b16 %v3886
    %v3953 = vunpack.c.l.b16 %v3887
    %v3954 = vunpack.c.h.b16 %v3887
    %v3955 = vunpack.c.l.b16 %v3888
    %v3956 = vunpack.c.h.b16 %v3888
    %v3957 = vunpack.c.l.b16 %v3889
    %v3958 = vunpack.c.h.b16 %v3889
    %v3959 = vunpack.c.l.b16 %v3890
    %v3960 = vunpack.c.h.b16 %v3890
    %v3961 = vunpack.c.l.b16 %v3891
    %v3962 = vunpack.c.h.b16 %v3891
    %v3963 = vunpack.c.l.b16 %v3892
    %v3964 = vunpack.c.h.b16 %v3892
    %v3965 = vunpack.c.l.b16 %v3893
    %v3966 = vunpack.c.h.b16 %v3893
    %v3967 = vunpack.c.l.b16 %v3894
    %v3968 = vunpack.c.h.b16 %v3894
    %v3969 = vunpack.c.l.b16 %v3895
    %v3970 = vunpack.c.h.b16 %v3895
    %v3971 = vunpack.c.l.b16 %v3896
    %v3972 = vunpack.c.h.b16 %v3896
    %v3973 = vunpack.c.l.b16 %v3897
    %v3974 = vunpack.c.h.b16 %v3897
    %v3975 = vunpack.c.l.b16 %v3898
    %v3976 = vunpack.c.h.b16 %v3898
    %v3977 = vunpack.c.l.b16 %v3899
    %v3978 = vunpack.c.h.b16 %v3899
    %v3979 = vunpack.c.l.b16 %v3900
    %v3980 = vunpack.c.h.b16 %v3900
    %v3981 = vunpack.c.l.b16 %v3901
    %v3982 = vunpack.c.h.b16 %v3901
    %v3983 = vunpack.c.l.b16 %v3902
    %v3984 = vunpack.c.h.b16 %v3902
    %v3985 = vunpack.c.l.b16 %v3903
    %v3986 = vunpack.c.h.b16 %v3903
    %v3987 = vunpack.c.l.b16 %v3904
    %v3988 = vunpack.c.h.b16 %v3904
    %v3989 = vunpack.c.l.b16 %v3905
    %v3990 = vunpack.c.h.b16 %v3905
    %v3991 = vunpack.c.l.b16 %v3906
    %v3992 = vunpack.c.h.b16 %v3906
    %v3993 = vunpack.c.l.b16 %v3907
    %v3994 = vunpack.c.h.b16 %v3907
    %v3995 = vunpack.c.l.b16 %v3908
    %v3996 = vunpack.c.h.b16 %v3908
    %v3997 = vunpack.c.l.b16 %v3909
    %v3998 = vunpack.c.h.b16 %v3909
    %v3999 = vunpack.c.l.b16 %v3910
    %v4000 = vunpack.c.h.b16 %v3910
    %v4001 = vunpack.c.l.b16 %v3911
    %v4002 = vunpack.c.h.b16 %v3911
    %v4003 = vunpack.c.l.b16 %v3912
    %v4004 = vunpack.c.h.b16 %v3912
    %v4005 = vunpack.c.l.b16 %v3913
    %v4006 = vunpack.c.h.b16 %v3913
    %v4007 = vunpack.c.l.b16 %v3914
    %v4008 = vunpack.c.h.b16 %v3914
    %v4009 = vunpack.c.l.b16 %v3915
    %v4010 = vunpack.c.h.b16 %v3915
    %v4011 = vunpack.c.l.b16 %v3916
    %v4012 = vunpack.c.h.b16 %v3916
    %v4013 = vpack.c.b16 %v3953, %v3949
    %v4014 = vpack.c.b16 %v3954, %v3950
    %v4015 = vpack.c.b16 %v3955, %v3951
    %v4016 = vpack.c.b16 %v3956, %v3952
    %v4017 = vpack.c.b16 %v3961, %v3957
    %v4018 = vpack.c.b16 %v3962, %v3958
    %v4019 = vpack.c.b16 %v3963, %v3959
    %v4020 = vpack.c.b16 %v3964, %v3960
    %v4021 = vpack.c.b16 %v3969, %v3965
    %v4022 = vpack.c.b16 %v3970, %v3966
    %v4023 = vpack.c.b16 %v3971, %v3967
    %v4024 = vpack.c.b16 %v3972, %v3968
    %v4025 = vpack.c.b16 %v3977, %v3973
    %v4026 = vpack.c.b16 %v3978, %v3974
    %v4027 = vpack.c.b16 %v3979, %v3975
    %v4028 = vpack.c.b16 %v3980, %v3976
    %v4029 = vpack.c.b16 %v3985, %v3981
    %v4030 = vpack.c.b16 %v3986, %v3982
    %v4031 = vpack.c.b16 %v3987, %v3983
    %v4032 = vpack.c.b16 %v3988, %v3984
    %v4033 = vpack.c.b16 %v3993, %v3989
    %v4034 = vpack.c.b16 %v3994, %v3990
    %v4035 = vpack.c.b16 %v3995, %v3991
    %v4036 = vpack.c.b16 %v3996, %v3992
    %v4037 = vpack.c.b16 %v4001, %v3997
    %v4038 = vpack.c.b16 %v4002, %v3998
    %v4039 = vpack.c.b16 %v4003, %v3999
    %v4040 = vpack.c.b16 %v4004, %v4000
    %v4041 = vpack.c.b16 %v4009, %v4005
    %v4042 = vpack.c.b16 %v4010, %v4006
    %v4043 = vpack.c.b16 %v4011, %v4007
    %v4044 = vpack.c.b16 %v4012, %v4008
    %4077 = vmatprep.subr.bf16.mxu0 %v4014
    %4078 = vmatpush1.bf16.msra.mxu0 %v4013
    %4079 = vmatprep.subr.bf16.mxu0 %v4018
    %4080 = vmatpush1.bf16.msra.mxu0 %v4017
    %4081 = vmatprep.subr.bf16.mxu0 %v4022
    %4082 = vmatpush1.bf16.msra.mxu0 %v4021
    %4083 = vmatprep.subr.bf16.mxu0 %v4026
    %4084 = vmatpush1.bf16.msra.mxu0 %v4025
    %4085 = vmatprep.subr.bf16.mxu0 %v4030
    %4086 = vmatpush1.bf16.msra.mxu0 %v4029
    %4087 = vmatprep.subr.bf16.mxu0 %v4034
    %4088 = vmatpush1.bf16.msra.mxu0 %v4033
    %4089 = vmatprep.subr.bf16.mxu0 %v4038
    %4090 = vmatpush1.bf16.msra.mxu0 %v4037
    %4091 = vmatprep.subr.bf16.mxu0 %v4042
    %4092 = vmatpush1.bf16.msra.mxu0 %v4041
    %4093 = vmatprep.subr.bf16.mxu0 0
    %4094 = vmatpush1.bf16.msra.mxu0 0
    %4095 = vmatprep.subr.bf16.mxu0 0
    %4096 = vmatpush1.bf16.msra.mxu0 0
    %4097 = vmatprep.subr.bf16.mxu0 0
    %4098 = vmatpush1.bf16.msra.mxu0 0
    %4099 = vmatprep.subr.bf16.mxu0 0
    %4100 = vmatpush1.bf16.msra.mxu0 0
    %4101 = vmatprep.subr.bf16.mxu0 0
    %4102 = vmatpush1.bf16.msra.mxu0 0
    %4103 = vmatprep.subr.bf16.mxu0 0
    %4104 = vmatpush1.bf16.msra.mxu0 0
    %4105 = vmatprep.subr.bf16.mxu0 0
    %4106 = vmatpush1.bf16.msra.mxu0 0
    %4107 = vmatprep.subr.bf16.mxu0 0
    %4108 = vmatpush1.bf16.msra.mxu0 0
    %4109 = vmatprep.mubr.bf16.mxu0 0
    %4110 = vmatmul.mubr.bf16.gmra.mrb[0].mxu0 %v3884
    %v4111 = vpop.f32.mrb[0].mxu0
    %v4112 = vadd.f32 0.0, %v4111
    %v4113 = vpop.f32.mrb[0].mxu0
    %v4114 = vadd.f32 0.0, %v4113
    %v4115 = vpop.f32.mrb[0].mxu0
    %v4116 = vpop.f32.mrb[0].mxu0
    %4117 = vdwg.mxu0
    %4118 = vmatprep.subr.bf16.mxu0 %v4016
    %4119 = vmatpush1.bf16.msra.mxu0 %v4015
    %4120 = vmatprep.subr.bf16.mxu0 %v4020
    %4121 = vmatpush1.bf16.msra.mxu0 %v4019
    %4122 = vmatprep.subr.bf16.mxu0 %v4024
    %4123 = vmatpush1.bf16.msra.mxu0 %v4023
    %4124 = vmatprep.subr.bf16.mxu0 %v4028
    %4125 = vmatpush1.bf16.msra.mxu0 %v4027
    %4126 = vmatprep.subr.bf16.mxu0 %v4032
    %4127 = vmatpush1.bf16.msra.mxu0 %v4031
    %4128 = vmatprep.subr.bf16.mxu0 %v4036
    %4129 = vmatpush1.bf16.msra.mxu0 %v4035
    %4130 = vmatprep.subr.bf16.mxu0 %v4040
    %4131 = vmatpush1.bf16.msra.mxu0 %v4039
    %4132 = vmatprep.subr.bf16.mxu0 %v4044
    %4133 = vmatpush1.bf16.msra.mxu0 %v4043
    %4134 = vmatprep.subr.bf16.mxu0 0
    %4135 = vmatpush1.bf16.msra.mxu0 0
    %4136 = vmatprep.subr.bf16.mxu0 0
    %4137 = vmatpush1.bf16.msra.mxu0 0
    %4138 = vmatprep.subr.bf16.mxu0 0
    %4139 = vmatpush1.bf16.msra.mxu0 0
    %4140 = vmatprep.subr.bf16.mxu0 0
    %4141 = vmatpush1.bf16.msra.mxu0 0
    %4142 = vmatprep.subr.bf16.mxu0 0
    %4143 = vmatpush1.bf16.msra.mxu0 0
    %4144 = vmatprep.subr.bf16.mxu0 0
    %4145 = vmatpush1.bf16.msra.mxu0 0
    %4146 = vmatprep.subr.bf16.mxu0 0
    %4147 = vmatpush1.bf16.msra.mxu0 0
    %4148 = vmatprep.subr.bf16.mxu0 0
    %4149 = vmatpush1.bf16.msra.mxu0 0
    %4150 = vmatprep.mubr.bf16.mxu0 0
    %4151 = vmatmul.mubr.bf16.gmra.mrb[0].mxu0 %v3884
    %v4152 = vpop.f32.mrb[0].mxu0
    %v4153 = vadd.f32 0.0, %v4152
    %v4154 = vpop.f32.mrb[0].mxu0
    %v4155 = vadd.f32 0.0, %v4154
    %v4156 = vpop.f32.mrb[0].mxu0
    %v4157 = vpop.f32.mrb[0].mxu0
    %4158 = vdwg.mxu0
    %v4159 = vadd.f32 %v3879, %v4112
    %v4160 = vadd.f32 %v3880, %v4114
    %v4161 = vadd.f32 %v3881, %v4153
    %v4162 = vadd.f32 %v3882, %v4155
    %v4163 = vmul.f32 %v4159, 0.5
    %v4164 = vtanh.pop %v4163
    %v4165 = vmul.f32 %v4164, 0.5
    %v4166 = vadd.f32 %v4165, 0.5
    %v4167 = vmul.f32 %v4160, 0.5
    %v4168 = vtanh.pop %v4167
    %v4169 = vmul.f32 %v4168, 0.5
    %v4170 = vadd.f32 %v4169, 0.5
    %v4171 = vtanh.pop %v4161
    %v4172 = vmul.f32 %v4162, 0.5
    %v4173 = vtanh.pop %v4172
    %v4174 = vmul.f32 %v4173, 0.5
    %v4175 = vadd.f32 %v4174, 0.5
    %v4176 = vld [vmem:[#allocation5] sm:$0xff]
    %v4177 = vmul.f32 %v4170, %v4176
    %v4178 = vmul.f32 %v4166, %v4171
    %v4179 = vadd.f32 %v4177, %v4178
    %v4180 = vtanh.pop %v4179
    %v4181 = vmul.f32 %v4175, %v4180
    %4182 = vst [vmem:[#allocation5] sm:$0xff] %v4179
    %4183 = vst [vmem:[#allocation4] sm:$0xff] %v4181
    %v4184 = vld [vmem:[%s1323] sm:$0xff]
    %v4185 = vld [vmem:[%s1323 + $0x8] sm:$0xff]
    %v4186 = vld [vmem:[%s1323 + $0x10] sm:$0xff]
    %v4187 = vld [vmem:[%s1323 + $0x18] sm:$0xff]
    %v4188 = vld [vmem:[#allocation4] sm:$0xff]
    %v4189 = vpack.c.bf16 %v4188, %v4188
    %v4190 = vld [vmem:[#allocation15] sm:$0xff]
    %v4191 = vld [vmem:[#allocation15 + $0x8] sm:$0xff]
    %v4192 = vld [vmem:[#allocation15 + $0x10] sm:$0xff]
    %v4193 = vld [vmem:[#allocation15 + $0x18] sm:$0xff]
    %v4194 = vld [vmem:[#allocation15 + $0x20] sm:$0xff]
    %v4195 = vld [vmem:[#allocation15 + $0x28] sm:$0xff]
    %v4196 = vld [vmem:[#allocation15 + $0x30] sm:$0xff]
    %v4197 = vld [vmem:[#allocation15 + $0x38] sm:$0xff]
    %v4198 = vld [vmem:[#allocation15 + $0x40] sm:$0xff]
    %v4199 = vld [vmem:[#allocation15 + $0x48] sm:$0xff]
    %v4200 = vld [vmem:[#allocation15 + $0x50] sm:$0xff]
    %v4201 = vld [vmem:[#allocation15 + $0x58] sm:$0xff]
    %v4202 = vld [vmem:[#allocation15 + $0x60] sm:$0xff]
    %v4203 = vld [vmem:[#allocation15 + $0x68] sm:$0xff]
    %v4204 = vld [vmem:[#allocation15 + $0x70] sm:$0xff]
    %v4205 = vld [vmem:[#allocation15 + $0x78] sm:$0xff]
    %v4206 = vld [vmem:[#allocation15 + $0x80] sm:$0xff]
    %v4207 = vld [vmem:[#allocation15 + $0x88] sm:$0xff]
    %v4208 = vld [vmem:[#allocation15 + $0x90] sm:$0xff]
    %v4209 = vld [vmem:[#allocation15 + $0x98] sm:$0xff]
    %v4210 = vld [vmem:[#allocation15 + $0xa0] sm:$0xff]
    %v4211 = vld [vmem:[#allocation15 + $0xa8] sm:$0xff]
    %v4212 = vld [vmem:[#allocation15 + $0xb0] sm:$0xff]
    %v4213 = vld [vmem:[#allocation15 + $0xb8] sm:$0xff]
    %v4214 = vld [vmem:[#allocation15 + $0xc0] sm:$0xff]
    %v4215 = vld [vmem:[#allocation15 + $0xc8] sm:$0xff]
    %v4216 = vld [vmem:[#allocation15 + $0xd0] sm:$0xff]
    %v4217 = vld [vmem:[#allocation15 + $0xd8] sm:$0xff]
    %v4218 = vld [vmem:[#allocation15 + $0xe0] sm:$0xff]
    %v4219 = vld [vmem:[#allocation15 + $0xe8] sm:$0xff]
    %v4220 = vld [vmem:[#allocation15 + $0xf0] sm:$0xff]
    %v4221 = vld [vmem:[#allocation15 + $0xf8] sm:$0xff]
    %v4254 = vunpack.c.l.b16 %v4190
    %v4255 = vunpack.c.h.b16 %v4190
    %v4256 = vunpack.c.l.b16 %v4191
    %v4257 = vunpack.c.h.b16 %v4191
    %v4258 = vunpack.c.l.b16 %v4192
    %v4259 = vunpack.c.h.b16 %v4192
    %v4260 = vunpack.c.l.b16 %v4193
    %v4261 = vunpack.c.h.b16 %v4193
    %v4262 = vunpack.c.l.b16 %v4194
    %v4263 = vunpack.c.h.b16 %v4194
    %v4264 = vunpack.c.l.b16 %v4195
    %v4265 = vunpack.c.h.b16 %v4195
    %v4266 = vunpack.c.l.b16 %v4196
    %v4267 = vunpack.c.h.b16 %v4196
    %v4268 = vunpack.c.l.b16 %v4197
    %v4269 = vunpack.c.h.b16 %v4197
    %v4270 = vunpack.c.l.b16 %v4198
    %v4271 = vunpack.c.h.b16 %v4198
    %v4272 = vunpack.c.l.b16 %v4199
    %v4273 = vunpack.c.h.b16 %v4199
    %v4274 = vunpack.c.l.b16 %v4200
    %v4275 = vunpack.c.h.b16 %v4200
    %v4276 = vunpack.c.l.b16 %v4201
    %v4277 = vunpack.c.h.b16 %v4201
    %v4278 = vunpack.c.l.b16 %v4202
    %v4279 = vunpack.c.h.b16 %v4202
    %v4280 = vunpack.c.l.b16 %v4203
    %v4281 = vunpack.c.h.b16 %v4203
    %v4282 = vunpack.c.l.b16 %v4204
    %v4283 = vunpack.c.h.b16 %v4204
    %v4284 = vunpack.c.l.b16 %v4205
    %v4285 = vunpack.c.h.b16 %v4205
    %v4286 = vunpack.c.l.b16 %v4206
    %v4287 = vunpack.c.h.b16 %v4206
    %v4288 = vunpack.c.l.b16 %v4207
    %v4289 = vunpack.c.h.b16 %v4207
    %v4290 = vunpack.c.l.b16 %v4208
    %v4291 = vunpack.c.h.b16 %v4208
    %v4292 = vunpack.c.l.b16 %v4209
    %v4293 = vunpack.c.h.b16 %v4209
    %v4294 = vunpack.c.l.b16 %v4210
    %v4295 = vunpack.c.h.b16 %v4210
    %v4296 = vunpack.c.l.b16 %v4211
    %v4297 = vunpack.c.h.b16 %v4211
    %v4298 = vunpack.c.l.b16 %v4212
    %v4299 = vunpack.c.h.b16 %v4212
    %v4300 = vunpack.c.l.b16 %v4213
    %v4301 = vunpack.c.h.b16 %v4213
    %v4302 = vunpack.c.l.b16 %v4214
    %v4303 = vunpack.c.h.b16 %v4214
    %v4304 = vunpack.c.l.b16 %v4215
    %v4305 = vunpack.c.h.b16 %v4215
    %v4306 = vunpack.c.l.b16 %v4216
    %v4307 = vunpack.c.h.b16 %v4216
    %v4308 = vunpack.c.l.b16 %v4217
    %v4309 = vunpack.c.h.b16 %v4217
    %v4310 = vunpack.c.l.b16 %v4218
    %v4311 = vunpack.c.h.b16 %v4218
    %v4312 = vunpack.c.l.b16 %v4219
    %v4313 = vunpack.c.h.b16 %v4219
    %v4314 = vunpack.c.l.b16 %v4220
    %v4315 = vunpack.c.h.b16 %v4220
    %v4316 = vunpack.c.l.b16 %v4221
    %v4317 = vunpack.c.h.b16 %v4221
    %v4318 = vpack.c.b16 %v4258, %v4254
    %v4319 = vpack.c.b16 %v4259, %v4255
    %v4320 = vpack.c.b16 %v4260, %v4256
    %v4321 = vpack.c.b16 %v4261, %v4257
    %v4322 = vpack.c.b16 %v4266, %v4262
    %v4323 = vpack.c.b16 %v4267, %v4263
    %v4324 = vpack.c.b16 %v4268, %v4264
    %v4325 = vpack.c.b16 %v4269, %v4265
    %v4326 = vpack.c.b16 %v4274, %v4270
    %v4327 = vpack.c.b16 %v4275, %v4271
    %v4328 = vpack.c.b16 %v4276, %v4272
    %v4329 = vpack.c.b16 %v4277, %v4273
    %v4330 = vpack.c.b16 %v4282, %v4278
    %v4331 = vpack.c.b16 %v4283, %v4279
    %v4332 = vpack.c.b16 %v4284, %v4280
    %v4333 = vpack.c.b16 %v4285, %v4281
    %v4334 = vpack.c.b16 %v4290, %v4286
    %v4335 = vpack.c.b16 %v4291, %v4287
    %v4336 = vpack.c.b16 %v4292, %v4288
    %v4337 = vpack.c.b16 %v4293, %v4289
    %v4338 = vpack.c.b16 %v4298, %v4294
    %v4339 = vpack.c.b16 %v4299, %v4295
    %v4340 = vpack.c.b16 %v4300, %v4296
    %v4341 = vpack.c.b16 %v4301, %v4297
    %v4342 = vpack.c.b16 %v4306, %v4302
    %v4343 = vpack.c.b16 %v4307, %v4303
    %v4344 = vpack.c.b16 %v4308, %v4304
    %v4345 = vpack.c.b16 %v4309, %v4305
    %v4346 = vpack.c.b16 %v4314, %v4310
    %v4347 = vpack.c.b16 %v4315, %v4311
    %v4348 = vpack.c.b16 %v4316, %v4312
    %v4349 = vpack.c.b16 %v4317, %v4313
    %4382 = vmatprep.subr.bf16.mxu0 %v4319
    %4383 = vmatpush1.bf16.msra.mxu0 %v4318
    %4384 = vmatprep.subr.bf16.mxu0 %v4323
    %4385 = vmatpush1.bf16.msra.mxu0 %v4322
    %4386 = vmatprep.subr.bf16.mxu0 %v4327
    %4387 = vmatpush1.bf16.msra.mxu0 %v4326
    %4388 = vmatprep.subr.bf16.mxu0 %v4331
    %4389 = vmatpush1.bf16.msra.mxu0 %v4330
    %4390 = vmatprep.subr.bf16.mxu0 %v4335
    %4391 = vmatpush1.bf16.msra.mxu0 %v4334
    %4392 = vmatprep.subr.bf16.mxu0 %v4339
    %4393 = vmatpush1.bf16.msra.mxu0 %v4338
    %4394 = vmatprep.subr.bf16.mxu0 %v4343
    %4395 = vmatpush1.bf16.msra.mxu0 %v4342
    %4396 = vmatprep.subr.bf16.mxu0 %v4347
    %4397 = vmatpush1.bf16.msra.mxu0 %v4346
    %4398 = vmatprep.subr.bf16.mxu0 0
    %4399 = vmatpush1.bf16.msra.mxu0 0
    %4400 = vmatprep.subr.bf16.mxu0 0
    %4401 = vmatpush1.bf16.msra.mxu0 0
    %4402 = vmatprep.subr.bf16.mxu0 0
    %4403 = vmatpush1.bf16.msra.mxu0 0
    %4404 = vmatprep.subr.bf16.mxu0 0
    %4405 = vmatpush1.bf16.msra.mxu0 0
    %4406 = vmatprep.subr.bf16.mxu0 0
    %4407 = vmatpush1.bf16.msra.mxu0 0
    %4408 = vmatprep.subr.bf16.mxu0 0
    %4409 = vmatpush1.bf16.msra.mxu0 0
    %4410 = vmatprep.subr.bf16.mxu0 0
    %4411 = vmatpush1.bf16.msra.mxu0 0
    %4412 = vmatprep.subr.bf16.mxu0 0
    %4413 = vmatpush1.bf16.msra.mxu0 0
    %4414 = vmatprep.mubr.bf16.mxu0 0
    %4415 = vmatmul.mubr.bf16.gmra.mrb[0].mxu0 %v4189
    %v4416 = vpop.f32.mrb[0].mxu0
    %v4417 = vadd.f32 0.0, %v4416
    %v4418 = vpop.f32.mrb[0].mxu0
    %v4419 = vadd.f32 0.0, %v4418
    %v4420 = vpop.f32.mrb[0].mxu0
    %v4421 = vpop.f32.mrb[0].mxu0
    %4422 = vdwg.mxu0
    %4423 = vmatprep.subr.bf16.mxu0 %v4321
    %4424 = vmatpush1.bf16.msra.mxu0 %v4320
    %4425 = vmatprep.subr.bf16.mxu0 %v4325
    %4426 = vmatpush1.bf16.msra.mxu0 %v4324
    %4427 = vmatprep.subr.bf16.mxu0 %v4329
    %4428 = vmatpush1.bf16.msra.mxu0 %v4328
    %4429 = vmatprep.subr.bf16.mxu0 %v4333
    %4430 = vmatpush1.bf16.msra.mxu0 %v4332
    %4431 = vmatprep.subr.bf16.mxu0 %v4337
    %4432 = vmatpush1.bf16.msra.mxu0 %v4336
    %4433 = vmatprep.subr.bf16.mxu0 %v4341
    %4434 = vmatpush1.bf16.msra.mxu0 %v4340
    %4435 = vmatprep.subr.bf16.mxu0 %v4345
    %4436 = vmatpush1.bf16.msra.mxu0 %v4344
    %4437 = vmatprep.subr.bf16.mxu0 %v4349
    %4438 = vmatpush1.bf16.msra.mxu0 %v4348
    %4439 = vmatprep.subr.bf16.mxu0 0
    %4440 = vmatpush1.bf16.msra.mxu0 0
    %4441 = vmatprep.subr.bf16.mxu0 0
    %4442 = vmatpush1.bf16.msra.mxu0 0
    %4443 = vmatprep.subr.bf16.mxu0 0
    %4444 = vmatpush1.bf16.msra.mxu0 0
    %4445 = vmatprep.subr.bf16.mxu0 0
    %4446 = vmatpush1.bf16.msra.mxu0 0
    %4447 = vmatprep.subr.bf16.mxu0 0
    %4448 = vmatpush1.bf16.msra.mxu0 0
    %4449 = vmatprep.subr.bf16.mxu0 0
    %4450 = vmatpush1.bf16.msra.mxu0 0
    %4451 = vmatprep.subr.bf16.mxu0 0
    %4452 = vmatpush1.bf16.msra.mxu0 0
    %4453 = vmatprep.subr.bf16.mxu0 0
    %4454 = vmatpush1.bf16.msra.mxu0 0
    %4455 = vmatprep.mubr.bf16.mxu0 0
    %4456 = vmatmul.mubr.bf16.gmra.mrb[0].mxu0 %v4189
    %v4457 = vpop.f32.mrb[0].mxu0
    %v4458 = vadd.f32 0.0, %v4457
    %v4459 = vpop.f32.mrb[0].mxu0
    %v4460 = vadd.f32 0.0, %v4459
    %v4461 = vpop.f32.mrb[0].mxu0
    %v4462 = vpop.f32.mrb[0].mxu0
    %4463 = vdwg.mxu0
    %v4464 = vadd.f32 %v4184, %v4417
    %v4465 = vadd.f32 %v4185, %v4419
    %v4466 = vadd.f32 %v4186, %v4458
    %v4467 = vadd.f32 %v4187, %v4460
    %v4468 = vmul.f32 %v4464, 0.5
    %v4469 = vtanh.pop %v4468
    %v4470 = vmul.f32 %v4469, 0.5
    %v4471 = vadd.f32 %v4470, 0.5
    %v4472 = vmul.f32 %v4465, 0.5
    %v4473 = vtanh.pop %v4472
    %v4474 = vmul.f32 %v4473, 0.5
    %v4475 = vadd.f32 %v4474, 0.5
    %v4476 = vtanh.pop %v4466
    %v4477 = vmul.f32 %v4467, 0.5
    %v4478 = vtanh.pop %v4477
    %v4479 = vmul.f32 %v4478, 0.5
    %v4480 = vadd.f32 %v4479, 0.5
    %v4481 = vld [vmem:[#allocation5] sm:$0xff]
    %v4482 = vmul.f32 %v4475, %v4481
    %v4483 = vmul.f32 %v4471, %v4476
    %v4484 = vadd.f32 %v4482, %v4483
    %v4485 = vtanh.pop %v4484
    %v4486 = vmul.f32 %v4480, %v4485
    %4487 = vst [vmem:[#allocation5] sm:$0xff] %v4484
    %4488 = vst [vmem:[#allocation4] sm:$0xff] %v4486
    %v4489 = vld [vmem:[%s1631] sm:$0xff]
    %v4490 = vld [vmem:[%s1631 + $0x8] sm:$0xff]
    %v4491 = vld [vmem:[%s1631 + $0x10] sm:$0xff]
    %v4492 = vld [vmem:[%s1631 + $0x18] sm:$0xff]
    %v4493 = vld [vmem:[#allocation4] sm:$0xff]
    %v4494 = vpack.c.bf16 %v4493, %v4493
    %v4495 = vld [vmem:[#allocation15] sm:$0xff]
    %v4496 = vld [vmem:[#allocation15 + $0x8] sm:$0xff]
    %v4497 = vld [vmem:[#allocation15 + $0x10] sm:$0xff]
    %v4498 = vld [vmem:[#allocation15 + $0x18] sm:$0xff]
    %v4499 = vld [vmem:[#allocation15 + $0x20] sm:$0xff]
    %v4500 = vld [vmem:[#allocation15 + $0x28] sm:$0xff]
    %v4501 = vld [vmem:[#allocation15 + $0x30] sm:$0xff]
    %v4502 = vld [vmem:[#allocation15 + $0x38] sm:$0xff]
    %v4503 = vld [vmem:[#allocation15 + $0x40] sm:$0xff]
    %v4504 = vld [vmem:[#allocation15 + $0x48] sm:$0xff]
    %v4505 = vld [vmem:[#allocation15 + $0x50] sm:$0xff]
    %v4506 = vld [vmem:[#allocation15 + $0x58] sm:$0xff]
    %v4507 = vld [vmem:[#allocation15 + $0x60] sm:$0xff]
    %v4508 = vld [vmem:[#allocation15 + $0x68] sm:$0xff]
    %v4509 = vld [vmem:[#allocation15 + $0x70] sm:$0xff]
    %v4510 = vld [vmem:[#allocation15 + $0x78] sm:$0xff]
    %v4511 = vld [vmem:[#allocation15 + $0x80] sm:$0xff]
    %v4512 = vld [vmem:[#allocation15 + $0x88] sm:$0xff]
    %v4513 = vld [vmem:[#allocation15 + $0x90] sm:$0xff]
    %v4514 = vld [vmem:[#allocation15 + $0x98] sm:$0xff]
    %v4515 = vld [vmem:[#allocation15 + $0xa0] sm:$0xff]
    %v4516 = vld [vmem:[#allocation15 + $0xa8] sm:$0xff]
    %v4517 = vld [vmem:[#allocation15 + $0xb0] sm:$0xff]
    %v4518 = vld [vmem:[#allocation15 + $0xb8] sm:$0xff]
    %v4519 = vld [vmem:[#allocation15 + $0xc0] sm:$0xff]
    %v4520 = vld [vmem:[#allocation15 + $0xc8] sm:$0xff]
    %v4521 = vld [vmem:[#allocation15 + $0xd0] sm:$0xff]
    %v4522 = vld [vmem:[#allocation15 + $0xd8] sm:$0xff]
    %v4523 = vld [vmem:[#allocation15 + $0xe0] sm:$0xff]
    %v4524 = vld [vmem:[#allocation15 + $0xe8] sm:$0xff]
    %v4525 = vld [vmem:[#allocation15 + $0xf0] sm:$0xff]
    %v4526 = vld [vmem:[#allocation15 + $0xf8] sm:$0xff]
    %v4559 = vunpack.c.l.b16 %v4495
    %v4560 = vunpack.c.h.b16 %v4495
    %v4561 = vunpack.c.l.b16 %v4496
    %v4562 = vunpack.c.h.b16 %v4496
    %v4563 = vunpack.c.l.b16 %v4497
    %v4564 = vunpack.c.h.b16 %v4497
    %v4565 = vunpack.c.l.b16 %v4498
    %v4566 = vunpack.c.h.b16 %v4498
    %v4567 = vunpack.c.l.b16 %v4499
    %v4568 = vunpack.c.h.b16 %v4499
    %v4569 = vunpack.c.l.b16 %v4500
    %v4570 = vunpack.c.h.b16 %v4500
    %v4571 = vunpack.c.l.b16 %v4501
    %v4572 = vunpack.c.h.b16 %v4501
    %v4573 = vunpack.c.l.b16 %v4502
    %v4574 = vunpack.c.h.b16 %v4502
    %v4575 = vunpack.c.l.b16 %v4503
    %v4576 = vunpack.c.h.b16 %v4503
    %v4577 = vunpack.c.l.b16 %v4504
    %v4578 = vunpack.c.h.b16 %v4504
    %v4579 = vunpack.c.l.b16 %v4505
    %v4580 = vunpack.c.h.b16 %v4505
    %v4581 = vunpack.c.l.b16 %v4506
    %v4582 = vunpack.c.h.b16 %v4506
    %v4583 = vunpack.c.l.b16 %v4507
    %v4584 = vunpack.c.h.b16 %v4507
    %v4585 = vunpack.c.l.b16 %v4508
    %v4586 = vunpack.c.h.b16 %v4508
    %v4587 = vunpack.c.l.b16 %v4509
    %v4588 = vunpack.c.h.b16 %v4509
    %v4589 = vunpack.c.l.b16 %v4510
    %v4590 = vunpack.c.h.b16 %v4510
    %v4591 = vunpack.c.l.b16 %v4511
    %v4592 = vunpack.c.h.b16 %v4511
    %v4593 = vunpack.c.l.b16 %v4512
    %v4594 = vunpack.c.h.b16 %v4512
    %v4595 = vunpack.c.l.b16 %v4513
    %v4596 = vunpack.c.h.b16 %v4513
    %v4597 = vunpack.c.l.b16 %v4514
    %v4598 = vunpack.c.h.b16 %v4514
    %v4599 = vunpack.c.l.b16 %v4515
    %v4600 = vunpack.c.h.b16 %v4515
    %v4601 = vunpack.c.l.b16 %v4516
    %v4602 = vunpack.c.h.b16 %v4516
    %v4603 = vunpack.c.l.b16 %v4517
    %v4604 = vunpack.c.h.b16 %v4517
    %v4605 = vunpack.c.l.b16 %v4518
    %v4606 = vunpack.c.h.b16 %v4518
    %v4607 = vunpack.c.l.b16 %v4519
    %v4608 = vunpack.c.h.b16 %v4519
    %v4609 = vunpack.c.l.b16 %v4520
    %v4610 = vunpack.c.h.b16 %v4520
    %v4611 = vunpack.c.l.b16 %v4521
    %v4612 = vunpack.c.h.b16 %v4521
    %v4613 = vunpack.c.l.b16 %v4522
    %v4614 = vunpack.c.h.b16 %v4522
    %v4615 = vunpack.c.l.b16 %v4523
    %v4616 = vunpack.c.h.b16 %v4523
    %v4617 = vunpack.c.l.b16 %v4524
    %v4618 = vunpack.c.h.b16 %v4524
    %v4619 = vunpack.c.l.b16 %v4525
    %v4620 = vunpack.c.h.b16 %v4525
    %v4621 = vunpack.c.l.b16 %v4526
    %v4622 = vunpack.c.h.b16 %v4526
    %v4623 = vpack.c.b16 %v4563, %v4559
    %v4624 = vpack.c.b16 %v4564, %v4560
    %v4625 = vpack.c.b16 %v4565, %v4561
    %v4626 = vpack.c.b16 %v4566, %v4562
    %v4627 = vpack.c.b16 %v4571, %v4567
    %v4628 = vpack.c.b16 %v4572, %v4568
    %v4629 = vpack.c.b16 %v4573, %v4569
    %v4630 = vpack.c.b16 %v4574, %v4570
    %v4631 = vpack.c.b16 %v4579, %v4575
    %v4632 = vpack.c.b16 %v4580, %v4576
    %v4633 = vpack.c.b16 %v4581, %v4577
    %v4634 = vpack.c.b16 %v4582, %v4578
    %v4635 = vpack.c.b16 %v4587, %v4583
    %v4636 = vpack.c.b16 %v4588, %v4584
    %v4637 = vpack.c.b16 %v4589, %v4585
    %v4638 = vpack.c.b16 %v4590, %v4586
    %v4639 = vpack.c.b16 %v4595, %v4591
    %v4640 = vpack.c.b16 %v4596, %v4592
    %v4641 = vpack.c.b16 %v4597, %v4593
    %v4642 = vpack.c.b16 %v4598, %v4594
    %v4643 = vpack.c.b16 %v4603, %v4599
    %v4644 = vpack.c.b16 %v4604, %v4600
    %v4645 = vpack.c.b16 %v4605, %v4601
    %v4646 = vpack.c.b16 %v4606, %v4602
    %v4647 = vpack.c.b16 %v4611, %v4607
    %v4648 = vpack.c.b16 %v4612, %v4608
    %v4649 = vpack.c.b16 %v4613, %v4609
    %v4650 = vpack.c.b16 %v4614, %v4610
    %v4651 = vpack.c.b16 %v4619, %v4615
    %v4652 = vpack.c.b16 %v4620, %v4616
    %v4653 = vpack.c.b16 %v4621, %v4617
    %v4654 = vpack.c.b16 %v4622, %v4618
    %4687 = vmatprep.subr.bf16.mxu0 %v4624
    %4688 = vmatpush1.bf16.msra.mxu0 %v4623
    %4689 = vmatprep.subr.bf16.mxu0 %v4628
    %4690 = vmatpush1.bf16.msra.mxu0 %v4627
    %4691 = vmatprep.subr.bf16.mxu0 %v4632
    %4692 = vmatpush1.bf16.msra.mxu0 %v4631
    %4693 = vmatprep.subr.bf16.mxu0 %v4636
    %4694 = vmatpush1.bf16.msra.mxu0 %v4635
    %4695 = vmatprep.subr.bf16.mxu0 %v4640
    %4696 = vmatpush1.bf16.msra.mxu0 %v4639
    %4697 = vmatprep.subr.bf16.mxu0 %v4644
    %4698 = vmatpush1.bf16.msra.mxu0 %v4643
    %4699 = vmatprep.subr.bf16.mxu0 %v4648
    %4700 = vmatpush1.bf16.msra.mxu0 %v4647
    %4701 = vmatprep.subr.bf16.mxu0 %v4652
    %4702 = vmatpush1.bf16.msra.mxu0 %v4651
    %4703 = vmatprep.subr.bf16.mxu0 0
    %4704 = vmatpush1.bf16.msra.mxu0 0
    %4705 = vmatprep.subr.bf16.mxu0 0
    %4706 = vmatpush1.bf16.msra.mxu0 0
    %4707 = vmatprep.subr.bf16.mxu0 0
    %4708 = vmatpush1.bf16.msra.mxu0 0
    %4709 = vmatprep.subr.bf16.mxu0 0
    %4710 = vmatpush1.bf16.msra.mxu0 0
    %4711 = vmatprep.subr.bf16.mxu0 0
    %4712 = vmatpush1.bf16.msra.mxu0 0
    %4713 = vmatprep.subr.bf16.mxu0 0
    %4714 = vmatpush1.bf16.msra.mxu0 0
    %4715 = vmatprep.subr.bf16.mxu0 0
    %4716 = vmatpush1.bf16.msra.mxu0 0
    %4717 = vmatprep.subr.bf16.mxu0 0
    %4718 = vmatpush1.bf16.msra.mxu0 0
    %4719 = vmatprep.mubr.bf16.mxu0 0
    %4720 = vmatmul.mubr.bf16.gmra.mrb[0].mxu0 %v4494
    %v4721 = vpop.f32.mrb[0].mxu0
    %v4722 = vadd.f32 0.0, %v4721
    %v4723 = vpop.f32.mrb[0].mxu0
    %v4724 = vadd.f32 0.0, %v4723
    %v4725 = vpop.f32.mrb[0].mxu0
    %v4726 = vpop.f32.mrb[0].mxu0
    %4727 = vdwg.mxu0
    %4728 = vmatprep.subr.bf16.mxu0 %v4626
    %4729 = vmatpush1.bf16.msra.mxu0 %v4625
    %4730 = vmatprep.subr.bf16.mxu0 %v4630
    %4731 = vmatpush1.bf16.msra.mxu0 %v4629
    %4732 = vmatprep.subr.bf16.mxu0 %v4634
    %4733 = vmatpush1.bf16.msra.mxu0 %v4633
    %4734 = vmatprep.subr.bf16.mxu0 %v4638
    %4735 = vmatpush1.bf16.msra.mxu0 %v4637
    %4736 = vmatprep.subr.bf16.mxu0 %v4642
    %4737 = vmatpush1.bf16.msra.mxu0 %v4641
    %4738 = vmatprep.subr.bf16.mxu0 %v4646
    %4739 = vmatpush1.bf16.msra.mxu0 %v4645
    %4740 = vmatprep.subr.bf16.mxu0 %v4650
    %4741 = vmatpush1.bf16.msra.mxu0 %v4649
    %4742 = vmatprep.subr.bf16.mxu0 %v4654
    %4743 = vmatpush1.bf16.msra.mxu0 %v4653
    %4744 = vmatprep.subr.bf16.mxu0 0
    %4745 = vmatpush1.bf16.msra.mxu0 0
    %4746 = vmatprep.subr.bf16.mxu0 0
    %4747 = vmatpush1.bf16.msra.mxu0 0
    %4748 = vmatprep.subr.bf16.mxu0 0
    %4749 = vmatpush1.bf16.msra.mxu0 0
    %4750 = vmatprep.subr.bf16.mxu0 0
    %4751 = vmatpush1.bf16.msra.mxu0 0
    %4752 = vmatprep.subr.bf16.mxu0 0
    %4753 = vmatpush1.bf16.msra.mxu0 0
    %4754 = vmatprep.subr.bf16.mxu0 0
    %4755 = vmatpush1.bf16.msra.mxu0 0
    %4756 = vmatprep.subr.bf16.mxu0 0
    %4757 = vmatpush1.bf16.msra.mxu0 0
    %4758 = vmatprep.subr.bf16.mxu0 0
    %4759 = vmatpush1.bf16.msra.mxu0 0
    %4760 = vmatprep.mubr.bf16.mxu0 0
    %4761 = vmatmul.mubr.bf16.gmra.mrb[0].mxu0 %v4494
    %v4762 = vpop.f32.mrb[0].mxu0
    %v4763 = vadd.f32 0.0, %v4762
    %v4764 = vpop.f32.mrb[0].mxu0
    %v4765 = vadd.f32 0.0, %v4764
    %v4766 = vpop.f32.mrb[0].mxu0
    %v4767 = vpop.f32.mrb[0].mxu0
    %4768 = vdwg.mxu0
    %v4769 = vadd.f32 %v4489, %v4722
    %v4770 = vadd.f32 %v4490, %v4724
    %v4771 = vadd.f32 %v4491, %v4763
    %v4772 = vadd.f32 %v4492, %v4765
    %v4773 = vmul.f32 %v4769, 0.5
    %v4774 = vtanh.pop %v4773
    %v4775 = vmul.f32 %v4774, 0.5
    %v4776 = vadd.f32 %v4775, 0.5
    %v4777 = vmul.f32 %v4770, 0.5
    %v4778 = vtanh.pop %v4777
    %v4779 = vmul.f32 %v4778, 0.5
    %v4780 = vadd.f32 %v4779, 0.5
    %v4781 = vtanh.pop %v4771
    %v4782 = vmul.f32 %v4772, 0.5
    %v4783 = vtanh.pop %v4782
    %v4784 = vmul.f32 %v4783, 0.5
    %v4785 = vadd.f32 %v4784, 0.5
    %v4786 = vld [vmem:[#allocation5] sm:$0xff]
    %v4787 = vmul.f32 %v4780, %v4786
    %v4788 = vmul.f32 %v4776, %v4781
    %v4789 = vadd.f32 %v4787, %v4788
    %v4790 = vtanh.pop %v4789
    %v4791 = vmul.f32 %v4785, %v4790
    %4792 = vst [vmem:[#allocation5] sm:$0xff] %v4789
    %4793 = vst [vmem:[#allocation4] sm:$0xff] %v4791
    %v4794 = vld [vmem:[%s1939] sm:$0xff]
    %v4795 = vld [vmem:[%s1939 + $0x8] sm:$0xff]
    %v4796 = vld [vmem:[%s1939 + $0x10] sm:$0xff]
    %v4797 = vld [vmem:[%s1939 + $0x18] sm:$0xff]
    %v4798 = vld [vmem:[#allocation4] sm:$0xff]
    %v4799 = vpack.c.bf16 %v4798, %v4798
    %v4800 = vld [vmem:[#allocation15] sm:$0xff]
    %v4801 = vld [vmem:[#allocation15 + $0x8] sm:$0xff]
    %v4802 = vld [vmem:[#allocation15 + $0x10] sm:$0xff]
    %v4803 = vld [vmem:[#allocation15 + $0x18] sm:$0xff]
    %v4804 = vld [vmem:[#allocation15 + $0x20] sm:$0xff]
    %v4805 = vld [vmem:[#allocation15 + $0x28] sm:$0xff]
    %v4806 = vld [vmem:[#allocation15 + $0x30] sm:$0xff]
    %v4807 = vld [vmem:[#allocation15 + $0x38] sm:$0xff]
    %v4808 = vld [vmem:[#allocation15 + $0x40] sm:$0xff]
    %v4809 = vld [vmem:[#allocation15 + $0x48] sm:$0xff]
    %v4810 = vld [vmem:[#allocation15 + $0x50] sm:$0xff]
    %v4811 = vld [vmem:[#allocation15 + $0x58] sm:$0xff]
    %v4812 = vld [vmem:[#allocation15 + $0x60] sm:$0xff]
    %v4813 = vld [vmem:[#allocation15 + $0x68] sm:$0xff]
    %v4814 = vld [vmem:[#allocation15 + $0x70] sm:$0xff]
    %v4815 = vld [vmem:[#allocation15 + $0x78] sm:$0xff]
    %v4816 = vld [vmem:[#allocation15 + $0x80] sm:$0xff]
    %v4817 = vld [vmem:[#allocation15 + $0x88] sm:$0xff]
    %v4818 = vld [vmem:[#allocation15 + $0x90] sm:$0xff]
    %v4819 = vld [vmem:[#allocation15 + $0x98] sm:$0xff]
    %v4820 = vld [vmem:[#allocation15 + $0xa0] sm:$0xff]
    %v4821 = vld [vmem:[#allocation15 + $0xa8] sm:$0xff]
    %v4822 = vld [vmem:[#allocation15 + $0xb0] sm:$0xff]
    %v4823 = vld [vmem:[#allocation15 + $0xb8] sm:$0xff]
    %v4824 = vld [vmem:[#allocation15 + $0xc0] sm:$0xff]
    %v4825 = vld [vmem:[#allocation15 + $0xc8] sm:$0xff]
    %v4826 = vld [vmem:[#allocation15 + $0xd0] sm:$0xff]
    %v4827 = vld [vmem:[#allocation15 + $0xd8] sm:$0xff]
    %v4828 = vld [vmem:[#allocation15 + $0xe0] sm:$0xff]
    %v4829 = vld [vmem:[#allocation15 + $0xe8] sm:$0xff]
    %v4830 = vld [vmem:[#allocation15 + $0xf0] sm:$0xff]
    %v4831 = vld [vmem:[#allocation15 + $0xf8] sm:$0xff]
    %v4864 = vunpack.c.l.b16 %v4800
    %v4865 = vunpack.c.h.b16 %v4800
    %v4866 = vunpack.c.l.b16 %v4801
    %v4867 = vunpack.c.h.b16 %v4801
    %v4868 = vunpack.c.l.b16 %v4802
    %v4869 = vunpack.c.h.b16 %v4802
    %v4870 = vunpack.c.l.b16 %v4803
    %v4871 = vunpack.c.h.b16 %v4803
    %v4872 = vunpack.c.l.b16 %v4804
    %v4873 = vunpack.c.h.b16 %v4804
    %v4874 = vunpack.c.l.b16 %v4805
    %v4875 = vunpack.c.h.b16 %v4805
    %v4876 = vunpack.c.l.b16 %v4806
    %v4877 = vunpack.c.h.b16 %v4806
    %v4878 = vunpack.c.l.b16 %v4807
    %v4879 = vunpack.c.h.b16 %v4807
    %v4880 = vunpack.c.l.b16 %v4808
    %v4881 = vunpack.c.h.b16 %v4808
    %v4882 = vunpack.c.l.b16 %v4809
    %v4883 = vunpack.c.h.b16 %v4809
    %v4884 = vunpack.c.l.b16 %v4810
    %v4885 = vunpack.c.h.b16 %v4810
    %v4886 = vunpack.c.l.b16 %v4811
    %v4887 = vunpack.c.h.b16 %v4811
    %v4888 = vunpack.c.l.b16 %v4812
    %v4889 = vunpack.c.h.b16 %v4812
    %v4890 = vunpack.c.l.b16 %v4813
    %v4891 = vunpack.c.h.b16 %v4813
    %v4892 = vunpack.c.l.b16 %v4814
    %v4893 = vunpack.c.h.b16 %v4814
    %v4894 = vunpack.c.l.b16 %v4815
    %v4895 = vunpack.c.h.b16 %v4815
    %v4896 = vunpack.c.l.b16 %v4816
    %v4897 = vunpack.c.h.b16 %v4816
    %v4898 = vunpack.c.l.b16 %v4817
    %v4899 = vunpack.c.h.b16 %v4817
    %v4900 = vunpack.c.l.b16 %v4818
    %v4901 = vunpack.c.h.b16 %v4818
    %v4902 = vunpack.c.l.b16 %v4819
    %v4903 = vunpack.c.h.b16 %v4819
    %v4904 = vunpack.c.l.b16 %v4820
    %v4905 = vunpack.c.h.b16 %v4820
    %v4906 = vunpack.c.l.b16 %v4821
    %v4907 = vunpack.c.h.b16 %v4821
    %v4908 = vunpack.c.l.b16 %v4822
    %v4909 = vunpack.c.h.b16 %v4822
    %v4910 = vunpack.c.l.b16 %v4823
    %v4911 = vunpack.c.h.b16 %v4823
    %v4912 = vunpack.c.l.b16 %v4824
    %v4913 = vunpack.c.h.b16 %v4824
    %v4914 = vunpack.c.l.b16 %v4825
    %v4915 = vunpack.c.h.b16 %v4825
    %v4916 = vunpack.c.l.b16 %v4826
    %v4917 = vunpack.c.h.b16 %v4826
    %v4918 = vunpack.c.l.b16 %v4827
    %v4919 = vunpack.c.h.b16 %v4827
    %v4920 = vunpack.c.l.b16 %v4828
    %v4921 = vunpack.c.h.b16 %v4828
    %v4922 = vunpack.c.l.b16 %v4829
    %v4923 = vunpack.c.h.b16 %v4829
    %v4924 = vunpack.c.l.b16 %v4830
    %v4925 = vunpack.c.h.b16 %v4830
    %v4926 = vunpack.c.l.b16 %v4831
    %v4927 = vunpack.c.h.b16 %v4831
    %v4928 = vpack.c.b16 %v4868, %v4864
    %v4929 = vpack.c.b16 %v4869, %v4865
    %v4930 = vpack.c.b16 %v4870, %v4866
    %v4931 = vpack.c.b16 %v4871, %v4867
    %v4932 = vpack.c.b16 %v4876, %v4872
    %v4933 = vpack.c.b16 %v4877, %v4873
    %v4934 = vpack.c.b16 %v4878, %v4874
    %v4935 = vpack.c.b16 %v4879, %v4875
    %v4936 = vpack.c.b16 %v4884, %v4880
    %v4937 = vpack.c.b16 %v4885, %v4881
    %v4938 = vpack.c.b16 %v4886, %v4882
    %v4939 = vpack.c.b16 %v4887, %v4883
    %v4940 = vpack.c.b16 %v4892, %v4888
    %v4941 = vpack.c.b16 %v4893, %v4889
    %v4942 = vpack.c.b16 %v4894, %v4890
    %v4943 = vpack.c.b16 %v4895, %v4891
    %v4944 = vpack.c.b16 %v4900, %v4896
    %v4945 = vpack.c.b16 %v4901, %v4897
    %v4946 = vpack.c.b16 %v4902, %v4898
    %v4947 = vpack.c.b16 %v4903, %v4899
    %v4948 = vpack.c.b16 %v4908, %v4904
    %v4949 = vpack.c.b16 %v4909, %v4905
    %v4950 = vpack.c.b16 %v4910, %v4906
    %v4951 = vpack.c.b16 %v4911, %v4907
    %v4952 = vpack.c.b16 %v4916, %v4912
    %v4953 = vpack.c.b16 %v4917, %v4913
    %v4954 = vpack.c.b16 %v4918, %v4914
    %v4955 = vpack.c.b16 %v4919, %v4915
    %v4956 = vpack.c.b16 %v4924, %v4920
    %v4957 = vpack.c.b16 %v4925, %v4921
    %v4958 = vpack.c.b16 %v4926, %v4922
    %v4959 = vpack.c.b16 %v4927, %v4923
    %4992 = vmatprep.subr.bf16.mxu0 %v4929
    %4993 = vmatpush1.bf16.msra.mxu0 %v4928
    %4994 = vmatprep.subr.bf16.mxu0 %v4933
    %4995 = vmatpush1.bf16.msra.mxu0 %v4932
    %4996 = vmatprep.subr.bf16.mxu0 %v4937
    %4997 = vmatpush1.bf16.msra.mxu0 %v4936
    %4998 = vmatprep.subr.bf16.mxu0 %v4941
    %4999 = vmatpush1.bf16.msra.mxu0 %v4940
    %5000 = vmatprep.subr.bf16.mxu0 %v4945
    %5001 = vmatpush1.bf16.msra.mxu0 %v4944
    %5002 = vmatprep.subr.bf16.mxu0 %v4949
    %5003 = vmatpush1.bf16.msra.mxu0 %v4948
    %5004 = vmatprep.subr.bf16.mxu0 %v4953
    %5005 = vmatpush1.bf16.msra.mxu0 %v4952
    %5006 = vmatprep.subr.bf16.mxu0 %v4957
    %5007 = vmatpush1.bf16.msra.mxu0 %v4956
    %5008 = vmatprep.subr.bf16.mxu0 0
    %5009 = vmatpush1.bf16.msra.mxu0 0
    %5010 = vmatprep.subr.bf16.mxu0 0
    %5011 = vmatpush1.bf16.msra.mxu0 0
    %5012 = vmatprep.subr.bf16.mxu0 0
    %5013 = vmatpush1.bf16.msra.mxu0 0
    %5014 = vmatprep.subr.bf16.mxu0 0
    %5015 = vmatpush1.bf16.msra.mxu0 0
    %5016 = vmatprep.subr.bf16.mxu0 0
    %5017 = vmatpush1.bf16.msra.mxu0 0
    %5018 = vmatprep.subr.bf16.mxu0 0
    %5019 = vmatpush1.bf16.msra.mxu0 0
    %5020 = vmatprep.subr.bf16.mxu0 0
    %5021 = vmatpush1.bf16.msra.mxu0 0
    %5022 = vmatprep.subr.bf16.mxu0 0
    %5023 = vmatpush1.bf16.msra.mxu0 0
    %5024 = vmatprep.mubr.bf16.mxu0 0
    %5025 = vmatmul.mubr.bf16.gmra.mrb[0].mxu0 %v4799
    %v5026 = vpop.f32.mrb[0].mxu0
    %v5027 = vadd.f32 0.0, %v5026
    %v5028 = vpop.f32.mrb[0].mxu0
    %v5029 = vadd.f32 0.0, %v5028
    %v5030 = vpop.f32.mrb[0].mxu0
    %v5031 = vpop.f32.mrb[0].mxu0
    %5032 = vdwg.mxu0
    %5033 = vmatprep.subr.bf16.mxu0 %v4931
    %5034 = vmatpush1.bf16.msra.mxu0 %v4930
    %5035 = vmatprep.subr.bf16.mxu0 %v4935
    %5036 = vmatpush1.bf16.msra.mxu0 %v4934
    %5037 = vmatprep.subr.bf16.mxu0 %v4939
    %5038 = vmatpush1.bf16.msra.mxu0 %v4938
    %5039 = vmatprep.subr.bf16.mxu0 %v4943
    %5040 = vmatpush1.bf16.msra.mxu0 %v4942
    %5041 = vmatprep.subr.bf16.mxu0 %v4947
    %5042 = vmatpush1.bf16.msra.mxu0 %v4946
    %5043 = vmatprep.subr.bf16.mxu0 %v4951
    %5044 = vmatpush1.bf16.msra.mxu0 %v4950
    %5045 = vmatprep.subr.bf16.mxu0 %v4955
    %5046 = vmatpush1.bf16.msra.mxu0 %v4954
    %5047 = vmatprep.subr.bf16.mxu0 %v4959
    %5048 = vmatpush1.bf16.msra.mxu0 %v4958
    %5049 = vmatprep.subr.bf16.mxu0 0
    %5050 = vmatpush1.bf16.msra.mxu0 0
    %5051 = vmatprep.subr.bf16.mxu0 0
    %5052 = vmatpush1.bf16.msra.mxu0 0
    %5053 = vmatprep.subr.bf16.mxu0 0
    %5054 = vmatpush1.bf16.msra.mxu0 0
    %5055 = vmatprep.subr.bf16.mxu0 0
    %5056 = vmatpush1.bf16.msra.mxu0 0
    %5057 = vmatprep.subr.bf16.mxu0 0
    %5058 = vmatpush1.bf16.msra.mxu0 0
    %5059 = vmatprep.subr.bf16.mxu0 0
    %5060 = vmatpush1.bf16.msra.mxu0 0
    %5061 = vmatprep.subr.bf16.mxu0 0
    %5062 = vmatpush1.bf16.msra.mxu0 0
    %5063 = vmatprep.subr.bf16.mxu0 0
    %5064 = vmatpush1.bf16.msra.mxu0 0
    %5065 = vmatprep.mubr.bf16.mxu0 0
    %5066 = vmatmul.mubr.bf16.gmra.mrb[0].mxu0 %v4799
    %v5067 = vpop.f32.mrb[0].mxu0
    %v5068 = vadd.f32 0.0, %v5067
    %v5069 = vpop.f32.mrb[0].mxu0
    %v5070 = vadd.f32 0.0, %v5069
    %v5071 = vpop.f32.mrb[0].mxu0
    %v5072 = vpop.f32.mrb[0].mxu0
    %5073 = vdwg.mxu0
    %v5074 = vadd.f32 %v4794, %v5027
    %v5075 = vadd.f32 %v4795, %v5029
    %v5076 = vadd.f32 %v4796, %v5068
    %v5077 = vadd.f32 %v4797, %v5070
    %v5078 = vmul.f32 %v5074, 0.5
    %v5079 = vtanh.pop %v5078
    %v5080 = vmul.f32 %v5079, 0.5
    %v5081 = vadd.f32 %v5080, 0.5
    %v5082 = vmul.f32 %v5075, 0.5
    %v5083 = vtanh.pop %v5082
    %v5084 = vmul.f32 %v5083, 0.5
    %v5085 = vadd.f32 %v5084, 0.5
    %v5086 = vtanh.pop %v5076
    %v5087 = vmul.f32 %v5077, 0.5
    %v5088 = vtanh.pop %v5087
    %v5089 = vmul.f32 %v5088, 0.5
    %v5090 = vadd.f32 %v5089, 0.5
    %v5091 = vld [vmem:[#allocation5] sm:$0xff]
    %v5092 = vmul.f32 %v5085, %v5091
    %v5093 = vmul.f32 %v5081, %v5086
    %v5094 = vadd.f32 %v5092, %v5093
    %v5095 = vtanh.pop %v5094
    %v5096 = vmul.f32 %v5090, %v5095
    %5097 = vst [vmem:[#allocation5] sm:$0xff] %v5094
    %5098 = vst [vmem:[#allocation4] sm:$0xff] %v5096
    %v5099 = vld [vmem:[%s2247] sm:$0xff]
    %v5100 = vld [vmem:[%s2247 + $0x8] sm:$0xff]
    %v5101 = vld [vmem:[%s2247 + $0x10] sm:$0xff]
    %v5102 = vld [vmem:[%s2247 + $0x18] sm:$0xff]
    %v5103 = vld [vmem:[#allocation4] sm:$0xff]
    %v5104 = vpack.c.bf16 %v5103, %v5103
    %v5105 = vld [vmem:[#allocation15] sm:$0xff]
    %v5106 = vld [vmem:[#allocation15 + $0x8] sm:$0xff]
    %v5107 = vld [vmem:[#allocation15 + $0x10] sm:$0xff]
    %v5108 = vld [vmem:[#allocation15 + $0x18] sm:$0xff]
    %v5109 = vld [vmem:[#allocation15 + $0x20] sm:$0xff]
    %v5110 = vld [vmem:[#allocation15 + $0x28] sm:$0xff]
    %v5111 = vld [vmem:[#allocation15 + $0x30] sm:$0xff]
    %v5112 = vld [vmem:[#allocation15 + $0x38] sm:$0xff]
    %v5113 = vld [vmem:[#allocation15 + $0x40] sm:$0xff]
    %v5114 = vld [vmem:[#allocation15 + $0x48] sm:$0xff]
    %v5115 = vld [vmem:[#allocation15 + $0x50] sm:$0xff]
    %v5116 = vld [vmem:[#allocation15 + $0x58] sm:$0xff]
    %v5117 = vld [vmem:[#allocation15 + $0x60] sm:$0xff]
    %v5118 = vld [vmem:[#allocation15 + $0x68] sm:$0xff]
    %v5119 = vld [vmem:[#allocation15 + $0x70] sm:$0xff]
    %v5120 = vld [vmem:[#allocation15 + $0x78] sm:$0xff]
    %v5121 = vld [vmem:[#allocation15 + $0x80] sm:$0xff]
    %v5122 = vld [vmem:[#allocation15 + $0x88] sm:$0xff]
    %v5123 = vld [vmem:[#allocation15 + $0x90] sm:$0xff]
    %v5124 = vld [vmem:[#allocation15 + $0x98] sm:$0xff]
    %v5125 = vld [vmem:[#allocation15 + $0xa0] sm:$0xff]
    %v5126 = vld [vmem:[#allocation15 + $0xa8] sm:$0xff]
    %v5127 = vld [vmem:[#allocation15 + $0xb0] sm:$0xff]
    %v5128 = vld [vmem:[#allocation15 + $0xb8] sm:$0xff]
    %v5129 = vld [vmem:[#allocation15 + $0xc0] sm:$0xff]
    %v5130 = vld [vmem:[#allocation15 + $0xc8] sm:$0xff]
    %v5131 = vld [vmem:[#allocation15 + $0xd0] sm:$0xff]
    %v5132 = vld [vmem:[#allocation15 + $0xd8] sm:$0xff]
    %v5133 = vld [vmem:[#allocation15 + $0xe0] sm:$0xff]
    %v5134 = vld [vmem:[#allocation15 + $0xe8] sm:$0xff]
    %v5135 = vld [vmem:[#allocation15 + $0xf0] sm:$0xff]
    %v5136 = vld [vmem:[#allocation15 + $0xf8] sm:$0xff]
    %v5169 = vunpack.c.l.b16 %v5105
    %v5170 = vunpack.c.h.b16 %v5105
    %v5171 = vunpack.c.l.b16 %v5106
    %v5172 = vunpack.c.h.b16 %v5106
    %v5173 = vunpack.c.l.b16 %v5107
    %v5174 = vunpack.c.h.b16 %v5107
    %v5175 = vunpack.c.l.b16 %v5108
    %v5176 = vunpack.c.h.b16 %v5108
    %v5177 = vunpack.c.l.b16 %v5109
    %v5178 = vunpack.c.h.b16 %v5109
    %v5179 = vunpack.c.l.b16 %v5110
    %v5180 = vunpack.c.h.b16 %v5110
    %v5181 = vunpack.c.l.b16 %v5111
    %v5182 = vunpack.c.h.b16 %v5111
    %v5183 = vunpack.c.l.b16 %v5112
    %v5184 = vunpack.c.h.b16 %v5112
    %v5185 = vunpack.c.l.b16 %v5113
    %v5186 = vunpack.c.h.b16 %v5113
    %v5187 = vunpack.c.l.b16 %v5114
    %v5188 = vunpack.c.h.b16 %v5114
    %v5189 = vunpack.c.l.b16 %v5115
    %v5190 = vunpack.c.h.b16 %v5115
    %v5191 = vunpack.c.l.b16 %v5116
    %v5192 = vunpack.c.h.b16 %v5116
    %v5193 = vunpack.c.l.b16 %v5117
    %v5194 = vunpack.c.h.b16 %v5117
    %v5195 = vunpack.c.l.b16 %v5118
    %v5196 = vunpack.c.h.b16 %v5118
    %v5197 = vunpack.c.l.b16 %v5119
    %v5198 = vunpack.c.h.b16 %v5119
    %v5199 = vunpack.c.l.b16 %v5120
    %v5200 = vunpack.c.h.b16 %v5120
    %v5201 = vunpack.c.l.b16 %v5121
    %v5202 = vunpack.c.h.b16 %v5121
    %v5203 = vunpack.c.l.b16 %v5122
    %v5204 = vunpack.c.h.b16 %v5122
    %v5205 = vunpack.c.l.b16 %v5123
    %v5206 = vunpack.c.h.b16 %v5123
    %v5207 = vunpack.c.l.b16 %v5124
    %v5208 = vunpack.c.h.b16 %v5124
    %v5209 = vunpack.c.l.b16 %v5125
    %v5210 = vunpack.c.h.b16 %v5125
    %v5211 = vunpack.c.l.b16 %v5126
    %v5212 = vunpack.c.h.b16 %v5126
    %v5213 = vunpack.c.l.b16 %v5127
    %v5214 = vunpack.c.h.b16 %v5127
    %v5215 = vunpack.c.l.b16 %v5128
    %v5216 = vunpack.c.h.b16 %v5128
    %v5217 = vunpack.c.l.b16 %v5129
    %v5218 = vunpack.c.h.b16 %v5129
    %v5219 = vunpack.c.l.b16 %v5130
    %v5220 = vunpack.c.h.b16 %v5130
    %v5221 = vunpack.c.l.b16 %v5131
    %v5222 = vunpack.c.h.b16 %v5131
    %v5223 = vunpack.c.l.b16 %v5132
    %v5224 = vunpack.c.h.b16 %v5132
    %v5225 = vunpack.c.l.b16 %v5133
    %v5226 = vunpack.c.h.b16 %v5133
    %v5227 = vunpack.c.l.b16 %v5134
    %v5228 = vunpack.c.h.b16 %v5134
    %v5229 = vunpack.c.l.b16 %v5135
    %v5230 = vunpack.c.h.b16 %v5135
    %v5231 = vunpack.c.l.b16 %v5136
    %v5232 = vunpack.c.h.b16 %v5136
    %v5233 = vpack.c.b16 %v5173, %v5169
    %v5234 = vpack.c.b16 %v5174, %v5170
    %v5235 = vpack.c.b16 %v5175, %v5171
    %v5236 = vpack.c.b16 %v5176, %v5172
    %v5237 = vpack.c.b16 %v5181, %v5177
    %v5238 = vpack.c.b16 %v5182, %v5178
    %v5239 = vpack.c.b16 %v5183, %v5179
    %v5240 = vpack.c.b16 %v5184, %v5180
    %v5241 = vpack.c.b16 %v5189, %v5185
    %v5242 = vpack.c.b16 %v5190, %v5186
    %v5243 = vpack.c.b16 %v5191, %v5187
    %v5244 = vpack.c.b16 %v5192, %v5188
    %v5245 = vpack.c.b16 %v5197, %v5193
    %v5246 = vpack.c.b16 %v5198, %v5194
    %v5247 = vpack.c.b16 %v5199, %v5195
    %v5248 = vpack.c.b16 %v5200, %v5196
    %v5249 = vpack.c.b16 %v5205, %v5201
    %v5250 = vpack.c.b16 %v5206, %v5202
    %v5251 = vpack.c.b16 %v5207, %v5203
    %v5252 = vpack.c.b16 %v5208, %v5204
    %v5253 = vpack.c.b16 %v5213, %v5209
    %v5254 = vpack.c.b16 %v5214, %v5210
    %v5255 = vpack.c.b16 %v5215, %v5211
    %v5256 = vpack.c.b16 %v5216, %v5212
    %v5257 = vpack.c.b16 %v5221, %v5217
    %v5258 = vpack.c.b16 %v5222, %v5218
    %v5259 = vpack.c.b16 %v5223, %v5219
    %v5260 = vpack.c.b16 %v5224, %v5220
    %v5261 = vpack.c.b16 %v5229, %v5225
    %v5262 = vpack.c.b16 %v5230, %v5226
    %v5263 = vpack.c.b16 %v5231, %v5227
    %v5264 = vpack.c.b16 %v5232, %v5228
    %5297 = vmatprep.subr.bf16.mxu0 %v5234
    %5298 = vmatpush1.bf16.msra.mxu0 %v5233
    %5299 = vmatprep.subr.bf16.mxu0 %v5238
    %5300 = vmatpush1.bf16.msra.mxu0 %v5237
    %5301 = vmatprep.subr.bf16.mxu0 %v5242
    %5302 = vmatpush1.bf16.msra.mxu0 %v5241
    %5303 = vmatprep.subr.bf16.mxu0 %v5246
    %5304 = vmatpush1.bf16.msra.mxu0 %v5245
    %5305 = vmatprep.subr.bf16.mxu0 %v5250
    %5306 = vmatpush1.bf16.msra.mxu0 %v5249
    %5307 = vmatprep.subr.bf16.mxu0 %v5254
    %5308 = vmatpush1.bf16.msra.mxu0 %v5253
    %5309 = vmatprep.subr.bf16.mxu0 %v5258
    %5310 = vmatpush1.bf16.msra.mxu0 %v5257
    %5311 = vmatprep.subr.bf16.mxu0 %v5262
    %5312 = vmatpush1.bf16.msra.mxu0 %v5261
    %5313 = vmatprep.subr.bf16.mxu0 0
    %5314 = vmatpush1.bf16.msra.mxu0 0
    %5315 = vmatprep.subr.bf16.mxu0 0
    %5316 = vmatpush1.bf16.msra.mxu0 0
    %5317 = vmatprep.subr.bf16.mxu0 0
    %5318 = vmatpush1.bf16.msra.mxu0 0
    %5319 = vmatprep.subr.bf16.mxu0 0
    %5320 = vmatpush1.bf16.msra.mxu0 0
    %5321 = vmatprep.subr.bf16.mxu0 0
    %5322 = vmatpush1.bf16.msra.mxu0 0
    %5323 = vmatprep.subr.bf16.mxu0 0
    %5324 = vmatpush1.bf16.msra.mxu0 0
    %5325 = vmatprep.subr.bf16.mxu0 0
    %5326 = vmatpush1.bf16.msra.mxu0 0
    %5327 = vmatprep.subr.bf16.mxu0 0
    %5328 = vmatpush1.bf16.msra.mxu0 0
    %5329 = vmatprep.mubr.bf16.mxu0 0
    %5330 = vmatmul.mubr.bf16.gmra.mrb[0].mxu0 %v5104
    %v5331 = vpop.f32.mrb[0].mxu0
    %v5332 = vadd.f32 0.0, %v5331
    %v5333 = vpop.f32.mrb[0].mxu0
    %v5334 = vadd.f32 0.0, %v5333
    %v5335 = vpop.f32.mrb[0].mxu0
    %v5336 = vpop.f32.mrb[0].mxu0
    %5337 = vdwg.mxu0
    %5338 = vmatprep.subr.bf16.mxu0 %v5236
    %5339 = vmatpush1.bf16.msra.mxu0 %v5235
    %5340 = vmatprep.subr.bf16.mxu0 %v5240
    %5341 = vmatpush1.bf16.msra.mxu0 %v5239
    %5342 = vmatprep.subr.bf16.mxu0 %v5244
    %5343 = vmatpush1.bf16.msra.mxu0 %v5243
    %5344 = vmatprep.subr.bf16.mxu0 %v5248
    %5345 = vmatpush1.bf16.msra.mxu0 %v5247
    %5346 = vmatprep.subr.bf16.mxu0 %v5252
    %5347 = vmatpush1.bf16.msra.mxu0 %v5251
    %5348 = vmatprep.subr.bf16.mxu0 %v5256
    %5349 = vmatpush1.bf16.msra.mxu0 %v5255
    %5350 = vmatprep.subr.bf16.mxu0 %v5260
    %5351 = vmatpush1.bf16.msra.mxu0 %v5259
    %5352 = vmatprep.subr.bf16.mxu0 %v5264
    %5353 = vmatpush1.bf16.msra.mxu0 %v5263
    %5354 = vmatprep.subr.bf16.mxu0 0
    %5355 = vmatpush1.bf16.msra.mxu0 0
    %5356 = vmatprep.subr.bf16.mxu0 0
    %5357 = vmatpush1.bf16.msra.mxu0 0
    %5358 = vmatprep.subr.bf16.mxu0 0
    %5359 = vmatpush1.bf16.msra.mxu0 0
    %5360 = vmatprep.subr.bf16.mxu0 0
    %5361 = vmatpush1.bf16.msra.mxu0 0
    %5362 = vmatprep.subr.bf16.mxu0 0
    %5363 = vmatpush1.bf16.msra.mxu0 0
    %5364 = vmatprep.subr.bf16.mxu0 0
    %5365 = vmatpush1.bf16.msra.mxu0 0
    %5366 = vmatprep.subr.bf16.mxu0 0
    %5367 = vmatpush1.bf16.msra.mxu0 0
    %5368 = vmatprep.subr.bf16.mxu0 0
    %5369 = vmatpush1.bf16.msra.mxu0 0
    %5370 = vmatprep.mubr.bf16.mxu0 0
    %5371 = vmatmul.mubr.bf16.gmra.mrb[0].mxu0 %v5104
    %v5372 = vpop.f32.mrb[0].mxu0
    %v5373 = vadd.f32 0.0, %v5372
    %v5374 = vpop.f32.mrb[0].mxu0
    %v5375 = vadd.f32 0.0, %v5374
    %v5376 = vpop.f32.mrb[0].mxu0
    %v5377 = vpop.f32.mrb[0].mxu0
    %5378 = vdwg.mxu0
    %v5379 = vadd.f32 %v5099, %v5332
    %v5380 = vadd.f32 %v5100, %v5334
    %v5381 = vadd.f32 %v5101, %v5373
    %v5382 = vadd.f32 %v5102, %v5375
    %v5383 = vmul.f32 %v5379, 0.5
    %v5384 = vtanh.pop %v5383
    %v5385 = vmul.f32 %v5384, 0.5
    %v5386 = vadd.f32 %v5385, 0.5
    %v5387 = vmul.f32 %v5380, 0.5
    %v5388 = vtanh.pop %v5387
    %v5389 = vmul.f32 %v5388, 0.5
    %v5390 = vadd.f32 %v5389, 0.5
    %v5391 = vtanh.pop %v5381
    %v5392 = vmul.f32 %v5382, 0.5
    %v5393 = vtanh.pop %v5392
    %v5394 = vmul.f32 %v5393, 0.5
    %v5395 = vadd.f32 %v5394, 0.5
    %v5396 = vld [vmem:[#allocation5] sm:$0xff]
    %v5397 = vmul.f32 %v5390, %v5396
    %v5398 = vmul.f32 %v5386, %v5391
    %v5399 = vadd.f32 %v5397, %v5398
    %v5400 = vtanh.pop %v5399
    %v5401 = vmul.f32 %v5395, %v5400
    %5402 = vst [vmem:[#allocation5] sm:$0xff] %v5399
    %5403 = vst [vmem:[#allocation4] sm:$0xff] %v5401
    %v5404 = vld [vmem:[%s2555] sm:$0xff]
    %v5405 = vld [vmem:[%s2555 + $0x8] sm:$0xff]
    %v5406 = vld [vmem:[%s2555 + $0x10] sm:$0xff]
    %v5407 = vld [vmem:[%s2555 + $0x18] sm:$0xff]
    %v5408 = vld [vmem:[#allocation4] sm:$0xff]
    %v5409 = vpack.c.bf16 %v5408, %v5408
    %v5410 = vld [vmem:[#allocation15] sm:$0xff]
    %v5411 = vld [vmem:[#allocation15 + $0x8] sm:$0xff]
    %v5412 = vld [vmem:[#allocation15 + $0x10] sm:$0xff]
    %v5413 = vld [vmem:[#allocation15 + $0x18] sm:$0xff]
    %v5414 = vld [vmem:[#allocation15 + $0x20] sm:$0xff]
    %v5415 = vld [vmem:[#allocation15 + $0x28] sm:$0xff]
    %v5416 = vld [vmem:[#allocation15 + $0x30] sm:$0xff]
    %v5417 = vld [vmem:[#allocation15 + $0x38] sm:$0xff]
    %v5418 = vld [vmem:[#allocation15 + $0x40] sm:$0xff]
    %v5419 = vld [vmem:[#allocation15 + $0x48] sm:$0xff]
    %v5420 = vld [vmem:[#allocation15 + $0x50] sm:$0xff]
    %v5421 = vld [vmem:[#allocation15 + $0x58] sm:$0xff]
    %v5422 = vld [vmem:[#allocation15 + $0x60] sm:$0xff]
    %v5423 = vld [vmem:[#allocation15 + $0x68] sm:$0xff]
    %v5424 = vld [vmem:[#allocation15 + $0x70] sm:$0xff]
    %v5425 = vld [vmem:[#allocation15 + $0x78] sm:$0xff]
    %v5426 = vld [vmem:[#allocation15 + $0x80] sm:$0xff]
    %v5427 = vld [vmem:[#allocation15 + $0x88] sm:$0xff]
    %v5428 = vld [vmem:[#allocation15 + $0x90] sm:$0xff]
    %v5429 = vld [vmem:[#allocation15 + $0x98] sm:$0xff]
    %v5430 = vld [vmem:[#allocation15 + $0xa0] sm:$0xff]
    %v5431 = vld [vmem:[#allocation15 + $0xa8] sm:$0xff]
    %v5432 = vld [vmem:[#allocation15 + $0xb0] sm:$0xff]
    %v5433 = vld [vmem:[#allocation15 + $0xb8] sm:$0xff]
    %v5434 = vld [vmem:[#allocation15 + $0xc0] sm:$0xff]
    %v5435 = vld [vmem:[#allocation15 + $0xc8] sm:$0xff]
    %v5436 = vld [vmem:[#allocation15 + $0xd0] sm:$0xff]
    %v5437 = vld [vmem:[#allocation15 + $0xd8] sm:$0xff]
    %v5438 = vld [vmem:[#allocation15 + $0xe0] sm:$0xff]
    %v5439 = vld [vmem:[#allocation15 + $0xe8] sm:$0xff]
    %v5440 = vld [vmem:[#allocation15 + $0xf0] sm:$0xff]
    %v5441 = vld [vmem:[#allocation15 + $0xf8] sm:$0xff]
    %v5474 = vunpack.c.l.b16 %v5410
    %v5475 = vunpack.c.h.b16 %v5410
    %v5476 = vunpack.c.l.b16 %v5411
    %v5477 = vunpack.c.h.b16 %v5411
    %v5478 = vunpack.c.l.b16 %v5412
    %v5479 = vunpack.c.h.b16 %v5412
    %v5480 = vunpack.c.l.b16 %v5413
    %v5481 = vunpack.c.h.b16 %v5413
    %v5482 = vunpack.c.l.b16 %v5414
    %v5483 = vunpack.c.h.b16 %v5414
    %v5484 = vunpack.c.l.b16 %v5415
    %v5485 = vunpack.c.h.b16 %v5415
    %v5486 = vunpack.c.l.b16 %v5416
    %v5487 = vunpack.c.h.b16 %v5416
    %v5488 = vunpack.c.l.b16 %v5417
    %v5489 = vunpack.c.h.b16 %v5417
    %v5490 = vunpack.c.l.b16 %v5418
    %v5491 = vunpack.c.h.b16 %v5418
    %v5492 = vunpack.c.l.b16 %v5419
    %v5493 = vunpack.c.h.b16 %v5419
    %v5494 = vunpack.c.l.b16 %v5420
    %v5495 = vunpack.c.h.b16 %v5420
    %v5496 = vunpack.c.l.b16 %v5421
    %v5497 = vunpack.c.h.b16 %v5421
    %v5498 = vunpack.c.l.b16 %v5422
    %v5499 = vunpack.c.h.b16 %v5422
    %v5500 = vunpack.c.l.b16 %v5423
    %v5501 = vunpack.c.h.b16 %v5423
    %v5502 = vunpack.c.l.b16 %v5424
    %v5503 = vunpack.c.h.b16 %v5424
    %v5504 = vunpack.c.l.b16 %v5425
    %v5505 = vunpack.c.h.b16 %v5425
    %v5506 = vunpack.c.l.b16 %v5426
    %v5507 = vunpack.c.h.b16 %v5426
    %v5508 = vunpack.c.l.b16 %v5427
    %v5509 = vunpack.c.h.b16 %v5427
    %v5510 = vunpack.c.l.b16 %v5428
    %v5511 = vunpack.c.h.b16 %v5428
    %v5512 = vunpack.c.l.b16 %v5429
    %v5513 = vunpack.c.h.b16 %v5429
    %v5514 = vunpack.c.l.b16 %v5430
    %v5515 = vunpack.c.h.b16 %v5430
    %v5516 = vunpack.c.l.b16 %v5431
    %v5517 = vunpack.c.h.b16 %v5431
    %v5518 = vunpack.c.l.b16 %v5432
    %v5519 = vunpack.c.h.b16 %v5432
    %v5520 = vunpack.c.l.b16 %v5433
    %v5521 = vunpack.c.h.b16 %v5433
    %v5522 = vunpack.c.l.b16 %v5434
    %v5523 = vunpack.c.h.b16 %v5434
    %v5524 = vunpack.c.l.b16 %v5435
    %v5525 = vunpack.c.h.b16 %v5435
    %v5526 = vunpack.c.l.b16 %v5436
    %v5527 = vunpack.c.h.b16 %v5436
    %v5528 = vunpack.c.l.b16 %v5437
    %v5529 = vunpack.c.h.b16 %v5437
    %v5530 = vunpack.c.l.b16 %v5438
    %v5531 = vunpack.c.h.b16 %v5438
    %v5532 = vunpack.c.l.b16 %v5439
    %v5533 = vunpack.c.h.b16 %v5439
    %v5534 = vunpack.c.l.b16 %v5440
    %v5535 = vunpack.c.h.b16 %v5440
    %v5536 = vunpack.c.l.b16 %v5441
    %v5537 = vunpack.c.h.b16 %v5441
    %v5538 = vpack.c.b16 %v5478, %v5474
    %v5539 = vpack.c.b16 %v5479, %v5475
    %v5540 = vpack.c.b16 %v5480, %v5476
    %v5541 = vpack.c.b16 %v5481, %v5477
    %v5542 = vpack.c.b16 %v5486, %v5482
    %v5543 = vpack.c.b16 %v5487, %v5483
    %v5544 = vpack.c.b16 %v5488, %v5484
    %v5545 = vpack.c.b16 %v5489, %v5485
    %v5546 = vpack.c.b16 %v5494, %v5490
    %v5547 = vpack.c.b16 %v5495, %v5491
    %v5548 = vpack.c.b16 %v5496, %v5492
    %v5549 = vpack.c.b16 %v5497, %v5493
    %v5550 = vpack.c.b16 %v5502, %v5498
    %v5551 = vpack.c.b16 %v5503, %v5499
    %v5552 = vpack.c.b16 %v5504, %v5500
    %v5553 = vpack.c.b16 %v5505, %v5501
    %v5554 = vpack.c.b16 %v5510, %v5506
    %v5555 = vpack.c.b16 %v5511, %v5507
    %v5556 = vpack.c.b16 %v5512, %v5508
    %v5557 = vpack.c.b16 %v5513, %v5509
    %v5558 = vpack.c.b16 %v5518, %v5514
    %v5559 = vpack.c.b16 %v5519, %v5515
    %v5560 = vpack.c.b16 %v5520, %v5516
    %v5561 = vpack.c.b16 %v5521, %v5517
    %v5562 = vpack.c.b16 %v5526, %v5522
    %v5563 = vpack.c.b16 %v5527, %v5523
    %v5564 = vpack.c.b16 %v5528, %v5524
    %v5565 = vpack.c.b16 %v5529, %v5525
    %v5566 = vpack.c.b16 %v5534, %v5530
    %v5567 = vpack.c.b16 %v5535, %v5531
    %v5568 = vpack.c.b16 %v5536, %v5532
    %v5569 = vpack.c.b16 %v5537, %v5533
    %5602 = vmatprep.subr.bf16.mxu0 %v5539
    %5603 = vmatpush1.bf16.msra.mxu0 %v5538
    %5604 = vmatprep.subr.bf16.mxu0 %v5543
    %5605 = vmatpush1.bf16.msra.mxu0 %v5542
    %5606 = vmatprep.subr.bf16.mxu0 %v5547
    %5607 = vmatpush1.bf16.msra.mxu0 %v5546
    %5608 = vmatprep.subr.bf16.mxu0 %v5551
    %5609 = vmatpush1.bf16.msra.mxu0 %v5550
    %5610 = vmatprep.subr.bf16.mxu0 %v5555
    %5611 = vmatpush1.bf16.msra.mxu0 %v5554
    %5612 = vmatprep.subr.bf16.mxu0 %v5559
    %5613 = vmatpush1.bf16.msra.mxu0 %v5558
    %5614 = vmatprep.subr.bf16.mxu0 %v5563
    %5615 = vmatpush1.bf16.msra.mxu0 %v5562
    %5616 = vmatprep.subr.bf16.mxu0 %v5567
    %5617 = vmatpush1.bf16.msra.mxu0 %v5566
    %5618 = vmatprep.subr.bf16.mxu0 0
    %5619 = vmatpush1.bf16.msra.mxu0 0
    %5620 = vmatprep.subr.bf16.mxu0 0
    %5621 = vmatpush1.bf16.msra.mxu0 0
    %5622 = vmatprep.subr.bf16.mxu0 0
    %5623 = vmatpush1.bf16.msra.mxu0 0
    %5624 = vmatprep.subr.bf16.mxu0 0
    %5625 = vmatpush1.bf16.msra.mxu0 0
    %5626 = vmatprep.subr.bf16.mxu0 0
    %5627 = vmatpush1.bf16.msra.mxu0 0
    %5628 = vmatprep.subr.bf16.mxu0 0
    %5629 = vmatpush1.bf16.msra.mxu0 0
    %5630 = vmatprep.subr.bf16.mxu0 0
    %5631 = vmatpush1.bf16.msra.mxu0 0
    %5632 = vmatprep.subr.bf16.mxu0 0
    %5633 = vmatpush1.bf16.msra.mxu0 0
    %5634 = vmatprep.mubr.bf16.mxu0 0
    %5635 = vmatmul.mubr.bf16.gmra.mrb[0].mxu0 %v5409
    %v5636 = vpop.f32.mrb[0].mxu0
    %v5637 = vadd.f32 0.0, %v5636
    %v5638 = vpop.f32.mrb[0].mxu0
    %v5639 = vadd.f32 0.0, %v5638
    %v5640 = vpop.f32.mrb[0].mxu0
    %v5641 = vpop.f32.mrb[0].mxu0
    %5642 = vdwg.mxu0
    %5643 = vmatprep.subr.bf16.mxu0 %v5541
    %5644 = vmatpush1.bf16.msra.mxu0 %v5540
    %5645 = vmatprep.subr.bf16.mxu0 %v5545
    %5646 = vmatpush1.bf16.msra.mxu0 %v5544
    %5647 = vmatprep.subr.bf16.mxu0 %v5549
    %5648 = vmatpush1.bf16.msra.mxu0 %v5548
    %5649 = vmatprep.subr.bf16.mxu0 %v5553
    %5650 = vmatpush1.bf16.msra.mxu0 %v5552
    %5651 = vmatprep.subr.bf16.mxu0 %v5557
    %5652 = vmatpush1.bf16.msra.mxu0 %v5556
    %5653 = vmatprep.subr.bf16.mxu0 %v5561
    %5654 = vmatpush1.bf16.msra.mxu0 %v5560
    %5655 = vmatprep.subr.bf16.mxu0 %v5565
    %5656 = vmatpush1.bf16.msra.mxu0 %v5564
    %5657 = vmatprep.subr.bf16.mxu0 %v5569
    %5658 = vmatpush1.bf16.msra.mxu0 %v5568
    %5659 = vmatprep.subr.bf16.mxu0 0
    %5660 = vmatpush1.bf16.msra.mxu0 0
    %5661 = vmatprep.subr.bf16.mxu0 0
    %5662 = vmatpush1.bf16.msra.mxu0 0
    %5663 = vmatprep.subr.bf16.mxu0 0
    %5664 = vmatpush1.bf16.msra.mxu0 0
    %5665 = vmatprep.subr.bf16.mxu0 0
    %5666 = vmatpush1.bf16.msra.mxu0 0
    %5667 = vmatprep.subr.bf16.mxu0 0
    %5668 = vmatpush1.bf16.msra.mxu0 0
    %5669 = vmatprep.subr.bf16.mxu0 0
    %5670 = vmatpush1.bf16.msra.mxu0 0
    %5671 = vmatprep.subr.bf16.mxu0 0
    %5672 = vmatpush1.bf16.msra.mxu0 0
    %5673 = vmatprep.subr.bf16.mxu0 0
    %5674 = vmatpush1.bf16.msra.mxu0 0
    %5675 = vmatprep.mubr.bf16.mxu0 0
    %5676 = vmatmul.mubr.bf16.gmra.mrb[0].mxu0 %v5409
    %v5677 = vpop.f32.mrb[0].mxu0
    %v5678 = vadd.f32 0.0, %v5677
    %v5679 = vpop.f32.mrb[0].mxu0
    %v5680 = vadd.f32 0.0, %v5679
    %v5681 = vpop.f32.mrb[0].mxu0
    %v5682 = vpop.f32.mrb[0].mxu0
    %5683 = vdwg.mxu0
    %v5684 = vadd.f32 %v5404, %v5637
    %v5685 = vadd.f32 %v5405, %v5639
    %v5686 = vadd.f32 %v5406, %v5678
    %v5687 = vadd.f32 %v5407, %v5680
    %v5688 = vmul.f32 %v5684, 0.5
    %v5689 = vtanh.pop %v5688
    %v5690 = vmul.f32 %v5689, 0.5
    %v5691 = vadd.f32 %v5690, 0.5
    %v5692 = vmul.f32 %v5685, 0.5
    %v5693 = vtanh.pop %v5692
    %v5694 = vmul.f32 %v5693, 0.5
    %v5695 = vadd.f32 %v5694, 0.5
    %v5696 = vtanh.pop %v5686
    %v5697 = vmul.f32 %v5687, 0.5
    %v5698 = vtanh.pop %v5697
    %v5699 = vmul.f32 %v5698, 0.5
    %v5700 = vadd.f32 %v5699, 0.5
    %v5701 = vld [vmem:[#allocation5] sm:$0xff]
    %v5702 = vmul.f32 %v5695, %v5701
    %v5703 = vmul.f32 %v5691, %v5696
    %v5704 = vadd.f32 %v5702, %v5703
    %v5705 = vtanh.pop %v5704
    %v5706 = vmul.f32 %v5700, %v5705
    %5707 = vst [vmem:[#allocation5] sm:$0xff] %v5704
    %5708 = vst [vmem:[#allocation4] sm:$0xff] %v5706
    %v5709 = vld [vmem:[#allocation4] sm:$0xff]
    %v5710 = vpack.c.bf16 %v5709, %v5709
    %v5711 = vld [vmem:[#allocation18] sm:$0xf]
    %v5712 = vld [vmem:[#allocation18 + $0x4] sm:$0xf]
    %v5713 = vld [vmem:[#allocation18 + $0x8] sm:$0xf]
    %v5714 = vld [vmem:[#allocation18 + $0xc] sm:$0xf]
    %v5715 = vld [vmem:[#allocation18 + $0x10] sm:$0xf]
    %v5716 = vld [vmem:[#allocation18 + $0x14] sm:$0xf]
    %v5717 = vld [vmem:[#allocation18 + $0x18] sm:$0xf]
    %v5718 = vld [vmem:[#allocation18 + $0x1c] sm:$0xf]
    %v5719 = vld [vmem:[#allocation18 + $0x20] sm:$0xf]
    %v5720 = vld [vmem:[#allocation18 + $0x24] sm:$0xf]
    %v5721 = vld [vmem:[#allocation18 + $0x28] sm:$0xf]
    %v5722 = vld [vmem:[#allocation18 + $0x2c] sm:$0xf]
    %v5723 = vld [vmem:[#allocation18 + $0x30] sm:$0xf]
    %v5724 = vld [vmem:[#allocation18 + $0x34] sm:$0xf]
    %v5725 = vld [vmem:[#allocation18 + $0x38] sm:$0xf]
    %v5726 = vld [vmem:[#allocation18 + $0x3c] sm:$0xf]
    %v5727 = vld [vmem:[#allocation20] sm:$0x1]
    %v5729 = vlaneseq
    %v5730 = vshrl.u32 %v5729, 7
    %v5731 = vsub.s32 0, %v5730
    %v5732 = vrot.slane %v5727, %v5731
    %v5750 = vunpack.c.l.b16 %v5711
    %v5751 = vunpack.c.l.b16 %v5712
    %v5752 = vunpack.c.l.b16 %v5713
    %v5753 = vunpack.c.l.b16 %v5714
    %v5754 = vunpack.c.l.b16 %v5715
    %v5755 = vunpack.c.l.b16 %v5716
    %v5756 = vunpack.c.l.b16 %v5717
    %v5757 = vunpack.c.l.b16 %v5718
    %v5758 = vunpack.c.l.b16 %v5719
    %v5759 = vunpack.c.l.b16 %v5720
    %v5760 = vunpack.c.l.b16 %v5721
    %v5761 = vunpack.c.l.b16 %v5722
    %v5762 = vunpack.c.l.b16 %v5723
    %v5763 = vunpack.c.l.b16 %v5724
    %v5764 = vunpack.c.l.b16 %v5725
    %v5765 = vunpack.c.l.b16 %v5726
    %v5766 = vpack.c.b16 %v5751, %v5750
    %v5767 = vpack.c.b16 %v5753, %v5752
    %v5768 = vpack.c.b16 %v5755, %v5754
    %v5769 = vpack.c.b16 %v5757, %v5756
    %v5770 = vpack.c.b16 %v5759, %v5758
    %v5771 = vpack.c.b16 %v5761, %v5760
    %v5772 = vpack.c.b16 %v5763, %v5762
    %v5773 = vpack.c.b16 %v5765, %v5764
    %5782 = vmatprep.subr.bf16.mxu0 0
    %5783 = vmatpush1.bf16.msra.mxu0 %v5766
    %5784 = vmatprep.subr.bf16.mxu0 0
    %5785 = vmatpush1.bf16.msra.mxu0 %v5767
    %5786 = vmatprep.subr.bf16.mxu0 0
    %5787 = vmatpush1.bf16.msra.mxu0 %v5768
    %5788 = vmatprep.subr.bf16.mxu0 0
    %5789 = vmatpush1.bf16.msra.mxu0 %v5769
    %5790 = vmatprep.subr.bf16.mxu0 0
    %5791 = vmatpush1.bf16.msra.mxu0 %v5770
    %5792 = vmatprep.subr.bf16.mxu0 0
    %5793 = vmatpush1.bf16.msra.mxu0 %v5771
    %5794 = vmatprep.subr.bf16.mxu0 0
    %5795 = vmatpush1.bf16.msra.mxu0 %v5772
    %5796 = vmatprep.subr.bf16.mxu0 0
    %5797 = vmatpush1.bf16.msra.mxu0 %v5773
    %5798 = vmatprep.subr.bf16.mxu0 0
    %5799 = vmatpush1.bf16.msra.mxu0 0
    %5800 = vmatprep.subr.bf16.mxu0 0
    %5801 = vmatpush1.bf16.msra.mxu0 0
    %5802 = vmatprep.subr.bf16.mxu0 0
    %5803 = vmatpush1.bf16.msra.mxu0 0
    %5804 = vmatprep.subr.bf16.mxu0 0
    %5805 = vmatpush1.bf16.msra.mxu0 0
    %5806 = vmatprep.subr.bf16.mxu0 0
    %5807 = vmatpush1.bf16.msra.mxu0 0
    %5808 = vmatprep.subr.bf16.mxu0 0
    %5809 = vmatpush1.bf16.msra.mxu0 0
    %5810 = vmatprep.subr.bf16.mxu0 0
    %5811 = vmatpush1.bf16.msra.mxu0 0
    %5812 = vmatprep.subr.bf16.mxu0 0
    %5813 = vmatpush1.bf16.msra.mxu0 0
    %5814 = vmatprep.mubr.bf16.mxu0 0
    %5815 = vmatmul.mubr.bf16.gmra.mrb[0].mxu0 %v5710
    %v5816 = vpop.f32.mrb[0].mxu0
    %v5817 = vadd.f32 %v5732, %v5816
    %v5818 = vpop.f32.mrb[0].mxu0
    %v5819 = vpop.f32.mrb[0].mxu0
    %v5820 = vpop.f32.mrb[0].mxu0
    %5821 = vdwg.mxu0
    %5822 = vst [vmem:[#allocation21] sm:$0xff] %v5817
    // Predicated region
    $region74: #{tpu_custom_call.1} parent=1 // pred_check
      _
    $region75: #{tpu_custom_call.1} parent=1 // pred_check_branch
      %5824 = sbr.rel (0) target = $region77
    $region76: #{tpu_custom_call.1} parent=1 // pred_region
      %s5826 = ssub.s32 128, 128
      %5827 = vsyncadd [#allocation8], %s5826
      %s5829 = sshll.u32 [#allocation21], 4
      %s5830 = int_to_ptr.vmem [resolvable:$true] %s5829
      %5832 = dma.vmem_to_hbm [thread:$0]  %s5830, 128, %s9, [#allocation8]
    $region77: #{tpu_custom_call.1} parent=1 // pred_fallthru
      _
    // Predicated region
    $region78: #{tpu_custom_call.1} parent=1 // pred_check
      _
    $region79: #{tpu_custom_call.1} parent=1 // pred_check_branch
      %5834 = sbr.rel (0) target = $region81
    $region80: #{tpu_custom_call.1} parent=1 // pred_region
      %5835 = dma.done [#allocation8], 128
    $region81: #{tpu_custom_call.1} parent=1 // pred_fallthru
      _
    %5836 = vsyncpa [#allocation7], 1
    %5837 = vsyncpa [#allocation10], 1
    %5838 = vsyncpa [#allocation13], 1
    %5839 = vsyncpa [#allocation16], 1
    %5840 = vsyncpa [#allocation19], 1
    %5841 = vsyncpa [#allocation8], 1

</llo_original>
